<compile_context>
chip_gen: v7x
topology: tpu7x:2x2x1
jax: 0.10.0
libtpu: 0.0.40
codegen_flags: <defaults>
</compile_context>

<pallas_src>
import functools

import jax
import jax.numpy as jnp
from jax.experimental import pallas as pl
from jax.experimental.pallas import tpu as pltpu

CPAD = 128        # lane width: all channel / class dims are padded to this
NEG_BIG = -1e9    # logit bias for padded class lanes (exp underflows to 0)


# ----------------------------------------------------------------------------
# Kernel 1: convolutional backbone (stem + residual block + GAP), one image
# per grid step, everything stays in VMEM.  Emits pooled features (N, 1, 128).
# ----------------------------------------------------------------------------
def _backbone_kernel(xcol_ref, w1_ref, b1_ref, w2_ref, b2_ref, w3_ref, b3_ref,
                     pooled_ref, padbuf, resbuf, *, H, W):
    HW = H * W

    # Re-zero only the halo border (the interior is fully overwritten below).
    # Done every step so each TensorCore's private scratch is initialized.
    padbuf[0:1, :, :] = jnp.zeros((1, W + 2, CPAD), jnp.float32)
    padbuf[H + 1:H + 2, :, :] = jnp.zeros((1, W + 2, CPAD), jnp.float32)
    padbuf[1:H + 1, 0:1, :] = jnp.zeros((H, 1, CPAD), jnp.float32)
    padbuf[1:H + 1, W + 1:W + 2, :] = jnp.zeros((H, 1, CPAD), jnp.float32)

    # ---- stem conv + relu: wrapper-built im2col -> one aligned MXU dot ----
    h = jnp.dot(xcol_ref[0], w1_ref[...], preferred_element_type=jnp.float32)
    h = jnp.maximum(h + b1_ref[...], 0.0)                 # (HW, CPAD) f32
    resbuf[...] = h.astype(jnp.bfloat16)                  # residual copy (aligned)
    padbuf[1:H + 1, 1:W + 1, :] = h.reshape(H, W, CPAD)   # spatial re-pad in VMEM

    def conv3x3(w_ref, b_ref):
        # 9 shifted taps from the padded activation; taps are loaded lazily
        # (no col materialization) and paired so each MXU dot has K=256.
        def tap(t):
            dy, dx = t // 3, t % 3
            v = padbuf[dy:dy + H, dx:dx + W, :]
            return v.reshape(HW, CPAD).astype(jnp.bfloat16)

        col2 = jnp.concatenate([tap(0), tap(1)], axis=-1)
        acc = jnp.dot(col2, w_ref[0:2 * CPAD, :],
                      preferred_element_type=jnp.float32)
        for p in range(1, 4):
            col2 = jnp.concatenate([tap(2 * p), tap(2 * p + 1)], axis=-1)
            acc = acc + jnp.dot(col2, w_ref[2 * p * CPAD:(2 * p + 2) * CPAD, :],
                                preferred_element_type=jnp.float32)
        acc = acc + jnp.dot(tap(8), w_ref[8 * CPAD:, :],
                            preferred_element_type=jnp.float32)
        return acc + b_ref[...]                           # (HW, CPAD) f32

    # ---- residual block: conv + relu, conv + residual + relu ----
    h = jnp.maximum(conv3x3(w2_ref, b2_ref), 0.0)
    padbuf[1:H + 1, 1:W + 1, :] = h.reshape(H, W, CPAD)
    h = jnp.maximum(conv3x3(w3_ref, b3_ref) + resbuf[...].astype(jnp.float32),
                    0.0)

    # ---- global average pool as an MXU dot (keeps the XLU free) ----
    ones_row = jnp.full((1, HW), 1.0 / HW, dtype=jnp.float32)
    pooled = jnp.dot(ones_row, h, preferred_element_type=jnp.float32)
    pooled_ref[...] = pooled.reshape(1, 1, CPAD)


def _backbone_call(x_col, prep, H, W):
    N = x_col.shape[0]
    HW = H * W
    kern = functools.partial(_backbone_kernel, H=H, W=W)
    const2 = lambda n: (0, 0)     # weights/biases: whole array, resident
    return pl.pallas_call(
        kern,
        out_shape=jax.ShapeDtypeStruct((N, 1, CPAD), jnp.float32),
        grid=(N,),
        in_specs=[
            pl.BlockSpec((1, HW, CPAD), lambda n: (n, 0, 0)),   # stem im2col
            pl.BlockSpec((CPAD, CPAD), const2),                 # w1
            pl.BlockSpec((1, CPAD), const2),                    # b1
            pl.BlockSpec((9 * CPAD, CPAD), const2),             # w2
            pl.BlockSpec((1, CPAD), const2),                    # b2
            pl.BlockSpec((9 * CPAD, CPAD), const2),             # w3
            pl.BlockSpec((1, CPAD), const2),                    # b3
        ],
        out_specs=pl.BlockSpec((1, 1, CPAD), lambda n: (n, 0, 0)),
        scratch_shapes=[
            pltpu.VMEM((H + 2, W + 2, CPAD), jnp.float32),      # padded activation
            pltpu.VMEM((HW, CPAD), jnp.bfloat16),               # residual (bf16)
        ],
        compiler_params=pltpu.CompilerParams(
            dimension_semantics=("parallel",)),
    )(x_col, prep["w1"], prep["b1"], prep["w2"], prep["b2"],
      prep["w3"], prep["b3"])


# ----------------------------------------------------------------------------
# Kernel 2: batched head — proj -> relu -> fc -> softmax (M = N on the MXU).
# ----------------------------------------------------------------------------
def _head_kernel(pooled_ref, wp_ref, bp_ref, wfc_ref, bfc_ref, out_ref):
    feats = jnp.dot(pooled_ref[...].astype(jnp.bfloat16), wp_ref[...],
                    preferred_element_type=jnp.float32) + bp_ref[...]
    feats = jnp.maximum(feats, 0.0)                       # relu(backbone feats)
    logits = jnp.dot(feats.astype(jnp.bfloat16), wfc_ref[...],
                     preferred_element_type=jnp.float32) + bfc_ref[...]
    m = jnp.max(logits, axis=-1, keepdims=True)
    e = jnp.exp(logits - m)
    # exact division: denominator is one scalar per row, approx recip not worth it
    out_ref[...] = e / jnp.sum(e, axis=-1, keepdims=True)


def _head_call(pooled, prep):
    N = pooled.shape[0]
    F = prep["wp"].shape[1]
    return pl.pallas_call(
        _head_kernel,
        out_shape=jax.ShapeDtypeStruct((N, CPAD), jnp.float32),
        grid=(1,),
        in_specs=[
            pl.BlockSpec((N, CPAD), lambda i: (0, 0)),
            pl.BlockSpec((CPAD, F), lambda i: (0, 0)),
            pl.BlockSpec((1, F), lambda i: (0, 0)),
            pl.BlockSpec((F, CPAD), lambda i: (0, 0)),
            pl.BlockSpec((1, CPAD), lambda i: (0, 0)),
        ],
        out_specs=pl.BlockSpec((N, CPAD), lambda i: (0, 0)),
        compiler_params=pltpu.CompilerParams(
            dimension_semantics=("arbitrary",)),
    )(pooled, prep["wp"], prep["bp"], prep["wfc"], prep["bfc"])


# ----------------------------------------------------------------------------
# Parameters (deterministic stand-in backbone + the module's own fc head)
# ----------------------------------------------------------------------------
def init_params(in_channels, n_classes, width=16, feat_dim=512 * 4):
    keys = jax.random.split(jax.random.PRNGKey(0), 10)
    return {
        # frozen backbone stand-in
        "stem_w": 0.05 * jax.random.normal(keys[0], (3, 3, in_channels, width), jnp.float32),
        "stem_b": 0.05 * jax.random.normal(keys[1], (width,), jnp.float32),
        "blk1_w": 0.05 * jax.random.normal(keys[2], (3, 3, width, width), jnp.float32),
        "blk1_b": 0.05 * jax.random.normal(keys[3], (width,), jnp.float32),
        "blk2_w": 0.05 * jax.random.normal(keys[4], (3, 3, width, width), jnp.float32),
        "blk2_b": 0.05 * jax.random.normal(keys[5], (width,), jnp.float32),
        "proj_w": 0.05 * jax.random.normal(keys[6], (width, feat_dim), jnp.float32),
        "proj_b": 0.05 * jax.random.normal(keys[7], (feat_dim,), jnp.float32),
        # trainable head: nn.Linear(512*4, n_classes), stored pre-transposed (F, K)
        "fc_w": 0.05 * jax.random.normal(keys[8], (feat_dim, n_classes), jnp.float32),
        "fc_b": 0.05 * jax.random.normal(keys[9], (n_classes,), jnp.float32),
    }


def _pad_to(x, shape):
    return jnp.pad(x, [(0, t - s) for s, t in zip(x.shape, shape)])


def prepare_params(p, n_classes):
    """Pad channel/class dims to 128 lanes, im2col-reshape conv weights, cast to bf16."""
    feat_dim = p["proj_w"].shape[1]
    in_ch = p["stem_w"].shape[2]
    width = p["stem_w"].shape[3]
    assert 9 * in_ch <= CPAD and width <= CPAD and n_classes <= CPAD

    # stem weight laid out to match the wrapper-built im2col: row = (ky*3+kx)*C + c
    w1 = _pad_to(p["stem_w"].reshape(9 * in_ch, width), (CPAD, CPAD)).astype(jnp.bfloat16)
    b1 = _pad_to(p["stem_b"].reshape(1, -1), (1, CPAD)).astype(jnp.float32)

    def blk(wname, bname):
        w = _pad_to(p[wname], (3, 3, CPAD, CPAD)).reshape(9 * CPAD, CPAD)
        b = _pad_to(p[bname].reshape(1, -1), (1, CPAD))
        return w.astype(jnp.bfloat16), b.astype(jnp.float32)

    w2, b2 = blk("blk1_w", "blk1_b")
    w3, b3 = blk("blk2_w", "blk2_b")
    wp = _pad_to(p["proj_w"], (CPAD, feat_dim)).astype(jnp.bfloat16)
    bp = p["proj_b"].reshape(1, feat_dim).astype(jnp.float32)
    wfc = _pad_to(p["fc_w"], (feat_dim, CPAD)).astype(jnp.bfloat16)
    # padded class lanes get a large negative bias so softmax ignores them
    bfc = jnp.full((1, CPAD), NEG_BIG, jnp.float32).at[0, :n_classes].set(p["fc_b"])
    return dict(w1=w1, b1=b1, w2=w2, b2=b2, w3=w3, b3=b3,
                wp=wp, bp=bp, wfc=wfc, bfc=bfc)


@functools.partial(jax.jit, static_argnames=("n_classes",))
def my_model_forward(prep, images_nchw, n_classes):
    # layout: NCHW input (PyTorch convention) -> NHWC internally
    x = jnp.transpose(images_nchw, (0, 2, 3, 1)).astype(jnp.float32)
    N, H, W, C = x.shape
    assert (H * W) % 8 == 0 and 9 * C <= CPAD
    xp = jnp.pad(x, ((0, 0), (1, 1), (1, 1), (0, 0)))      # spatial halo only
    # stem im2col built in the wrapper (tiny raw input, layout plumbing):
    # real K = 9*C, padded to the 128-lane width and cast to bf16.
    taps = [xp[:, dy:dy + H, dx:dx + W, :] for dy in range(3) for dx in range(3)]
    x_col = jnp.concatenate(taps, axis=-1).reshape(N, H * W, 9 * C)
    x_col = jnp.pad(x_col, ((0, 0), (0, 0), (0, CPAD - 9 * C))).astype(jnp.bfloat16)

    pooled = _backbone_call(x_col, prep, H, W)              # (N, 1, 128) f32
    probs = _head_call(pooled.reshape(N, CPAD), prep)       # (N, 128) f32
    return probs[:, :n_classes]                             # slice padded classes off


# ----------------------------------------------------------------------------
# Pure-JAX f32 reference of the same forward (for correctness check)
# ----------------------------------------------------------------------------
def _reference_forward(params, images_nchw):
    x = jnp.transpose(images_nchw, (0, 2, 3, 1)).astype(jnp.float32)

    def conv(x, w, b, res=None):
        y = jax.lax.conv_general_dilated(
            x, w, window_strides=(1, 1), padding="SAME",
            dimension_numbers=("NHWC", "HWIO", "NHWC")) + b
        if res is not None:
            y = y + res
        return jnp.maximum(y, 0.0)

    h = conv(x, params["stem_w"], params["stem_b"])
    r = h
    h = conv(h, params["blk1_w"], params["blk1_b"])
    h = conv(h, params["blk2_w"], params["blk2_b"], res=r)
    pooled = jnp.mean(h, axis=(1, 2))
    feats = pooled @ params["proj_w"] + params["proj_b"]
    logits = jnp.maximum(feats, 0.0) @ params["fc_w"] + params["fc_b"]
    return jax.nn.softmax(logits, axis=-1)


if __name__ == "__main__":
    N, C, H, W = 2, 4, 16, 16
    n_classes = 10

    key = jax.random.PRNGKey(0)
    images = jax.random.normal(key, (N, C, H, W), jnp.float32)   # NCHW like PyTorch

    params = init_params(C, n_classes)
    prep = prepare_params(params, n_classes)

    scores = my_model_forward(prep, images, n_classes=n_classes)
    scores = jax.block_until_ready(scores)

    assert scores.shape == (N, n_classes)
    assert bool(jnp.all(jnp.isfinite(scores)))
    # softmax rows sum to 1 (exact division in the head now)
    assert bool(jnp.allclose(jnp.sum(scores, axis=-1), 1.0, atol=1e-3))
    # matches the f32 reference (loose tol: bf16 MXU operands)
    ref = _reference_forward(params, images)
    assert bool(jnp.allclose(scores, ref, atol=5e-2))
    print("KERNEL_OK")
</pallas_src>

<mosaic_0001>
module attributes {stable_mosaic.version = 11 : i64} {
  func.func @_backbone_kernel(%arg0: i32, %arg1: memref<1x256x128xbf16, #tpu.memory_space<vmem>>, %arg2: memref<128x128xbf16, #tpu.memory_space<vmem>>, %arg3: memref<1x128xf32, #tpu.memory_space<vmem>>, %arg4: memref<1152x128xbf16, #tpu.memory_space<vmem>>, %arg5: memref<1x128xf32, #tpu.memory_space<vmem>>, %arg6: memref<1152x128xbf16, #tpu.memory_space<vmem>>, %arg7: memref<1x128xf32, #tpu.memory_space<vmem>>, %arg8: memref<1x1x128xf32, #tpu.memory_space<vmem>>, %arg9: memref<18x18x128xf32, #tpu.memory_space<vmem>>, %arg10: memref<256x128xbf16, #tpu.memory_space<vmem>>) attributes {dimension_semantics = [#tpu.dimension_semantics<parallel>], iteration_bounds = array<i64: 2>, scalar_prefetch = 0 : i64, scratch_operands = 2 : i64, tpu.core_type = #tpu.core_type<tc>, window_params = [{transform_indices = @transform_0, window_bounds = array<i64: 1, 256, 128>}, {pipeline_mode = #tpu.pipeline_mode<synchronous>, transform_indices = @transform_1, window_bounds = array<i64: 128, 128>}, {pipeline_mode = #tpu.pipeline_mode<synchronous>, transform_indices = @transform_2, window_bounds = array<i64: 1, 128>}, {pipeline_mode = #tpu.pipeline_mode<synchronous>, transform_indices = @transform_3, window_bounds = array<i64: 1152, 128>}, {pipeline_mode = #tpu.pipeline_mode<synchronous>, transform_indices = @transform_4, window_bounds = array<i64: 1, 128>}, {pipeline_mode = #tpu.pipeline_mode<synchronous>, transform_indices = @transform_5, window_bounds = array<i64: 1152, 128>}, {pipeline_mode = #tpu.pipeline_mode<synchronous>, transform_indices = @transform_6, window_bounds = array<i64: 1, 128>}, {transform_indices = @transform_7, window_bounds = array<i64: 1, 1, 128>}]} {
    %cst = arith.constant 0.000000e+00 : f32
    %0 = vector.broadcast %cst : f32 to vector<1x18x128xf32>
    %c0 = arith.constant 0 : index
    %c0_0 = arith.constant 0 : index
    %c0_1 = arith.constant 0 : index
    %1 = vector.load %arg9[%c0, %c0_0, %c0_1] : memref<18x18x128xf32, #tpu.memory_space<vmem>>, vector<1x18x128xf32>
    tpu.vector_store %arg9[%c0, %c0_0, %c0_1], %0 {strides = array<i32>} : memref<18x18x128xf32, #tpu.memory_space<vmem>>, vector<1x18x128xf32>,
    %cst_2 = arith.constant 0.000000e+00 : f32
    %2 = vector.broadcast %cst_2 : f32 to vector<1x18x128xf32>
    %c17 = arith.constant 17 : index
    %c0_3 = arith.constant 0 : index
    %c0_4 = arith.constant 0 : index
    %3 = vector.load %arg9[%c17, %c0_3, %c0_4] : memref<18x18x128xf32, #tpu.memory_space<vmem>>, vector<1x18x128xf32>
    tpu.vector_store %arg9[%c17, %c0_3, %c0_4], %2 {strides = array<i32>} : memref<18x18x128xf32, #tpu.memory_space<vmem>>, vector<1x18x128xf32>,
    %cst_5 = arith.constant 0.000000e+00 : f32
    %4 = vector.broadcast %cst_5 : f32 to vector<16x1x128xf32>
    %c1 = arith.constant 1 : index
    %c0_6 = arith.constant 0 : index
    %c0_7 = arith.constant 0 : index
    %5 = vector.load %arg9[%c1, %c0_6, %c0_7] : memref<18x18x128xf32, #tpu.memory_space<vmem>>, vector<16x1x128xf32>
    tpu.vector_store %arg9[%c1, %c0_6, %c0_7], %4 {strides = array<i32>} : memref<18x18x128xf32, #tpu.memory_space<vmem>>, vector<16x1x128xf32>,
    %cst_8 = arith.constant 0.000000e+00 : f32
    %6 = vector.broadcast %cst_8 : f32 to vector<16x1x128xf32>
    %c1_9 = arith.constant 1 : index
    %c17_10 = arith.constant 17 : index
    %c0_11 = arith.constant 0 : index
    %7 = vector.load %arg9[%c1_9, %c17_10, %c0_11] : memref<18x18x128xf32, #tpu.memory_space<vmem>>, vector<16x1x128xf32>
    tpu.vector_store %arg9[%c1_9, %c17_10, %c0_11], %6 {strides = array<i32>} : memref<18x18x128xf32, #tpu.memory_space<vmem>>, vector<16x1x128xf32>,
    %c0_12 = arith.constant 0 : index
    %c0_13 = arith.constant 0 : index
    %c0_14 = arith.constant 0 : index
    %8 = vector.load %arg1[%c0_12, %c0_13, %c0_14] : memref<1x256x128xbf16, #tpu.memory_space<vmem>>, vector<1x256x128xbf16>
    %9 = vector.shape_cast %8 : vector<1x256x128xbf16> to vector<256x128xbf16>
    %c0_15 = arith.constant 0 : index
    %c0_16 = arith.constant 0 : index
    %10 = vector.load %arg2[%c0_15, %c0_16] : memref<128x128xbf16, #tpu.memory_space<vmem>>, vector<128x128xbf16>
    %cst_17 = arith.constant dense<0.000000e+00> : vector<256x128xf32>
    %11 = tpu.matmul %9, %10, %cst_17 {dimension_numbers = #tpu.dot_dimension_numbers<[1], [0], [0], [1], [0, 0, 1, 1], [], []>} : vector<256x128xbf16>, vector<128x128xbf16>, vector<256x128xf32> -> vector<256x128xf32>
    %c0_18 = arith.constant 0 : index
    %c0_19 = arith.constant 0 : index
    %12 = vector.load %arg3[%c0_18, %c0_19] : memref<1x128xf32, #tpu.memory_space<vmem>>, vector<1x128xf32>
    %13 = vector.broadcast %12 : vector<1x128xf32> to vector<256x128xf32>
    %14 = arith.addf %11, %13 : vector<256x128xf32>
    %cst_20 = arith.constant 0.000000e+00 : f32
    %15 = vector.broadcast %cst_20 : f32 to vector<256x128xf32>
    %16 = arith.maximumf %14, %15 : vector<256x128xf32>
    %17 = arith.truncf %16 : vector<256x128xf32> to vector<256x128xbf16>
    %c0_21 = arith.constant 0 : index
    %c0_22 = arith.constant 0 : index
    %18 = vector.load %arg10[%c0_21, %c0_22] : memref<256x128xbf16, #tpu.memory_space<vmem>>, vector<256x128xbf16>
    tpu.vector_store %arg10[%c0_21, %c0_22], %17 {strides = array<i32>} : memref<256x128xbf16, #tpu.memory_space<vmem>>, vector<256x128xbf16>,
    %19 = vector.shape_cast %16 : vector<256x128xf32> to vector<16x16x128xf32>
    %c1_23 = arith.constant 1 : index
    %c1_24 = arith.constant 1 : index
    %c0_25 = arith.constant 0 : index
    %20 = vector.load %arg9[%c1_23, %c1_24, %c0_25] : memref<18x18x128xf32, #tpu.memory_space<vmem>>, vector<16x16x128xf32>
    tpu.vector_store %arg9[%c1_23, %c1_24, %c0_25], %19 {strides = array<i32>} : memref<18x18x128xf32, #tpu.memory_space<vmem>>, vector<16x16x128xf32>,
    %c0_26 = arith.constant 0 : index
    %c0_27 = arith.constant 0 : index
    %c0_28 = arith.constant 0 : index
    %21 = vector.load %arg9[%c0_26, %c0_27, %c0_28] : memref<18x18x128xf32, #tpu.memory_space<vmem>>, vector<16x16x128xf32>
    %22 = vector.shape_cast %21 : vector<16x16x128xf32> to vector<256x128xf32>
    %23 = arith.truncf %22 : vector<256x128xf32> to vector<256x128xbf16>
    %c0_29 = arith.constant 0 : index
    %c1_30 = arith.constant 1 : index
    %c0_31 = arith.constant 0 : index
    %24 = vector.load %arg9[%c0_29, %c1_30, %c0_31] : memref<18x18x128xf32, #tpu.memory_space<vmem>>, vector<16x16x128xf32>
    %25 = vector.shape_cast %24 : vector<16x16x128xf32> to vector<256x128xf32>
    %26 = arith.truncf %25 : vector<256x128xf32> to vector<256x128xbf16>
    %27 = tpu.concatenate %23, %26 in 1 : vector<256x128xbf16>, vector<256x128xbf16> -> vector<256x256xbf16>
    %c0_32 = arith.constant 0 : index
    %c0_33 = arith.constant 0 : index
    %28 = vector.load %arg4[%c0_32, %c0_33] : memref<1152x128xbf16, #tpu.memory_space<vmem>>, vector<256x128xbf16>
    %cst_34 = arith.constant dense<0.000000e+00> : vector<256x128xf32>
    %29 = tpu.matmul %27, %28, %cst_34 {dimension_numbers = #tpu.dot_dimension_numbers<[1], [0], [0], [1], [0, 0, 1, 1], [], []>} : vector<256x256xbf16>, vector<256x128xbf16>, vector<256x128xf32> -> vector<256x128xf32>
    %c0_35 = arith.constant 0 : index
    %c2 = arith.constant 2 : index
    %c0_36 = arith.constant 0 : index
    %30 = vector.load %arg9[%c0_35, %c2, %c0_36] : memref<18x18x128xf32, #tpu.memory_space<vmem>>, vector<16x16x128xf32>
    %31 = vector.shape_cast %30 : vector<16x16x128xf32> to vector<256x128xf32>
    %32 = arith.truncf %31 : vector<256x128xf32> to vector<256x128xbf16>
    %c1_37 = arith.constant 1 : index
    %c0_38 = arith.constant 0 : index
    %c0_39 = arith.constant 0 : index
    %33 = vector.load %arg9[%c1_37, %c0_38, %c0_39] : memref<18x18x128xf32, #tpu.memory_space<vmem>>, vector<16x16x128xf32>
    %34 = vector.shape_cast %33 : vector<16x16x128xf32> to vector<256x128xf32>
    %35 = arith.truncf %34 : vector<256x128xf32> to vector<256x128xbf16>
    %36 = tpu.concatenate %32, %35 in 1 : vector<256x128xbf16>, vector<256x128xbf16> -> vector<256x256xbf16>
    %c256 = arith.constant 256 : index
    %c0_40 = arith.constant 0 : index
    %37 = vector.load %arg4[%c256, %c0_40] : memref<1152x128xbf16, #tpu.memory_space<vmem>>, vector<256x128xbf16>
    %cst_41 = arith.constant dense<0.000000e+00> : vector<256x128xf32>
    %38 = tpu.matmul %36, %37, %cst_41 {dimension_numbers = #tpu.dot_dimension_numbers<[1], [0], [0], [1], [0, 0, 1, 1], [], []>} : vector<256x256xbf16>, vector<256x128xbf16>, vector<256x128xf32> -> vector<256x128xf32>
    %39 = arith.addf %29, %38 : vector<256x128xf32>
    %c1_42 = arith.constant 1 : index
    %c1_43 = arith.constant 1 : index
    %c0_44 = arith.constant 0 : index
    %40 = vector.load %arg9[%c1_42, %c1_43, %c0_44] : memref<18x18x128xf32, #tpu.memory_space<vmem>>, vector<16x16x128xf32>
    %41 = vector.shape_cast %40 : vector<16x16x128xf32> to vector<256x128xf32>
    %42 = arith.truncf %41 : vector<256x128xf32> to vector<256x128xbf16>
    %c1_45 = arith.constant 1 : index
    %c2_46 = arith.constant 2 : index
    %c0_47 = arith.constant 0 : index
    %43 = vector.load %arg9[%c1_45, %c2_46, %c0_47] : memref<18x18x128xf32, #tpu.memory_space<vmem>>, vector<16x16x128xf32>
    %44 = vector.shape_cast %43 : vector<16x16x128xf32> to vector<256x128xf32>
    %45 = arith.truncf %44 : vector<256x128xf32> to vector<256x128xbf16>
    %46 = tpu.concatenate %42, %45 in 1 : vector<256x128xbf16>, vector<256x128xbf16> -> vector<256x256xbf16>
    %c512 = arith.constant 512 : index
    %c0_48 = arith.constant 0 : index
    %47 = vector.load %arg4[%c512, %c0_48] : memref<1152x128xbf16, #tpu.memory_space<vmem>>, vector<256x128xbf16>
    %cst_49 = arith.constant dense<0.000000e+00> : vector<256x128xf32>
    %48 = tpu.matmul %46, %47, %cst_49 {dimension_numbers = #tpu.dot_dimension_numbers<[1], [0], [0], [1], [0, 0, 1, 1], [], []>} : vector<256x256xbf16>, vector<256x128xbf16>, vector<256x128xf32> -> vector<256x128xf32>
    %49 = arith.addf %39, %48 : vector<256x128xf32>
    %c2_50 = arith.constant 2 : index
    %c0_51 = arith.constant 0 : index
    %c0_52 = arith.constant 0 : index
    %50 = vector.load %arg9[%c2_50, %c0_51, %c0_52] : memref<18x18x128xf32, #tpu.memory_space<vmem>>, vector<16x16x128xf32>
    %51 = vector.shape_cast %50 : vector<16x16x128xf32> to vector<256x128xf32>
    %52 = arith.truncf %51 : vector<256x128xf32> to vector<256x128xbf16>
    %c2_53 = arith.constant 2 : index
    %c1_54 = arith.constant 1 : index
    %c0_55 = arith.constant 0 : index
    %53 = vector.load %arg9[%c2_53, %c1_54, %c0_55] : memref<18x18x128xf32, #tpu.memory_space<vmem>>, vector<16x16x128xf32>
    %54 = vector.shape_cast %53 : vector<16x16x128xf32> to vector<256x128xf32>
    %55 = arith.truncf %54 : vector<256x128xf32> to vector<256x128xbf16>
    %56 = tpu.concatenate %52, %55 in 1 : vector<256x128xbf16>, vector<256x128xbf16> -> vector<256x256xbf16>
    %c768 = arith.constant 768 : index
    %c0_56 = arith.constant 0 : index
    %57 = vector.load %arg4[%c768, %c0_56] : memref<1152x128xbf16, #tpu.memory_space<vmem>>, vector<256x128xbf16>
    %cst_57 = arith.constant dense<0.000000e+00> : vector<256x128xf32>
    %58 = tpu.matmul %56, %57, %cst_57 {dimension_numbers = #tpu.dot_dimension_numbers<[1], [0], [0], [1], [0, 0, 1, 1], [], []>} : vector<256x256xbf16>, vector<256x128xbf16>, vector<256x128xf32> -> vector<256x128xf32>
    %59 = arith.addf %49, %58 : vector<256x128xf32>
    %c2_58 = arith.constant 2 : index
    %c2_59 = arith.constant 2 : index
    %c0_60 = arith.constant 0 : index
    %60 = vector.load %arg9[%c2_58, %c2_59, %c0_60] : memref<18x18x128xf32, #tpu.memory_space<vmem>>, vector<16x16x128xf32>
    %61 = vector.shape_cast %60 : vector<16x16x128xf32> to vector<256x128xf32>
    %62 = arith.truncf %61 : vector<256x128xf32> to vector<256x128xbf16>
    %c1024 = arith.constant 1024 : index
    %c0_61 = arith.constant 0 : index
    %63 = vector.load %arg4[%c1024, %c0_61] : memref<1152x128xbf16, #tpu.memory_space<vmem>>, vector<128x128xbf16>
    %cst_62 = arith.constant dense<0.000000e+00> : vector<256x128xf32>
    %64 = tpu.matmul %62, %63, %cst_62 {dimension_numbers = #tpu.dot_dimension_numbers<[1], [0], [0], [1], [0, 0, 1, 1], [], []>} : vector<256x128xbf16>, vector<128x128xbf16>, vector<256x128xf32> -> vector<256x128xf32>
    %65 = arith.addf %59, %64 : vector<256x128xf32>
    %c0_63 = arith.constant 0 : index
    %c0_64 = arith.constant 0 : index
    %66 = vector.load %arg5[%c0_63, %c0_64] : memref<1x128xf32, #tpu.memory_space<vmem>>, vector<1x128xf32>
    %67 = vector.broadcast %66 : vector<1x128xf32> to vector<256x128xf32>
    %68 = arith.addf %65, %67 : vector<256x128xf32>
    %cst_65 = arith.constant 0.000000e+00 : f32
    %69 = vector.broadcast %cst_65 : f32 to vector<256x128xf32>
    %70 = arith.maximumf %68, %69 : vector<256x128xf32>
    %71 = vector.shape_cast %70 : vector<256x128xf32> to vector<16x16x128xf32>
    %c1_66 = arith.constant 1 : index
    %c1_67 = arith.constant 1 : index
    %c0_68 = arith.constant 0 : index
    %72 = vector.load %arg9[%c1_66, %c1_67, %c0_68] : memref<18x18x128xf32, #tpu.memory_space<vmem>>, vector<16x16x128xf32>
    tpu.vector_store %arg9[%c1_66, %c1_67, %c0_68], %71 {strides = array<i32>} : memref<18x18x128xf32, #tpu.memory_space<vmem>>, vector<16x16x128xf32>,
    %c0_69 = arith.constant 0 : index
    %c0_70 = arith.constant 0 : index
    %c0_71 = arith.constant 0 : index
    %73 = vector.load %arg9[%c0_69, %c0_70, %c0_71] : memref<18x18x128xf32, #tpu.memory_space<vmem>>, vector<16x16x128xf32>
    %74 = vector.shape_cast %73 : vector<16x16x128xf32> to vector<256x128xf32>
    %75 = arith.truncf %74 : vector<256x128xf32> to vector<256x128xbf16>
    %c0_72 = arith.constant 0 : index
    %c1_73 = arith.constant 1 : index
    %c0_74 = arith.constant 0 : index
    %76 = vector.load %arg9[%c0_72, %c1_73, %c0_74] : memref<18x18x128xf32, #tpu.memory_space<vmem>>, vector<16x16x128xf32>
    %77 = vector.shape_cast %76 : vector<16x16x128xf32> to vector<256x128xf32>
    %78 = arith.truncf %77 : vector<256x128xf32> to vector<256x128xbf16>
    %79 = tpu.concatenate %75, %78 in 1 : vector<256x128xbf16>, vector<256x128xbf16> -> vector<256x256xbf16>
    %c0_75 = arith.constant 0 : index
    %c0_76 = arith.constant 0 : index
    %80 = vector.load %arg6[%c0_75, %c0_76] : memref<1152x128xbf16, #tpu.memory_space<vmem>>, vector<256x128xbf16>
    %cst_77 = arith.constant dense<0.000000e+00> : vector<256x128xf32>
    %81 = tpu.matmul %79, %80, %cst_77 {dimension_numbers = #tpu.dot_dimension_numbers<[1], [0], [0], [1], [0, 0, 1, 1], [], []>} : vector<256x256xbf16>, vector<256x128xbf16>, vector<256x128xf32> -> vector<256x128xf32>
    %c0_78 = arith.constant 0 : index
    %c2_79 = arith.constant 2 : index
    %c0_80 = arith.constant 0 : index
    %82 = vector.load %arg9[%c0_78, %c2_79, %c0_80] : memref<18x18x128xf32, #tpu.memory_space<vmem>>, vector<16x16x128xf32>
    %83 = vector.shape_cast %82 : vector<16x16x128xf32> to vector<256x128xf32>
    %84 = arith.truncf %83 : vector<256x128xf32> to vector<256x128xbf16>
    %c1_81 = arith.constant 1 : index
    %c0_82 = arith.constant 0 : index
    %c0_83 = arith.constant 0 : index
    %85 = vector.load %arg9[%c1_81, %c0_82, %c0_83] : memref<18x18x128xf32, #tpu.memory_space<vmem>>, vector<16x16x128xf32>
    %86 = vector.shape_cast %85 : vector<16x16x128xf32> to vector<256x128xf32>
    %87 = arith.truncf %86 : vector<256x128xf32> to vector<256x128xbf16>
    %88 = tpu.concatenate %84, %87 in 1 : vector<256x128xbf16>, vector<256x128xbf16> -> vector<256x256xbf16>
    %c256_84 = arith.constant 256 : index
    %c0_85 = arith.constant 0 : index
    %89 = vector.load %arg6[%c256_84, %c0_85] : memref<1152x128xbf16, #tpu.memory_space<vmem>>, vector<256x128xbf16>
    %cst_86 = arith.constant dense<0.000000e+00> : vector<256x128xf32>
    %90 = tpu.matmul %88, %89, %cst_86 {dimension_numbers = #tpu.dot_dimension_numbers<[1], [0], [0], [1], [0, 0, 1, 1], [], []>} : vector<256x256xbf16>, vector<256x128xbf16>, vector<256x128xf32> -> vector<256x128xf32>
    %91 = arith.addf %81, %90 : vector<256x128xf32>
    %c1_87 = arith.constant 1 : index
    %c1_88 = arith.constant 1 : index
    %c0_89 = arith.constant 0 : index
    %92 = vector.load %arg9[%c1_87, %c1_88, %c0_89] : memref<18x18x128xf32, #tpu.memory_space<vmem>>, vector<16x16x128xf32>
    %93 = vector.shape_cast %92 : vector<16x16x128xf32> to vector<256x128xf32>
    %94 = arith.truncf %93 : vector<256x128xf32> to vector<256x128xbf16>
    %c1_90 = arith.constant 1 : index
    %c2_91 = arith.constant 2 : index
    %c0_92 = arith.constant 0 : index
    %95 = vector.load %arg9[%c1_90, %c2_91, %c0_92] : memref<18x18x128xf32, #tpu.memory_space<vmem>>, vector<16x16x128xf32>
    %96 = vector.shape_cast %95 : vector<16x16x128xf32> to vector<256x128xf32>
    %97 = arith.truncf %96 : vector<256x128xf32> to vector<256x128xbf16>
    %98 = tpu.concatenate %94, %97 in 1 : vector<256x128xbf16>, vector<256x128xbf16> -> vector<256x256xbf16>
    %c512_93 = arith.constant 512 : index
    %c0_94 = arith.constant 0 : index
    %99 = vector.load %arg6[%c512_93, %c0_94] : memref<1152x128xbf16, #tpu.memory_space<vmem>>, vector<256x128xbf16>
    %cst_95 = arith.constant dense<0.000000e+00> : vector<256x128xf32>
    %100 = tpu.matmul %98, %99, %cst_95 {dimension_numbers = #tpu.dot_dimension_numbers<[1], [0], [0], [1], [0, 0, 1, 1], [], []>} : vector<256x256xbf16>, vector<256x128xbf16>, vector<256x128xf32> -> vector<256x128xf32>
    %101 = arith.addf %91, %100 : vector<256x128xf32>
    %c2_96 = arith.constant 2 : index
    %c0_97 = arith.constant 0 : index
    %c0_98 = arith.constant 0 : index
    %102 = vector.load %arg9[%c2_96, %c0_97, %c0_98] : memref<18x18x128xf32, #tpu.memory_space<vmem>>, vector<16x16x128xf32>
    %103 = vector.shape_cast %102 : vector<16x16x128xf32> to vector<256x128xf32>
    %104 = arith.truncf %103 : vector<256x128xf32> to vector<256x128xbf16>
    %c2_99 = arith.constant 2 : index
    %c1_100 = arith.constant 1 : index
    %c0_101 = arith.constant 0 : index
    %105 = vector.load %arg9[%c2_99, %c1_100, %c0_101] : memref<18x18x128xf32, #tpu.memory_space<vmem>>, vector<16x16x128xf32>
    %106 = vector.shape_cast %105 : vector<16x16x128xf32> to vector<256x128xf32>
    %107 = arith.truncf %106 : vector<256x128xf32> to vector<256x128xbf16>
    %108 = tpu.concatenate %104, %107 in 1 : vector<256x128xbf16>, vector<256x128xbf16> -> vector<256x256xbf16>
    %c768_102 = arith.constant 768 : index
    %c0_103 = arith.constant 0 : index
    %109 = vector.load %arg6[%c768_102, %c0_103] : memref<1152x128xbf16, #tpu.memory_space<vmem>>, vector<256x128xbf16>
    %cst_104 = arith.constant dense<0.000000e+00> : vector<256x128xf32>
    %110 = tpu.matmul %108, %109, %cst_104 {dimension_numbers = #tpu.dot_dimension_numbers<[1], [0], [0], [1], [0, 0, 1, 1], [], []>} : vector<256x256xbf16>, vector<256x128xbf16>, vector<256x128xf32> -> vector<256x128xf32>
    %111 = arith.addf %101, %110 : vector<256x128xf32>
    %c2_105 = arith.constant 2 : index
    %c2_106 = arith.constant 2 : index
    %c0_107 = arith.constant 0 : index
    %112 = vector.load %arg9[%c2_105, %c2_106, %c0_107] : memref<18x18x128xf32, #tpu.memory_space<vmem>>, vector<16x16x128xf32>
    %113 = vector.shape_cast %112 : vector<16x16x128xf32> to vector<256x128xf32>
    %114 = arith.truncf %113 : vector<256x128xf32> to vector<256x128xbf16>
    %c1024_108 = arith.constant 1024 : index
    %c0_109 = arith.constant 0 : index
    %115 = vector.load %arg6[%c1024_108, %c0_109] : memref<1152x128xbf16, #tpu.memory_space<vmem>>, vector<128x128xbf16>
    %cst_110 = arith.constant dense<0.000000e+00> : vector<256x128xf32>
    %116 = tpu.matmul %114, %115, %cst_110 {dimension_numbers = #tpu.dot_dimension_numbers<[1], [0], [0], [1], [0, 0, 1, 1], [], []>} : vector<256x128xbf16>, vector<128x128xbf16>, vector<256x128xf32> -> vector<256x128xf32>
    %117 = arith.addf %111, %116 : vector<256x128xf32>
    %c0_111 = arith.constant 0 : index
    %c0_112 = arith.constant 0 : index
    %118 = vector.load %arg7[%c0_111, %c0_112] : memref<1x128xf32, #tpu.memory_space<vmem>>, vector<1x128xf32>
    %119 = vector.broadcast %118 : vector<1x128xf32> to vector<256x128xf32>
    %120 = arith.addf %117, %119 : vector<256x128xf32>
    %c0_113 = arith.constant 0 : index
    %c0_114 = arith.constant 0 : index
    %121 = vector.load %arg10[%c0_113, %c0_114] : memref<256x128xbf16, #tpu.memory_space<vmem>>, vector<256x128xbf16>
    %122 = arith.extf %121 : vector<256x128xbf16> to vector<256x128xf32>
    %123 = arith.addf %120, %122 : vector<256x128xf32>
    %cst_115 = arith.constant 0.000000e+00 : f32
    %124 = vector.broadcast %cst_115 : f32 to vector<256x128xf32>
    %125 = arith.maximumf %123, %124 : vector<256x128xf32>
    %cst_116 = arith.constant 3.906250e-03 : f32
    %126 = vector.broadcast %cst_116 : f32 to vector<1x256xf32>
    %cst_117 = arith.constant dense<0.000000e+00> : vector<1x128xf32>
    %127 = tpu.matmul %126, %125, %cst_117 {dimension_numbers = #tpu.dot_dimension_numbers<[1], [0], [0], [1], [0, 0, 1, 1], [], []>} : vector<1x256xf32>, vector<256x128xf32>, vector<1x128xf32> -> vector<1x128xf32>
    %128 = vector.shape_cast %127 : vector<1x128xf32> to vector<1x1x128xf32>
    %c0_118 = arith.constant 0 : index
    %c0_119 = arith.constant 0 : index
    %c0_120 = arith.constant 0 : index
    %129 = vector.load %arg8[%c0_118, %c0_119, %c0_120] : memref<1x1x128xf32, #tpu.memory_space<vmem>>, vector<1x1x128xf32>
    tpu.vector_store %arg8[%c0_118, %c0_119, %c0_120], %128 {strides = array<i32>} : memref<1x1x128xf32, #tpu.memory_space<vmem>>, vector<1x1x128xf32>,
    return
  }
  func.func @transform_0(%arg0: i32) -> (i32, i32, i32) {
    %c0_i32 = arith.constant 0 : i32
    %c0_i32_0 = arith.constant 0 : i32
    %c0_i32_1 = arith.constant 0 : i32
    return %arg0, %c0_i32, %c0_i32_0 : i32, i32, i32
  }
  func.func @transform_1(%arg0: i32) -> (i32, i32) {
    %c0_i32 = arith.constant 0 : i32
    %c0_i32_0 = arith.constant 0 : i32
    %c0_i32_1 = arith.constant 0 : i32
    return %c0_i32, %c0_i32_0 : i32, i32
  }
  func.func @transform_2(%arg0: i32) -> (i32, i32) {
    %c0_i32 = arith.constant 0 : i32
    %c0_i32_0 = arith.constant 0 : i32
    %c0_i32_1 = arith.constant 0 : i32
    return %c0_i32, %c0_i32_0 : i32, i32
  }
  func.func @transform_3(%arg0: i32) -> (i32, i32) {
    %c0_i32 = arith.constant 0 : i32
    %c0_i32_0 = arith.constant 0 : i32
    %c0_i32_1 = arith.constant 0 : i32
    return %c0_i32, %c0_i32_0 : i32, i32
  }
  func.func @transform_4(%arg0: i32) -> (i32, i32) {
    %c0_i32 = arith.constant 0 : i32
    %c0_i32_0 = arith.constant 0 : i32
    %c0_i32_1 = arith.constant 0 : i32
    return %c0_i32, %c0_i32_0 : i32, i32
  }
  func.func @transform_5(%arg0: i32) -> (i32, i32) {
    %c0_i32 = arith.constant 0 : i32
    %c0_i32_0 = arith.constant 0 : i32
    %c0_i32_1 = arith.constant 0 : i32
    return %c0_i32, %c0_i32_0 : i32, i32
  }
  func.func @transform_6(%arg0: i32) -> (i32, i32) {
    %c0_i32 = arith.constant 0 : i32
    %c0_i32_0 = arith.constant 0 : i32
    %c0_i32_1 = arith.constant 0 : i32
    return %c0_i32, %c0_i32_0 : i32, i32
  }
  func.func @transform_7(%arg0: i32) -> (i32, i32, i32) {
    %c0_i32 = arith.constant 0 : i32
    %c0_i32_0 = arith.constant 0 : i32
    %c0_i32_1 = arith.constant 0 : i32
    return %arg0, %c0_i32, %c0_i32_0 : i32, i32, i32
  }
}

module attributes {stable_mosaic.version = 11 : i64} {
  func.func @_head_kernel(%arg0: i32, %arg1: memref<2x128xf32, #tpu.memory_space<vmem>>, %arg2: memref<128x2048xbf16, #tpu.memory_space<vmem>>, %arg3: memref<1x2048xf32, #tpu.memory_space<vmem>>, %arg4: memref<2048x128xbf16, #tpu.memory_space<vmem>>, %arg5: memref<1x128xf32, #tpu.memory_space<vmem>>, %arg6: memref<2x128xf32, #tpu.memory_space<vmem>>) attributes {dimension_semantics = [#tpu.dimension_semantics<arbitrary>], iteration_bounds = array<i64: 1>, scalar_prefetch = 0 : i64, scratch_operands = 0 : i64, tpu.core_type = #tpu.core_type<tc>, window_params = [{pipeline_mode = #tpu.pipeline_mode<synchronous>, transform_indices = @transform_0, window_bounds = array<i64: 2, 128>}, {pipeline_mode = #tpu.pipeline_mode<synchronous>, transform_indices = @transform_1, window_bounds = array<i64: 128, 2048>}, {pipeline_mode = #tpu.pipeline_mode<synchronous>, transform_indices = @transform_2, window_bounds = array<i64: 1, 2048>}, {pipeline_mode = #tpu.pipeline_mode<synchronous>, transform_indices = @transform_3, window_bounds = array<i64: 2048, 128>}, {pipeline_mode = #tpu.pipeline_mode<synchronous>, transform_indices = @transform_4, window_bounds = array<i64: 1, 128>}, {pipeline_mode = #tpu.pipeline_mode<synchronous>, transform_indices = @transform_5, window_bounds = array<i64: 2, 128>}]} {
    %c0 = arith.constant 0 : index
    %c0_0 = arith.constant 0 : index
    %0 = vector.load %arg1[%c0, %c0_0] : memref<2x128xf32, #tpu.memory_space<vmem>>, vector<2x128xf32>
    %1 = arith.truncf %0 : vector<2x128xf32> to vector<2x128xbf16>
    %c0_1 = arith.constant 0 : index
    %c0_2 = arith.constant 0 : index
    %2 = vector.load %arg2[%c0_1, %c0_2] : memref<128x2048xbf16, #tpu.memory_space<vmem>>, vector<128x2048xbf16>
    %cst = arith.constant dense<0.000000e+00> : vector<2x2048xf32>
    %3 = tpu.matmul %1, %2, %cst {dimension_numbers = #tpu.dot_dimension_numbers<[1], [0], [0], [1], [0, 0, 1, 1], [], []>} : vector<2x128xbf16>, vector<128x2048xbf16>, vector<2x2048xf32> -> vector<2x2048xf32>
    %c0_3 = arith.constant 0 : index
    %c0_4 = arith.constant 0 : index
    %4 = vector.load %arg3[%c0_3, %c0_4] : memref<1x2048xf32, #tpu.memory_space<vmem>>, vector<1x2048xf32>
    %5 = vector.broadcast %4 : vector<1x2048xf32> to vector<2x2048xf32>
    %6 = arith.addf %3, %5 : vector<2x2048xf32>
    %cst_5 = arith.constant 0.000000e+00 : f32
    %7 = vector.broadcast %cst_5 : f32 to vector<2x2048xf32>
    %8 = arith.maximumf %6, %7 : vector<2x2048xf32>
    %9 = arith.truncf %8 : vector<2x2048xf32> to vector<2x2048xbf16>
    %c0_6 = arith.constant 0 : index
    %c0_7 = arith.constant 0 : index
    %10 = vector.load %arg4[%c0_6, %c0_7] : memref<2048x128xbf16, #tpu.memory_space<vmem>>, vector<2048x128xbf16>
    %cst_8 = arith.constant dense<0.000000e+00> : vector<2x128xf32>
    %11 = tpu.matmul %9, %10, %cst_8 {dimension_numbers = #tpu.dot_dimension_numbers<[1], [0], [0], [1], [0, 0, 1, 1], [], []>} : vector<2x2048xbf16>, vector<2048x128xbf16>, vector<2x128xf32> -> vector<2x128xf32>
    %c0_9 = arith.constant 0 : index
    %c0_10 = arith.constant 0 : index
    %12 = vector.load %arg5[%c0_9, %c0_10] : memref<1x128xf32, #tpu.memory_space<vmem>>, vector<1x128xf32>
    %13 = vector.broadcast %12 : vector<1x128xf32> to vector<2x128xf32>
    %14 = arith.addf %11, %13 : vector<2x128xf32>
    %cst_11 = arith.constant dense<0xFF800000> : vector<2xf32>
    %15 = vector.multi_reduction <maximumf>, %14, %cst_11 [1] : vector<2x128xf32> to vector<2xf32>
    %16 = vector.shape_cast %15 : vector<2xf32> to vector<2x1xf32>
    %17 = vector.broadcast %16 : vector<2x1xf32> to vector<2x128xf32>
    %18 = arith.subf %14, %17 : vector<2x128xf32>
    %19 = math.exp %18 : vector<2x128xf32>
    %cst_12 = arith.constant dense<0.000000e+00> : vector<2xf32>
    %20 = vector.multi_reduction <add>, %19, %cst_12 [1] : vector<2x128xf32> to vector<2xf32>
    %21 = vector.shape_cast %20 : vector<2xf32> to vector<2x1xf32>
    %22 = vector.broadcast %21 : vector<2x1xf32> to vector<2x128xf32>
    %23 = arith.divf %19, %22 : vector<2x128xf32>
    %c0_13 = arith.constant 0 : index
    %c0_14 = arith.constant 0 : index
    %24 = vector.load %arg6[%c0_13, %c0_14] : memref<2x128xf32, #tpu.memory_space<vmem>>, vector<2x128xf32>
    tpu.vector_store %arg6[%c0_13, %c0_14], %23 {strides = array<i32>} : memref<2x128xf32, #tpu.memory_space<vmem>>, vector<2x128xf32>,
    return
  }
  func.func @transform_0(%arg0: i32) -> (i32, i32) {
    %c0_i32 = arith.constant 0 : i32
    %c0_i32_0 = arith.constant 0 : i32
    %c0_i32_1 = arith.constant 0 : i32
    return %c0_i32, %c0_i32_0 : i32, i32
  }
  func.func @transform_1(%arg0: i32) -> (i32, i32) {
    %c0_i32 = arith.constant 0 : i32
    %c0_i32_0 = arith.constant 0 : i32
    %c0_i32_1 = arith.constant 0 : i32
    return %c0_i32, %c0_i32_0 : i32, i32
  }
  func.func @transform_2(%arg0: i32) -> (i32, i32) {
    %c0_i32 = arith.constant 0 : i32
    %c0_i32_0 = arith.constant 0 : i32
    %c0_i32_1 = arith.constant 0 : i32
    return %c0_i32, %c0_i32_0 : i32, i32
  }
  func.func @transform_3(%arg0: i32) -> (i32, i32) {
    %c0_i32 = arith.constant 0 : i32
    %c0_i32_0 = arith.constant 0 : i32
    %c0_i32_1 = arith.constant 0 : i32
    return %c0_i32, %c0_i32_0 : i32, i32
  }
  func.func @transform_4(%arg0: i32) -> (i32, i32) {
    %c0_i32 = arith.constant 0 : i32
    %c0_i32_0 = arith.constant 0 : i32
    %c0_i32_1 = arith.constant 0 : i32
    return %c0_i32, %c0_i32_0 : i32, i32
  }
  func.func @transform_5(%arg0: i32) -> (i32, i32) {
    %c0_i32 = arith.constant 0 : i32
    %c0_i32_0 = arith.constant 0 : i32
    %c0_i32_1 = arith.constant 0 : i32
    return %c0_i32, %c0_i32_0 : i32, i32
  }
}

</mosaic_0001>

<llo_original>
// kernel: my_model_forward.3
$region0: #{my_model_forward.3}
  #allocation0 [shape = 'u32[]', space=smem, size = 0x4, offset = 0x4, fixed_abs, tag = 'smem constant byte address 0x4 - core index']
  #allocation1 [shape = 'u32[144,128]{1,0:T(1,128)}', space=vmem, size = 0x12000, scoped, tag = 'internal scratch']
  %s0 = inlined_call_operand.vmem [shape: f32[2,128], index: 0, kind: input, shape index: {}]
  %s1 = inlined_call_operand.vmem [shape: bf16[128,2048], index: 1, kind: input, shape index: {}]
  %s2 = inlined_call_operand.vmem [shape: f32[1,2048], index: 2, kind: input, shape index: {}]
  %s3 = inlined_call_operand.vmem [shape: bf16[2048,128], index: 3, kind: input, shape index: {}]
  %s4 = inlined_call_operand.vmem [shape: f32[1,128], index: 4, kind: input, shape index: {}]
  %s5 = inlined_call_operand.hbm [shape: f32[2,128], index: 5, kind: output, shape index: {}]
  %s6 = sld [smem:[#allocation0]]
  $region30: #{my_model_forward.3} parent=0
    _
  %s8 = ssub.s32 1, %s6
  %s9 = scalar_select 0, %s8, %s6
  $region1: #{my_model_forward.3} parent=0
    #allocation2 [shape = 'u8[1024]{0}', space=vmem, size = 0x400, scoped, tag = 'output window, operand 0, single buffered']
    #allocation3 [shape = 's32[1]{0}', space=sflag, size = 0x4, scoped, tag = 'scoped memory for my_model_forward.3']
    %10 = vsyncpa [#allocation3], 0
    // Predicated region
    $region2: #{my_model_forward.3} parent=1 // pred_check
      _
    $region3: #{my_model_forward.3} parent=1 // pred_check_branch
      %12 = sbr.rel (0) target = $region5
    $region4: #{my_model_forward.3} parent=1 // pred_region
      _
    $region5: #{my_model_forward.3} parent=1 // pred_fallthru
      _
    // Predicated region
    $region6: #{my_model_forward.3} parent=1 // pred_check
      _
    $region7: #{my_model_forward.3} parent=1 // pred_check_branch
      %14 = sbr.rel (0) target = $region9
    $region8: #{my_model_forward.3} parent=1 // pred_region
      _
    $region9: #{my_model_forward.3} parent=1 // pred_fallthru
      _
    // Predicated region
    $region10: #{my_model_forward.3} parent=1 // pred_check
      _
    $region11: #{my_model_forward.3} parent=1 // pred_check_branch
      %16 = sbr.rel (0) target = $region13
    $region12: #{my_model_forward.3} parent=1 // pred_region
      _
    $region13: #{my_model_forward.3} parent=1 // pred_fallthru
      _
    // Predicated region
    $region14: #{my_model_forward.3} parent=1 // pred_check
      _
    $region15: #{my_model_forward.3} parent=1 // pred_check_branch
      %18 = sbr.rel (0) target = $region17
    $region16: #{my_model_forward.3} parent=1 // pred_region
      _
    $region17: #{my_model_forward.3} parent=1 // pred_fallthru
      _
    // Predicated region
    $region18: #{my_model_forward.3} parent=1 // pred_check
      _
    $region19: #{my_model_forward.3} parent=1 // pred_check_branch
      %20 = sbr.rel (0) target = $region21
    $region20: #{my_model_forward.3} parent=1 // pred_region
      _
    $region21: #{my_model_forward.3} parent=1 // pred_fallthru
      _
    %v22 = vld [vmem:[%s0] sm:$0x3]
    %v23 = vpack.c.bf16 %v22, %v22
    %v24 = vld [vmem:[%s1] sm:$0xff]
    %v25 = vld [vmem:[%s1 + $0x8] sm:$0xff]
    %v26 = vld [vmem:[%s1 + $0x10] sm:$0xff]
    %v27 = vld [vmem:[%s1 + $0x18] sm:$0xff]
    %v28 = vld [vmem:[%s1 + $0x20] sm:$0xff]
    %v29 = vld [vmem:[%s1 + $0x28] sm:$0xff]
    %v30 = vld [vmem:[%s1 + $0x30] sm:$0xff]
    %v31 = vld [vmem:[%s1 + $0x38] sm:$0xff]
    %v32 = vld [vmem:[%s1 + $0x40] sm:$0xff]
    %v33 = vld [vmem:[%s1 + $0x48] sm:$0xff]
    %v34 = vld [vmem:[%s1 + $0x50] sm:$0xff]
    %v35 = vld [vmem:[%s1 + $0x58] sm:$0xff]
    %v36 = vld [vmem:[%s1 + $0x60] sm:$0xff]
    %v37 = vld [vmem:[%s1 + $0x68] sm:$0xff]
    %v38 = vld [vmem:[%s1 + $0x70] sm:$0xff]
    %v39 = vld [vmem:[%s1 + $0x78] sm:$0xff]
    %v40 = vld [vmem:[%s1 + $0x80] sm:$0xff]
    %v41 = vld [vmem:[%s1 + $0x88] sm:$0xff]
    %v42 = vld [vmem:[%s1 + $0x90] sm:$0xff]
    %v43 = vld [vmem:[%s1 + $0x98] sm:$0xff]
    %v44 = vld [vmem:[%s1 + $0xa0] sm:$0xff]
    %v45 = vld [vmem:[%s1 + $0xa8] sm:$0xff]
    %v46 = vld [vmem:[%s1 + $0xb0] sm:$0xff]
    %v47 = vld [vmem:[%s1 + $0xb8] sm:$0xff]
    %v48 = vld [vmem:[%s1 + $0xc0] sm:$0xff]
    %v49 = vld [vmem:[%s1 + $0xc8] sm:$0xff]
    %v50 = vld [vmem:[%s1 + $0xd0] sm:$0xff]
    %v51 = vld [vmem:[%s1 + $0xd8] sm:$0xff]
    %v52 = vld [vmem:[%s1 + $0xe0] sm:$0xff]
    %v53 = vld [vmem:[%s1 + $0xe8] sm:$0xff]
    %v54 = vld [vmem:[%s1 + $0xf0] sm:$0xff]
    %v55 = vld [vmem:[%s1 + $0xf8] sm:$0xff]
    %v56 = vld [vmem:[%s1 + $0x100] sm:$0xff]
    %v57 = vld [vmem:[%s1 + $0x108] sm:$0xff]
    %v58 = vld [vmem:[%s1 + $0x110] sm:$0xff]
    %v59 = vld [vmem:[%s1 + $0x118] sm:$0xff]
    %v60 = vld [vmem:[%s1 + $0x120] sm:$0xff]
    %v61 = vld [vmem:[%s1 + $0x128] sm:$0xff]
    %v62 = vld [vmem:[%s1 + $0x130] sm:$0xff]
    %v63 = vld [vmem:[%s1 + $0x138] sm:$0xff]
    %v64 = vld [vmem:[%s1 + $0x140] sm:$0xff]
    %v65 = vld [vmem:[%s1 + $0x148] sm:$0xff]
    %v66 = vld [vmem:[%s1 + $0x150] sm:$0xff]
    %v67 = vld [vmem:[%s1 + $0x158] sm:$0xff]
    %v68 = vld [vmem:[%s1 + $0x160] sm:$0xff]
    %v69 = vld [vmem:[%s1 + $0x168] sm:$0xff]
    %v70 = vld [vmem:[%s1 + $0x170] sm:$0xff]
    %v71 = vld [vmem:[%s1 + $0x178] sm:$0xff]
    %v72 = vld [vmem:[%s1 + $0x180] sm:$0xff]
    %v73 = vld [vmem:[%s1 + $0x188] sm:$0xff]
    %v74 = vld [vmem:[%s1 + $0x190] sm:$0xff]
    %v75 = vld [vmem:[%s1 + $0x198] sm:$0xff]
    %v76 = vld [vmem:[%s1 + $0x1a0] sm:$0xff]
    %v77 = vld [vmem:[%s1 + $0x1a8] sm:$0xff]
    %v78 = vld [vmem:[%s1 + $0x1b0] sm:$0xff]
    %v79 = vld [vmem:[%s1 + $0x1b8] sm:$0xff]
    %v80 = vld [vmem:[%s1 + $0x1c0] sm:$0xff]
    %v81 = vld [vmem:[%s1 + $0x1c8] sm:$0xff]
    %v82 = vld [vmem:[%s1 + $0x1d0] sm:$0xff]
    %v83 = vld [vmem:[%s1 + $0x1d8] sm:$0xff]
    %v84 = vld [vmem:[%s1 + $0x1e0] sm:$0xff]
    %v85 = vld [vmem:[%s1 + $0x1e8] sm:$0xff]
    %v86 = vld [vmem:[%s1 + $0x1f0] sm:$0xff]
    %v87 = vld [vmem:[%s1 + $0x1f8] sm:$0xff]
    %v88 = vld [vmem:[%s1 + $0x200] sm:$0xff]
    %v89 = vld [vmem:[%s1 + $0x208] sm:$0xff]
    %v90 = vld [vmem:[%s1 + $0x210] sm:$0xff]
    %v91 = vld [vmem:[%s1 + $0x218] sm:$0xff]
    %v92 = vld [vmem:[%s1 + $0x220] sm:$0xff]
    %v93 = vld [vmem:[%s1 + $0x228] sm:$0xff]
    %v94 = vld [vmem:[%s1 + $0x230] sm:$0xff]
    %v95 = vld [vmem:[%s1 + $0x238] sm:$0xff]
    %v96 = vld [vmem:[%s1 + $0x240] sm:$0xff]
    %v97 = vld [vmem:[%s1 + $0x248] sm:$0xff]
    %v98 = vld [vmem:[%s1 + $0x250] sm:$0xff]
    %v99 = vld [vmem:[%s1 + $0x258] sm:$0xff]
    %v100 = vld [vmem:[%s1 + $0x260] sm:$0xff]
    %v101 = vld [vmem:[%s1 + $0x268] sm:$0xff]
    %v102 = vld [vmem:[%s1 + $0x270] sm:$0xff]
    %v103 = vld [vmem:[%s1 + $0x278] sm:$0xff]
    %v104 = vld [vmem:[%s1 + $0x280] sm:$0xff]
    %v105 = vld [vmem:[%s1 + $0x288] sm:$0xff]
    %v106 = vld [vmem:[%s1 + $0x290] sm:$0xff]
    %v107 = vld [vmem:[%s1 + $0x298] sm:$0xff]
    %v108 = vld [vmem:[%s1 + $0x2a0] sm:$0xff]
    %v109 = vld [vmem:[%s1 + $0x2a8] sm:$0xff]
    %v110 = vld [vmem:[%s1 + $0x2b0] sm:$0xff]
    %v111 = vld [vmem:[%s1 + $0x2b8] sm:$0xff]
    %v112 = vld [vmem:[%s1 + $0x2c0] sm:$0xff]
    %v113 = vld [vmem:[%s1 + $0x2c8] sm:$0xff]
    %v114 = vld [vmem:[%s1 + $0x2d0] sm:$0xff]
    %v115 = vld [vmem:[%s1 + $0x2d8] sm:$0xff]
    %v116 = vld [vmem:[%s1 + $0x2e0] sm:$0xff]
    %v117 = vld [vmem:[%s1 + $0x2e8] sm:$0xff]
    %v118 = vld [vmem:[%s1 + $0x2f0] sm:$0xff]
    %v119 = vld [vmem:[%s1 + $0x2f8] sm:$0xff]
    %v120 = vld [vmem:[%s1 + $0x300] sm:$0xff]
    %v121 = vld [vmem:[%s1 + $0x308] sm:$0xff]
    %v122 = vld [vmem:[%s1 + $0x310] sm:$0xff]
    %v123 = vld [vmem:[%s1 + $0x318] sm:$0xff]
    %v124 = vld [vmem:[%s1 + $0x320] sm:$0xff]
    %v125 = vld [vmem:[%s1 + $0x328] sm:$0xff]
    %v126 = vld [vmem:[%s1 + $0x330] sm:$0xff]
    %v127 = vld [vmem:[%s1 + $0x338] sm:$0xff]
    %v128 = vld [vmem:[%s1 + $0x340] sm:$0xff]
    %v129 = vld [vmem:[%s1 + $0x348] sm:$0xff]
    %v130 = vld [vmem:[%s1 + $0x350] sm:$0xff]
    %v131 = vld [vmem:[%s1 + $0x358] sm:$0xff]
    %v132 = vld [vmem:[%s1 + $0x360] sm:$0xff]
    %v133 = vld [vmem:[%s1 + $0x368] sm:$0xff]
    %v134 = vld [vmem:[%s1 + $0x370] sm:$0xff]
    %v135 = vld [vmem:[%s1 + $0x378] sm:$0xff]
    %v136 = vld [vmem:[%s1 + $0x380] sm:$0xff]
    %v137 = vld [vmem:[%s1 + $0x388] sm:$0xff]
    %v138 = vld [vmem:[%s1 + $0x390] sm:$0xff]
    %v139 = vld [vmem:[%s1 + $0x398] sm:$0xff]
    %v140 = vld [vmem:[%s1 + $0x3a0] sm:$0xff]
    %v141 = vld [vmem:[%s1 + $0x3a8] sm:$0xff]
    %v142 = vld [vmem:[%s1 + $0x3b0] sm:$0xff]
    %v143 = vld [vmem:[%s1 + $0x3b8] sm:$0xff]
    %v144 = vld [vmem:[%s1 + $0x3c0] sm:$0xff]
    %v145 = vld [vmem:[%s1 + $0x3c8] sm:$0xff]
    %v146 = vld [vmem:[%s1 + $0x3d0] sm:$0xff]
    %v147 = vld [vmem:[%s1 + $0x3d8] sm:$0xff]
    %v148 = vld [vmem:[%s1 + $0x3e0] sm:$0xff]
    %v149 = vld [vmem:[%s1 + $0x3e8] sm:$0xff]
    %v150 = vld [vmem:[%s1 + $0x3f0] sm:$0xff]
    %v151 = vld [vmem:[%s1 + $0x3f8] sm:$0xff]
    %v152 = vld [vmem:[%s2] sm:$0xff]
    %v153 = vld [vmem:[%s2 + $0x8] sm:$0xff]
    %v156 = vlaneseq
    %v157 = vshrl.u32 %v156, 7
    %v158 = vsub.s32 0, %v157
    %v159 = vrot.slane %v152, %v158
    %v160 = vlaneseq
    %v161 = vshrl.u32 %v160, 7
    %v162 = vsub.s32 1, %v161
    %v163 = vrot.slane %v152, %v162
    %v164 = vlaneseq
    %v165 = vshrl.u32 %v164, 7
    %v166 = vsub.s32 2, %v165
    %v167 = vrot.slane %v152, %v166
    %v168 = vlaneseq
    %v169 = vshrl.u32 %v168, 7
    %v170 = vsub.s32 3, %v169
    %v171 = vrot.slane %v152, %v170
    %v172 = vlaneseq
    %v173 = vshrl.u32 %v172, 7
    %v174 = vsub.s32 4, %v173
    %v175 = vrot.slane %v152, %v174
    %v176 = vlaneseq
    %v177 = vshrl.u32 %v176, 7
    %v178 = vsub.s32 5, %v177
    %v179 = vrot.slane %v152, %v178
    %v180 = vlaneseq
    %v181 = vshrl.u32 %v180, 7
    %v182 = vsub.s32 6, %v181
    %v183 = vrot.slane %v152, %v182
    %v184 = vlaneseq
    %v185 = vshrl.u32 %v184, 7
    %v186 = vsub.s32 7, %v185
    %v187 = vrot.slane %v152, %v186
    %v188 = vlaneseq
    %v189 = vshrl.u32 %v188, 7
    %v190 = vsub.s32 0, %v189
    %v191 = vrot.slane %v153, %v190
    %v192 = vlaneseq
    %v193 = vshrl.u32 %v192, 7
    %v194 = vsub.s32 1, %v193
    %v195 = vrot.slane %v153, %v194
    %v196 = vlaneseq
    %v197 = vshrl.u32 %v196, 7
    %v198 = vsub.s32 2, %v197
    %v199 = vrot.slane %v153, %v198
    %v200 = vlaneseq
    %v201 = vshrl.u32 %v200, 7
    %v202 = vsub.s32 3, %v201
    %v203 = vrot.slane %v153, %v202
    %v204 = vlaneseq
    %v205 = vshrl.u32 %v204, 7
    %v206 = vsub.s32 4, %v205
    %v207 = vrot.slane %v153, %v206
    %v208 = vlaneseq
    %v209 = vshrl.u32 %v208, 7
    %v210 = vsub.s32 5, %v209
    %v211 = vrot.slane %v153, %v210
    %v212 = vlaneseq
    %v213 = vshrl.u32 %v212, 7
    %v214 = vsub.s32 6, %v213
    %v215 = vrot.slane %v153, %v214
    %v216 = vlaneseq
    %v217 = vshrl.u32 %v216, 7
    %v218 = vsub.s32 7, %v217
    %v219 = vrot.slane %v153, %v218
    %v364 = vunpack.c.l.b16 %v24
    %v365 = vunpack.c.h.b16 %v24
    %v366 = vunpack.c.l.b16 %v25
    %v367 = vunpack.c.h.b16 %v25
    %v368 = vunpack.c.l.b16 %v26
    %v369 = vunpack.c.h.b16 %v26
    %v370 = vunpack.c.l.b16 %v27
    %v371 = vunpack.c.h.b16 %v27
    %v372 = vunpack.c.l.b16 %v28
    %v373 = vunpack.c.h.b16 %v28
    %v374 = vunpack.c.l.b16 %v29
    %v375 = vunpack.c.h.b16 %v29
    %v376 = vunpack.c.l.b16 %v30
    %v377 = vunpack.c.h.b16 %v30
    %v378 = vunpack.c.l.b16 %v31
    %v379 = vunpack.c.h.b16 %v31
    %v380 = vunpack.c.l.b16 %v32
    %v381 = vunpack.c.h.b16 %v32
    %v382 = vunpack.c.l.b16 %v33
    %v383 = vunpack.c.h.b16 %v33
    %v384 = vunpack.c.l.b16 %v34
    %v385 = vunpack.c.h.b16 %v34
    %v386 = vunpack.c.l.b16 %v35
    %v387 = vunpack.c.h.b16 %v35
    %v388 = vunpack.c.l.b16 %v36
    %v389 = vunpack.c.h.b16 %v36
    %v390 = vunpack.c.l.b16 %v37
    %v391 = vunpack.c.h.b16 %v37
    %v392 = vunpack.c.l.b16 %v38
    %v393 = vunpack.c.h.b16 %v38
    %v394 = vunpack.c.l.b16 %v39
    %v395 = vunpack.c.h.b16 %v39
    %v396 = vunpack.c.l.b16 %v40
    %v397 = vunpack.c.h.b16 %v40
    %v398 = vunpack.c.l.b16 %v41
    %v399 = vunpack.c.h.b16 %v41
    %v400 = vunpack.c.l.b16 %v42
    %v401 = vunpack.c.h.b16 %v42
    %v402 = vunpack.c.l.b16 %v43
    %v403 = vunpack.c.h.b16 %v43
    %v404 = vunpack.c.l.b16 %v44
    %v405 = vunpack.c.h.b16 %v44
    %v406 = vunpack.c.l.b16 %v45
    %v407 = vunpack.c.h.b16 %v45
    %v408 = vunpack.c.l.b16 %v46
    %v409 = vunpack.c.h.b16 %v46
    %v410 = vunpack.c.l.b16 %v47
    %v411 = vunpack.c.h.b16 %v47
    %v412 = vunpack.c.l.b16 %v48
    %v413 = vunpack.c.h.b16 %v48
    %v414 = vunpack.c.l.b16 %v49
    %v415 = vunpack.c.h.b16 %v49
    %v416 = vunpack.c.l.b16 %v50
    %v417 = vunpack.c.h.b16 %v50
    %v418 = vunpack.c.l.b16 %v51
    %v419 = vunpack.c.h.b16 %v51
    %v420 = vunpack.c.l.b16 %v52
    %v421 = vunpack.c.h.b16 %v52
    %v422 = vunpack.c.l.b16 %v53
    %v423 = vunpack.c.h.b16 %v53
    %v424 = vunpack.c.l.b16 %v54
    %v425 = vunpack.c.h.b16 %v54
    %v426 = vunpack.c.l.b16 %v55
    %v427 = vunpack.c.h.b16 %v55
    %v428 = vunpack.c.l.b16 %v56
    %v429 = vunpack.c.h.b16 %v56
    %v430 = vunpack.c.l.b16 %v57
    %v431 = vunpack.c.h.b16 %v57
    %v432 = vunpack.c.l.b16 %v58
    %v433 = vunpack.c.h.b16 %v58
    %v434 = vunpack.c.l.b16 %v59
    %v435 = vunpack.c.h.b16 %v59
    %v436 = vunpack.c.l.b16 %v60
    %v437 = vunpack.c.h.b16 %v60
    %v438 = vunpack.c.l.b16 %v61
    %v439 = vunpack.c.h.b16 %v61
    %v440 = vunpack.c.l.b16 %v62
    %v441 = vunpack.c.h.b16 %v62
    %v442 = vunpack.c.l.b16 %v63
    %v443 = vunpack.c.h.b16 %v63
    %v444 = vunpack.c.l.b16 %v64
    %v445 = vunpack.c.h.b16 %v64
    %v446 = vunpack.c.l.b16 %v65
    %v447 = vunpack.c.h.b16 %v65
    %v448 = vunpack.c.l.b16 %v66
    %v449 = vunpack.c.h.b16 %v66
    %v450 = vunpack.c.l.b16 %v67
    %v451 = vunpack.c.h.b16 %v67
    %v452 = vunpack.c.l.b16 %v68
    %v453 = vunpack.c.h.b16 %v68
    %v454 = vunpack.c.l.b16 %v69
    %v455 = vunpack.c.h.b16 %v69
    %v456 = vunpack.c.l.b16 %v70
    %v457 = vunpack.c.h.b16 %v70
    %v458 = vunpack.c.l.b16 %v71
    %v459 = vunpack.c.h.b16 %v71
    %v460 = vunpack.c.l.b16 %v72
    %v461 = vunpack.c.h.b16 %v72
    %v462 = vunpack.c.l.b16 %v73
    %v463 = vunpack.c.h.b16 %v73
    %v464 = vunpack.c.l.b16 %v74
    %v465 = vunpack.c.h.b16 %v74
    %v466 = vunpack.c.l.b16 %v75
    %v467 = vunpack.c.h.b16 %v75
    %v468 = vunpack.c.l.b16 %v76
    %v469 = vunpack.c.h.b16 %v76
    %v470 = vunpack.c.l.b16 %v77
    %v471 = vunpack.c.h.b16 %v77
    %v472 = vunpack.c.l.b16 %v78
    %v473 = vunpack.c.h.b16 %v78
    %v474 = vunpack.c.l.b16 %v79
    %v475 = vunpack.c.h.b16 %v79
    %v476 = vunpack.c.l.b16 %v80
    %v477 = vunpack.c.h.b16 %v80
    %v478 = vunpack.c.l.b16 %v81
    %v479 = vunpack.c.h.b16 %v81
    %v480 = vunpack.c.l.b16 %v82
    %v481 = vunpack.c.h.b16 %v82
    %v482 = vunpack.c.l.b16 %v83
    %v483 = vunpack.c.h.b16 %v83
    %v484 = vunpack.c.l.b16 %v84
    %v485 = vunpack.c.h.b16 %v84
    %v486 = vunpack.c.l.b16 %v85
    %v487 = vunpack.c.h.b16 %v85
    %v488 = vunpack.c.l.b16 %v86
    %v489 = vunpack.c.h.b16 %v86
    %v490 = vunpack.c.l.b16 %v87
    %v491 = vunpack.c.h.b16 %v87
    %v492 = vunpack.c.l.b16 %v88
    %v493 = vunpack.c.h.b16 %v88
    %v494 = vunpack.c.l.b16 %v89
    %v495 = vunpack.c.h.b16 %v89
    %v496 = vunpack.c.l.b16 %v90
    %v497 = vunpack.c.h.b16 %v90
    %v498 = vunpack.c.l.b16 %v91
    %v499 = vunpack.c.h.b16 %v91
    %v500 = vunpack.c.l.b16 %v92
    %v501 = vunpack.c.h.b16 %v92
    %v502 = vunpack.c.l.b16 %v93
    %v503 = vunpack.c.h.b16 %v93
    %v504 = vunpack.c.l.b16 %v94
    %v505 = vunpack.c.h.b16 %v94
    %v506 = vunpack.c.l.b16 %v95
    %v507 = vunpack.c.h.b16 %v95
    %v508 = vunpack.c.l.b16 %v96
    %v509 = vunpack.c.h.b16 %v96
    %v510 = vunpack.c.l.b16 %v97
    %v511 = vunpack.c.h.b16 %v97
    %v512 = vunpack.c.l.b16 %v98
    %v513 = vunpack.c.h.b16 %v98
    %v514 = vunpack.c.l.b16 %v99
    %v515 = vunpack.c.h.b16 %v99
    %v516 = vunpack.c.l.b16 %v100
    %v517 = vunpack.c.h.b16 %v100
    %v518 = vunpack.c.l.b16 %v101
    %v519 = vunpack.c.h.b16 %v101
    %v520 = vunpack.c.l.b16 %v102
    %v521 = vunpack.c.h.b16 %v102
    %v522 = vunpack.c.l.b16 %v103
    %v523 = vunpack.c.h.b16 %v103
    %v524 = vunpack.c.l.b16 %v104
    %v525 = vunpack.c.h.b16 %v104
    %v526 = vunpack.c.l.b16 %v105
    %v527 = vunpack.c.h.b16 %v105
    %v528 = vunpack.c.l.b16 %v106
    %v529 = vunpack.c.h.b16 %v106
    %v530 = vunpack.c.l.b16 %v107
    %v531 = vunpack.c.h.b16 %v107
    %v532 = vunpack.c.l.b16 %v108
    %v533 = vunpack.c.h.b16 %v108
    %v534 = vunpack.c.l.b16 %v109
    %v535 = vunpack.c.h.b16 %v109
    %v536 = vunpack.c.l.b16 %v110
    %v537 = vunpack.c.h.b16 %v110
    %v538 = vunpack.c.l.b16 %v111
    %v539 = vunpack.c.h.b16 %v111
    %v540 = vunpack.c.l.b16 %v112
    %v541 = vunpack.c.h.b16 %v112
    %v542 = vunpack.c.l.b16 %v113
    %v543 = vunpack.c.h.b16 %v113
    %v544 = vunpack.c.l.b16 %v114
    %v545 = vunpack.c.h.b16 %v114
    %v546 = vunpack.c.l.b16 %v115
    %v547 = vunpack.c.h.b16 %v115
    %v548 = vunpack.c.l.b16 %v116
    %v549 = vunpack.c.h.b16 %v116
    %v550 = vunpack.c.l.b16 %v117
    %v551 = vunpack.c.h.b16 %v117
    %v552 = vunpack.c.l.b16 %v118
    %v553 = vunpack.c.h.b16 %v118
    %v554 = vunpack.c.l.b16 %v119
    %v555 = vunpack.c.h.b16 %v119
    %v556 = vunpack.c.l.b16 %v120
    %v557 = vunpack.c.h.b16 %v120
    %v558 = vunpack.c.l.b16 %v121
    %v559 = vunpack.c.h.b16 %v121
    %v560 = vunpack.c.l.b16 %v122
    %v561 = vunpack.c.h.b16 %v122
    %v562 = vunpack.c.l.b16 %v123
    %v563 = vunpack.c.h.b16 %v123
    %v564 = vunpack.c.l.b16 %v124
    %v565 = vunpack.c.h.b16 %v124
    %v566 = vunpack.c.l.b16 %v125
    %v567 = vunpack.c.h.b16 %v125
    %v568 = vunpack.c.l.b16 %v126
    %v569 = vunpack.c.h.b16 %v126
    %v570 = vunpack.c.l.b16 %v127
    %v571 = vunpack.c.h.b16 %v127
    %v572 = vunpack.c.l.b16 %v128
    %v573 = vunpack.c.h.b16 %v128
    %v574 = vunpack.c.l.b16 %v129
    %v575 = vunpack.c.h.b16 %v129
    %v576 = vunpack.c.l.b16 %v130
    %v577 = vunpack.c.h.b16 %v130
    %v578 = vunpack.c.l.b16 %v131
    %v579 = vunpack.c.h.b16 %v131
    %v580 = vunpack.c.l.b16 %v132
    %v581 = vunpack.c.h.b16 %v132
    %v582 = vunpack.c.l.b16 %v133
    %v583 = vunpack.c.h.b16 %v133
    %v584 = vunpack.c.l.b16 %v134
    %v585 = vunpack.c.h.b16 %v134
    %v586 = vunpack.c.l.b16 %v135
    %v587 = vunpack.c.h.b16 %v135
    %v588 = vunpack.c.l.b16 %v136
    %v589 = vunpack.c.h.b16 %v136
    %v590 = vunpack.c.l.b16 %v137
    %v591 = vunpack.c.h.b16 %v137
    %v592 = vunpack.c.l.b16 %v138
    %v593 = vunpack.c.h.b16 %v138
    %v594 = vunpack.c.l.b16 %v139
    %v595 = vunpack.c.h.b16 %v139
    %v596 = vunpack.c.l.b16 %v140
    %v597 = vunpack.c.h.b16 %v140
    %v598 = vunpack.c.l.b16 %v141
    %v599 = vunpack.c.h.b16 %v141
    %v600 = vunpack.c.l.b16 %v142
    %v601 = vunpack.c.h.b16 %v142
    %v602 = vunpack.c.l.b16 %v143
    %v603 = vunpack.c.h.b16 %v143
    %v604 = vunpack.c.l.b16 %v144
    %v605 = vunpack.c.h.b16 %v144
    %v606 = vunpack.c.l.b16 %v145
    %v607 = vunpack.c.h.b16 %v145
    %v608 = vunpack.c.l.b16 %v146
    %v609 = vunpack.c.h.b16 %v146
    %v610 = vunpack.c.l.b16 %v147
    %v611 = vunpack.c.h.b16 %v147
    %v612 = vunpack.c.l.b16 %v148
    %v613 = vunpack.c.h.b16 %v148
    %v614 = vunpack.c.l.b16 %v149
    %v615 = vunpack.c.h.b16 %v149
    %v616 = vunpack.c.l.b16 %v150
    %v617 = vunpack.c.h.b16 %v150
    %v618 = vunpack.c.l.b16 %v151
    %v619 = vunpack.c.h.b16 %v151
    %v620 = vpack.c.b16 %v380, %v364
    %v621 = vpack.c.b16 %v381, %v365
    %v622 = vpack.c.b16 %v382, %v366
    %v623 = vpack.c.b16 %v383, %v367
    %v624 = vpack.c.b16 %v384, %v368
    %v625 = vpack.c.b16 %v385, %v369
    %v626 = vpack.c.b16 %v386, %v370
    %v627 = vpack.c.b16 %v387, %v371
    %v628 = vpack.c.b16 %v388, %v372
    %v629 = vpack.c.b16 %v389, %v373
    %v630 = vpack.c.b16 %v390, %v374
    %v631 = vpack.c.b16 %v391, %v375
    %v632 = vpack.c.b16 %v392, %v376
    %v633 = vpack.c.b16 %v393, %v377
    %v634 = vpack.c.b16 %v394, %v378
    %v635 = vpack.c.b16 %v395, %v379
    %v636 = vpack.c.b16 %v412, %v396
    %v637 = vpack.c.b16 %v413, %v397
    %v638 = vpack.c.b16 %v414, %v398
    %v639 = vpack.c.b16 %v415, %v399
    %v640 = vpack.c.b16 %v416, %v400
    %v641 = vpack.c.b16 %v417, %v401
    %v642 = vpack.c.b16 %v418, %v402
    %v643 = vpack.c.b16 %v419, %v403
    %v644 = vpack.c.b16 %v420, %v404
    %v645 = vpack.c.b16 %v421, %v405
    %v646 = vpack.c.b16 %v422, %v406
    %v647 = vpack.c.b16 %v423, %v407
    %v648 = vpack.c.b16 %v424, %v408
    %v649 = vpack.c.b16 %v425, %v409
    %v650 = vpack.c.b16 %v426, %v410
    %v651 = vpack.c.b16 %v427, %v411
    %v652 = vpack.c.b16 %v444, %v428
    %v653 = vpack.c.b16 %v445, %v429
    %v654 = vpack.c.b16 %v446, %v430
    %v655 = vpack.c.b16 %v447, %v431
    %v656 = vpack.c.b16 %v448, %v432
    %v657 = vpack.c.b16 %v449, %v433
    %v658 = vpack.c.b16 %v450, %v434
    %v659 = vpack.c.b16 %v451, %v435
    %v660 = vpack.c.b16 %v452, %v436
    %v661 = vpack.c.b16 %v453, %v437
    %v662 = vpack.c.b16 %v454, %v438
    %v663 = vpack.c.b16 %v455, %v439
    %v664 = vpack.c.b16 %v456, %v440
    %v665 = vpack.c.b16 %v457, %v441
    %v666 = vpack.c.b16 %v458, %v442
    %v667 = vpack.c.b16 %v459, %v443
    %v668 = vpack.c.b16 %v476, %v460
    %v669 = vpack.c.b16 %v477, %v461
    %v670 = vpack.c.b16 %v478, %v462
    %v671 = vpack.c.b16 %v479, %v463
    %v672 = vpack.c.b16 %v480, %v464
    %v673 = vpack.c.b16 %v481, %v465
    %v674 = vpack.c.b16 %v482, %v466
    %v675 = vpack.c.b16 %v483, %v467
    %v676 = vpack.c.b16 %v484, %v468
    %v677 = vpack.c.b16 %v485, %v469
    %v678 = vpack.c.b16 %v486, %v470
    %v679 = vpack.c.b16 %v487, %v471
    %v680 = vpack.c.b16 %v488, %v472
    %v681 = vpack.c.b16 %v489, %v473
    %v682 = vpack.c.b16 %v490, %v474
    %v683 = vpack.c.b16 %v491, %v475
    %v684 = vpack.c.b16 %v508, %v492
    %v685 = vpack.c.b16 %v509, %v493
    %v686 = vpack.c.b16 %v510, %v494
    %v687 = vpack.c.b16 %v511, %v495
    %v688 = vpack.c.b16 %v512, %v496
    %v689 = vpack.c.b16 %v513, %v497
    %v690 = vpack.c.b16 %v514, %v498
    %v691 = vpack.c.b16 %v515, %v499
    %v692 = vpack.c.b16 %v516, %v500
    %v693 = vpack.c.b16 %v517, %v501
    %v694 = vpack.c.b16 %v518, %v502
    %v695 = vpack.c.b16 %v519, %v503
    %v696 = vpack.c.b16 %v520, %v504
    %v697 = vpack.c.b16 %v521, %v505
    %v698 = vpack.c.b16 %v522, %v506
    %v699 = vpack.c.b16 %v523, %v507
    %v700 = vpack.c.b16 %v540, %v524
    %v701 = vpack.c.b16 %v541, %v525
    %v702 = vpack.c.b16 %v542, %v526
    %v703 = vpack.c.b16 %v543, %v527
    %v704 = vpack.c.b16 %v544, %v528
    %v705 = vpack.c.b16 %v545, %v529
    %v706 = vpack.c.b16 %v546, %v530
    %v707 = vpack.c.b16 %v547, %v531
    %v708 = vpack.c.b16 %v548, %v532
    %v709 = vpack.c.b16 %v549, %v533
    %v710 = vpack.c.b16 %v550, %v534
    %v711 = vpack.c.b16 %v551, %v535
    %v712 = vpack.c.b16 %v552, %v536
    %v713 = vpack.c.b16 %v553, %v537
    %v714 = vpack.c.b16 %v554, %v538
    %v715 = vpack.c.b16 %v555, %v539
    %v716 = vpack.c.b16 %v572, %v556
    %v717 = vpack.c.b16 %v573, %v557
    %v718 = vpack.c.b16 %v574, %v558
    %v719 = vpack.c.b16 %v575, %v559
    %v720 = vpack.c.b16 %v576, %v560
    %v721 = vpack.c.b16 %v577, %v561
    %v722 = vpack.c.b16 %v578, %v562
    %v723 = vpack.c.b16 %v579, %v563
    %v724 = vpack.c.b16 %v580, %v564
    %v725 = vpack.c.b16 %v581, %v565
    %v726 = vpack.c.b16 %v582, %v566
    %v727 = vpack.c.b16 %v583, %v567
    %v728 = vpack.c.b16 %v584, %v568
    %v729 = vpack.c.b16 %v585, %v569
    %v730 = vpack.c.b16 %v586, %v570
    %v731 = vpack.c.b16 %v587, %v571
    %v732 = vpack.c.b16 %v604, %v588
    %v733 = vpack.c.b16 %v605, %v589
    %v734 = vpack.c.b16 %v606, %v590
    %v735 = vpack.c.b16 %v607, %v591
    %v736 = vpack.c.b16 %v608, %v592
    %v737 = vpack.c.b16 %v609, %v593
    %v738 = vpack.c.b16 %v610, %v594
    %v739 = vpack.c.b16 %v611, %v595
    %v740 = vpack.c.b16 %v612, %v596
    %v741 = vpack.c.b16 %v613, %v597
    %v742 = vpack.c.b16 %v614, %v598
    %v743 = vpack.c.b16 %v615, %v599
    %v744 = vpack.c.b16 %v616, %v600
    %v745 = vpack.c.b16 %v617, %v601
    %v746 = vpack.c.b16 %v618, %v602
    %v747 = vpack.c.b16 %v619, %v603
    %876 = vmatprep.subr.bf16.mxu0 %v621
    %877 = vmatpush1.bf16.msra.mxu0 %v620
    %878 = vmatprep.subr.bf16.mxu0 %v637
    %879 = vmatpush1.bf16.msra.mxu0 %v636
    %880 = vmatprep.subr.bf16.mxu0 %v653
    %881 = vmatpush1.bf16.msra.mxu0 %v652
    %882 = vmatprep.subr.bf16.mxu0 %v669
    %883 = vmatpush1.bf16.msra.mxu0 %v668
    %884 = vmatprep.subr.bf16.mxu0 %v685
    %885 = vmatpush1.bf16.msra.mxu0 %v684
    %886 = vmatprep.subr.bf16.mxu0 %v701
    %887 = vmatpush1.bf16.msra.mxu0 %v700
    %888 = vmatprep.subr.bf16.mxu0 %v717
    %889 = vmatpush1.bf16.msra.mxu0 %v716
    %890 = vmatprep.subr.bf16.mxu0 %v733
    %891 = vmatpush1.bf16.msra.mxu0 %v732
    %892 = vmatprep.subr.bf16.mxu0 0
    %893 = vmatpush1.bf16.msra.mxu0 0
    %894 = vmatprep.subr.bf16.mxu0 0
    %895 = vmatpush1.bf16.msra.mxu0 0
    %896 = vmatprep.subr.bf16.mxu0 0
    %897 = vmatpush1.bf16.msra.mxu0 0
    %898 = vmatprep.subr.bf16.mxu0 0
    %899 = vmatpush1.bf16.msra.mxu0 0
    %900 = vmatprep.subr.bf16.mxu0 0
    %901 = vmatpush1.bf16.msra.mxu0 0
    %902 = vmatprep.subr.bf16.mxu0 0
    %903 = vmatpush1.bf16.msra.mxu0 0
    %904 = vmatprep.subr.bf16.mxu0 0
    %905 = vmatpush1.bf16.msra.mxu0 0
    %906 = vmatprep.subr.bf16.mxu0 0
    %907 = vmatpush1.bf16.msra.mxu0 0
    %908 = vmatprep.mubr.bf16.mxu0 0
    %909 = vmatmul.mubr.bf16.gmra.mrb[0].mxu0 %v23
    %v910 = vpop.f32.mrb[0].mxu0
    %v911 = vadd.f32 %v159, %v910
    %v912 = vpop.f32.mrb[0].mxu0
    %v913 = vadd.f32 %v163, %v912
    %v914 = vpop.f32.mrb[0].mxu0
    %v915 = vpop.f32.mrb[0].mxu0
    %916 = vdwg.mxu0
    %917 = vmatprep.subr.bf16.mxu0 %v623
    %918 = vmatpush1.bf16.msra.mxu0 %v622
    %919 = vmatprep.subr.bf16.mxu0 %v639
    %920 = vmatpush1.bf16.msra.mxu0 %v638
    %921 = vmatprep.subr.bf16.mxu0 %v655
    %922 = vmatpush1.bf16.msra.mxu0 %v654
    %923 = vmatprep.subr.bf16.mxu0 %v671
    %924 = vmatpush1.bf16.msra.mxu0 %v670
    %925 = vmatprep.subr.bf16.mxu0 %v687
    %926 = vmatpush1.bf16.msra.mxu0 %v686
    %927 = vmatprep.subr.bf16.mxu0 %v703
    %928 = vmatpush1.bf16.msra.mxu0 %v702
    %929 = vmatprep.subr.bf16.mxu0 %v719
    %930 = vmatpush1.bf16.msra.mxu0 %v718
    %931 = vmatprep.subr.bf16.mxu0 %v735
    %932 = vmatpush1.bf16.msra.mxu0 %v734
    %933 = vmatprep.subr.bf16.mxu0 0
    %934 = vmatpush1.bf16.msra.mxu0 0
    %935 = vmatprep.subr.bf16.mxu0 0
    %936 = vmatpush1.bf16.msra.mxu0 0
    %937 = vmatprep.subr.bf16.mxu0 0
    %938 = vmatpush1.bf16.msra.mxu0 0
    %939 = vmatprep.subr.bf16.mxu0 0
    %940 = vmatpush1.bf16.msra.mxu0 0
    %941 = vmatprep.subr.bf16.mxu0 0
    %942 = vmatpush1.bf16.msra.mxu0 0
    %943 = vmatprep.subr.bf16.mxu0 0
    %944 = vmatpush1.bf16.msra.mxu0 0
    %945 = vmatprep.subr.bf16.mxu0 0
    %946 = vmatpush1.bf16.msra.mxu0 0
    %947 = vmatprep.subr.bf16.mxu0 0
    %948 = vmatpush1.bf16.msra.mxu0 0
    %949 = vmatprep.mubr.bf16.mxu0 0
    %950 = vmatmul.mubr.bf16.gmra.mrb[0].mxu0 %v23
    %v951 = vpop.f32.mrb[0].mxu0
    %v952 = vadd.f32 %v167, %v951
    %v953 = vpop.f32.mrb[0].mxu0
    %v954 = vadd.f32 %v171, %v953
    %v955 = vpop.f32.mrb[0].mxu0
    %v956 = vpop.f32.mrb[0].mxu0
    %957 = vdwg.mxu0
    %958 = vmatprep.subr.bf16.mxu0 %v625
    %959 = vmatpush1.bf16.msra.mxu0 %v624
    %960 = vmatprep.subr.bf16.mxu0 %v641
    %961 = vmatpush1.bf16.msra.mxu0 %v640
    %962 = vmatprep.subr.bf16.mxu0 %v657
    %963 = vmatpush1.bf16.msra.mxu0 %v656
    %964 = vmatprep.subr.bf16.mxu0 %v673
    %965 = vmatpush1.bf16.msra.mxu0 %v672
    %966 = vmatprep.subr.bf16.mxu0 %v689
    %967 = vmatpush1.bf16.msra.mxu0 %v688
    %968 = vmatprep.subr.bf16.mxu0 %v705
    %969 = vmatpush1.bf16.msra.mxu0 %v704
    %970 = vmatprep.subr.bf16.mxu0 %v721
    %971 = vmatpush1.bf16.msra.mxu0 %v720
    %972 = vmatprep.subr.bf16.mxu0 %v737
    %973 = vmatpush1.bf16.msra.mxu0 %v736
    %974 = vmatprep.subr.bf16.mxu0 0
    %975 = vmatpush1.bf16.msra.mxu0 0
    %976 = vmatprep.subr.bf16.mxu0 0
    %977 = vmatpush1.bf16.msra.mxu0 0
    %978 = vmatprep.subr.bf16.mxu0 0
    %979 = vmatpush1.bf16.msra.mxu0 0
    %980 = vmatprep.subr.bf16.mxu0 0
    %981 = vmatpush1.bf16.msra.mxu0 0
    %982 = vmatprep.subr.bf16.mxu0 0
    %983 = vmatpush1.bf16.msra.mxu0 0
    %984 = vmatprep.subr.bf16.mxu0 0
    %985 = vmatpush1.bf16.msra.mxu0 0
    %986 = vmatprep.subr.bf16.mxu0 0
    %987 = vmatpush1.bf16.msra.mxu0 0
    %988 = vmatprep.subr.bf16.mxu0 0
    %989 = vmatpush1.bf16.msra.mxu0 0
    %990 = vmatprep.mubr.bf16.mxu0 0
    %991 = vmatmul.mubr.bf16.gmra.mrb[0].mxu0 %v23
    %v992 = vpop.f32.mrb[0].mxu0
    %v993 = vadd.f32 %v175, %v992
    %v994 = vpop.f32.mrb[0].mxu0
    %v995 = vadd.f32 %v179, %v994
    %v996 = vpop.f32.mrb[0].mxu0
    %v997 = vpop.f32.mrb[0].mxu0
    %998 = vdwg.mxu0
    %999 = vmatprep.subr.bf16.mxu0 %v627
    %1000 = vmatpush1.bf16.msra.mxu0 %v626
    %1001 = vmatprep.subr.bf16.mxu0 %v643
    %1002 = vmatpush1.bf16.msra.mxu0 %v642
    %1003 = vmatprep.subr.bf16.mxu0 %v659
    %1004 = vmatpush1.bf16.msra.mxu0 %v658
    %1005 = vmatprep.subr.bf16.mxu0 %v675
    %1006 = vmatpush1.bf16.msra.mxu0 %v674
    %1007 = vmatprep.subr.bf16.mxu0 %v691
    %1008 = vmatpush1.bf16.msra.mxu0 %v690
    %1009 = vmatprep.subr.bf16.mxu0 %v707
    %1010 = vmatpush1.bf16.msra.mxu0 %v706
    %1011 = vmatprep.subr.bf16.mxu0 %v723
    %1012 = vmatpush1.bf16.msra.mxu0 %v722
    %1013 = vmatprep.subr.bf16.mxu0 %v739
    %1014 = vmatpush1.bf16.msra.mxu0 %v738
    %1015 = vmatprep.subr.bf16.mxu0 0
    %1016 = vmatpush1.bf16.msra.mxu0 0
    %1017 = vmatprep.subr.bf16.mxu0 0
    %1018 = vmatpush1.bf16.msra.mxu0 0
    %1019 = vmatprep.subr.bf16.mxu0 0
    %1020 = vmatpush1.bf16.msra.mxu0 0
    %1021 = vmatprep.subr.bf16.mxu0 0
    %1022 = vmatpush1.bf16.msra.mxu0 0
    %1023 = vmatprep.subr.bf16.mxu0 0
    %1024 = vmatpush1.bf16.msra.mxu0 0
    %1025 = vmatprep.subr.bf16.mxu0 0
    %1026 = vmatpush1.bf16.msra.mxu0 0
    %1027 = vmatprep.subr.bf16.mxu0 0
    %1028 = vmatpush1.bf16.msra.mxu0 0
    %1029 = vmatprep.subr.bf16.mxu0 0
    %1030 = vmatpush1.bf16.msra.mxu0 0
    %1031 = vmatprep.mubr.bf16.mxu0 0
    %1032 = vmatmul.mubr.bf16.gmra.mrb[0].mxu0 %v23
    %v1033 = vpop.f32.mrb[0].mxu0
    %v1034 = vadd.f32 %v183, %v1033
    %v1035 = vpop.f32.mrb[0].mxu0
    %v1036 = vadd.f32 %v187, %v1035
    %v1037 = vpop.f32.mrb[0].mxu0
    %v1038 = vpop.f32.mrb[0].mxu0
    %1039 = vdwg.mxu0
    %1040 = vmatprep.subr.bf16.mxu0 %v629
    %1041 = vmatpush1.bf16.msra.mxu0 %v628
    %1042 = vmatprep.subr.bf16.mxu0 %v645
    %1043 = vmatpush1.bf16.msra.mxu0 %v644
    %1044 = vmatprep.subr.bf16.mxu0 %v661
    %1045 = vmatpush1.bf16.msra.mxu0 %v660
    %1046 = vmatprep.subr.bf16.mxu0 %v677
    %1047 = vmatpush1.bf16.msra.mxu0 %v676
    %1048 = vmatprep.subr.bf16.mxu0 %v693
    %1049 = vmatpush1.bf16.msra.mxu0 %v692
    %1050 = vmatprep.subr.bf16.mxu0 %v709
    %1051 = vmatpush1.bf16.msra.mxu0 %v708
    %1052 = vmatprep.subr.bf16.mxu0 %v725
    %1053 = vmatpush1.bf16.msra.mxu0 %v724
    %1054 = vmatprep.subr.bf16.mxu0 %v741
    %1055 = vmatpush1.bf16.msra.mxu0 %v740
    %1056 = vmatprep.subr.bf16.mxu0 0
    %1057 = vmatpush1.bf16.msra.mxu0 0
    %1058 = vmatprep.subr.bf16.mxu0 0
    %1059 = vmatpush1.bf16.msra.mxu0 0
    %1060 = vmatprep.subr.bf16.mxu0 0
    %1061 = vmatpush1.bf16.msra.mxu0 0
    %1062 = vmatprep.subr.bf16.mxu0 0
    %1063 = vmatpush1.bf16.msra.mxu0 0
    %1064 = vmatprep.subr.bf16.mxu0 0
    %1065 = vmatpush1.bf16.msra.mxu0 0
    %1066 = vmatprep.subr.bf16.mxu0 0
    %1067 = vmatpush1.bf16.msra.mxu0 0
    %1068 = vmatprep.subr.bf16.mxu0 0
    %1069 = vmatpush1.bf16.msra.mxu0 0
    %1070 = vmatprep.subr.bf16.mxu0 0
    %1071 = vmatpush1.bf16.msra.mxu0 0
    %1072 = vmatprep.mubr.bf16.mxu0 0
    %1073 = vmatmul.mubr.bf16.gmra.mrb[0].mxu0 %v23
    %v1074 = vpop.f32.mrb[0].mxu0
    %v1075 = vadd.f32 %v191, %v1074
    %v1076 = vpop.f32.mrb[0].mxu0
    %v1077 = vadd.f32 %v195, %v1076
    %v1078 = vpop.f32.mrb[0].mxu0
    %v1079 = vpop.f32.mrb[0].mxu0
    %1080 = vdwg.mxu0
    %1081 = vmatprep.subr.bf16.mxu0 %v631
    %1082 = vmatpush1.bf16.msra.mxu0 %v630
    %1083 = vmatprep.subr.bf16.mxu0 %v647
    %1084 = vmatpush1.bf16.msra.mxu0 %v646
    %1085 = vmatprep.subr.bf16.mxu0 %v663
    %1086 = vmatpush1.bf16.msra.mxu0 %v662
    %1087 = vmatprep.subr.bf16.mxu0 %v679
    %1088 = vmatpush1.bf16.msra.mxu0 %v678
    %1089 = vmatprep.subr.bf16.mxu0 %v695
    %1090 = vmatpush1.bf16.msra.mxu0 %v694
    %1091 = vmatprep.subr.bf16.mxu0 %v711
    %1092 = vmatpush1.bf16.msra.mxu0 %v710
    %1093 = vmatprep.subr.bf16.mxu0 %v727
    %1094 = vmatpush1.bf16.msra.mxu0 %v726
    %1095 = vmatprep.subr.bf16.mxu0 %v743
    %1096 = vmatpush1.bf16.msra.mxu0 %v742
    %1097 = vmatprep.subr.bf16.mxu0 0
    %1098 = vmatpush1.bf16.msra.mxu0 0
    %1099 = vmatprep.subr.bf16.mxu0 0
    %1100 = vmatpush1.bf16.msra.mxu0 0
    %1101 = vmatprep.subr.bf16.mxu0 0
    %1102 = vmatpush1.bf16.msra.mxu0 0
    %1103 = vmatprep.subr.bf16.mxu0 0
    %1104 = vmatpush1.bf16.msra.mxu0 0
    %1105 = vmatprep.subr.bf16.mxu0 0
    %1106 = vmatpush1.bf16.msra.mxu0 0
    %1107 = vmatprep.subr.bf16.mxu0 0
    %1108 = vmatpush1.bf16.msra.mxu0 0
    %1109 = vmatprep.subr.bf16.mxu0 0
    %1110 = vmatpush1.bf16.msra.mxu0 0
    %1111 = vmatprep.subr.bf16.mxu0 0
    %1112 = vmatpush1.bf16.msra.mxu0 0
    %1113 = vmatprep.mubr.bf16.mxu0 0
    %1114 = vmatmul.mubr.bf16.gmra.mrb[0].mxu0 %v23
    %v1115 = vpop.f32.mrb[0].mxu0
    %v1116 = vadd.f32 %v199, %v1115
    %v1117 = vpop.f32.mrb[0].mxu0
    %v1118 = vadd.f32 %v203, %v1117
    %v1119 = vpop.f32.mrb[0].mxu0
    %v1120 = vpop.f32.mrb[0].mxu0
    %1121 = vdwg.mxu0
    %1122 = vmatprep.subr.bf16.mxu0 %v633
    %1123 = vmatpush1.bf16.msra.mxu0 %v632
    %1124 = vmatprep.subr.bf16.mxu0 %v649
    %1125 = vmatpush1.bf16.msra.mxu0 %v648
    %1126 = vmatprep.subr.bf16.mxu0 %v665
    %1127 = vmatpush1.bf16.msra.mxu0 %v664
    %1128 = vmatprep.subr.bf16.mxu0 %v681
    %1129 = vmatpush1.bf16.msra.mxu0 %v680
    %1130 = vmatprep.subr.bf16.mxu0 %v697
    %1131 = vmatpush1.bf16.msra.mxu0 %v696
    %1132 = vmatprep.subr.bf16.mxu0 %v713
    %1133 = vmatpush1.bf16.msra.mxu0 %v712
    %1134 = vmatprep.subr.bf16.mxu0 %v729
    %1135 = vmatpush1.bf16.msra.mxu0 %v728
    %1136 = vmatprep.subr.bf16.mxu0 %v745
    %1137 = vmatpush1.bf16.msra.mxu0 %v744
    %1138 = vmatprep.subr.bf16.mxu0 0
    %1139 = vmatpush1.bf16.msra.mxu0 0
    %1140 = vmatprep.subr.bf16.mxu0 0
    %1141 = vmatpush1.bf16.msra.mxu0 0
    %1142 = vmatprep.subr.bf16.mxu0 0
    %1143 = vmatpush1.bf16.msra.mxu0 0
    %1144 = vmatprep.subr.bf16.mxu0 0
    %1145 = vmatpush1.bf16.msra.mxu0 0
    %1146 = vmatprep.subr.bf16.mxu0 0
    %1147 = vmatpush1.bf16.msra.mxu0 0
    %1148 = vmatprep.subr.bf16.mxu0 0
    %1149 = vmatpush1.bf16.msra.mxu0 0
    %1150 = vmatprep.subr.bf16.mxu0 0
    %1151 = vmatpush1.bf16.msra.mxu0 0
    %1152 = vmatprep.subr.bf16.mxu0 0
    %1153 = vmatpush1.bf16.msra.mxu0 0
    %1154 = vmatprep.mubr.bf16.mxu0 0
    %1155 = vmatmul.mubr.bf16.gmra.mrb[0].mxu0 %v23
    %v1156 = vpop.f32.mrb[0].mxu0
    %v1157 = vadd.f32 %v207, %v1156
    %v1158 = vpop.f32.mrb[0].mxu0
    %v1159 = vadd.f32 %v211, %v1158
    %v1160 = vpop.f32.mrb[0].mxu0
    %v1161 = vpop.f32.mrb[0].mxu0
    %1162 = vdwg.mxu0
    %1163 = vmatprep.subr.bf16.mxu0 %v635
    %1164 = vmatpush1.bf16.msra.mxu0 %v634
    %1165 = vmatprep.subr.bf16.mxu0 %v651
    %1166 = vmatpush1.bf16.msra.mxu0 %v650
    %1167 = vmatprep.subr.bf16.mxu0 %v667
    %1168 = vmatpush1.bf16.msra.mxu0 %v666
    %1169 = vmatprep.subr.bf16.mxu0 %v683
    %1170 = vmatpush1.bf16.msra.mxu0 %v682
    %1171 = vmatprep.subr.bf16.mxu0 %v699
    %1172 = vmatpush1.bf16.msra.mxu0 %v698
    %1173 = vmatprep.subr.bf16.mxu0 %v715
    %1174 = vmatpush1.bf16.msra.mxu0 %v714
    %1175 = vmatprep.subr.bf16.mxu0 %v731
    %1176 = vmatpush1.bf16.msra.mxu0 %v730
    %1177 = vmatprep.subr.bf16.mxu0 %v747
    %1178 = vmatpush1.bf16.msra.mxu0 %v746
    %1179 = vmatprep.subr.bf16.mxu0 0
    %1180 = vmatpush1.bf16.msra.mxu0 0
    %1181 = vmatprep.subr.bf16.mxu0 0
    %1182 = vmatpush1.bf16.msra.mxu0 0
    %1183 = vmatprep.subr.bf16.mxu0 0
    %1184 = vmatpush1.bf16.msra.mxu0 0
    %1185 = vmatprep.subr.bf16.mxu0 0
    %1186 = vmatpush1.bf16.msra.mxu0 0
    %1187 = vmatprep.subr.bf16.mxu0 0
    %1188 = vmatpush1.bf16.msra.mxu0 0
    %1189 = vmatprep.subr.bf16.mxu0 0
    %1190 = vmatpush1.bf16.msra.mxu0 0
    %1191 = vmatprep.subr.bf16.mxu0 0
    %1192 = vmatpush1.bf16.msra.mxu0 0
    %1193 = vmatprep.subr.bf16.mxu0 0
    %1194 = vmatpush1.bf16.msra.mxu0 0
    %1195 = vmatprep.mubr.bf16.mxu0 0
    %1196 = vmatmul.mubr.bf16.gmra.mrb[0].mxu0 %v23
    %v1197 = vpop.f32.mrb[0].mxu0
    %v1198 = vadd.f32 %v215, %v1197
    %v1199 = vpop.f32.mrb[0].mxu0
    %v1200 = vadd.f32 %v219, %v1199
    %v1201 = vpop.f32.mrb[0].mxu0
    %v1202 = vpop.f32.mrb[0].mxu0
    %1203 = vdwg.mxu0
    %v1204 = vmax.f32 %v911, 0.0
    %v1205 = vmax.f32 %v913, 0.0
    %v1206 = vmax.f32 %v952, 0.0
    %v1207 = vmax.f32 %v954, 0.0
    %v1208 = vmax.f32 %v993, 0.0
    %v1209 = vmax.f32 %v995, 0.0
    %v1210 = vmax.f32 %v1034, 0.0
    %v1211 = vmax.f32 %v1036, 0.0
    %v1212 = vmax.f32 %v1075, 0.0
    %v1213 = vmax.f32 %v1077, 0.0
    %v1214 = vmax.f32 %v1116, 0.0
    %v1215 = vmax.f32 %v1118, 0.0
    %v1216 = vmax.f32 %v1157, 0.0
    %v1217 = vmax.f32 %v1159, 0.0
    %v1218 = vmax.f32 %v1198, 0.0
    %v1219 = vmax.f32 %v1200, 0.0
    %v1220 = vpack.c.bf16 %v1204, %v1204
    %v1221 = vpack.c.bf16 %v1205, %v1205
    %v1222 = vpack.c.bf16 %v1206, %v1206
    %v1223 = vpack.c.bf16 %v1207, %v1207
    %v1224 = vpack.c.bf16 %v1208, %v1208
    %v1225 = vpack.c.bf16 %v1209, %v1209
    %v1226 = vpack.c.bf16 %v1210, %v1210
    %v1227 = vpack.c.bf16 %v1211, %v1211
    %v1228 = vpack.c.bf16 %v1212, %v1212
    %v1229 = vpack.c.bf16 %v1213, %v1213
    %v1230 = vpack.c.bf16 %v1214, %v1214
    %v1231 = vpack.c.bf16 %v1215, %v1215
    %v1232 = vpack.c.bf16 %v1216, %v1216
    %v1233 = vpack.c.bf16 %v1217, %v1217
    %v1234 = vpack.c.bf16 %v1218, %v1218
    %v1235 = vpack.c.bf16 %v1219, %v1219
    %v1236 = vld [vmem:[%s3] sm:$0xf]
    %v1237 = vld [vmem:[%s3 + $0x4] sm:$0xf]
    %v1238 = vld [vmem:[%s3 + $0x8] sm:$0xf]
    %v1239 = vld [vmem:[%s3 + $0xc] sm:$0xf]
    %v1240 = vld [vmem:[%s3 + $0x10] sm:$0xf]
    %v1241 = vld [vmem:[%s3 + $0x14] sm:$0xf]
    %v1242 = vld [vmem:[%s3 + $0x18] sm:$0xf]
    %v1243 = vld [vmem:[%s3 + $0x1c] sm:$0xf]
    %v1244 = vld [vmem:[%s3 + $0x20] sm:$0xf]
    %v1245 = vld [vmem:[%s3 + $0x24] sm:$0xf]
    %v1246 = vld [vmem:[%s3 + $0x28] sm:$0xf]
    %v1247 = vld [vmem:[%s3 + $0x2c] sm:$0xf]
    %v1248 = vld [vmem:[%s3 + $0x30] sm:$0xf]
    %v1249 = vld [vmem:[%s3 + $0x34] sm:$0xf]
    %v1250 = vld [vmem:[%s3 + $0x38] sm:$0xf]
    %v1251 = vld [vmem:[%s3 + $0x3c] sm:$0xf]
    %v1252 = vld [vmem:[%s3 + $0x40] sm:$0xf]
    %v1253 = vld [vmem:[%s3 + $0x44] sm:$0xf]
    %v1254 = vld [vmem:[%s3 + $0x48] sm:$0xf]
    %v1255 = vld [vmem:[%s3 + $0x4c] sm:$0xf]
    %v1256 = vld [vmem:[%s3 + $0x50] sm:$0xf]
    %v1257 = vld [vmem:[%s3 + $0x54] sm:$0xf]
    %v1258 = vld [vmem:[%s3 + $0x58] sm:$0xf]
    %v1259 = vld [vmem:[%s3 + $0x5c] sm:$0xf]
    %v1260 = vld [vmem:[%s3 + $0x60] sm:$0xf]
    %v1261 = vld [vmem:[%s3 + $0x64] sm:$0xf]
    %v1262 = vld [vmem:[%s3 + $0x68] sm:$0xf]
    %v1263 = vld [vmem:[%s3 + $0x6c] sm:$0xf]
    %v1264 = vld [vmem:[%s3 + $0x70] sm:$0xf]
    %v1265 = vld [vmem:[%s3 + $0x74] sm:$0xf]
    %v1266 = vld [vmem:[%s3 + $0x78] sm:$0xf]
    %v1267 = vld [vmem:[%s3 + $0x7c] sm:$0xf]
    %v1268 = vld [vmem:[%s3 + $0x80] sm:$0xf]
    %v1269 = vld [vmem:[%s3 + $0x84] sm:$0xf]
    %v1270 = vld [vmem:[%s3 + $0x88] sm:$0xf]
    %v1271 = vld [vmem:[%s3 + $0x8c] sm:$0xf]
    %v1272 = vld [vmem:[%s3 + $0x90] sm:$0xf]
    %v1273 = vld [vmem:[%s3 + $0x94] sm:$0xf]
    %v1274 = vld [vmem:[%s3 + $0x98] sm:$0xf]
    %v1275 = vld [vmem:[%s3 + $0x9c] sm:$0xf]
    %v1276 = vld [vmem:[%s3 + $0xa0] sm:$0xf]
    %v1277 = vld [vmem:[%s3 + $0xa4] sm:$0xf]
    %v1278 = vld [vmem:[%s3 + $0xa8] sm:$0xf]
    %v1279 = vld [vmem:[%s3 + $0xac] sm:$0xf]
    %v1280 = vld [vmem:[%s3 + $0xb0] sm:$0xf]
    %v1281 = vld [vmem:[%s3 + $0xb4] sm:$0xf]
    %v1282 = vld [vmem:[%s3 + $0xb8] sm:$0xf]
    %v1283 = vld [vmem:[%s3 + $0xbc] sm:$0xf]
    %v1284 = vld [vmem:[%s3 + $0xc0] sm:$0xf]
    %v1285 = vld [vmem:[%s3 + $0xc4] sm:$0xf]
    %v1286 = vld [vmem:[%s3 + $0xc8] sm:$0xf]
    %v1287 = vld [vmem:[%s3 + $0xcc] sm:$0xf]
    %v1288 = vld [vmem:[%s3 + $0xd0] sm:$0xf]
    %v1289 = vld [vmem:[%s3 + $0xd4] sm:$0xf]
    %v1290 = vld [vmem:[%s3 + $0xd8] sm:$0xf]
    %v1291 = vld [vmem:[%s3 + $0xdc] sm:$0xf]
    %v1292 = vld [vmem:[%s3 + $0xe0] sm:$0xf]
    %v1293 = vld [vmem:[%s3 + $0xe4] sm:$0xf]
    %v1294 = vld [vmem:[%s3 + $0xe8] sm:$0xf]
    %v1295 = vld [vmem:[%s3 + $0xec] sm:$0xf]
    %v1296 = vld [vmem:[%s3 + $0xf0] sm:$0xf]
    %v1297 = vld [vmem:[%s3 + $0xf4] sm:$0xf]
    %v1298 = vld [vmem:[%s3 + $0xf8] sm:$0xf]
    %v1299 = vld [vmem:[%s3 + $0xfc] sm:$0xf]
    %v1300 = vld [vmem:[%s3 + $0x100] sm:$0xf]
    %v1301 = vld [vmem:[%s3 + $0x104] sm:$0xf]
    %v1302 = vld [vmem:[%s3 + $0x108] sm:$0xf]
    %v1303 = vld [vmem:[%s3 + $0x10c] sm:$0xf]
    %v1304 = vld [vmem:[%s3 + $0x110] sm:$0xf]
    %v1305 = vld [vmem:[%s3 + $0x114] sm:$0xf]
    %v1306 = vld [vmem:[%s3 + $0x118] sm:$0xf]
    %v1307 = vld [vmem:[%s3 + $0x11c] sm:$0xf]
    %v1308 = vld [vmem:[%s3 + $0x120] sm:$0xf]
    %v1309 = vld [vmem:[%s3 + $0x124] sm:$0xf]
    %v1310 = vld [vmem:[%s3 + $0x128] sm:$0xf]
    %v1311 = vld [vmem:[%s3 + $0x12c] sm:$0xf]
    %v1312 = vld [vmem:[%s3 + $0x130] sm:$0xf]
    %v1313 = vld [vmem:[%s3 + $0x134] sm:$0xf]
    %v1314 = vld [vmem:[%s3 + $0x138] sm:$0xf]
    %v1315 = vld [vmem:[%s3 + $0x13c] sm:$0xf]
    %v1316 = vld [vmem:[%s3 + $0x140] sm:$0xf]
    %v1317 = vld [vmem:[%s3 + $0x144] sm:$0xf]
    %v1318 = vld [vmem:[%s3 + $0x148] sm:$0xf]
    %v1319 = vld [vmem:[%s3 + $0x14c] sm:$0xf]
    %v1320 = vld [vmem:[%s3 + $0x150] sm:$0xf]
    %v1321 = vld [vmem:[%s3 + $0x154] sm:$0xf]
    %v1322 = vld [vmem:[%s3 + $0x158] sm:$0xf]
    %v1323 = vld [vmem:[%s3 + $0x15c] sm:$0xf]
    %v1324 = vld [vmem:[%s3 + $0x160] sm:$0xf]
    %v1325 = vld [vmem:[%s3 + $0x164] sm:$0xf]
    %v1326 = vld [vmem:[%s3 + $0x168] sm:$0xf]
    %v1327 = vld [vmem:[%s3 + $0x16c] sm:$0xf]
    %v1328 = vld [vmem:[%s3 + $0x170] sm:$0xf]
    %v1329 = vld [vmem:[%s3 + $0x174] sm:$0xf]
    %v1330 = vld [vmem:[%s3 + $0x178] sm:$0xf]
    %v1331 = vld [vmem:[%s3 + $0x17c] sm:$0xf]
    %v1332 = vld [vmem:[%s3 + $0x180] sm:$0xf]
    %v1333 = vld [vmem:[%s3 + $0x184] sm:$0xf]
    %v1334 = vld [vmem:[%s3 + $0x188] sm:$0xf]
    %v1335 = vld [vmem:[%s3 + $0x18c] sm:$0xf]
    %v1336 = vld [vmem:[%s3 + $0x190] sm:$0xf]
    %v1337 = vld [vmem:[%s3 + $0x194] sm:$0xf]
    %v1338 = vld [vmem:[%s3 + $0x198] sm:$0xf]
    %v1339 = vld [vmem:[%s3 + $0x19c] sm:$0xf]
    %v1340 = vld [vmem:[%s3 + $0x1a0] sm:$0xf]
    %v1341 = vld [vmem:[%s3 + $0x1a4] sm:$0xf]
    %v1342 = vld [vmem:[%s3 + $0x1a8] sm:$0xf]
    %v1343 = vld [vmem:[%s3 + $0x1ac] sm:$0xf]
    %v1344 = vld [vmem:[%s3 + $0x1b0] sm:$0xf]
    %v1345 = vld [vmem:[%s3 + $0x1b4] sm:$0xf]
    %v1346 = vld [vmem:[%s3 + $0x1b8] sm:$0xf]
    %v1347 = vld [vmem:[%s3 + $0x1bc] sm:$0xf]
    %v1348 = vld [vmem:[%s3 + $0x1c0] sm:$0xf]
    %v1349 = vld [vmem:[%s3 + $0x1c4] sm:$0xf]
    %v1350 = vld [vmem:[%s3 + $0x1c8] sm:$0xf]
    %v1351 = vld [vmem:[%s3 + $0x1cc] sm:$0xf]
    %v1352 = vld [vmem:[%s3 + $0x1d0] sm:$0xf]
    %v1353 = vld [vmem:[%s3 + $0x1d4] sm:$0xf]
    %v1354 = vld [vmem:[%s3 + $0x1d8] sm:$0xf]
    %v1355 = vld [vmem:[%s3 + $0x1dc] sm:$0xf]
    %v1356 = vld [vmem:[%s3 + $0x1e0] sm:$0xf]
    %v1357 = vld [vmem:[%s3 + $0x1e4] sm:$0xf]
    %v1358 = vld [vmem:[%s3 + $0x1e8] sm:$0xf]
    %v1359 = vld [vmem:[%s3 + $0x1ec] sm:$0xf]
    %v1360 = vld [vmem:[%s3 + $0x1f0] sm:$0xf]
    %v1361 = vld [vmem:[%s3 + $0x1f4] sm:$0xf]
    %v1362 = vld [vmem:[%s3 + $0x1f8] sm:$0xf]
    %v1363 = vld [vmem:[%s3 + $0x1fc] sm:$0xf]
    %v1364 = vld [vmem:[%s3 + $0x200] sm:$0xf]
    %v1365 = vld [vmem:[%s3 + $0x204] sm:$0xf]
    %v1366 = vld [vmem:[%s3 + $0x208] sm:$0xf]
    %v1367 = vld [vmem:[%s3 + $0x20c] sm:$0xf]
    %v1368 = vld [vmem:[%s3 + $0x210] sm:$0xf]
    %v1369 = vld [vmem:[%s3 + $0x214] sm:$0xf]
    %v1370 = vld [vmem:[%s3 + $0x218] sm:$0xf]
    %v1371 = vld [vmem:[%s3 + $0x21c] sm:$0xf]
    %v1372 = vld [vmem:[%s3 + $0x220] sm:$0xf]
    %v1373 = vld [vmem:[%s3 + $0x224] sm:$0xf]
    %v1374 = vld [vmem:[%s3 + $0x228] sm:$0xf]
    %v1375 = vld [vmem:[%s3 + $0x22c] sm:$0xf]
    %v1376 = vld [vmem:[%s3 + $0x230] sm:$0xf]
    %v1377 = vld [vmem:[%s3 + $0x234] sm:$0xf]
    %v1378 = vld [vmem:[%s3 + $0x238] sm:$0xf]
    %v1379 = vld [vmem:[%s3 + $0x23c] sm:$0xf]
    %v1380 = vld [vmem:[%s3 + $0x240] sm:$0xf]
    %v1381 = vld [vmem:[%s3 + $0x244] sm:$0xf]
    %v1382 = vld [vmem:[%s3 + $0x248] sm:$0xf]
    %v1383 = vld [vmem:[%s3 + $0x24c] sm:$0xf]
    %v1384 = vld [vmem:[%s3 + $0x250] sm:$0xf]
    %v1385 = vld [vmem:[%s3 + $0x254] sm:$0xf]
    %v1386 = vld [vmem:[%s3 + $0x258] sm:$0xf]
    %v1387 = vld [vmem:[%s3 + $0x25c] sm:$0xf]
    %v1388 = vld [vmem:[%s3 + $0x260] sm:$0xf]
    %v1389 = vld [vmem:[%s3 + $0x264] sm:$0xf]
    %v1390 = vld [vmem:[%s3 + $0x268] sm:$0xf]
    %v1391 = vld [vmem:[%s3 + $0x26c] sm:$0xf]
    %v1392 = vld [vmem:[%s3 + $0x270] sm:$0xf]
    %v1393 = vld [vmem:[%s3 + $0x274] sm:$0xf]
    %v1394 = vld [vmem:[%s3 + $0x278] sm:$0xf]
    %v1395 = vld [vmem:[%s3 + $0x27c] sm:$0xf]
    %v1396 = vld [vmem:[%s3 + $0x280] sm:$0xf]
    %v1397 = vld [vmem:[%s3 + $0x284] sm:$0xf]
    %v1398 = vld [vmem:[%s3 + $0x288] sm:$0xf]
    %v1399 = vld [vmem:[%s3 + $0x28c] sm:$0xf]
    %v1400 = vld [vmem:[%s3 + $0x290] sm:$0xf]
    %v1401 = vld [vmem:[%s3 + $0x294] sm:$0xf]
    %v1402 = vld [vmem:[%s3 + $0x298] sm:$0xf]
    %v1403 = vld [vmem:[%s3 + $0x29c] sm:$0xf]
    %v1404 = vld [vmem:[%s3 + $0x2a0] sm:$0xf]
    %v1405 = vld [vmem:[%s3 + $0x2a4] sm:$0xf]
    %v1406 = vld [vmem:[%s3 + $0x2a8] sm:$0xf]
    %v1407 = vld [vmem:[%s3 + $0x2ac] sm:$0xf]
    %v1408 = vld [vmem:[%s3 + $0x2b0] sm:$0xf]
    %v1409 = vld [vmem:[%s3 + $0x2b4] sm:$0xf]
    %v1410 = vld [vmem:[%s3 + $0x2b8] sm:$0xf]
    %v1411 = vld [vmem:[%s3 + $0x2bc] sm:$0xf]
    %v1412 = vld [vmem:[%s3 + $0x2c0] sm:$0xf]
    %v1413 = vld [vmem:[%s3 + $0x2c4] sm:$0xf]
    %v1414 = vld [vmem:[%s3 + $0x2c8] sm:$0xf]
    %v1415 = vld [vmem:[%s3 + $0x2cc] sm:$0xf]
    %v1416 = vld [vmem:[%s3 + $0x2d0] sm:$0xf]
    %v1417 = vld [vmem:[%s3 + $0x2d4] sm:$0xf]
    %v1418 = vld [vmem:[%s3 + $0x2d8] sm:$0xf]
    %v1419 = vld [vmem:[%s3 + $0x2dc] sm:$0xf]
    %v1420 = vld [vmem:[%s3 + $0x2e0] sm:$0xf]
    %v1421 = vld [vmem:[%s3 + $0x2e4] sm:$0xf]
    %v1422 = vld [vmem:[%s3 + $0x2e8] sm:$0xf]
    %v1423 = vld [vmem:[%s3 + $0x2ec] sm:$0xf]
    %v1424 = vld [vmem:[%s3 + $0x2f0] sm:$0xf]
    %v1425 = vld [vmem:[%s3 + $0x2f4] sm:$0xf]
    %v1426 = vld [vmem:[%s3 + $0x2f8] sm:$0xf]
    %v1427 = vld [vmem:[%s3 + $0x2fc] sm:$0xf]
    %v1428 = vld [vmem:[%s3 + $0x300] sm:$0xf]
    %v1429 = vld [vmem:[%s3 + $0x304] sm:$0xf]
    %v1430 = vld [vmem:[%s3 + $0x308] sm:$0xf]
    %v1431 = vld [vmem:[%s3 + $0x30c] sm:$0xf]
    %v1432 = vld [vmem:[%s3 + $0x310] sm:$0xf]
    %v1433 = vld [vmem:[%s3 + $0x314] sm:$0xf]
    %v1434 = vld [vmem:[%s3 + $0x318] sm:$0xf]
    %v1435 = vld [vmem:[%s3 + $0x31c] sm:$0xf]
    %v1436 = vld [vmem:[%s3 + $0x320] sm:$0xf]
    %v1437 = vld [vmem:[%s3 + $0x324] sm:$0xf]
    %v1438 = vld [vmem:[%s3 + $0x328] sm:$0xf]
    %v1439 = vld [vmem:[%s3 + $0x32c] sm:$0xf]
    %v1440 = vld [vmem:[%s3 + $0x330] sm:$0xf]
    %v1441 = vld [vmem:[%s3 + $0x334] sm:$0xf]
    %v1442 = vld [vmem:[%s3 + $0x338] sm:$0xf]
    %v1443 = vld [vmem:[%s3 + $0x33c] sm:$0xf]
    %v1444 = vld [vmem:[%s3 + $0x340] sm:$0xf]
    %v1445 = vld [vmem:[%s3 + $0x344] sm:$0xf]
    %v1446 = vld [vmem:[%s3 + $0x348] sm:$0xf]
    %v1447 = vld [vmem:[%s3 + $0x34c] sm:$0xf]
    %v1448 = vld [vmem:[%s3 + $0x350] sm:$0xf]
    %v1449 = vld [vmem:[%s3 + $0x354] sm:$0xf]
    %v1450 = vld [vmem:[%s3 + $0x358] sm:$0xf]
    %v1451 = vld [vmem:[%s3 + $0x35c] sm:$0xf]
    %v1452 = vld [vmem:[%s3 + $0x360] sm:$0xf]
    %v1453 = vld [vmem:[%s3 + $0x364] sm:$0xf]
    %v1454 = vld [vmem:[%s3 + $0x368] sm:$0xf]
    %v1455 = vld [vmem:[%s3 + $0x36c] sm:$0xf]
    %v1456 = vld [vmem:[%s3 + $0x370] sm:$0xf]
    %v1457 = vld [vmem:[%s3 + $0x374] sm:$0xf]
    %v1458 = vld [vmem:[%s3 + $0x378] sm:$0xf]
    %v1459 = vld [vmem:[%s3 + $0x37c] sm:$0xf]
    %v1460 = vld [vmem:[%s3 + $0x380] sm:$0xf]
    %v1461 = vld [vmem:[%s3 + $0x384] sm:$0xf]
    %v1462 = vld [vmem:[%s3 + $0x388] sm:$0xf]
    %v1463 = vld [vmem:[%s3 + $0x38c] sm:$0xf]
    %v1464 = vld [vmem:[%s3 + $0x390] sm:$0xf]
    %v1465 = vld [vmem:[%s3 + $0x394] sm:$0xf]
    %v1466 = vld [vmem:[%s3 + $0x398] sm:$0xf]
    %v1467 = vld [vmem:[%s3 + $0x39c] sm:$0xf]
    %v1468 = vld [vmem:[%s3 + $0x3a0] sm:$0xf]
    %v1469 = vld [vmem:[%s3 + $0x3a4] sm:$0xf]
    %v1470 = vld [vmem:[%s3 + $0x3a8] sm:$0xf]
    %v1471 = vld [vmem:[%s3 + $0x3ac] sm:$0xf]
    %v1472 = vld [vmem:[%s3 + $0x3b0] sm:$0xf]
    %v1473 = vld [vmem:[%s3 + $0x3b4] sm:$0xf]
    %v1474 = vld [vmem:[%s3 + $0x3b8] sm:$0xf]
    %v1475 = vld [vmem:[%s3 + $0x3bc] sm:$0xf]
    %v1476 = vld [vmem:[%s3 + $0x3c0] sm:$0xf]
    %v1477 = vld [vmem:[%s3 + $0x3c4] sm:$0xf]
    %v1478 = vld [vmem:[%s3 + $0x3c8] sm:$0xf]
    %v1479 = vld [vmem:[%s3 + $0x3cc] sm:$0xf]
    %v1480 = vld [vmem:[%s3 + $0x3d0] sm:$0xf]
    %v1481 = vld [vmem:[%s3 + $0x3d4] sm:$0xf]
    %v1482 = vld [vmem:[%s3 + $0x3d8] sm:$0xf]
    %v1483 = vld [vmem:[%s3 + $0x3dc] sm:$0xf]
    %v1484 = vld [vmem:[%s3 + $0x3e0] sm:$0xf]
    %v1485 = vld [vmem:[%s3 + $0x3e4] sm:$0xf]
    %v1486 = vld [vmem:[%s3 + $0x3e8] sm:$0xf]
    %v1487 = vld [vmem:[%s3 + $0x3ec] sm:$0xf]
    %v1488 = vld [vmem:[%s3 + $0x3f0] sm:$0xf]
    %v1489 = vld [vmem:[%s3 + $0x3f4] sm:$0xf]
    %v1490 = vld [vmem:[%s3 + $0x3f8] sm:$0xf]
    %v1491 = vld [vmem:[%s3 + $0x3fc] sm:$0xf]
    %v1492 = vld [vmem:[%s4] sm:$0x1]
    %v1494 = vlaneseq
    %v1495 = vshrl.u32 %v1494, 7
    %v1496 = vsub.s32 0, %v1495
    %v1497 = vrot.slane %v1492, %v1496
    %v1755 = vunpack.c.l.b16 %v1236
    %v1756 = vunpack.c.l.b16 %v1237
    %v1757 = vunpack.c.l.b16 %v1238
    %v1758 = vunpack.c.l.b16 %v1239
    %v1759 = vunpack.c.l.b16 %v1240
    %v1760 = vunpack.c.l.b16 %v1241
    %v1761 = vunpack.c.l.b16 %v1242
    %v1762 = vunpack.c.l.b16 %v1243
    %v1763 = vunpack.c.l.b16 %v1244
    %v1764 = vunpack.c.l.b16 %v1245
    %v1765 = vunpack.c.l.b16 %v1246
    %v1766 = vunpack.c.l.b16 %v1247
    %v1767 = vunpack.c.l.b16 %v1248
    %v1768 = vunpack.c.l.b16 %v1249
    %v1769 = vunpack.c.l.b16 %v1250
    %v1770 = vunpack.c.l.b16 %v1251
    %v1771 = vunpack.c.l.b16 %v1252
    %v1772 = vunpack.c.l.b16 %v1253
    %v1773 = vunpack.c.l.b16 %v1254
    %v1774 = vunpack.c.l.b16 %v1255
    %v1775 = vunpack.c.l.b16 %v1256
    %v1776 = vunpack.c.l.b16 %v1257
    %v1777 = vunpack.c.l.b16 %v1258
    %v1778 = vunpack.c.l.b16 %v1259
    %v1779 = vunpack.c.l.b16 %v1260
    %v1780 = vunpack.c.l.b16 %v1261
    %v1781 = vunpack.c.l.b16 %v1262
    %v1782 = vunpack.c.l.b16 %v1263
    %v1783 = vunpack.c.l.b16 %v1264
    %v1784 = vunpack.c.l.b16 %v1265
    %v1785 = vunpack.c.l.b16 %v1266
    %v1786 = vunpack.c.l.b16 %v1267
    %v1787 = vunpack.c.l.b16 %v1268
    %v1788 = vunpack.c.l.b16 %v1269
    %v1789 = vunpack.c.l.b16 %v1270
    %v1790 = vunpack.c.l.b16 %v1271
    %v1791 = vunpack.c.l.b16 %v1272
    %v1792 = vunpack.c.l.b16 %v1273
    %v1793 = vunpack.c.l.b16 %v1274
    %v1794 = vunpack.c.l.b16 %v1275
    %v1795 = vunpack.c.l.b16 %v1276
    %v1796 = vunpack.c.l.b16 %v1277
    %v1797 = vunpack.c.l.b16 %v1278
    %v1798 = vunpack.c.l.b16 %v1279
    %v1799 = vunpack.c.l.b16 %v1280
    %v1800 = vunpack.c.l.b16 %v1281
    %v1801 = vunpack.c.l.b16 %v1282
    %v1802 = vunpack.c.l.b16 %v1283
    %v1803 = vunpack.c.l.b16 %v1284
    %v1804 = vunpack.c.l.b16 %v1285
    %v1805 = vunpack.c.l.b16 %v1286
    %v1806 = vunpack.c.l.b16 %v1287
    %v1807 = vunpack.c.l.b16 %v1288
    %v1808 = vunpack.c.l.b16 %v1289
    %v1809 = vunpack.c.l.b16 %v1290
    %v1810 = vunpack.c.l.b16 %v1291
    %v1811 = vunpack.c.l.b16 %v1292
    %v1812 = vunpack.c.l.b16 %v1293
    %v1813 = vunpack.c.l.b16 %v1294
    %v1814 = vunpack.c.l.b16 %v1295
    %v1815 = vunpack.c.l.b16 %v1296
    %v1816 = vunpack.c.l.b16 %v1297
    %v1817 = vunpack.c.l.b16 %v1298
    %v1818 = vunpack.c.l.b16 %v1299
    %v1819 = vunpack.c.l.b16 %v1300
    %v1820 = vunpack.c.l.b16 %v1301
    %v1821 = vunpack.c.l.b16 %v1302
    %v1822 = vunpack.c.l.b16 %v1303
    %v1823 = vunpack.c.l.b16 %v1304
    %v1824 = vunpack.c.l.b16 %v1305
    %v1825 = vunpack.c.l.b16 %v1306
    %v1826 = vunpack.c.l.b16 %v1307
    %v1827 = vunpack.c.l.b16 %v1308
    %v1828 = vunpack.c.l.b16 %v1309
    %v1829 = vunpack.c.l.b16 %v1310
    %v1830 = vunpack.c.l.b16 %v1311
    %v1831 = vunpack.c.l.b16 %v1312
    %v1832 = vunpack.c.l.b16 %v1313
    %v1833 = vunpack.c.l.b16 %v1314
    %v1834 = vunpack.c.l.b16 %v1315
    %v1835 = vunpack.c.l.b16 %v1316
    %v1836 = vunpack.c.l.b16 %v1317
    %v1837 = vunpack.c.l.b16 %v1318
    %v1838 = vunpack.c.l.b16 %v1319
    %v1839 = vunpack.c.l.b16 %v1320
    %v1840 = vunpack.c.l.b16 %v1321
    %v1841 = vunpack.c.l.b16 %v1322
    %v1842 = vunpack.c.l.b16 %v1323
    %v1843 = vunpack.c.l.b16 %v1324
    %v1844 = vunpack.c.l.b16 %v1325
    %v1845 = vunpack.c.l.b16 %v1326
    %v1846 = vunpack.c.l.b16 %v1327
    %v1847 = vunpack.c.l.b16 %v1328
    %v1848 = vunpack.c.l.b16 %v1329
    %v1849 = vunpack.c.l.b16 %v1330
    %v1850 = vunpack.c.l.b16 %v1331
    %v1851 = vunpack.c.l.b16 %v1332
    %v1852 = vunpack.c.l.b16 %v1333
    %v1853 = vunpack.c.l.b16 %v1334
    %v1854 = vunpack.c.l.b16 %v1335
    %v1855 = vunpack.c.l.b16 %v1336
    %v1856 = vunpack.c.l.b16 %v1337
    %v1857 = vunpack.c.l.b16 %v1338
    %v1858 = vunpack.c.l.b16 %v1339
    %v1859 = vunpack.c.l.b16 %v1340
    %v1860 = vunpack.c.l.b16 %v1341
    %v1861 = vunpack.c.l.b16 %v1342
    %v1862 = vunpack.c.l.b16 %v1343
    %v1863 = vunpack.c.l.b16 %v1344
    %v1864 = vunpack.c.l.b16 %v1345
    %v1865 = vunpack.c.l.b16 %v1346
    %v1866 = vunpack.c.l.b16 %v1347
    %v1867 = vunpack.c.l.b16 %v1348
    %v1868 = vunpack.c.l.b16 %v1349
    %v1869 = vunpack.c.l.b16 %v1350
    %v1870 = vunpack.c.l.b16 %v1351
    %v1871 = vunpack.c.l.b16 %v1352
    %v1872 = vunpack.c.l.b16 %v1353
    %v1873 = vunpack.c.l.b16 %v1354
    %v1874 = vunpack.c.l.b16 %v1355
    %v1875 = vunpack.c.l.b16 %v1356
    %v1876 = vunpack.c.l.b16 %v1357
    %v1877 = vunpack.c.l.b16 %v1358
    %v1878 = vunpack.c.l.b16 %v1359
    %v1879 = vunpack.c.l.b16 %v1360
    %v1880 = vunpack.c.l.b16 %v1361
    %v1881 = vunpack.c.l.b16 %v1362
    %v1882 = vunpack.c.l.b16 %v1363
    %v1883 = vunpack.c.l.b16 %v1364
    %v1884 = vunpack.c.l.b16 %v1365
    %v1885 = vunpack.c.l.b16 %v1366
    %v1886 = vunpack.c.l.b16 %v1367
    %v1887 = vunpack.c.l.b16 %v1368
    %v1888 = vunpack.c.l.b16 %v1369
    %v1889 = vunpack.c.l.b16 %v1370
    %v1890 = vunpack.c.l.b16 %v1371
    %v1891 = vunpack.c.l.b16 %v1372
    %v1892 = vunpack.c.l.b16 %v1373
    %v1893 = vunpack.c.l.b16 %v1374
    %v1894 = vunpack.c.l.b16 %v1375
    %v1895 = vunpack.c.l.b16 %v1376
    %v1896 = vunpack.c.l.b16 %v1377
    %v1897 = vunpack.c.l.b16 %v1378
    %v1898 = vunpack.c.l.b16 %v1379
    %v1899 = vunpack.c.l.b16 %v1380
    %v1900 = vunpack.c.l.b16 %v1381
    %v1901 = vunpack.c.l.b16 %v1382
    %v1902 = vunpack.c.l.b16 %v1383
    %v1903 = vunpack.c.l.b16 %v1384
    %v1904 = vunpack.c.l.b16 %v1385
    %v1905 = vunpack.c.l.b16 %v1386
    %v1906 = vunpack.c.l.b16 %v1387
    %v1907 = vunpack.c.l.b16 %v1388
    %v1908 = vunpack.c.l.b16 %v1389
    %v1909 = vunpack.c.l.b16 %v1390
    %v1910 = vunpack.c.l.b16 %v1391
    %v1911 = vunpack.c.l.b16 %v1392
    %v1912 = vunpack.c.l.b16 %v1393
    %v1913 = vunpack.c.l.b16 %v1394
    %v1914 = vunpack.c.l.b16 %v1395
    %v1915 = vunpack.c.l.b16 %v1396
    %v1916 = vunpack.c.l.b16 %v1397
    %v1917 = vunpack.c.l.b16 %v1398
    %v1918 = vunpack.c.l.b16 %v1399
    %v1919 = vunpack.c.l.b16 %v1400
    %v1920 = vunpack.c.l.b16 %v1401
    %v1921 = vunpack.c.l.b16 %v1402
    %v1922 = vunpack.c.l.b16 %v1403
    %v1923 = vunpack.c.l.b16 %v1404
    %v1924 = vunpack.c.l.b16 %v1405
    %v1925 = vunpack.c.l.b16 %v1406
    %v1926 = vunpack.c.l.b16 %v1407
    %v1927 = vunpack.c.l.b16 %v1408
    %v1928 = vunpack.c.l.b16 %v1409
    %v1929 = vunpack.c.l.b16 %v1410
    %v1930 = vunpack.c.l.b16 %v1411
    %v1931 = vunpack.c.l.b16 %v1412
    %v1932 = vunpack.c.l.b16 %v1413
    %v1933 = vunpack.c.l.b16 %v1414
    %v1934 = vunpack.c.l.b16 %v1415
    %v1935 = vunpack.c.l.b16 %v1416
    %v1936 = vunpack.c.l.b16 %v1417
    %v1937 = vunpack.c.l.b16 %v1418
    %v1938 = vunpack.c.l.b16 %v1419
    %v1939 = vunpack.c.l.b16 %v1420
    %v1940 = vunpack.c.l.b16 %v1421
    %v1941 = vunpack.c.l.b16 %v1422
    %v1942 = vunpack.c.l.b16 %v1423
    %v1943 = vunpack.c.l.b16 %v1424
    %v1944 = vunpack.c.l.b16 %v1425
    %v1945 = vunpack.c.l.b16 %v1426
    %v1946 = vunpack.c.l.b16 %v1427
    %v1947 = vunpack.c.l.b16 %v1428
    %v1948 = vunpack.c.l.b16 %v1429
    %v1949 = vunpack.c.l.b16 %v1430
    %v1950 = vunpack.c.l.b16 %v1431
    %v1951 = vunpack.c.l.b16 %v1432
    %v1952 = vunpack.c.l.b16 %v1433
    %v1953 = vunpack.c.l.b16 %v1434
    %v1954 = vunpack.c.l.b16 %v1435
    %v1955 = vunpack.c.l.b16 %v1436
    %v1956 = vunpack.c.l.b16 %v1437
    %v1957 = vunpack.c.l.b16 %v1438
    %v1958 = vunpack.c.l.b16 %v1439
    %v1959 = vunpack.c.l.b16 %v1440
    %v1960 = vunpack.c.l.b16 %v1441
    %v1961 = vunpack.c.l.b16 %v1442
    %v1962 = vunpack.c.l.b16 %v1443
    %v1963 = vunpack.c.l.b16 %v1444
    %v1964 = vunpack.c.l.b16 %v1445
    %v1965 = vunpack.c.l.b16 %v1446
    %v1966 = vunpack.c.l.b16 %v1447
    %v1967 = vunpack.c.l.b16 %v1448
    %v1968 = vunpack.c.l.b16 %v1449
    %v1969 = vunpack.c.l.b16 %v1450
    %v1970 = vunpack.c.l.b16 %v1451
    %v1971 = vunpack.c.l.b16 %v1452
    %v1972 = vunpack.c.l.b16 %v1453
    %v1973 = vunpack.c.l.b16 %v1454
    %v1974 = vunpack.c.l.b16 %v1455
    %v1975 = vunpack.c.l.b16 %v1456
    %v1976 = vunpack.c.l.b16 %v1457
    %v1977 = vunpack.c.l.b16 %v1458
    %v1978 = vunpack.c.l.b16 %v1459
    %v1979 = vunpack.c.l.b16 %v1460
    %v1980 = vunpack.c.l.b16 %v1461
    %v1981 = vunpack.c.l.b16 %v1462
    %v1982 = vunpack.c.l.b16 %v1463
    %v1983 = vunpack.c.l.b16 %v1464
    %v1984 = vunpack.c.l.b16 %v1465
    %v1985 = vunpack.c.l.b16 %v1466
    %v1986 = vunpack.c.l.b16 %v1467
    %v1987 = vunpack.c.l.b16 %v1468
    %v1988 = vunpack.c.l.b16 %v1469
    %v1989 = vunpack.c.l.b16 %v1470
    %v1990 = vunpack.c.l.b16 %v1471
    %v1991 = vunpack.c.l.b16 %v1472
    %v1992 = vunpack.c.l.b16 %v1473
    %v1993 = vunpack.c.l.b16 %v1474
    %v1994 = vunpack.c.l.b16 %v1475
    %v1995 = vunpack.c.l.b16 %v1476
    %v1996 = vunpack.c.l.b16 %v1477
    %v1997 = vunpack.c.l.b16 %v1478
    %v1998 = vunpack.c.l.b16 %v1479
    %v1999 = vunpack.c.l.b16 %v1480
    %v2000 = vunpack.c.l.b16 %v1481
    %v2001 = vunpack.c.l.b16 %v1482
    %v2002 = vunpack.c.l.b16 %v1483
    %v2003 = vunpack.c.l.b16 %v1484
    %v2004 = vunpack.c.l.b16 %v1485
    %v2005 = vunpack.c.l.b16 %v1486
    %v2006 = vunpack.c.l.b16 %v1487
    %v2007 = vunpack.c.l.b16 %v1488
    %v2008 = vunpack.c.l.b16 %v1489
    %v2009 = vunpack.c.l.b16 %v1490
    %v2010 = vunpack.c.l.b16 %v1491
    %v2011 = vpack.c.b16 %v1756, %v1755
    %v2012 = vpack.c.b16 %v1758, %v1757
    %v2013 = vpack.c.b16 %v1760, %v1759
    %v2014 = vpack.c.b16 %v1762, %v1761
    %v2015 = vpack.c.b16 %v1764, %v1763
    %v2016 = vpack.c.b16 %v1766, %v1765
    %v2017 = vpack.c.b16 %v1768, %v1767
    %v2018 = vpack.c.b16 %v1770, %v1769
    %v2019 = vpack.c.b16 %v1772, %v1771
    %v2020 = vpack.c.b16 %v1774, %v1773
    %v2021 = vpack.c.b16 %v1776, %v1775
    %v2022 = vpack.c.b16 %v1778, %v1777
    %v2023 = vpack.c.b16 %v1780, %v1779
    %v2024 = vpack.c.b16 %v1782, %v1781
    %v2025 = vpack.c.b16 %v1784, %v1783
    %v2026 = vpack.c.b16 %v1786, %v1785
    %v2027 = vpack.c.b16 %v1788, %v1787
    %v2028 = vpack.c.b16 %v1790, %v1789
    %v2029 = vpack.c.b16 %v1792, %v1791
    %v2030 = vpack.c.b16 %v1794, %v1793
    %v2031 = vpack.c.b16 %v1796, %v1795
    %v2032 = vpack.c.b16 %v1798, %v1797
    %v2033 = vpack.c.b16 %v1800, %v1799
    %v2034 = vpack.c.b16 %v1802, %v1801
    %v2035 = vpack.c.b16 %v1804, %v1803
    %v2036 = vpack.c.b16 %v1806, %v1805
    %v2037 = vpack.c.b16 %v1808, %v1807
    %v2038 = vpack.c.b16 %v1810, %v1809
    %v2039 = vpack.c.b16 %v1812, %v1811
    %v2040 = vpack.c.b16 %v1814, %v1813
    %v2041 = vpack.c.b16 %v1816, %v1815
    %v2042 = vpack.c.b16 %v1818, %v1817
    %v2043 = vpack.c.b16 %v1820, %v1819
    %v2044 = vpack.c.b16 %v1822, %v1821
    %v2045 = vpack.c.b16 %v1824, %v1823
    %v2046 = vpack.c.b16 %v1826, %v1825
    %v2047 = vpack.c.b16 %v1828, %v1827
    %v2048 = vpack.c.b16 %v1830, %v1829
    %v2049 = vpack.c.b16 %v1832, %v1831
    %v2050 = vpack.c.b16 %v1834, %v1833
    %v2051 = vpack.c.b16 %v1836, %v1835
    %v2052 = vpack.c.b16 %v1838, %v1837
    %v2053 = vpack.c.b16 %v1840, %v1839
    %v2054 = vpack.c.b16 %v1842, %v1841
    %v2055 = vpack.c.b16 %v1844, %v1843
    %v2056 = vpack.c.b16 %v1846, %v1845
    %v2057 = vpack.c.b16 %v1848, %v1847
    %v2058 = vpack.c.b16 %v1850, %v1849
    %v2059 = vpack.c.b16 %v1852, %v1851
    %v2060 = vpack.c.b16 %v1854, %v1853
    %v2061 = vpack.c.b16 %v1856, %v1855
    %v2062 = vpack.c.b16 %v1858, %v1857
    %v2063 = vpack.c.b16 %v1860, %v1859
    %v2064 = vpack.c.b16 %v1862, %v1861
    %v2065 = vpack.c.b16 %v1864, %v1863
    %v2066 = vpack.c.b16 %v1866, %v1865
    %v2067 = vpack.c.b16 %v1868, %v1867
    %v2068 = vpack.c.b16 %v1870, %v1869
    %v2069 = vpack.c.b16 %v1872, %v1871
    %v2070 = vpack.c.b16 %v1874, %v1873
    %v2071 = vpack.c.b16 %v1876, %v1875
    %v2072 = vpack.c.b16 %v1878, %v1877
    %v2073 = vpack.c.b16 %v1880, %v1879
    %v2074 = vpack.c.b16 %v1882, %v1881
    %v2075 = vpack.c.b16 %v1884, %v1883
    %v2076 = vpack.c.b16 %v1886, %v1885
    %v2077 = vpack.c.b16 %v1888, %v1887
    %v2078 = vpack.c.b16 %v1890, %v1889
    %v2079 = vpack.c.b16 %v1892, %v1891
    %v2080 = vpack.c.b16 %v1894, %v1893
    %v2081 = vpack.c.b16 %v1896, %v1895
    %v2082 = vpack.c.b16 %v1898, %v1897
    %v2083 = vpack.c.b16 %v1900, %v1899
    %v2084 = vpack.c.b16 %v1902, %v1901
    %v2085 = vpack.c.b16 %v1904, %v1903
    %v2086 = vpack.c.b16 %v1906, %v1905
    %v2087 = vpack.c.b16 %v1908, %v1907
    %v2088 = vpack.c.b16 %v1910, %v1909
    %v2089 = vpack.c.b16 %v1912, %v1911
    %v2090 = vpack.c.b16 %v1914, %v1913
    %v2091 = vpack.c.b16 %v1916, %v1915
    %v2092 = vpack.c.b16 %v1918, %v1917
    %v2093 = vpack.c.b16 %v1920, %v1919
    %v2094 = vpack.c.b16 %v1922, %v1921
    %v2095 = vpack.c.b16 %v1924, %v1923
    %v2096 = vpack.c.b16 %v1926, %v1925
    %v2097 = vpack.c.b16 %v1928, %v1927
    %v2098 = vpack.c.b16 %v1930, %v1929
    %v2099 = vpack.c.b16 %v1932, %v1931
    %v2100 = vpack.c.b16 %v1934, %v1933
    %v2101 = vpack.c.b16 %v1936, %v1935
    %v2102 = vpack.c.b16 %v1938, %v1937
    %v2103 = vpack.c.b16 %v1940, %v1939
    %v2104 = vpack.c.b16 %v1942, %v1941
    %v2105 = vpack.c.b16 %v1944, %v1943
    %v2106 = vpack.c.b16 %v1946, %v1945
    %v2107 = vpack.c.b16 %v1948, %v1947
    %v2108 = vpack.c.b16 %v1950, %v1949
    %v2109 = vpack.c.b16 %v1952, %v1951
    %v2110 = vpack.c.b16 %v1954, %v1953
    %v2111 = vpack.c.b16 %v1956, %v1955
    %v2112 = vpack.c.b16 %v1958, %v1957
    %v2113 = vpack.c.b16 %v1960, %v1959
    %v2114 = vpack.c.b16 %v1962, %v1961
    %v2115 = vpack.c.b16 %v1964, %v1963
    %v2116 = vpack.c.b16 %v1966, %v1965
    %v2117 = vpack.c.b16 %v1968, %v1967
    %v2118 = vpack.c.b16 %v1970, %v1969
    %v2119 = vpack.c.b16 %v1972, %v1971
    %v2120 = vpack.c.b16 %v1974, %v1973
    %v2121 = vpack.c.b16 %v1976, %v1975
    %v2122 = vpack.c.b16 %v1978, %v1977
    %v2123 = vpack.c.b16 %v1980, %v1979
    %v2124 = vpack.c.b16 %v1982, %v1981
    %v2125 = vpack.c.b16 %v1984, %v1983
    %v2126 = vpack.c.b16 %v1986, %v1985
    %v2127 = vpack.c.b16 %v1988, %v1987
    %v2128 = vpack.c.b16 %v1990, %v1989
    %v2129 = vpack.c.b16 %v1992, %v1991
    %v2130 = vpack.c.b16 %v1994, %v1993
    %v2131 = vpack.c.b16 %v1996, %v1995
    %v2132 = vpack.c.b16 %v1998, %v1997
    %v2133 = vpack.c.b16 %v2000, %v1999
    %v2134 = vpack.c.b16 %v2002, %v2001
    %v2135 = vpack.c.b16 %v2004, %v2003
    %v2136 = vpack.c.b16 %v2006, %v2005
    %v2137 = vpack.c.b16 %v2008, %v2007
    %v2138 = vpack.c.b16 %v2010, %v2009
    %2267 = vmatprep.subr.bf16.mxu0 0
    %2268 = vmatpush1.bf16.msra.mxu0 %v2011
    %2269 = vmatprep.subr.bf16.mxu0 0
    %2270 = vmatpush1.bf16.msra.mxu0 %v2012
    %2271 = vmatprep.subr.bf16.mxu0 0
    %2272 = vmatpush1.bf16.msra.mxu0 %v2013
    %2273 = vmatprep.subr.bf16.mxu0 0
    %2274 = vmatpush1.bf16.msra.mxu0 %v2014
    %2275 = vmatprep.subr.bf16.mxu0 0
    %2276 = vmatpush1.bf16.msra.mxu0 %v2015
    %2277 = vmatprep.subr.bf16.mxu0 0
    %2278 = vmatpush1.bf16.msra.mxu0 %v2016
    %2279 = vmatprep.subr.bf16.mxu0 0
    %2280 = vmatpush1.bf16.msra.mxu0 %v2017
    %2281 = vmatprep.subr.bf16.mxu0 0
    %2282 = vmatpush1.bf16.msra.mxu0 %v2018
    %2283 = vmatprep.subr.bf16.mxu0 0
    %2284 = vmatpush1.bf16.msra.mxu0 %v2019
    %2285 = vmatprep.subr.bf16.mxu0 0
    %2286 = vmatpush1.bf16.msra.mxu0 %v2020
    %2287 = vmatprep.subr.bf16.mxu0 0
    %2288 = vmatpush1.bf16.msra.mxu0 %v2021
    %2289 = vmatprep.subr.bf16.mxu0 0
    %2290 = vmatpush1.bf16.msra.mxu0 %v2022
    %2291 = vmatprep.subr.bf16.mxu0 0
    %2292 = vmatpush1.bf16.msra.mxu0 %v2023
    %2293 = vmatprep.subr.bf16.mxu0 0
    %2294 = vmatpush1.bf16.msra.mxu0 %v2024
    %2295 = vmatprep.subr.bf16.mxu0 0
    %2296 = vmatpush1.bf16.msra.mxu0 %v2025
    %2297 = vmatprep.subr.bf16.mxu0 0
    %2298 = vmatpush1.bf16.msra.mxu0 %v2026
    %2299 = vmatprep.mubr.bf16.mxu0 %v1221
    %2300 = vmatmul.mubr.bf16.gmra.mrb[0].mxu0 %v1220
    %v2301 = vpop.f32.mrb[0].mxu0
    %v2302 = vadd.f32 %v1497, %v2301
    %v2303 = vpop.f32.mrb[0].mxu0
    %v2304 = vpop.f32.mrb[0].mxu0
    %v2305 = vpop.f32.mrb[0].mxu0
    %2306 = vdwg.mxu0
    %2307 = vmatprep.subr.bf16.mxu0 0
    %2308 = vmatpush1.bf16.msra.mxu0 %v2027
    %2309 = vmatprep.subr.bf16.mxu0 0
    %2310 = vmatpush1.bf16.msra.mxu0 %v2028
    %2311 = vmatprep.subr.bf16.mxu0 0
    %2312 = vmatpush1.bf16.msra.mxu0 %v2029
    %2313 = vmatprep.subr.bf16.mxu0 0
    %2314 = vmatpush1.bf16.msra.mxu0 %v2030
    %2315 = vmatprep.subr.bf16.mxu0 0
    %2316 = vmatpush1.bf16.msra.mxu0 %v2031
    %2317 = vmatprep.subr.bf16.mxu0 0
    %2318 = vmatpush1.bf16.msra.mxu0 %v2032
    %2319 = vmatprep.subr.bf16.mxu0 0
    %2320 = vmatpush1.bf16.msra.mxu0 %v2033
    %2321 = vmatprep.subr.bf16.mxu0 0
    %2322 = vmatpush1.bf16.msra.mxu0 %v2034
    %2323 = vmatprep.subr.bf16.mxu0 0
    %2324 = vmatpush1.bf16.msra.mxu0 %v2035
    %2325 = vmatprep.subr.bf16.mxu0 0
    %2326 = vmatpush1.bf16.msra.mxu0 %v2036
    %2327 = vmatprep.subr.bf16.mxu0 0
    %2328 = vmatpush1.bf16.msra.mxu0 %v2037
    %2329 = vmatprep.subr.bf16.mxu0 0
    %2330 = vmatpush1.bf16.msra.mxu0 %v2038
    %2331 = vmatprep.subr.bf16.mxu0 0
    %2332 = vmatpush1.bf16.msra.mxu0 %v2039
    %2333 = vmatprep.subr.bf16.mxu0 0
    %2334 = vmatpush1.bf16.msra.mxu0 %v2040
    %2335 = vmatprep.subr.bf16.mxu0 0
    %2336 = vmatpush1.bf16.msra.mxu0 %v2041
    %2337 = vmatprep.subr.bf16.mxu0 0
    %2338 = vmatpush1.bf16.msra.mxu0 %v2042
    %2339 = vmatprep.mubr.bf16.mxu0 %v1223
    %2340 = vmatmul.mubr.bf16.gmra.mrb[0].mxu0 %v1222
    %v2341 = vpop.f32.mrb[0].mxu0
    %v2342 = vadd.f32 %v2302, %v2341
    %v2343 = vpop.f32.mrb[0].mxu0
    %v2344 = vpop.f32.mrb[0].mxu0
    %v2345 = vpop.f32.mrb[0].mxu0
    %2346 = vdwg.mxu0
    %2347 = vmatprep.subr.bf16.mxu0 0
    %2348 = vmatpush1.bf16.msra.mxu0 %v2043
    %2349 = vmatprep.subr.bf16.mxu0 0
    %2350 = vmatpush1.bf16.msra.mxu0 %v2044
    %2351 = vmatprep.subr.bf16.mxu0 0
    %2352 = vmatpush1.bf16.msra.mxu0 %v2045
    %2353 = vmatprep.subr.bf16.mxu0 0
    %2354 = vmatpush1.bf16.msra.mxu0 %v2046
    %2355 = vmatprep.subr.bf16.mxu0 0
    %2356 = vmatpush1.bf16.msra.mxu0 %v2047
    %2357 = vmatprep.subr.bf16.mxu0 0
    %2358 = vmatpush1.bf16.msra.mxu0 %v2048
    %2359 = vmatprep.subr.bf16.mxu0 0
    %2360 = vmatpush1.bf16.msra.mxu0 %v2049
    %2361 = vmatprep.subr.bf16.mxu0 0
    %2362 = vmatpush1.bf16.msra.mxu0 %v2050
    %2363 = vmatprep.subr.bf16.mxu0 0
    %2364 = vmatpush1.bf16.msra.mxu0 %v2051
    %2365 = vmatprep.subr.bf16.mxu0 0
    %2366 = vmatpush1.bf16.msra.mxu0 %v2052
    %2367 = vmatprep.subr.bf16.mxu0 0
    %2368 = vmatpush1.bf16.msra.mxu0 %v2053
    %2369 = vmatprep.subr.bf16.mxu0 0
    %2370 = vmatpush1.bf16.msra.mxu0 %v2054
    %2371 = vmatprep.subr.bf16.mxu0 0
    %2372 = vmatpush1.bf16.msra.mxu0 %v2055
    %2373 = vmatprep.subr.bf16.mxu0 0
    %2374 = vmatpush1.bf16.msra.mxu0 %v2056
    %2375 = vmatprep.subr.bf16.mxu0 0
    %2376 = vmatpush1.bf16.msra.mxu0 %v2057
    %2377 = vmatprep.subr.bf16.mxu0 0
    %2378 = vmatpush1.bf16.msra.mxu0 %v2058
    %2379 = vmatprep.mubr.bf16.mxu0 %v1225
    %2380 = vmatmul.mubr.bf16.gmra.mrb[0].mxu0 %v1224
    %v2381 = vpop.f32.mrb[0].mxu0
    %v2382 = vadd.f32 %v2342, %v2381
    %v2383 = vpop.f32.mrb[0].mxu0
    %v2384 = vpop.f32.mrb[0].mxu0
    %v2385 = vpop.f32.mrb[0].mxu0
    %2386 = vdwg.mxu0
    %2387 = vmatprep.subr.bf16.mxu0 0
    %2388 = vmatpush1.bf16.msra.mxu0 %v2059
    %2389 = vmatprep.subr.bf16.mxu0 0
    %2390 = vmatpush1.bf16.msra.mxu0 %v2060
    %2391 = vmatprep.subr.bf16.mxu0 0
    %2392 = vmatpush1.bf16.msra.mxu0 %v2061
    %2393 = vmatprep.subr.bf16.mxu0 0
    %2394 = vmatpush1.bf16.msra.mxu0 %v2062
    %2395 = vmatprep.subr.bf16.mxu0 0
    %2396 = vmatpush1.bf16.msra.mxu0 %v2063
    %2397 = vmatprep.subr.bf16.mxu0 0
    %2398 = vmatpush1.bf16.msra.mxu0 %v2064
    %2399 = vmatprep.subr.bf16.mxu0 0
    %2400 = vmatpush1.bf16.msra.mxu0 %v2065
    %2401 = vmatprep.subr.bf16.mxu0 0
    %2402 = vmatpush1.bf16.msra.mxu0 %v2066
    %2403 = vmatprep.subr.bf16.mxu0 0
    %2404 = vmatpush1.bf16.msra.mxu0 %v2067
    %2405 = vmatprep.subr.bf16.mxu0 0
    %2406 = vmatpush1.bf16.msra.mxu0 %v2068
    %2407 = vmatprep.subr.bf16.mxu0 0
    %2408 = vmatpush1.bf16.msra.mxu0 %v2069
    %2409 = vmatprep.subr.bf16.mxu0 0
    %2410 = vmatpush1.bf16.msra.mxu0 %v2070
    %2411 = vmatprep.subr.bf16.mxu0 0
    %2412 = vmatpush1.bf16.msra.mxu0 %v2071
    %2413 = vmatprep.subr.bf16.mxu0 0
    %2414 = vmatpush1.bf16.msra.mxu0 %v2072
    %2415 = vmatprep.subr.bf16.mxu0 0
    %2416 = vmatpush1.bf16.msra.mxu0 %v2073
    %2417 = vmatprep.subr.bf16.mxu0 0
    %2418 = vmatpush1.bf16.msra.mxu0 %v2074
    %2419 = vmatprep.mubr.bf16.mxu0 %v1227
    %2420 = vmatmul.mubr.bf16.gmra.mrb[0].mxu0 %v1226
    %v2421 = vpop.f32.mrb[0].mxu0
    %v2422 = vadd.f32 %v2382, %v2421
    %v2423 = vpop.f32.mrb[0].mxu0
    %v2424 = vpop.f32.mrb[0].mxu0
    %v2425 = vpop.f32.mrb[0].mxu0
    %2426 = vdwg.mxu0
    %2427 = vmatprep.subr.bf16.mxu0 0
    %2428 = vmatpush1.bf16.msra.mxu0 %v2075
    %2429 = vmatprep.subr.bf16.mxu0 0
    %2430 = vmatpush1.bf16.msra.mxu0 %v2076
    %2431 = vmatprep.subr.bf16.mxu0 0
    %2432 = vmatpush1.bf16.msra.mxu0 %v2077
    %2433 = vmatprep.subr.bf16.mxu0 0
    %2434 = vmatpush1.bf16.msra.mxu0 %v2078
    %2435 = vmatprep.subr.bf16.mxu0 0
    %2436 = vmatpush1.bf16.msra.mxu0 %v2079
    %2437 = vmatprep.subr.bf16.mxu0 0
    %2438 = vmatpush1.bf16.msra.mxu0 %v2080
    %2439 = vmatprep.subr.bf16.mxu0 0
    %2440 = vmatpush1.bf16.msra.mxu0 %v2081
    %2441 = vmatprep.subr.bf16.mxu0 0
    %2442 = vmatpush1.bf16.msra.mxu0 %v2082
    %2443 = vmatprep.subr.bf16.mxu0 0
    %2444 = vmatpush1.bf16.msra.mxu0 %v2083
    %2445 = vmatprep.subr.bf16.mxu0 0
    %2446 = vmatpush1.bf16.msra.mxu0 %v2084
    %2447 = vmatprep.subr.bf16.mxu0 0
    %2448 = vmatpush1.bf16.msra.mxu0 %v2085
    %2449 = vmatprep.subr.bf16.mxu0 0
    %2450 = vmatpush1.bf16.msra.mxu0 %v2086
    %2451 = vmatprep.subr.bf16.mxu0 0
    %2452 = vmatpush1.bf16.msra.mxu0 %v2087
    %2453 = vmatprep.subr.bf16.mxu0 0
    %2454 = vmatpush1.bf16.msra.mxu0 %v2088
    %2455 = vmatprep.subr.bf16.mxu0 0
    %2456 = vmatpush1.bf16.msra.mxu0 %v2089
    %2457 = vmatprep.subr.bf16.mxu0 0
    %2458 = vmatpush1.bf16.msra.mxu0 %v2090
    %2459 = vmatprep.mubr.bf16.mxu0 %v1229
    %2460 = vmatmul.mubr.bf16.gmra.mrb[0].mxu0 %v1228
    %v2461 = vpop.f32.mrb[0].mxu0
    %v2462 = vadd.f32 %v2422, %v2461
    %v2463 = vpop.f32.mrb[0].mxu0
    %v2464 = vpop.f32.mrb[0].mxu0
    %v2465 = vpop.f32.mrb[0].mxu0
    %2466 = vdwg.mxu0
    %2467 = vmatprep.subr.bf16.mxu0 0
    %2468 = vmatpush1.bf16.msra.mxu0 %v2091
    %2469 = vmatprep.subr.bf16.mxu0 0
    %2470 = vmatpush1.bf16.msra.mxu0 %v2092
    %2471 = vmatprep.subr.bf16.mxu0 0
    %2472 = vmatpush1.bf16.msra.mxu0 %v2093
    %2473 = vmatprep.subr.bf16.mxu0 0
    %2474 = vmatpush1.bf16.msra.mxu0 %v2094
    %2475 = vmatprep.subr.bf16.mxu0 0
    %2476 = vmatpush1.bf16.msra.mxu0 %v2095
    %2477 = vmatprep.subr.bf16.mxu0 0
    %2478 = vmatpush1.bf16.msra.mxu0 %v2096
    %2479 = vmatprep.subr.bf16.mxu0 0
    %2480 = vmatpush1.bf16.msra.mxu0 %v2097
    %2481 = vmatprep.subr.bf16.mxu0 0
    %2482 = vmatpush1.bf16.msra.mxu0 %v2098
    %2483 = vmatprep.subr.bf16.mxu0 0
    %2484 = vmatpush1.bf16.msra.mxu0 %v2099
    %2485 = vmatprep.subr.bf16.mxu0 0
    %2486 = vmatpush1.bf16.msra.mxu0 %v2100
    %2487 = vmatprep.subr.bf16.mxu0 0
    %2488 = vmatpush1.bf16.msra.mxu0 %v2101
    %2489 = vmatprep.subr.bf16.mxu0 0
    %2490 = vmatpush1.bf16.msra.mxu0 %v2102
    %2491 = vmatprep.subr.bf16.mxu0 0
    %2492 = vmatpush1.bf16.msra.mxu0 %v2103
    %2493 = vmatprep.subr.bf16.mxu0 0
    %2494 = vmatpush1.bf16.msra.mxu0 %v2104
    %2495 = vmatprep.subr.bf16.mxu0 0
    %2496 = vmatpush1.bf16.msra.mxu0 %v2105
    %2497 = vmatprep.subr.bf16.mxu0 0
    %2498 = vmatpush1.bf16.msra.mxu0 %v2106
    %2499 = vmatprep.mubr.bf16.mxu0 %v1231
    %2500 = vmatmul.mubr.bf16.gmra.mrb[0].mxu0 %v1230
    %v2501 = vpop.f32.mrb[0].mxu0
    %v2502 = vadd.f32 %v2462, %v2501
    %v2503 = vpop.f32.mrb[0].mxu0
    %v2504 = vpop.f32.mrb[0].mxu0
    %v2505 = vpop.f32.mrb[0].mxu0
    %2506 = vdwg.mxu0
    %2507 = vmatprep.subr.bf16.mxu0 0
    %2508 = vmatpush1.bf16.msra.mxu0 %v2107
    %2509 = vmatprep.subr.bf16.mxu0 0
    %2510 = vmatpush1.bf16.msra.mxu0 %v2108
    %2511 = vmatprep.subr.bf16.mxu0 0
    %2512 = vmatpush1.bf16.msra.mxu0 %v2109
    %2513 = vmatprep.subr.bf16.mxu0 0
    %2514 = vmatpush1.bf16.msra.mxu0 %v2110
    %2515 = vmatprep.subr.bf16.mxu0 0
    %2516 = vmatpush1.bf16.msra.mxu0 %v2111
    %2517 = vmatprep.subr.bf16.mxu0 0
    %2518 = vmatpush1.bf16.msra.mxu0 %v2112
    %2519 = vmatprep.subr.bf16.mxu0 0
    %2520 = vmatpush1.bf16.msra.mxu0 %v2113
    %2521 = vmatprep.subr.bf16.mxu0 0
    %2522 = vmatpush1.bf16.msra.mxu0 %v2114
    %2523 = vmatprep.subr.bf16.mxu0 0
    %2524 = vmatpush1.bf16.msra.mxu0 %v2115
    %2525 = vmatprep.subr.bf16.mxu0 0
    %2526 = vmatpush1.bf16.msra.mxu0 %v2116
    %2527 = vmatprep.subr.bf16.mxu0 0
    %2528 = vmatpush1.bf16.msra.mxu0 %v2117
    %2529 = vmatprep.subr.bf16.mxu0 0
    %2530 = vmatpush1.bf16.msra.mxu0 %v2118
    %2531 = vmatprep.subr.bf16.mxu0 0
    %2532 = vmatpush1.bf16.msra.mxu0 %v2119
    %2533 = vmatprep.subr.bf16.mxu0 0
    %2534 = vmatpush1.bf16.msra.mxu0 %v2120
    %2535 = vmatprep.subr.bf16.mxu0 0
    %2536 = vmatpush1.bf16.msra.mxu0 %v2121
    %2537 = vmatprep.subr.bf16.mxu0 0
    %2538 = vmatpush1.bf16.msra.mxu0 %v2122
    %2539 = vmatprep.mubr.bf16.mxu0 %v1233
    %2540 = vmatmul.mubr.bf16.gmra.mrb[0].mxu0 %v1232
    %v2541 = vpop.f32.mrb[0].mxu0
    %v2542 = vadd.f32 %v2502, %v2541
    %v2543 = vpop.f32.mrb[0].mxu0
    %v2544 = vpop.f32.mrb[0].mxu0
    %v2545 = vpop.f32.mrb[0].mxu0
    %2546 = vdwg.mxu0
    %2547 = vmatprep.subr.bf16.mxu0 0
    %2548 = vmatpush1.bf16.msra.mxu0 %v2123
    %2549 = vmatprep.subr.bf16.mxu0 0
    %2550 = vmatpush1.bf16.msra.mxu0 %v2124
    %2551 = vmatprep.subr.bf16.mxu0 0
    %2552 = vmatpush1.bf16.msra.mxu0 %v2125
    %2553 = vmatprep.subr.bf16.mxu0 0
    %2554 = vmatpush1.bf16.msra.mxu0 %v2126
    %2555 = vmatprep.subr.bf16.mxu0 0
    %2556 = vmatpush1.bf16.msra.mxu0 %v2127
    %2557 = vmatprep.subr.bf16.mxu0 0
    %2558 = vmatpush1.bf16.msra.mxu0 %v2128
    %2559 = vmatprep.subr.bf16.mxu0 0
    %2560 = vmatpush1.bf16.msra.mxu0 %v2129
    %2561 = vmatprep.subr.bf16.mxu0 0
    %2562 = vmatpush1.bf16.msra.mxu0 %v2130
    %2563 = vmatprep.subr.bf16.mxu0 0
    %2564 = vmatpush1.bf16.msra.mxu0 %v2131
    %2565 = vmatprep.subr.bf16.mxu0 0
    %2566 = vmatpush1.bf16.msra.mxu0 %v2132
    %2567 = vmatprep.subr.bf16.mxu0 0
    %2568 = vmatpush1.bf16.msra.mxu0 %v2133
    %2569 = vmatprep.subr.bf16.mxu0 0
    %2570 = vmatpush1.bf16.msra.mxu0 %v2134
    %2571 = vmatprep.subr.bf16.mxu0 0
    %2572 = vmatpush1.bf16.msra.mxu0 %v2135
    %2573 = vmatprep.subr.bf16.mxu0 0
    %2574 = vmatpush1.bf16.msra.mxu0 %v2136
    %2575 = vmatprep.subr.bf16.mxu0 0
    %2576 = vmatpush1.bf16.msra.mxu0 %v2137
    %2577 = vmatprep.subr.bf16.mxu0 0
    %2578 = vmatpush1.bf16.msra.mxu0 %v2138
    %2579 = vmatprep.mubr.bf16.mxu0 %v1235
    %2580 = vmatmul.mubr.bf16.gmra.mrb[0].mxu0 %v1234
    %v2581 = vpop.f32.mrb[0].mxu0
    %v2582 = vadd.f32 %v2542, %v2581
    %v2583 = vpop.f32.mrb[0].mxu0
    %v2584 = vpop.f32.mrb[0].mxu0
    %v2585 = vpop.f32.mrb[0].mxu0
    %2586 = vdwg.mxu0
    %vm2587 = vcmask 1041408
    %v2588 = vsel %vm2587, %v2582, -inf
    %2589 = vmax.xlane.f32.xlu0 %v2588
    %v2590 = vpop.xlane.xlu0 %2589
    %v2591 = vsub.f32 %v2582, %v2590
    %v2592 = vmul.f32 %v2591, 1.442695
    %v2593 = vpow.pop %v2592
    %v2594 = vsel %vm2587, %v2593, 0.0
    %2595 = vadd.xlane.f32.xlu0 %v2594
    %v2596 = vpop.xlane.xlu0 %2595
    %v2597 = vrcp.pop %v2596
    %v2598 = vmul.f32 %v2593, %v2597
    %2599 = vst [vmem:[#allocation2] sm:$0x3] %v2598
    // Predicated region
    $region22: #{my_model_forward.3} parent=1 // pred_check
      _
    $region23: #{my_model_forward.3} parent=1 // pred_check_branch
      %2601 = sbr.rel (0) target = $region25
    $region24: #{my_model_forward.3} parent=1 // pred_region
      %s2603 = ssub.s32 32, 32
      %2604 = vsyncadd [#allocation3], %s2603
      %s2606 = sshll.u32 [#allocation2], 4
      %s2607 = int_to_ptr.vmem [resolvable:$true] %s2606
      %2609 = dma.vmem_to_hbm [thread:$0]  %s2607, 32, %s5, [#allocation3]
    $region25: #{my_model_forward.3} parent=1 // pred_fallthru
      _
    // Predicated region
    $region26: #{my_model_forward.3} parent=1 // pred_check
      _
    $region27: #{my_model_forward.3} parent=1 // pred_check_branch
      %2611 = sbr.rel (0) target = $region29
    $region28: #{my_model_forward.3} parent=1 // pred_region
      %2612 = dma.done [#allocation3], 32
    $region29: #{my_model_forward.3} parent=1 // pred_fallthru
      _
    %2613 = vsyncpa [#allocation3], 1

// kernel: my_model_forward.2
$region0: #{my_model_forward.2}
  #allocation0 [shape = 'u32[]', space=smem, size = 0x4, offset = 0x4, fixed_abs, tag = 'smem constant byte address 0x4 - core index']
  #allocation1 [shape = 'u32[144,128]{1,0:T(1,128)}', space=vmem, size = 0x12000, scoped, tag = 'internal scratch']
  #allocation2 [shape = 'f32[18,18,128]{2,1,0:T(8,128)}', space=vmem, size = 0x36000, scoped, tag = 'scratch operand']
  #allocation3 [shape = 'bf16[256,128]{1,0:T(16,128)(2,1)}', space=vmem, size = 0x10000, scoped, tag = 'scratch operand']
  %s0 = inlined_call_operand.vmem [shape: bf16[2,256,128], index: 0, kind: input, shape index: {}]
  %s1 = inlined_call_operand.vmem [shape: bf16[128,128], index: 1, kind: input, shape index: {}]
  %s2 = inlined_call_operand.vmem [shape: f32[1,128], index: 2, kind: input, shape index: {}]
  %s3 = inlined_call_operand.vmem [shape: bf16[1152,128], index: 3, kind: input, shape index: {}]
  %s4 = inlined_call_operand.vmem [shape: f32[1,128], index: 4, kind: input, shape index: {}]
  %s5 = inlined_call_operand.vmem [shape: bf16[1152,128], index: 5, kind: input, shape index: {}]
  %s6 = inlined_call_operand.vmem [shape: f32[1,128], index: 6, kind: input, shape index: {}]
  %s7 = inlined_call_operand.vmem [shape: f32[2,1,128], index: 7, kind: output, shape index: {}]
  %s8 = sld [smem:[#allocation0]]
  $region61: #{my_model_forward.2} parent=0
    _
  %s10 = ssub.s32 1, %s8
  %s11 = scalar_select 0, %s10, %s8
  loop: start=0, step=1, limit=4
  $region2: #{my_model_forward.2} parent=0 // loop_pre_header
    _
  $region3: #{my_model_forward.2} parent=0 // loop_header
    %s13 = sphi 0, %s17
    %p14 = scmp.ge.s32.totalorder %s13, 4
    %s23 = sphi 0, %s25
    %s26 = sphi 0, %s23
    %s27 = sphi 0, %s26
    %s43 = sphi 0, %s27
    %s47 = sphi 0, %s47
    %s49 = sphi 0, %s47
    %s50 = sphi 0, %s49
    %s64 = sphi 0, %s50
    %s68 = sphi 0, %s68
    %s70 = sphi 0, %s68
    %s71 = sphi 0, %s70
    %s85 = sphi 0, %s71
    %s89 = sphi 0, %s89
    %s91 = sphi 0, %s89
    %s92 = sphi 0, %s91
    %s106 = sphi 0, %s92
    %s110 = sphi 0, %s110
    %s112 = sphi 0, %s110
    %s113 = sphi 0, %s112
    %s127 = sphi 0, %s113
    %s131 = sphi 0, %s131
    %s133 = sphi 0, %s131
    %s134 = sphi 0, %s133
    %s148 = sphi 0, %s134
    %s152 = sphi 0, %s152
    %s154 = sphi 0, %s152
    %s155 = sphi 0, %s154
    %s169 = sphi 0, %s155
    %s175 = sphi 0, %s177
    %s178 = sphi 0, %s175
    %s179 = sphi 0, %s178
    %s195 = sphi 0, %s179
  $region4: #{my_model_forward.2} parent=0 // loop_header_branch
    %16 = sbr.rel (%p14) target = $region8
  $region5: #{my_model_forward.2} parent=0 // loop_body
    %s18 = ssub.s32 %s13, 1
    %s19 = ssub.s32 %s13, 2
    %s20 = sadd.s32 %s13, 1
    %s21 = ssub.s32 %s13, %s20
    %p22 = scmp.eq.s32.totalorder %s21, 0
    %s24 = sadd.s32 %s23, 1
    %s25 = scalar_select %p22, %s23, %s24
    %p28 = pneg %p22
    %p29 = scmp.eq.s32.totalorder %s13, 1
    %p30 = por %p28, %p29
    %p31 = scmp.ne.s32.totalorder %s23, %s26
    %p32 = scmp.eq.s32.totalorder %s13, 0
    %p33 = por %p31, %p32
    %p34 = scmp.ne.s32.totalorder %s23, %s26
    %p35 = scmp.eq.s32.totalorder %s18, 1
    %p36 = por %p34, %p35
    %p37 = scmp.ne.s32.totalorder %s26, %s27
    %p38 = scmp.eq.s32.totalorder %s18, 0
    %p39 = por %p37, %p38
    %p40 = scmp.ne.s32.totalorder %s26, %s27
    %p41 = scmp.eq.s32.totalorder %s19, 1
    %p42 = por %p40, %p41
    %p44 = scmp.ne.s32.totalorder %s27, %s43
    %p45 = scmp.eq.s32.totalorder %s19, 0
    %p46 = por %p44, %p45
    %s48 = sadd.s32 %s47, 1
    %p51 = scmp.eq.s32.totalorder %s13, 1
    %p52 = scmp.ne.s32.totalorder %s47, %s49
    %p53 = scmp.eq.s32.totalorder %s13, 0
    %p54 = por %p52, %p53
    %p55 = scmp.ne.s32.totalorder %s47, %s49
    %p56 = scmp.eq.s32.totalorder %s18, 1
    %p57 = por %p55, %p56
    %p58 = scmp.ne.s32.totalorder %s49, %s50
    %p59 = scmp.eq.s32.totalorder %s18, 0
    %p60 = por %p58, %p59
    %p61 = scmp.ne.s32.totalorder %s49, %s50
    %p62 = scmp.eq.s32.totalorder %s19, 1
    %p63 = por %p61, %p62
    %p65 = scmp.ne.s32.totalorder %s50, %s64
    %p66 = scmp.eq.s32.totalorder %s19, 0
    %p67 = por %p65, %p66
    %s69 = sadd.s32 %s68, 1
    %p72 = scmp.eq.s32.totalorder %s13, 1
    %p73 = scmp.ne.s32.totalorder %s68, %s70
    %p74 = scmp.eq.s32.totalorder %s13, 0
    %p75 = por %p73, %p74
    %p76 = scmp.ne.s32.totalorder %s68, %s70
    %p77 = scmp.eq.s32.totalorder %s18, 1
    %p78 = por %p76, %p77
    %p79 = scmp.ne.s32.totalorder %s70, %s71
    %p80 = scmp.eq.s32.totalorder %s18, 0
    %p81 = por %p79, %p80
    %p82 = scmp.ne.s32.totalorder %s70, %s71
    %p83 = scmp.eq.s32.totalorder %s19, 1
    %p84 = por %p82, %p83
    %p86 = scmp.ne.s32.totalorder %s71, %s85
    %p87 = scmp.eq.s32.totalorder %s19, 0
    %p88 = por %p86, %p87
    %s90 = sadd.s32 %s89, 1
    %p93 = scmp.eq.s32.totalorder %s13, 1
    %p94 = scmp.ne.s32.totalorder %s89, %s91
    %p95 = scmp.eq.s32.totalorder %s13, 0
    %p96 = por %p94, %p95
    %p97 = scmp.ne.s32.totalorder %s89, %s91
    %p98 = scmp.eq.s32.totalorder %s18, 1
    %p99 = por %p97, %p98
    %p100 = scmp.ne.s32.totalorder %s91, %s92
    %p101 = scmp.eq.s32.totalorder %s18, 0
    %p102 = por %p100, %p101
    %p103 = scmp.ne.s32.totalorder %s91, %s92
    %p104 = scmp.eq.s32.totalorder %s19, 1
    %p105 = por %p103, %p104
    %p107 = scmp.ne.s32.totalorder %s92, %s106
    %p108 = scmp.eq.s32.totalorder %s19, 0
    %p109 = por %p107, %p108
    %s111 = sadd.s32 %s110, 1
    %p114 = scmp.eq.s32.totalorder %s13, 1
    %p115 = scmp.ne.s32.totalorder %s110, %s112
    %p116 = scmp.eq.s32.totalorder %s13, 0
    %p117 = por %p115, %p116
    %p118 = scmp.ne.s32.totalorder %s110, %s112
    %p119 = scmp.eq.s32.totalorder %s18, 1
    %p120 = por %p118, %p119
    %p121 = scmp.ne.s32.totalorder %s112, %s113
    %p122 = scmp.eq.s32.totalorder %s18, 0
    %p123 = por %p121, %p122
    %p124 = scmp.ne.s32.totalorder %s112, %s113
    %p125 = scmp.eq.s32.totalorder %s19, 1
    %p126 = por %p124, %p125
    %p128 = scmp.ne.s32.totalorder %s113, %s127
    %p129 = scmp.eq.s32.totalorder %s19, 0
    %p130 = por %p128, %p129
    %s132 = sadd.s32 %s131, 1
    %p135 = scmp.eq.s32.totalorder %s13, 1
    %p136 = scmp.ne.s32.totalorder %s131, %s133
    %p137 = scmp.eq.s32.totalorder %s13, 0
    %p138 = por %p136, %p137
    %p139 = scmp.ne.s32.totalorder %s131, %s133
    %p140 = scmp.eq.s32.totalorder %s18, 1
    %p141 = por %p139, %p140
    %p142 = scmp.ne.s32.totalorder %s133, %s134
    %p143 = scmp.eq.s32.totalorder %s18, 0
    %p144 = por %p142, %p143
    %p145 = scmp.ne.s32.totalorder %s133, %s134
    %p146 = scmp.eq.s32.totalorder %s19, 1
    %p147 = por %p145, %p146
    %p149 = scmp.ne.s32.totalorder %s134, %s148
    %p150 = scmp.eq.s32.totalorder %s19, 0
    %p151 = por %p149, %p150
    %s153 = sadd.s32 %s152, 1
    %p156 = scmp.eq.s32.totalorder %s13, 1
    %p157 = scmp.ne.s32.totalorder %s152, %s154
    %p158 = scmp.eq.s32.totalorder %s13, 0
    %p159 = por %p157, %p158
    %p160 = scmp.ne.s32.totalorder %s152, %s154
    %p161 = scmp.eq.s32.totalorder %s18, 1
    %p162 = por %p160, %p161
    %p163 = scmp.ne.s32.totalorder %s154, %s155
    %p164 = scmp.eq.s32.totalorder %s18, 0
    %p165 = por %p163, %p164
    %p166 = scmp.ne.s32.totalorder %s154, %s155
    %p167 = scmp.eq.s32.totalorder %s19, 1
    %p168 = por %p166, %p167
    %p170 = scmp.ne.s32.totalorder %s155, %s169
    %p171 = scmp.eq.s32.totalorder %s19, 0
    %p172 = por %p170, %p171
    %s173 = ssub.s32 %s13, %s20
    %p174 = scmp.eq.s32.totalorder %s173, 0
    %s176 = sadd.s32 %s175, 1
    %s177 = scalar_select %p174, %s175, %s176
    %p180 = pneg %p174
    %p181 = scmp.eq.s32.totalorder %s13, 1
    %p182 = por %p180, %p181
    %p183 = scmp.ne.s32.totalorder %s175, %s178
    %p184 = scmp.eq.s32.totalorder %s13, 0
    %p185 = por %p183, %p184
    %p186 = scmp.ne.s32.totalorder %s175, %s178
    %p187 = scmp.eq.s32.totalorder %s18, 1
    %p188 = por %p186, %p187
    %p189 = scmp.ne.s32.totalorder %s178, %s179
    %p190 = scmp.eq.s32.totalorder %s18, 0
    %p191 = por %p189, %p190
    %p192 = scmp.ne.s32.totalorder %s178, %s179
    %p193 = scmp.eq.s32.totalorder %s19, 1
    %p194 = por %p192, %p193
    %p196 = scmp.ne.s32.totalorder %s179, %s195
    %p197 = scmp.eq.s32.totalorder %s19, 0
    %p198 = por %p196, %p197
    %p199 = scmp.le.s32.totalorder 1, %s13
    %p200 = scmp.lt.s32.totalorder %s13, 3
    %p201 = pnand %p199, %p200
    %p202 = pneg %p201
    // Predicated region
    $region9: #{my_model_forward.2} parent=5 // pred_check
      _
    $region10: #{my_model_forward.2} parent=5 // pred_check_branch
      %204 = sbr.rel (%p201) target = $region12
    $region11: #{my_model_forward.2} parent=5 // pred_region
      %s205 = ssub.s32 %s13, 1
      // Predicated region
      $region13: #{my_model_forward.2} parent=11 // pred_check
        %p206 = pneg %p60
      $region14: #{my_model_forward.2} parent=11 // pred_check_branch
        %208 = sbr.rel (%p206) target = $region16
      $region15: #{my_model_forward.2} parent=11 // pred_region
        _
      $region16: #{my_model_forward.2} parent=11 // pred_fallthru
        _
      // Predicated region
      $region17: #{my_model_forward.2} parent=11 // pred_check
        %p209 = pneg %p81
      $region18: #{my_model_forward.2} parent=11 // pred_check_branch
        %211 = sbr.rel (%p209) target = $region20
      $region19: #{my_model_forward.2} parent=11 // pred_region
        _
      $region20: #{my_model_forward.2} parent=11 // pred_fallthru
        _
      // Predicated region
      $region21: #{my_model_forward.2} parent=11 // pred_check
        %p212 = pneg %p102
      $region22: #{my_model_forward.2} parent=11 // pred_check_branch
        %214 = sbr.rel (%p212) target = $region24
      $region23: #{my_model_forward.2} parent=11 // pred_region
        _
      $region24: #{my_model_forward.2} parent=11 // pred_fallthru
        _
      // Predicated region
      $region25: #{my_model_forward.2} parent=11 // pred_check
        %p215 = pneg %p123
      $region26: #{my_model_forward.2} parent=11 // pred_check_branch
        %217 = sbr.rel (%p215) target = $region28
      $region27: #{my_model_forward.2} parent=11 // pred_region
        _
      $region28: #{my_model_forward.2} parent=11 // pred_fallthru
        _
      // Predicated region
      $region29: #{my_model_forward.2} parent=11 // pred_check
        %p218 = pneg %p144
      $region30: #{my_model_forward.2} parent=11 // pred_check_branch
        %220 = sbr.rel (%p218) target = $region32
      $region31: #{my_model_forward.2} parent=11 // pred_region
        _
      $region32: #{my_model_forward.2} parent=11 // pred_fallthru
        _
      // Predicated region
      $region33: #{my_model_forward.2} parent=11 // pred_check
        %p221 = pneg %p165
      $region34: #{my_model_forward.2} parent=11 // pred_check_branch
        %223 = sbr.rel (%p221) target = $region36
      $region35: #{my_model_forward.2} parent=11 // pred_region
        _
      $region36: #{my_model_forward.2} parent=11 // pred_fallthru
        _
    $region12: #{my_model_forward.2} parent=5 // pred_fallthru
      _
    %p224 = scmp.lt.s32.totalorder %s13, 2
    // Predicated region
    $region37: #{my_model_forward.2} parent=5 // pred_check
      %p225 = pneg %p224
    $region38: #{my_model_forward.2} parent=5 // pred_check_branch
      %227 = sbr.rel (%p225) target = $region40
    $region39: #{my_model_forward.2} parent=5 // pred_region
      // Predicated region
      $region41: #{my_model_forward.2} parent=39 // pred_check
        %p228 = pneg %p33
      $region42: #{my_model_forward.2} parent=39 // pred_check_branch
        %230 = sbr.rel (%p228) target = $region44
      $region43: #{my_model_forward.2} parent=39 // pred_region
        %p231 = scmp.lt.s32.totalorder %s13, 1
        %s232 = scalar_select %p231, %s13, 1
        %s233 = smul.addr %s232, 32
        %s234 = smul.addr %s233, 4
        %s235 = scalar_lea.vmem %s0, %s234
      $region44: #{my_model_forward.2} parent=39 // pred_fallthru
        _
    $region40: #{my_model_forward.2} parent=5 // pred_fallthru
      _
    %p236 = scmp.le.s32.totalorder 1, %s13
    %p237 = scmp.lt.s32.totalorder %s13, 3
    %p238 = pnand %p236, %p237
    %p239 = pneg %p238
    // Predicated region
    $region45: #{my_model_forward.2} parent=5 // pred_check
      _
    $region46: #{my_model_forward.2} parent=5 // pred_check_branch
      %241 = sbr.rel (%p238) target = $region48
    $region47: #{my_model_forward.2} parent=5 // pred_region
      %s242 = ssub.s32 %s13, 1
      %p243 = scmp.lt.s32.totalorder %s18, 1
      %s244 = scalar_select %p243, %s18, 1
      %s245 = smul.addr %s244, 32
      %s246 = smul.addr %s245, 4
      %s247 = scalar_lea.vmem %s0, %s246
      %p248 = pneg %p39
      %p249 = pneg %p36
      %p250 = pneg %p60
      %p251 = pneg %p57
      %p252 = pneg %p81
      %p253 = pneg %p78
      %p254 = pneg %p102
      %p255 = pneg %p99
      %p256 = pneg %p123
      %p257 = pneg %p120
      %p258 = pneg %p144
      %p259 = pneg %p141
      %p260 = pneg %p165
      %p261 = pneg %p162
      %p262 = pneg %p191
      %p263 = pneg %p188
      %p264 = scmp.lt.s32.totalorder %s18, 1
      %s265 = scalar_select %p264, %s18, 1
      %s266 = scalar_lea.vmem %s7, %s265
      %p267 = scmp.lt.s32.totalorder %s18, 1
      %s268 = scalar_select %p267, %s18, 1
      %s269 = smul.addr %s268, 32
      %s270 = smul.addr %s269, 4
      %s271 = scalar_lea.vmem %s0, %s270
      %p272 = scmp.lt.s32.totalorder %s18, 1
      %s273 = scalar_select %p272, %s18, 1
      %s274 = scalar_lea.vmem %s7, %s273
      %276 = vst [vmem:[#allocation2] sm:$0xff] 0.0
      %277 = vst [vmem:[#allocation2 + $0x8] sm:$0xff] 0.0
      %278 = vst [vmem:[#allocation2 + $0x10] sm:$0x3] 0.0
      %s279 = scalar_lea.vmem [#allocation2], 408
      %280 = vst [vmem:[%s279] sm:$0xff] 0.0
      %281 = vst [vmem:[%s279 + $0x8] sm:$0xff] 0.0
      %282 = vst [vmem:[%s279 + $0x10] sm:$0x3] 0.0
      %s283 = scalar_lea.vmem [#allocation2], 24
      %284 = vst [vmem:[%s283] sm:$0x1] 0.0
      %285 = vst [vmem:[%s283 + $0x18] sm:$0x1] 0.0
      %286 = vst [vmem:[%s283 + $0x30] sm:$0x1] 0.0
      %287 = vst [vmem:[%s283 + $0x48] sm:$0x1] 0.0
      %288 = vst [vmem:[%s283 + $0x60] sm:$0x1] 0.0
      %289 = vst [vmem:[%s283 + $0x78] sm:$0x1] 0.0
      %290 = vst [vmem:[%s283 + $0x90] sm:$0x1] 0.0
      %291 = vst [vmem:[%s283 + $0xa8] sm:$0x1] 0.0
      %292 = vst [vmem:[%s283 + $0xc0] sm:$0x1] 0.0
      %293 = vst [vmem:[%s283 + $0xd8] sm:$0x1] 0.0
      %294 = vst [vmem:[%s283 + $0xf0] sm:$0x1] 0.0
      %295 = vst [vmem:[%s283 + $0x108] sm:$0x1] 0.0
      %296 = vst [vmem:[%s283 + $0x120] sm:$0x1] 0.0
      %297 = vst [vmem:[%s283 + $0x138] sm:$0x1] 0.0
      %298 = vst [vmem:[%s283 + $0x150] sm:$0x1] 0.0
      %299 = vst [vmem:[%s283 + $0x168] sm:$0x1] 0.0
      %300 = vst [vmem:[%s283 + $0x11] sm:$0x1] 0.0
      %301 = vst [vmem:[%s283 + $0x29] sm:$0x1] 0.0
      %302 = vst [vmem:[%s283 + $0x41] sm:$0x1] 0.0
      %303 = vst [vmem:[%s283 + $0x59] sm:$0x1] 0.0
      %304 = vst [vmem:[%s283 + $0x71] sm:$0x1] 0.0
      %305 = vst [vmem:[%s283 + $0x89] sm:$0x1] 0.0
      %306 = vst [vmem:[%s283 + $0xa1] sm:$0x1] 0.0
      %307 = vst [vmem:[%s283 + $0xb9] sm:$0x1] 0.0
      %308 = vst [vmem:[%s283 + $0xd1] sm:$0x1] 0.0
      %309 = vst [vmem:[%s283 + $0xe9] sm:$0x1] 0.0
      %310 = vst [vmem:[%s283 + $0x101] sm:$0x1] 0.0
      %311 = vst [vmem:[%s283 + $0x119] sm:$0x1] 0.0
      %312 = vst [vmem:[%s283 + $0x131] sm:$0x1] 0.0
      %313 = vst [vmem:[%s283 + $0x149] sm:$0x1] 0.0
      %314 = vst [vmem:[%s283 + $0x161] sm:$0x1] 0.0
      %315 = vst [vmem:[%s283 + $0x179] sm:$0x1] 0.0
      %v316 = vld [vmem:[%s271] sm:$0xf]
      %v317 = vld [vmem:[%s271 + $0x4] sm:$0xf]
      %v318 = vld [vmem:[%s271 + $0x8] sm:$0xf]
      %v319 = vld [vmem:[%s271 + $0xc] sm:$0xf]
      %v320 = vld [vmem:[%s271 + $0x10] sm:$0xf]
      %v321 = vld [vmem:[%s271 + $0x14] sm:$0xf]
      %v322 = vld [vmem:[%s271 + $0x18] sm:$0xf]
      %v323 = vld [vmem:[%s271 + $0x1c] sm:$0xf]
      %v324 = vld [vmem:[%s271 + $0x20] sm:$0xf]
      %v325 = vld [vmem:[%s271 + $0x24] sm:$0xf]
      %v326 = vld [vmem:[%s271 + $0x28] sm:$0xf]
      %v327 = vld [vmem:[%s271 + $0x2c] sm:$0xf]
      %v328 = vld [vmem:[%s271 + $0x30] sm:$0xf]
      %v329 = vld [vmem:[%s271 + $0x34] sm:$0xf]
      %v330 = vld [vmem:[%s271 + $0x38] sm:$0xf]
      %v331 = vld [vmem:[%s271 + $0x3c] sm:$0xf]
      %v332 = vld [vmem:[%s271 + $0x40] sm:$0xf]
      %v333 = vld [vmem:[%s271 + $0x44] sm:$0xf]
      %v334 = vld [vmem:[%s271 + $0x48] sm:$0xf]
      %v335 = vld [vmem:[%s271 + $0x4c] sm:$0xf]
      %v336 = vld [vmem:[%s271 + $0x50] sm:$0xf]
      %v337 = vld [vmem:[%s271 + $0x54] sm:$0xf]
      %v338 = vld [vmem:[%s271 + $0x58] sm:$0xf]
      %v339 = vld [vmem:[%s271 + $0x5c] sm:$0xf]
      %v340 = vld [vmem:[%s271 + $0x60] sm:$0xf]
      %v341 = vld [vmem:[%s271 + $0x64] sm:$0xf]
      %v342 = vld [vmem:[%s271 + $0x68] sm:$0xf]
      %v343 = vld [vmem:[%s271 + $0x6c] sm:$0xf]
      %v344 = vld [vmem:[%s271 + $0x70] sm:$0xf]
      %v345 = vld [vmem:[%s271 + $0x74] sm:$0xf]
      %v346 = vld [vmem:[%s271 + $0x78] sm:$0xf]
      %v347 = vld [vmem:[%s271 + $0x7c] sm:$0xf]
      %v348 = vld [vmem:[%s1] sm:$0xf]
      %v349 = vld [vmem:[%s1 + $0x4] sm:$0xf]
      %v350 = vld [vmem:[%s1 + $0x8] sm:$0xf]
      %v351 = vld [vmem:[%s1 + $0xc] sm:$0xf]
      %v352 = vld [vmem:[%s1 + $0x10] sm:$0xf]
      %v353 = vld [vmem:[%s1 + $0x14] sm:$0xf]
      %v354 = vld [vmem:[%s1 + $0x18] sm:$0xf]
      %v355 = vld [vmem:[%s1 + $0x1c] sm:$0xf]
      %v356 = vld [vmem:[%s1 + $0x20] sm:$0xf]
      %v357 = vld [vmem:[%s1 + $0x24] sm:$0xf]
      %v358 = vld [vmem:[%s1 + $0x28] sm:$0xf]
      %v359 = vld [vmem:[%s1 + $0x2c] sm:$0xf]
      %v360 = vld [vmem:[%s1 + $0x30] sm:$0xf]
      %v361 = vld [vmem:[%s1 + $0x34] sm:$0xf]
      %v362 = vld [vmem:[%s1 + $0x38] sm:$0xf]
      %v363 = vld [vmem:[%s1 + $0x3c] sm:$0xf]
      %v364 = vld [vmem:[%s2] sm:$0x1]
      %v366 = vlaneseq
      %v367 = vshrl.u32 %v366, 7
      %v368 = vsub.s32 0, %v367
      %v369 = vrot.slane %v364, %v368
      %v403 = vunpack.c.l.b16 %v316
      %v404 = vunpack.c.l.b16 %v317
      %v405 = vunpack.c.l.b16 %v318
      %v406 = vunpack.c.l.b16 %v319
      %v407 = vunpack.c.l.b16 %v320
      %v408 = vunpack.c.l.b16 %v321
      %v409 = vunpack.c.l.b16 %v322
      %v410 = vunpack.c.l.b16 %v323
      %v411 = vunpack.c.l.b16 %v324
      %v412 = vunpack.c.l.b16 %v325
      %v413 = vunpack.c.l.b16 %v326
      %v414 = vunpack.c.l.b16 %v327
      %v415 = vunpack.c.l.b16 %v328
      %v416 = vunpack.c.l.b16 %v329
      %v417 = vunpack.c.l.b16 %v330
      %v418 = vunpack.c.l.b16 %v331
      %v419 = vunpack.c.l.b16 %v332
      %v420 = vunpack.c.l.b16 %v333
      %v421 = vunpack.c.l.b16 %v334
      %v422 = vunpack.c.l.b16 %v335
      %v423 = vunpack.c.l.b16 %v336
      %v424 = vunpack.c.l.b16 %v337
      %v425 = vunpack.c.l.b16 %v338
      %v426 = vunpack.c.l.b16 %v339
      %v427 = vunpack.c.l.b16 %v340
      %v428 = vunpack.c.l.b16 %v341
      %v429 = vunpack.c.l.b16 %v342
      %v430 = vunpack.c.l.b16 %v343
      %v431 = vunpack.c.l.b16 %v344
      %v432 = vunpack.c.l.b16 %v345
      %v433 = vunpack.c.l.b16 %v346
      %v434 = vunpack.c.l.b16 %v347
      %v435 = vpack.c.b16 %v404, %v403
      %v436 = vpack.c.b16 %v406, %v405
      %v437 = vpack.c.b16 %v408, %v407
      %v438 = vpack.c.b16 %v410, %v409
      %v439 = vpack.c.b16 %v412, %v411
      %v440 = vpack.c.b16 %v414, %v413
      %v441 = vpack.c.b16 %v416, %v415
      %v442 = vpack.c.b16 %v418, %v417
      %v443 = vpack.c.b16 %v420, %v419
      %v444 = vpack.c.b16 %v422, %v421
      %v445 = vpack.c.b16 %v424, %v423
      %v446 = vpack.c.b16 %v426, %v425
      %v447 = vpack.c.b16 %v428, %v427
      %v448 = vpack.c.b16 %v430, %v429
      %v449 = vpack.c.b16 %v432, %v431
      %v450 = vpack.c.b16 %v434, %v433
      %v483 = vunpack.c.l.b16 %v348
      %v484 = vunpack.c.l.b16 %v349
      %v485 = vunpack.c.l.b16 %v350
      %v486 = vunpack.c.l.b16 %v351
      %v487 = vunpack.c.l.b16 %v352
      %v488 = vunpack.c.l.b16 %v353
      %v489 = vunpack.c.l.b16 %v354
      %v490 = vunpack.c.l.b16 %v355
      %v491 = vunpack.c.l.b16 %v356
      %v492 = vunpack.c.l.b16 %v357
      %v493 = vunpack.c.l.b16 %v358
      %v494 = vunpack.c.l.b16 %v359
      %v495 = vunpack.c.l.b16 %v360
      %v496 = vunpack.c.l.b16 %v361
      %v497 = vunpack.c.l.b16 %v362
      %v498 = vunpack.c.l.b16 %v363
      %v499 = vpack.c.b16 %v484, %v483
      %v500 = vpack.c.b16 %v486, %v485
      %v501 = vpack.c.b16 %v488, %v487
      %v502 = vpack.c.b16 %v490, %v489
      %v503 = vpack.c.b16 %v492, %v491
      %v504 = vpack.c.b16 %v494, %v493
      %v505 = vpack.c.b16 %v496, %v495
      %v506 = vpack.c.b16 %v498, %v497
      %515 = vmatprep.subr.bf16.mxu0 0
      %516 = vmatpush1.bf16.msra.mxu0 %v499
      %517 = vmatprep.subr.bf16.mxu0 0
      %518 = vmatpush1.bf16.msra.mxu0 %v500
      %519 = vmatprep.subr.bf16.mxu0 0
      %520 = vmatpush1.bf16.msra.mxu0 %v501
      %521 = vmatprep.subr.bf16.mxu0 0
      %522 = vmatpush1.bf16.msra.mxu0 %v502
      %523 = vmatprep.subr.bf16.mxu0 0
      %524 = vmatpush1.bf16.msra.mxu0 %v503
      %525 = vmatprep.subr.bf16.mxu0 0
      %526 = vmatpush1.bf16.msra.mxu0 %v504
      %527 = vmatprep.subr.bf16.mxu0 0
      %528 = vmatpush1.bf16.msra.mxu0 %v505
      %529 = vmatprep.subr.bf16.mxu0 0
      %530 = vmatpush1.bf16.msra.mxu0 %v506
      %531 = vmatprep.subr.bf16.mxu0 0
      %532 = vmatpush1.bf16.msra.mxu0 0
      %533 = vmatprep.subr.bf16.mxu0 0
      %534 = vmatpush1.bf16.msra.mxu0 0
      %535 = vmatprep.subr.bf16.mxu0 0
      %536 = vmatpush1.bf16.msra.mxu0 0
      %537 = vmatprep.subr.bf16.mxu0 0
      %538 = vmatpush1.bf16.msra.mxu0 0
      %539 = vmatprep.subr.bf16.mxu0 0
      %540 = vmatpush1.bf16.msra.mxu0 0
      %541 = vmatprep.subr.bf16.mxu0 0
      %542 = vmatpush1.bf16.msra.mxu0 0
      %543 = vmatprep.subr.bf16.mxu0 0
      %544 = vmatpush1.bf16.msra.mxu0 0
      %545 = vmatprep.subr.bf16.mxu0 0
      %546 = vmatpush1.bf16.msra.mxu0 0
      %547 = vmatprep.mubr.bf16.mxu0 0
      %548 = vmatmul.mubr.bf16.gmra.mrb[0].mxu0 %v435
      %v549 = vpop.f32.mrb[0].mxu0
      %v550 = vadd.f32 %v369, %v549
      %v551 = vpop.f32.mrb[0].mxu0
      %v552 = vpop.f32.mrb[0].mxu0
      %v553 = vadd.f32 %v369, %v552
      %v554 = vpop.f32.mrb[0].mxu0
      %555 = vmatprep.mubr.bf16.mxu0 0
      %556 = vmatmul.mubr.bf16.gmra.mrb[0].mxu0 %v436
      %v557 = vpop.f32.mrb[0].mxu0
      %v558 = vadd.f32 %v369, %v557
      %v559 = vpop.f32.mrb[0].mxu0
      %v560 = vpop.f32.mrb[0].mxu0
      %v561 = vadd.f32 %v369, %v560
      %v562 = vpop.f32.mrb[0].mxu0
      %563 = vmatprep.mubr.bf16.mxu0 0
      %564 = vmatmul.mubr.bf16.gmra.mrb[0].mxu0 %v437
      %v565 = vpop.f32.mrb[0].mxu0
      %v566 = vadd.f32 %v369, %v565
      %v567 = vpop.f32.mrb[0].mxu0
      %v568 = vpop.f32.mrb[0].mxu0
      %v569 = vadd.f32 %v369, %v568
      %v570 = vpop.f32.mrb[0].mxu0
      %571 = vmatprep.mubr.bf16.mxu0 0
      %572 = vmatmul.mubr.bf16.gmra.mrb[0].mxu0 %v438
      %v573 = vpop.f32.mrb[0].mxu0
      %v574 = vadd.f32 %v369, %v573
      %v575 = vpop.f32.mrb[0].mxu0
      %v576 = vpop.f32.mrb[0].mxu0
      %v577 = vadd.f32 %v369, %v576
      %v578 = vpop.f32.mrb[0].mxu0
      %579 = vmatprep.mubr.bf16.mxu0 0
      %580 = vmatmul.mubr.bf16.gmra.mrb[0].mxu0 %v439
      %v581 = vpop.f32.mrb[0].mxu0
      %v582 = vadd.f32 %v369, %v581
      %v583 = vpop.f32.mrb[0].mxu0
      %v584 = vpop.f32.mrb[0].mxu0
      %v585 = vadd.f32 %v369, %v584
      %v586 = vpop.f32.mrb[0].mxu0
      %587 = vmatprep.mubr.bf16.mxu0 0
      %588 = vmatmul.mubr.bf16.gmra.mrb[0].mxu0 %v440
      %v589 = vpop.f32.mrb[0].mxu0
      %v590 = vadd.f32 %v369, %v589
      %v591 = vpop.f32.mrb[0].mxu0
      %v592 = vpop.f32.mrb[0].mxu0
      %v593 = vadd.f32 %v369, %v592
      %v594 = vpop.f32.mrb[0].mxu0
      %595 = vmatprep.mubr.bf16.mxu0 0
      %596 = vmatmul.mubr.bf16.gmra.mrb[0].mxu0 %v441
      %v597 = vpop.f32.mrb[0].mxu0
      %v598 = vadd.f32 %v369, %v597
      %v599 = vpop.f32.mrb[0].mxu0
      %v600 = vpop.f32.mrb[0].mxu0
      %v601 = vadd.f32 %v369, %v600
      %v602 = vpop.f32.mrb[0].mxu0
      %603 = vmatprep.mubr.bf16.mxu0 0
      %604 = vmatmul.mubr.bf16.gmra.mrb[0].mxu0 %v442
      %v605 = vpop.f32.mrb[0].mxu0
      %v606 = vadd.f32 %v369, %v605
      %v607 = vpop.f32.mrb[0].mxu0
      %v608 = vpop.f32.mrb[0].mxu0
      %v609 = vadd.f32 %v369, %v608
      %v610 = vpop.f32.mrb[0].mxu0
      %611 = vmatprep.mubr.bf16.mxu0 0
      %612 = vmatmul.mubr.bf16.gmra.mrb[0].mxu0 %v443
      %v613 = vpop.f32.mrb[0].mxu0
      %v614 = vadd.f32 %v369, %v613
      %v615 = vpop.f32.mrb[0].mxu0
      %v616 = vpop.f32.mrb[0].mxu0
      %v617 = vadd.f32 %v369, %v616
      %v618 = vpop.f32.mrb[0].mxu0
      %619 = vmatprep.mubr.bf16.mxu0 0
      %620 = vmatmul.mubr.bf16.gmra.mrb[0].mxu0 %v444
      %v621 = vpop.f32.mrb[0].mxu0
      %v622 = vadd.f32 %v369, %v621
      %v623 = vpop.f32.mrb[0].mxu0
      %v624 = vpop.f32.mrb[0].mxu0
      %v625 = vadd.f32 %v369, %v624
      %v626 = vpop.f32.mrb[0].mxu0
      %627 = vmatprep.mubr.bf16.mxu0 0
      %628 = vmatmul.mubr.bf16.gmra.mrb[0].mxu0 %v445
      %v629 = vpop.f32.mrb[0].mxu0
      %v630 = vadd.f32 %v369, %v629
      %v631 = vpop.f32.mrb[0].mxu0
      %v632 = vpop.f32.mrb[0].mxu0
      %v633 = vadd.f32 %v369, %v632
      %v634 = vpop.f32.mrb[0].mxu0
      %635 = vmatprep.mubr.bf16.mxu0 0
      %636 = vmatmul.mubr.bf16.gmra.mrb[0].mxu0 %v446
      %v637 = vpop.f32.mrb[0].mxu0
      %v638 = vadd.f32 %v369, %v637
      %v639 = vpop.f32.mrb[0].mxu0
      %v640 = vpop.f32.mrb[0].mxu0
      %v641 = vadd.f32 %v369, %v640
      %v642 = vpop.f32.mrb[0].mxu0
      %643 = vmatprep.mubr.bf16.mxu0 0
      %644 = vmatmul.mubr.bf16.gmra.mrb[0].mxu0 %v447
      %v645 = vpop.f32.mrb[0].mxu0
      %v646 = vadd.f32 %v369, %v645
      %v647 = vpop.f32.mrb[0].mxu0
      %v648 = vpop.f32.mrb[0].mxu0
      %v649 = vadd.f32 %v369, %v648
      %v650 = vpop.f32.mrb[0].mxu0
      %651 = vmatprep.mubr.bf16.mxu0 0
      %652 = vmatmul.mubr.bf16.gmra.mrb[0].mxu0 %v448
      %v653 = vpop.f32.mrb[0].mxu0
      %v654 = vadd.f32 %v369, %v653
      %v655 = vpop.f32.mrb[0].mxu0
      %v656 = vpop.f32.mrb[0].mxu0
      %v657 = vadd.f32 %v369, %v656
      %v658 = vpop.f32.mrb[0].mxu0
      %659 = vmatprep.mubr.bf16.mxu0 0
      %660 = vmatmul.mubr.bf16.gmra.mrb[0].mxu0 %v449
      %v661 = vpop.f32.mrb[0].mxu0
      %v662 = vadd.f32 %v369, %v661
      %v663 = vpop.f32.mrb[0].mxu0
      %v664 = vpop.f32.mrb[0].mxu0
      %v665 = vadd.f32 %v369, %v664
      %v666 = vpop.f32.mrb[0].mxu0
      %667 = vmatprep.mubr.bf16.mxu0 0
      %668 = vmatmul.mubr.bf16.gmra.mrb[0].mxu0 %v450
      %v669 = vpop.f32.mrb[0].mxu0
      %v670 = vadd.f32 %v369, %v669
      %v671 = vpop.f32.mrb[0].mxu0
      %v672 = vpop.f32.mrb[0].mxu0
      %v673 = vadd.f32 %v369, %v672
      %v674 = vpop.f32.mrb[0].mxu0
      %675 = vdwg.mxu0
      %v676 = vmax.f32 %v550, 0.0
      %v677 = vmax.f32 %v553, 0.0
      %v678 = vmax.f32 %v558, 0.0
      %v679 = vmax.f32 %v561, 0.0
      %v680 = vmax.f32 %v566, 0.0
      %v681 = vmax.f32 %v569, 0.0
      %v682 = vmax.f32 %v574, 0.0
      %v683 = vmax.f32 %v577, 0.0
      %v684 = vmax.f32 %v582, 0.0
      %v685 = vmax.f32 %v585, 0.0
      %v686 = vmax.f32 %v590, 0.0
      %v687 = vmax.f32 %v593, 0.0
      %v688 = vmax.f32 %v598, 0.0
      %v689 = vmax.f32 %v601, 0.0
      %v690 = vmax.f32 %v606, 0.0
      %v691 = vmax.f32 %v609, 0.0
      %v692 = vmax.f32 %v614, 0.0
      %v693 = vmax.f32 %v617, 0.0
      %v694 = vmax.f32 %v622, 0.0
      %v695 = vmax.f32 %v625, 0.0
      %v696 = vmax.f32 %v630, 0.0
      %v697 = vmax.f32 %v633, 0.0
      %v698 = vmax.f32 %v638, 0.0
      %v699 = vmax.f32 %v641, 0.0
      %v700 = vmax.f32 %v646, 0.0
      %v701 = vmax.f32 %v649, 0.0
      %v702 = vmax.f32 %v654, 0.0
      %v703 = vmax.f32 %v657, 0.0
      %v704 = vmax.f32 %v662, 0.0
      %v705 = vmax.f32 %v665, 0.0
      %v706 = vmax.f32 %v670, 0.0
      %v707 = vmax.f32 %v673, 0.0
      %v708 = vpack.c.bf16 %v677, %v676
      %v709 = vpack.c.bf16 %v679, %v678
      %v710 = vpack.c.bf16 %v681, %v680
      %v711 = vpack.c.bf16 %v683, %v682
      %v712 = vpack.c.bf16 %v685, %v684
      %v713 = vpack.c.bf16 %v687, %v686
      %v714 = vpack.c.bf16 %v689, %v688
      %v715 = vpack.c.bf16 %v691, %v690
      %v716 = vpack.c.bf16 %v693, %v692
      %v717 = vpack.c.bf16 %v695, %v694
      %v718 = vpack.c.bf16 %v697, %v696
      %v719 = vpack.c.bf16 %v699, %v698
      %v720 = vpack.c.bf16 %v701, %v700
      %v721 = vpack.c.bf16 %v703, %v702
      %v722 = vpack.c.bf16 %v705, %v704
      %v723 = vpack.c.bf16 %v707, %v706
      %724 = vst [vmem:[#allocation3] sm:$0xff] %v708
      %725 = vst [vmem:[#allocation3 + $0x8] sm:$0xff] %v709
      %726 = vst [vmem:[#allocation3 + $0x10] sm:$0xff] %v710
      %727 = vst [vmem:[#allocation3 + $0x18] sm:$0xff] %v711
      %728 = vst [vmem:[#allocation3 + $0x20] sm:$0xff] %v712
      %729 = vst [vmem:[#allocation3 + $0x28] sm:$0xff] %v713
      %730 = vst [vmem:[#allocation3 + $0x30] sm:$0xff] %v714
      %731 = vst [vmem:[#allocation3 + $0x38] sm:$0xff] %v715
      %732 = vst [vmem:[#allocation3 + $0x40] sm:$0xff] %v716
      %733 = vst [vmem:[#allocation3 + $0x48] sm:$0xff] %v717
      %734 = vst [vmem:[#allocation3 + $0x50] sm:$0xff] %v718
      %735 = vst [vmem:[#allocation3 + $0x58] sm:$0xff] %v719
      %736 = vst [vmem:[#allocation3 + $0x60] sm:$0xff] %v720
      %737 = vst [vmem:[#allocation3 + $0x68] sm:$0xff] %v721
      %738 = vst [vmem:[#allocation3 + $0x70] sm:$0xff] %v722
      %739 = vst [vmem:[#allocation3 + $0x78] sm:$0xff] %v723
      %740 = vst [vmem:[%s283 + $0x1] sm:$0xff] %v676
      %741 = vst [vmem:[%s283 + $0x9] sm:$0xff] %v677
      %742 = vst [vmem:[%s283 + $0x19] sm:$0xff] %v678
      %743 = vst [vmem:[%s283 + $0x21] sm:$0xff] %v679
      %744 = vst [vmem:[%s283 + $0x31] sm:$0xff] %v680
      %745 = vst [vmem:[%s283 + $0x39] sm:$0xff] %v681
      %746 = vst [vmem:[%s283 + $0x49] sm:$0xff] %v682
      %747 = vst [vmem:[%s283 + $0x51] sm:$0xff] %v683
      %748 = vst [vmem:[%s283 + $0x61] sm:$0xff] %v684
      %749 = vst [vmem:[%s283 + $0x69] sm:$0xff] %v685
      %750 = vst [vmem:[%s283 + $0x79] sm:$0xff] %v686
      %751 = vst [vmem:[%s283 + $0x81] sm:$0xff] %v687
      %752 = vst [vmem:[%s283 + $0x91] sm:$0xff] %v688
      %753 = vst [vmem:[%s283 + $0x99] sm:$0xff] %v689
      %754 = vst [vmem:[%s283 + $0xa9] sm:$0xff] %v690
      %755 = vst [vmem:[%s283 + $0xb1] sm:$0xff] %v691
      %756 = vst [vmem:[%s283 + $0xc1] sm:$0xff] %v692
      %757 = vst [vmem:[%s283 + $0xc9] sm:$0xff] %v693
      %758 = vst [vmem:[%s283 + $0xd9] sm:$0xff] %v694
      %759 = vst [vmem:[%s283 + $0xe1] sm:$0xff] %v695
      %760 = vst [vmem:[%s283 + $0xf1] sm:$0xff] %v696
      %761 = vst [vmem:[%s283 + $0xf9] sm:$0xff] %v697
      %762 = vst [vmem:[%s283 + $0x109] sm:$0xff] %v698
      %763 = vst [vmem:[%s283 + $0x111] sm:$0xff] %v699
      %764 = vst [vmem:[%s283 + $0x121] sm:$0xff] %v700
      %765 = vst [vmem:[%s283 + $0x129] sm:$0xff] %v701
      %766 = vst [vmem:[%s283 + $0x139] sm:$0xff] %v702
      %767 = vst [vmem:[%s283 + $0x141] sm:$0xff] %v703
      %768 = vst [vmem:[%s283 + $0x151] sm:$0xff] %v704
      %769 = vst [vmem:[%s283 + $0x159] sm:$0xff] %v705
      %770 = vst [vmem:[%s283 + $0x169] sm:$0xff] %v706
      %771 = vst [vmem:[%s283 + $0x171] sm:$0xff] %v707
      %v772 = vld [vmem:[#allocation2] sm:$0xff]
      %v773 = vld [vmem:[#allocation2 + $0x8] sm:$0xff]
      %v774 = vld [vmem:[#allocation2 + $0x18] sm:$0xff]
      %v775 = vld [vmem:[#allocation2 + $0x20] sm:$0xff]
      %v776 = vld [vmem:[#allocation2 + $0x30] sm:$0xff]
      %v777 = vld [vmem:[#allocation2 + $0x38] sm:$0xff]
      %v778 = vld [vmem:[#allocation2 + $0x48] sm:$0xff]
      %v779 = vld [vmem:[#allocation2 + $0x50] sm:$0xff]
      %v780 = vld [vmem:[#allocation2 + $0x60] sm:$0xff]
      %v781 = vld [vmem:[#allocation2 + $0x68] sm:$0xff]
      %v782 = vld [vmem:[#allocation2 + $0x78] sm:$0xff]
      %v783 = vld [vmem:[#allocation2 + $0x80] sm:$0xff]
      %v784 = vld [vmem:[#allocation2 + $0x90] sm:$0xff]
      %v785 = vld [vmem:[#allocation2 + $0x98] sm:$0xff]
      %v786 = vld [vmem:[#allocation2 + $0xa8] sm:$0xff]
      %v787 = vld [vmem:[#allocation2 + $0xb0] sm:$0xff]
      %v788 = vld [vmem:[#allocation2 + $0xc0] sm:$0xff]
      %v789 = vld [vmem:[#allocation2 + $0xc8] sm:$0xff]
      %v790 = vld [vmem:[#allocation2 + $0xd8] sm:$0xff]
      %v791 = vld [vmem:[#allocation2 + $0xe0] sm:$0xff]
      %v792 = vld [vmem:[#allocation2 + $0xf0] sm:$0xff]
      %v793 = vld [vmem:[#allocation2 + $0xf8] sm:$0xff]
      %v794 = vld [vmem:[#allocation2 + $0x108] sm:$0xff]
      %v795 = vld [vmem:[#allocation2 + $0x110] sm:$0xff]
      %v796 = vld [vmem:[#allocation2 + $0x120] sm:$0xff]
      %v797 = vld [vmem:[#allocation2 + $0x128] sm:$0xff]
      %v798 = vld [vmem:[#allocation2 + $0x138] sm:$0xff]
      %v799 = vld [vmem:[#allocation2 + $0x140] sm:$0xff]
      %v800 = vld [vmem:[#allocation2 + $0x150] sm:$0xff]
      %v801 = vld [vmem:[#allocation2 + $0x158] sm:$0xff]
      %v802 = vld [vmem:[#allocation2 + $0x168] sm:$0xff]
      %v803 = vld [vmem:[#allocation2 + $0x170] sm:$0xff]
      %v804 = vpack.c.bf16 %v773, %v772
      %v805 = vpack.c.bf16 %v775, %v774
      %v806 = vpack.c.bf16 %v777, %v776
      %v807 = vpack.c.bf16 %v779, %v778
      %v808 = vpack.c.bf16 %v781, %v780
      %v809 = vpack.c.bf16 %v783, %v782
      %v810 = vpack.c.bf16 %v785, %v784
      %v811 = vpack.c.bf16 %v787, %v786
      %v812 = vpack.c.bf16 %v789, %v788
      %v813 = vpack.c.bf16 %v791, %v790
      %v814 = vpack.c.bf16 %v793, %v792
      %v815 = vpack.c.bf16 %v795, %v794
      %v816 = vpack.c.bf16 %v797, %v796
      %v817 = vpack.c.bf16 %v799, %v798
      %v818 = vpack.c.bf16 %v801, %v800
      %v819 = vpack.c.bf16 %v803, %v802
      %v820 = vld [vmem:[#allocation2 + $0x1] sm:$0xff]
      %v821 = vld [vmem:[#allocation2 + $0x9] sm:$0xff]
      %v822 = vld [vmem:[#allocation2 + $0x19] sm:$0xff]
      %v823 = vld [vmem:[#allocation2 + $0x21] sm:$0xff]
      %v824 = vld [vmem:[#allocation2 + $0x31] sm:$0xff]
      %v825 = vld [vmem:[#allocation2 + $0x39] sm:$0xff]
      %v826 = vld [vmem:[#allocation2 + $0x49] sm:$0xff]
      %v827 = vld [vmem:[#allocation2 + $0x51] sm:$0xff]
      %v828 = vld [vmem:[#allocation2 + $0x61] sm:$0xff]
      %v829 = vld [vmem:[#allocation2 + $0x69] sm:$0xff]
      %v830 = vld [vmem:[#allocation2 + $0x79] sm:$0xff]
      %v831 = vld [vmem:[#allocation2 + $0x81] sm:$0xff]
      %v832 = vld [vmem:[#allocation2 + $0x91] sm:$0xff]
      %v833 = vld [vmem:[#allocation2 + $0x99] sm:$0xff]
      %v834 = vld [vmem:[#allocation2 + $0xa9] sm:$0xff]
      %v835 = vld [vmem:[#allocation2 + $0xb1] sm:$0xff]
      %v836 = vld [vmem:[#allocation2 + $0xc1] sm:$0xff]
      %v837 = vld [vmem:[#allocation2 + $0xc9] sm:$0xff]
      %v838 = vld [vmem:[#allocation2 + $0xd9] sm:$0xff]
      %v839 = vld [vmem:[#allocation2 + $0xe1] sm:$0xff]
      %v840 = vld [vmem:[#allocation2 + $0xf1] sm:$0xff]
      %v841 = vld [vmem:[#allocation2 + $0xf9] sm:$0xff]
      %v842 = vld [vmem:[#allocation2 + $0x109] sm:$0xff]
      %v843 = vld [vmem:[#allocation2 + $0x111] sm:$0xff]
      %v844 = vld [vmem:[#allocation2 + $0x121] sm:$0xff]
      %v845 = vld [vmem:[#allocation2 + $0x129] sm:$0xff]
      %v846 = vld [vmem:[#allocation2 + $0x139] sm:$0xff]
      %v847 = vld [vmem:[#allocation2 + $0x141] sm:$0xff]
      %v848 = vld [vmem:[#allocation2 + $0x151] sm:$0xff]
      %v849 = vld [vmem:[#allocation2 + $0x159] sm:$0xff]
      %v850 = vld [vmem:[#allocation2 + $0x169] sm:$0xff]
      %v851 = vld [vmem:[#allocation2 + $0x171] sm:$0xff]
      %v852 = vpack.c.bf16 %v821, %v820
      %v853 = vpack.c.bf16 %v823, %v822
      %v854 = vpack.c.bf16 %v825, %v824
      %v855 = vpack.c.bf16 %v827, %v826
      %v856 = vpack.c.bf16 %v829, %v828
      %v857 = vpack.c.bf16 %v831, %v830
      %v858 = vpack.c.bf16 %v833, %v832
      %v859 = vpack.c.bf16 %v835, %v834
      %v860 = vpack.c.bf16 %v837, %v836
      %v861 = vpack.c.bf16 %v839, %v838
      %v862 = vpack.c.bf16 %v841, %v840
      %v863 = vpack.c.bf16 %v843, %v842
      %v864 = vpack.c.bf16 %v845, %v844
      %v865 = vpack.c.bf16 %v847, %v846
      %v866 = vpack.c.bf16 %v849, %v848
      %v867 = vpack.c.bf16 %v851, %v850
      %v868 = vld [vmem:[%s3] sm:$0xf]
      %v869 = vld [vmem:[%s3 + $0x4] sm:$0xf]
      %v870 = vld [vmem:[%s3 + $0x8] sm:$0xf]
      %v871 = vld [vmem:[%s3 + $0xc] sm:$0xf]
      %v872 = vld [vmem:[%s3 + $0x10] sm:$0xf]
      %v873 = vld [vmem:[%s3 + $0x14] sm:$0xf]
      %v874 = vld [vmem:[%s3 + $0x18] sm:$0xf]
      %v875 = vld [vmem:[%s3 + $0x1c] sm:$0xf]
      %v876 = vld [vmem:[%s3 + $0x20] sm:$0xf]
      %v877 = vld [vmem:[%s3 + $0x24] sm:$0xf]
      %v878 = vld [vmem:[%s3 + $0x28] sm:$0xf]
      %v879 = vld [vmem:[%s3 + $0x2c] sm:$0xf]
      %v880 = vld [vmem:[%s3 + $0x30] sm:$0xf]
      %v881 = vld [vmem:[%s3 + $0x34] sm:$0xf]
      %v882 = vld [vmem:[%s3 + $0x38] sm:$0xf]
      %v883 = vld [vmem:[%s3 + $0x3c] sm:$0xf]
      %v884 = vld [vmem:[%s3 + $0x40] sm:$0xf]
      %v885 = vld [vmem:[%s3 + $0x44] sm:$0xf]
      %v886 = vld [vmem:[%s3 + $0x48] sm:$0xf]
      %v887 = vld [vmem:[%s3 + $0x4c] sm:$0xf]
      %v888 = vld [vmem:[%s3 + $0x50] sm:$0xf]
      %v889 = vld [vmem:[%s3 + $0x54] sm:$0xf]
      %v890 = vld [vmem:[%s3 + $0x58] sm:$0xf]
      %v891 = vld [vmem:[%s3 + $0x5c] sm:$0xf]
      %v892 = vld [vmem:[%s3 + $0x60] sm:$0xf]
      %v893 = vld [vmem:[%s3 + $0x64] sm:$0xf]
      %v894 = vld [vmem:[%s3 + $0x68] sm:$0xf]
      %v895 = vld [vmem:[%s3 + $0x6c] sm:$0xf]
      %v896 = vld [vmem:[%s3 + $0x70] sm:$0xf]
      %v897 = vld [vmem:[%s3 + $0x74] sm:$0xf]
      %v898 = vld [vmem:[%s3 + $0x78] sm:$0xf]
      %v899 = vld [vmem:[%s3 + $0x7c] sm:$0xf]
      %v900 = vld [vmem:[#allocation2 + $0x2] sm:$0xff]
      %v901 = vld [vmem:[#allocation2 + $0xa] sm:$0xff]
      %v902 = vld [vmem:[#allocation2 + $0x1a] sm:$0xff]
      %v903 = vld [vmem:[#allocation2 + $0x22] sm:$0xff]
      %v904 = vld [vmem:[#allocation2 + $0x32] sm:$0xff]
      %v905 = vld [vmem:[#allocation2 + $0x3a] sm:$0xff]
      %v906 = vld [vmem:[#allocation2 + $0x4a] sm:$0xff]
      %v907 = vld [vmem:[#allocation2 + $0x52] sm:$0xff]
      %v908 = vld [vmem:[#allocation2 + $0x62] sm:$0xff]
      %v909 = vld [vmem:[#allocation2 + $0x6a] sm:$0xff]
      %v910 = vld [vmem:[#allocation2 + $0x7a] sm:$0xff]
      %v911 = vld [vmem:[#allocation2 + $0x82] sm:$0xff]
      %v912 = vld [vmem:[#allocation2 + $0x92] sm:$0xff]
      %v913 = vld [vmem:[#allocation2 + $0x9a] sm:$0xff]
      %v914 = vld [vmem:[#allocation2 + $0xaa] sm:$0xff]
      %v915 = vld [vmem:[#allocation2 + $0xb2] sm:$0xff]
      %v916 = vld [vmem:[#allocation2 + $0xc2] sm:$0xff]
      %v917 = vld [vmem:[#allocation2 + $0xca] sm:$0xff]
      %v918 = vld [vmem:[#allocation2 + $0xda] sm:$0xff]
      %v919 = vld [vmem:[#allocation2 + $0xe2] sm:$0xff]
      %v920 = vld [vmem:[#allocation2 + $0xf2] sm:$0xff]
      %v921 = vld [vmem:[#allocation2 + $0xfa] sm:$0xff]
      %v922 = vld [vmem:[#allocation2 + $0x10a] sm:$0xff]
      %v923 = vld [vmem:[#allocation2 + $0x112] sm:$0xff]
      %v924 = vld [vmem:[#allocation2 + $0x122] sm:$0xff]
      %v925 = vld [vmem:[#allocation2 + $0x12a] sm:$0xff]
      %v926 = vld [vmem:[#allocation2 + $0x13a] sm:$0xff]
      %v927 = vld [vmem:[#allocation2 + $0x142] sm:$0xff]
      %v928 = vld [vmem:[#allocation2 + $0x152] sm:$0xff]
      %v929 = vld [vmem:[#allocation2 + $0x15a] sm:$0xff]
      %v930 = vld [vmem:[#allocation2 + $0x16a] sm:$0xff]
      %v931 = vld [vmem:[#allocation2 + $0x172] sm:$0xff]
      %v932 = vpack.c.bf16 %v901, %v900
      %v933 = vpack.c.bf16 %v903, %v902
      %v934 = vpack.c.bf16 %v905, %v904
      %v935 = vpack.c.bf16 %v907, %v906
      %v936 = vpack.c.bf16 %v909, %v908
      %v937 = vpack.c.bf16 %v911, %v910
      %v938 = vpack.c.bf16 %v913, %v912
      %v939 = vpack.c.bf16 %v915, %v914
      %v940 = vpack.c.bf16 %v917, %v916
      %v941 = vpack.c.bf16 %v919, %v918
      %v942 = vpack.c.bf16 %v921, %v920
      %v943 = vpack.c.bf16 %v923, %v922
      %v944 = vpack.c.bf16 %v925, %v924
      %v945 = vpack.c.bf16 %v927, %v926
      %v946 = vpack.c.bf16 %v929, %v928
      %v947 = vpack.c.bf16 %v931, %v930
      %v948 = vld [vmem:[%s283] sm:$0xff]
      %v949 = vld [vmem:[%s283 + $0x8] sm:$0xff]
      %v950 = vld [vmem:[%s283 + $0x18] sm:$0xff]
      %v951 = vld [vmem:[%s283 + $0x20] sm:$0xff]
      %v952 = vld [vmem:[%s283 + $0x30] sm:$0xff]
      %v953 = vld [vmem:[%s283 + $0x38] sm:$0xff]
      %v954 = vld [vmem:[%s283 + $0x48] sm:$0xff]
      %v955 = vld [vmem:[%s283 + $0x50] sm:$0xff]
      %v956 = vld [vmem:[%s283 + $0x60] sm:$0xff]
      %v957 = vld [vmem:[%s283 + $0x68] sm:$0xff]
      %v958 = vld [vmem:[%s283 + $0x78] sm:$0xff]
      %v959 = vld [vmem:[%s283 + $0x80] sm:$0xff]
      %v960 = vld [vmem:[%s283 + $0x90] sm:$0xff]
      %v961 = vld [vmem:[%s283 + $0x98] sm:$0xff]
      %v962 = vld [vmem:[%s283 + $0xa8] sm:$0xff]
      %v963 = vld [vmem:[%s283 + $0xb0] sm:$0xff]
      %v964 = vld [vmem:[%s283 + $0xc0] sm:$0xff]
      %v965 = vld [vmem:[%s283 + $0xc8] sm:$0xff]
      %v966 = vld [vmem:[%s283 + $0xd8] sm:$0xff]
      %v967 = vld [vmem:[%s283 + $0xe0] sm:$0xff]
      %v968 = vld [vmem:[%s283 + $0xf0] sm:$0xff]
      %v969 = vld [vmem:[%s283 + $0xf8] sm:$0xff]
      %v970 = vld [vmem:[%s283 + $0x108] sm:$0xff]
      %v971 = vld [vmem:[%s283 + $0x110] sm:$0xff]
      %v972 = vld [vmem:[%s283 + $0x120] sm:$0xff]
      %v973 = vld [vmem:[%s283 + $0x128] sm:$0xff]
      %v974 = vld [vmem:[%s283 + $0x138] sm:$0xff]
      %v975 = vld [vmem:[%s283 + $0x140] sm:$0xff]
      %v976 = vld [vmem:[%s283 + $0x150] sm:$0xff]
      %v977 = vld [vmem:[%s283 + $0x158] sm:$0xff]
      %v978 = vld [vmem:[%s283 + $0x168] sm:$0xff]
      %v979 = vld [vmem:[%s283 + $0x170] sm:$0xff]
      %v980 = vpack.c.bf16 %v949, %v948
      %v981 = vpack.c.bf16 %v951, %v950
      %v982 = vpack.c.bf16 %v953, %v952
      %v983 = vpack.c.bf16 %v955, %v954
      %v984 = vpack.c.bf16 %v957, %v956
      %v985 = vpack.c.bf16 %v959, %v958
      %v986 = vpack.c.bf16 %v961, %v960
      %v987 = vpack.c.bf16 %v963, %v962
      %v988 = vpack.c.bf16 %v965, %v964
      %v989 = vpack.c.bf16 %v967, %v966
      %v990 = vpack.c.bf16 %v969, %v968
      %v991 = vpack.c.bf16 %v971, %v970
      %v992 = vpack.c.bf16 %v973, %v972
      %v993 = vpack.c.bf16 %v975, %v974
      %v994 = vpack.c.bf16 %v977, %v976
      %v995 = vpack.c.bf16 %v979, %v978
      %v996 = vld [vmem:[%s3 + $0x80] sm:$0xf]
      %v997 = vld [vmem:[%s3 + $0x84] sm:$0xf]
      %v998 = vld [vmem:[%s3 + $0x88] sm:$0xf]
      %v999 = vld [vmem:[%s3 + $0x8c] sm:$0xf]
      %v1000 = vld [vmem:[%s3 + $0x90] sm:$0xf]
      %v1001 = vld [vmem:[%s3 + $0x94] sm:$0xf]
      %v1002 = vld [vmem:[%s3 + $0x98] sm:$0xf]
      %v1003 = vld [vmem:[%s3 + $0x9c] sm:$0xf]
      %v1004 = vld [vmem:[%s3 + $0xa0] sm:$0xf]
      %v1005 = vld [vmem:[%s3 + $0xa4] sm:$0xf]
      %v1006 = vld [vmem:[%s3 + $0xa8] sm:$0xf]
      %v1007 = vld [vmem:[%s3 + $0xac] sm:$0xf]
      %v1008 = vld [vmem:[%s3 + $0xb0] sm:$0xf]
      %v1009 = vld [vmem:[%s3 + $0xb4] sm:$0xf]
      %v1010 = vld [vmem:[%s3 + $0xb8] sm:$0xf]
      %v1011 = vld [vmem:[%s3 + $0xbc] sm:$0xf]
      %v1012 = vld [vmem:[%s3 + $0xc0] sm:$0xf]
      %v1013 = vld [vmem:[%s3 + $0xc4] sm:$0xf]
      %v1014 = vld [vmem:[%s3 + $0xc8] sm:$0xf]
      %v1015 = vld [vmem:[%s3 + $0xcc] sm:$0xf]
      %v1016 = vld [vmem:[%s3 + $0xd0] sm:$0xf]
      %v1017 = vld [vmem:[%s3 + $0xd4] sm:$0xf]
      %v1018 = vld [vmem:[%s3 + $0xd8] sm:$0xf]
      %v1019 = vld [vmem:[%s3 + $0xdc] sm:$0xf]
      %v1020 = vld [vmem:[%s3 + $0xe0] sm:$0xf]
      %v1021 = vld [vmem:[%s3 + $0xe4] sm:$0xf]
      %v1022 = vld [vmem:[%s3 + $0xe8] sm:$0xf]
      %v1023 = vld [vmem:[%s3 + $0xec] sm:$0xf]
      %v1024 = vld [vmem:[%s3 + $0xf0] sm:$0xf]
      %v1025 = vld [vmem:[%s3 + $0xf4] sm:$0xf]
      %v1026 = vld [vmem:[%s3 + $0xf8] sm:$0xf]
      %v1027 = vld [vmem:[%s3 + $0xfc] sm:$0xf]
      %v1060 = vunpack.c.l.b16 %v996
      %v1061 = vunpack.c.l.b16 %v997
      %v1062 = vunpack.c.l.b16 %v998
      %v1063 = vunpack.c.l.b16 %v999
      %v1064 = vunpack.c.l.b16 %v1000
      %v1065 = vunpack.c.l.b16 %v1001
      %v1066 = vunpack.c.l.b16 %v1002
      %v1067 = vunpack.c.l.b16 %v1003
      %v1068 = vunpack.c.l.b16 %v1004
      %v1069 = vunpack.c.l.b16 %v1005
      %v1070 = vunpack.c.l.b16 %v1006
      %v1071 = vunpack.c.l.b16 %v1007
      %v1072 = vunpack.c.l.b16 %v1008
      %v1073 = vunpack.c.l.b16 %v1009
      %v1074 = vunpack.c.l.b16 %v1010
      %v1075 = vunpack.c.l.b16 %v1011
      %v1076 = vunpack.c.l.b16 %v1012
      %v1077 = vunpack.c.l.b16 %v1013
      %v1078 = vunpack.c.l.b16 %v1014
      %v1079 = vunpack.c.l.b16 %v1015
      %v1080 = vunpack.c.l.b16 %v1016
      %v1081 = vunpack.c.l.b16 %v1017
      %v1082 = vunpack.c.l.b16 %v1018
      %v1083 = vunpack.c.l.b16 %v1019
      %v1084 = vunpack.c.l.b16 %v1020
      %v1085 = vunpack.c.l.b16 %v1021
      %v1086 = vunpack.c.l.b16 %v1022
      %v1087 = vunpack.c.l.b16 %v1023
      %v1088 = vunpack.c.l.b16 %v1024
      %v1089 = vunpack.c.l.b16 %v1025
      %v1090 = vunpack.c.l.b16 %v1026
      %v1091 = vunpack.c.l.b16 %v1027
      %v1092 = vpack.c.b16 %v1061, %v1060
      %v1093 = vpack.c.b16 %v1063, %v1062
      %v1094 = vpack.c.b16 %v1065, %v1064
      %v1095 = vpack.c.b16 %v1067, %v1066
      %v1096 = vpack.c.b16 %v1069, %v1068
      %v1097 = vpack.c.b16 %v1071, %v1070
      %v1098 = vpack.c.b16 %v1073, %v1072
      %v1099 = vpack.c.b16 %v1075, %v1074
      %v1100 = vpack.c.b16 %v1077, %v1076
      %v1101 = vpack.c.b16 %v1079, %v1078
      %v1102 = vpack.c.b16 %v1081, %v1080
      %v1103 = vpack.c.b16 %v1083, %v1082
      %v1104 = vpack.c.b16 %v1085, %v1084
      %v1105 = vpack.c.b16 %v1087, %v1086
      %v1106 = vpack.c.b16 %v1089, %v1088
      %v1107 = vpack.c.b16 %v1091, %v1090
      %1124 = vmatprep.subr.bf16.mxu0 0
      %1125 = vmatpush1.bf16.msra.mxu0 %v1092
      %1126 = vmatprep.subr.bf16.mxu0 0
      %1127 = vmatpush1.bf16.msra.mxu0 %v1093
      %1128 = vmatprep.subr.bf16.mxu0 0
      %1129 = vmatpush1.bf16.msra.mxu0 %v1094
      %1130 = vmatprep.subr.bf16.mxu0 0
      %1131 = vmatpush1.bf16.msra.mxu0 %v1095
      %1132 = vmatprep.subr.bf16.mxu0 0
      %1133 = vmatpush1.bf16.msra.mxu0 %v1096
      %1134 = vmatprep.subr.bf16.mxu0 0
      %1135 = vmatpush1.bf16.msra.mxu0 %v1097
      %1136 = vmatprep.subr.bf16.mxu0 0
      %1137 = vmatpush1.bf16.msra.mxu0 %v1098
      %1138 = vmatprep.subr.bf16.mxu0 0
      %1139 = vmatpush1.bf16.msra.mxu0 %v1099
      %1140 = vmatprep.subr.bf16.mxu0 0
      %1141 = vmatpush1.bf16.msra.mxu0 %v1100
      %1142 = vmatprep.subr.bf16.mxu0 0
      %1143 = vmatpush1.bf16.msra.mxu0 %v1101
      %1144 = vmatprep.subr.bf16.mxu0 0
      %1145 = vmatpush1.bf16.msra.mxu0 %v1102
      %1146 = vmatprep.subr.bf16.mxu0 0
      %1147 = vmatpush1.bf16.msra.mxu0 %v1103
      %1148 = vmatprep.subr.bf16.mxu0 0
      %1149 = vmatpush1.bf16.msra.mxu0 %v1104
      %1150 = vmatprep.subr.bf16.mxu0 0
      %1151 = vmatpush1.bf16.msra.mxu0 %v1105
      %1152 = vmatprep.subr.bf16.mxu0 0
      %1153 = vmatpush1.bf16.msra.mxu0 %v1106
      %1154 = vmatprep.subr.bf16.mxu0 0
      %1155 = vmatpush1.bf16.msra.mxu0 %v1107
      %1156 = vmatprep.mubr.bf16.mxu0 %v980
      %1157 = vmatmul.mubr.bf16.gmra.mrb[0].mxu0 %v932
      %v1158 = vpop.f32.mrb[0].mxu0
      %v1159 = vadd.f32 0.0, %v1158
      %v1160 = vpop.f32.mrb[0].mxu0
      %v1161 = vpop.f32.mrb[0].mxu0
      %v1162 = vadd.f32 0.0, %v1161
      %v1163 = vpop.f32.mrb[0].mxu0
      %1164 = vmatprep.mubr.bf16.mxu0 %v981
      %1165 = vmatmul.mubr.bf16.gmra.mrb[0].mxu0 %v933
      %v1166 = vpop.f32.mrb[0].mxu0
      %v1167 = vadd.f32 0.0, %v1166
      %v1168 = vpop.f32.mrb[0].mxu0
      %v1169 = vpop.f32.mrb[0].mxu0
      %v1170 = vadd.f32 0.0, %v1169
      %v1171 = vpop.f32.mrb[0].mxu0
      %1172 = vmatprep.mubr.bf16.mxu0 %v982
      %1173 = vmatmul.mubr.bf16.gmra.mrb[0].mxu0 %v934
      %v1174 = vpop.f32.mrb[0].mxu0
      %v1175 = vadd.f32 0.0, %v1174
      %v1176 = vpop.f32.mrb[0].mxu0
      %v1177 = vpop.f32.mrb[0].mxu0
      %v1178 = vadd.f32 0.0, %v1177
      %v1179 = vpop.f32.mrb[0].mxu0
      %1180 = vmatprep.mubr.bf16.mxu0 %v983
      %1181 = vmatmul.mubr.bf16.gmra.mrb[0].mxu0 %v935
      %v1182 = vpop.f32.mrb[0].mxu0
      %v1183 = vadd.f32 0.0, %v1182
      %v1184 = vpop.f32.mrb[0].mxu0
      %v1185 = vpop.f32.mrb[0].mxu0
      %v1186 = vadd.f32 0.0, %v1185
      %v1187 = vpop.f32.mrb[0].mxu0
      %1188 = vmatprep.mubr.bf16.mxu0 %v984
      %1189 = vmatmul.mubr.bf16.gmra.mrb[0].mxu0 %v936
      %v1190 = vpop.f32.mrb[0].mxu0
      %v1191 = vadd.f32 0.0, %v1190
      %v1192 = vpop.f32.mrb[0].mxu0
      %v1193 = vpop.f32.mrb[0].mxu0
      %v1194 = vadd.f32 0.0, %v1193
      %v1195 = vpop.f32.mrb[0].mxu0
      %1196 = vmatprep.mubr.bf16.mxu0 %v985
      %1197 = vmatmul.mubr.bf16.gmra.mrb[0].mxu0 %v937
      %v1198 = vpop.f32.mrb[0].mxu0
      %v1199 = vadd.f32 0.0, %v1198
      %v1200 = vpop.f32.mrb[0].mxu0
      %v1201 = vpop.f32.mrb[0].mxu0
      %v1202 = vadd.f32 0.0, %v1201
      %v1203 = vpop.f32.mrb[0].mxu0
      %1204 = vmatprep.mubr.bf16.mxu0 %v986
      %1205 = vmatmul.mubr.bf16.gmra.mrb[0].mxu0 %v938
      %v1206 = vpop.f32.mrb[0].mxu0
      %v1207 = vadd.f32 0.0, %v1206
      %v1208 = vpop.f32.mrb[0].mxu0
      %v1209 = vpop.f32.mrb[0].mxu0
      %v1210 = vadd.f32 0.0, %v1209
      %v1211 = vpop.f32.mrb[0].mxu0
      %1212 = vmatprep.mubr.bf16.mxu0 %v987
      %1213 = vmatmul.mubr.bf16.gmra.mrb[0].mxu0 %v939
      %v1214 = vpop.f32.mrb[0].mxu0
      %v1215 = vadd.f32 0.0, %v1214
      %v1216 = vpop.f32.mrb[0].mxu0
      %v1217 = vpop.f32.mrb[0].mxu0
      %v1218 = vadd.f32 0.0, %v1217
      %v1219 = vpop.f32.mrb[0].mxu0
      %1220 = vmatprep.mubr.bf16.mxu0 %v988
      %1221 = vmatmul.mubr.bf16.gmra.mrb[0].mxu0 %v940
      %v1222 = vpop.f32.mrb[0].mxu0
      %v1223 = vadd.f32 0.0, %v1222
      %v1224 = vpop.f32.mrb[0].mxu0
      %v1225 = vpop.f32.mrb[0].mxu0
      %v1226 = vadd.f32 0.0, %v1225
      %v1227 = vpop.f32.mrb[0].mxu0
      %1228 = vmatprep.mubr.bf16.mxu0 %v989
      %1229 = vmatmul.mubr.bf16.gmra.mrb[0].mxu0 %v941
      %v1230 = vpop.f32.mrb[0].mxu0
      %v1231 = vadd.f32 0.0, %v1230
      %v1232 = vpop.f32.mrb[0].mxu0
      %v1233 = vpop.f32.mrb[0].mxu0
      %v1234 = vadd.f32 0.0, %v1233
      %v1235 = vpop.f32.mrb[0].mxu0
      %1236 = vmatprep.mubr.bf16.mxu0 %v990
      %1237 = vmatmul.mubr.bf16.gmra.mrb[0].mxu0 %v942
      %v1238 = vpop.f32.mrb[0].mxu0
      %v1239 = vadd.f32 0.0, %v1238
      %v1240 = vpop.f32.mrb[0].mxu0
      %v1241 = vpop.f32.mrb[0].mxu0
      %v1242 = vadd.f32 0.0, %v1241
      %v1243 = vpop.f32.mrb[0].mxu0
      %1244 = vmatprep.mubr.bf16.mxu0 %v991
      %1245 = vmatmul.mubr.bf16.gmra.mrb[0].mxu0 %v943
      %v1246 = vpop.f32.mrb[0].mxu0
      %v1247 = vadd.f32 0.0, %v1246
      %v1248 = vpop.f32.mrb[0].mxu0
      %v1249 = vpop.f32.mrb[0].mxu0
      %v1250 = vadd.f32 0.0, %v1249
      %v1251 = vpop.f32.mrb[0].mxu0
      %1252 = vmatprep.mubr.bf16.mxu0 %v992
      %1253 = vmatmul.mubr.bf16.gmra.mrb[0].mxu0 %v944
      %v1254 = vpop.f32.mrb[0].mxu0
      %v1255 = vadd.f32 0.0, %v1254
      %v1256 = vpop.f32.mrb[0].mxu0
      %v1257 = vpop.f32.mrb[0].mxu0
      %v1258 = vadd.f32 0.0, %v1257
      %v1259 = vpop.f32.mrb[0].mxu0
      %1260 = vmatprep.mubr.bf16.mxu0 %v993
      %1261 = vmatmul.mubr.bf16.gmra.mrb[0].mxu0 %v945
      %v1262 = vpop.f32.mrb[0].mxu0
      %v1263 = vadd.f32 0.0, %v1262
      %v1264 = vpop.f32.mrb[0].mxu0
      %v1265 = vpop.f32.mrb[0].mxu0
      %v1266 = vadd.f32 0.0, %v1265
      %v1267 = vpop.f32.mrb[0].mxu0
      %1268 = vmatprep.mubr.bf16.mxu0 %v994
      %1269 = vmatmul.mubr.bf16.gmra.mrb[0].mxu0 %v946
      %v1270 = vpop.f32.mrb[0].mxu0
      %v1271 = vadd.f32 0.0, %v1270
      %v1272 = vpop.f32.mrb[0].mxu0
      %v1273 = vpop.f32.mrb[0].mxu0
      %v1274 = vadd.f32 0.0, %v1273
      %v1275 = vpop.f32.mrb[0].mxu0
      %1276 = vmatprep.mubr.bf16.mxu0 %v995
      %1277 = vmatmul.mubr.bf16.gmra.mrb[0].mxu0 %v947
      %v1278 = vpop.f32.mrb[0].mxu0
      %v1279 = vadd.f32 0.0, %v1278
      %v1280 = vpop.f32.mrb[0].mxu0
      %v1281 = vpop.f32.mrb[0].mxu0
      %v1282 = vadd.f32 0.0, %v1281
      %v1283 = vpop.f32.mrb[0].mxu0
      %1284 = vdwg.mxu0
      %v1317 = vunpack.c.l.b16 %v868
      %v1318 = vunpack.c.l.b16 %v869
      %v1319 = vunpack.c.l.b16 %v870
      %v1320 = vunpack.c.l.b16 %v871
      %v1321 = vunpack.c.l.b16 %v872
      %v1322 = vunpack.c.l.b16 %v873
      %v1323 = vunpack.c.l.b16 %v874
      %v1324 = vunpack.c.l.b16 %v875
      %v1325 = vunpack.c.l.b16 %v876
      %v1326 = vunpack.c.l.b16 %v877
      %v1327 = vunpack.c.l.b16 %v878
      %v1328 = vunpack.c.l.b16 %v879
      %v1329 = vunpack.c.l.b16 %v880
      %v1330 = vunpack.c.l.b16 %v881
      %v1331 = vunpack.c.l.b16 %v882
      %v1332 = vunpack.c.l.b16 %v883
      %v1333 = vunpack.c.l.b16 %v884
      %v1334 = vunpack.c.l.b16 %v885
      %v1335 = vunpack.c.l.b16 %v886
      %v1336 = vunpack.c.l.b16 %v887
      %v1337 = vunpack.c.l.b16 %v888
      %v1338 = vunpack.c.l.b16 %v889
      %v1339 = vunpack.c.l.b16 %v890
      %v1340 = vunpack.c.l.b16 %v891
      %v1341 = vunpack.c.l.b16 %v892
      %v1342 = vunpack.c.l.b16 %v893
      %v1343 = vunpack.c.l.b16 %v894
      %v1344 = vunpack.c.l.b16 %v895
      %v1345 = vunpack.c.l.b16 %v896
      %v1346 = vunpack.c.l.b16 %v897
      %v1347 = vunpack.c.l.b16 %v898
      %v1348 = vunpack.c.l.b16 %v899
      %v1349 = vpack.c.b16 %v1318, %v1317
      %v1350 = vpack.c.b16 %v1320, %v1319
      %v1351 = vpack.c.b16 %v1322, %v1321
      %v1352 = vpack.c.b16 %v1324, %v1323
      %v1353 = vpack.c.b16 %v1326, %v1325
      %v1354 = vpack.c.b16 %v1328, %v1327
      %v1355 = vpack.c.b16 %v1330, %v1329
      %v1356 = vpack.c.b16 %v1332, %v1331
      %v1357 = vpack.c.b16 %v1334, %v1333
      %v1358 = vpack.c.b16 %v1336, %v1335
      %v1359 = vpack.c.b16 %v1338, %v1337
      %v1360 = vpack.c.b16 %v1340, %v1339
      %v1361 = vpack.c.b16 %v1342, %v1341
      %v1362 = vpack.c.b16 %v1344, %v1343
      %v1363 = vpack.c.b16 %v1346, %v1345
      %v1364 = vpack.c.b16 %v1348, %v1347
      %1381 = vmatprep.subr.bf16.mxu0 0
      %1382 = vmatpush1.bf16.msra.mxu0 %v1349
      %1383 = vmatprep.subr.bf16.mxu0 0
      %1384 = vmatpush1.bf16.msra.mxu0 %v1350
      %1385 = vmatprep.subr.bf16.mxu0 0
      %1386 = vmatpush1.bf16.msra.mxu0 %v1351
      %1387 = vmatprep.subr.bf16.mxu0 0
      %1388 = vmatpush1.bf16.msra.mxu0 %v1352
      %1389 = vmatprep.subr.bf16.mxu0 0
      %1390 = vmatpush1.bf16.msra.mxu0 %v1353
      %1391 = vmatprep.subr.bf16.mxu0 0
      %1392 = vmatpush1.bf16.msra.mxu0 %v1354
      %1393 = vmatprep.subr.bf16.mxu0 0
      %1394 = vmatpush1.bf16.msra.mxu0 %v1355
      %1395 = vmatprep.subr.bf16.mxu0 0
      %1396 = vmatpush1.bf16.msra.mxu0 %v1356
      %1397 = vmatprep.subr.bf16.mxu0 0
      %1398 = vmatpush1.bf16.msra.mxu0 %v1357
      %1399 = vmatprep.subr.bf16.mxu0 0
      %1400 = vmatpush1.bf16.msra.mxu0 %v1358
      %1401 = vmatprep.subr.bf16.mxu0 0
      %1402 = vmatpush1.bf16.msra.mxu0 %v1359
      %1403 = vmatprep.subr.bf16.mxu0 0
      %1404 = vmatpush1.bf16.msra.mxu0 %v1360
      %1405 = vmatprep.subr.bf16.mxu0 0
      %1406 = vmatpush1.bf16.msra.mxu0 %v1361
      %1407 = vmatprep.subr.bf16.mxu0 0
      %1408 = vmatpush1.bf16.msra.mxu0 %v1362
      %1409 = vmatprep.subr.bf16.mxu0 0
      %1410 = vmatpush1.bf16.msra.mxu0 %v1363
      %1411 = vmatprep.subr.bf16.mxu0 0
      %1412 = vmatpush1.bf16.msra.mxu0 %v1364
      %1413 = vmatprep.mubr.bf16.mxu0 %v852
      %1414 = vmatmul.mubr.bf16.gmra.mrb[0].mxu0 %v804
      %v1415 = vpop.f32.mrb[0].mxu0
      %v1416 = vadd.f32 %v1159, %v1415
      %v1417 = vpop.f32.mrb[0].mxu0
      %v1418 = vpop.f32.mrb[0].mxu0
      %v1419 = vadd.f32 %v1162, %v1418
      %v1420 = vpop.f32.mrb[0].mxu0
      %1421 = vmatprep.mubr.bf16.mxu0 %v853
      %1422 = vmatmul.mubr.bf16.gmra.mrb[0].mxu0 %v805
      %v1423 = vpop.f32.mrb[0].mxu0
      %v1424 = vadd.f32 %v1167, %v1423
      %v1425 = vpop.f32.mrb[0].mxu0
      %v1426 = vpop.f32.mrb[0].mxu0
      %v1427 = vadd.f32 %v1170, %v1426
      %v1428 = vpop.f32.mrb[0].mxu0
      %1429 = vmatprep.mubr.bf16.mxu0 %v854
      %1430 = vmatmul.mubr.bf16.gmra.mrb[0].mxu0 %v806
      %v1431 = vpop.f32.mrb[0].mxu0
      %v1432 = vadd.f32 %v1175, %v1431
      %v1433 = vpop.f32.mrb[0].mxu0
      %v1434 = vpop.f32.mrb[0].mxu0
      %v1435 = vadd.f32 %v1178, %v1434
      %v1436 = vpop.f32.mrb[0].mxu0
      %1437 = vmatprep.mubr.bf16.mxu0 %v855
      %1438 = vmatmul.mubr.bf16.gmra.mrb[0].mxu0 %v807
      %v1439 = vpop.f32.mrb[0].mxu0
      %v1440 = vadd.f32 %v1183, %v1439
      %v1441 = vpop.f32.mrb[0].mxu0
      %v1442 = vpop.f32.mrb[0].mxu0
      %v1443 = vadd.f32 %v1186, %v1442
      %v1444 = vpop.f32.mrb[0].mxu0
      %1445 = vmatprep.mubr.bf16.mxu0 %v856
      %1446 = vmatmul.mubr.bf16.gmra.mrb[0].mxu0 %v808
      %v1447 = vpop.f32.mrb[0].mxu0
      %v1448 = vadd.f32 %v1191, %v1447
      %v1449 = vpop.f32.mrb[0].mxu0
      %v1450 = vpop.f32.mrb[0].mxu0
      %v1451 = vadd.f32 %v1194, %v1450
      %v1452 = vpop.f32.mrb[0].mxu0
      %1453 = vmatprep.mubr.bf16.mxu0 %v857
      %1454 = vmatmul.mubr.bf16.gmra.mrb[0].mxu0 %v809
      %v1455 = vpop.f32.mrb[0].mxu0
      %v1456 = vadd.f32 %v1199, %v1455
      %v1457 = vpop.f32.mrb[0].mxu0
      %v1458 = vpop.f32.mrb[0].mxu0
      %v1459 = vadd.f32 %v1202, %v1458
      %v1460 = vpop.f32.mrb[0].mxu0
      %1461 = vmatprep.mubr.bf16.mxu0 %v858
      %1462 = vmatmul.mubr.bf16.gmra.mrb[0].mxu0 %v810
      %v1463 = vpop.f32.mrb[0].mxu0
      %v1464 = vadd.f32 %v1207, %v1463
      %v1465 = vpop.f32.mrb[0].mxu0
      %v1466 = vpop.f32.mrb[0].mxu0
      %v1467 = vadd.f32 %v1210, %v1466
      %v1468 = vpop.f32.mrb[0].mxu0
      %1469 = vmatprep.mubr.bf16.mxu0 %v859
      %1470 = vmatmul.mubr.bf16.gmra.mrb[0].mxu0 %v811
      %v1471 = vpop.f32.mrb[0].mxu0
      %v1472 = vadd.f32 %v1215, %v1471
      %v1473 = vpop.f32.mrb[0].mxu0
      %v1474 = vpop.f32.mrb[0].mxu0
      %v1475 = vadd.f32 %v1218, %v1474
      %v1476 = vpop.f32.mrb[0].mxu0
      %1477 = vmatprep.mubr.bf16.mxu0 %v860
      %1478 = vmatmul.mubr.bf16.gmra.mrb[0].mxu0 %v812
      %v1479 = vpop.f32.mrb[0].mxu0
      %v1480 = vadd.f32 %v1223, %v1479
      %v1481 = vpop.f32.mrb[0].mxu0
      %v1482 = vpop.f32.mrb[0].mxu0
      %v1483 = vadd.f32 %v1226, %v1482
      %v1484 = vpop.f32.mrb[0].mxu0
      %1485 = vmatprep.mubr.bf16.mxu0 %v861
      %1486 = vmatmul.mubr.bf16.gmra.mrb[0].mxu0 %v813
      %v1487 = vpop.f32.mrb[0].mxu0
      %v1488 = vadd.f32 %v1231, %v1487
      %v1489 = vpop.f32.mrb[0].mxu0
      %v1490 = vpop.f32.mrb[0].mxu0
      %v1491 = vadd.f32 %v1234, %v1490
      %v1492 = vpop.f32.mrb[0].mxu0
      %1493 = vmatprep.mubr.bf16.mxu0 %v862
      %1494 = vmatmul.mubr.bf16.gmra.mrb[0].mxu0 %v814
      %v1495 = vpop.f32.mrb[0].mxu0
      %v1496 = vadd.f32 %v1239, %v1495
      %v1497 = vpop.f32.mrb[0].mxu0
      %v1498 = vpop.f32.mrb[0].mxu0
      %v1499 = vadd.f32 %v1242, %v1498
      %v1500 = vpop.f32.mrb[0].mxu0
      %1501 = vmatprep.mubr.bf16.mxu0 %v863
      %1502 = vmatmul.mubr.bf16.gmra.mrb[0].mxu0 %v815
      %v1503 = vpop.f32.mrb[0].mxu0
      %v1504 = vadd.f32 %v1247, %v1503
      %v1505 = vpop.f32.mrb[0].mxu0
      %v1506 = vpop.f32.mrb[0].mxu0
      %v1507 = vadd.f32 %v1250, %v1506
      %v1508 = vpop.f32.mrb[0].mxu0
      %1509 = vmatprep.mubr.bf16.mxu0 %v864
      %1510 = vmatmul.mubr.bf16.gmra.mrb[0].mxu0 %v816
      %v1511 = vpop.f32.mrb[0].mxu0
      %v1512 = vadd.f32 %v1255, %v1511
      %v1513 = vpop.f32.mrb[0].mxu0
      %v1514 = vpop.f32.mrb[0].mxu0
      %v1515 = vadd.f32 %v1258, %v1514
      %v1516 = vpop.f32.mrb[0].mxu0
      %1517 = vmatprep.mubr.bf16.mxu0 %v865
      %1518 = vmatmul.mubr.bf16.gmra.mrb[0].mxu0 %v817
      %v1519 = vpop.f32.mrb[0].mxu0
      %v1520 = vadd.f32 %v1263, %v1519
      %v1521 = vpop.f32.mrb[0].mxu0
      %v1522 = vpop.f32.mrb[0].mxu0
      %v1523 = vadd.f32 %v1266, %v1522
      %v1524 = vpop.f32.mrb[0].mxu0
      %1525 = vmatprep.mubr.bf16.mxu0 %v866
      %1526 = vmatmul.mubr.bf16.gmra.mrb[0].mxu0 %v818
      %v1527 = vpop.f32.mrb[0].mxu0
      %v1528 = vadd.f32 %v1271, %v1527
      %v1529 = vpop.f32.mrb[0].mxu0
      %v1530 = vpop.f32.mrb[0].mxu0
      %v1531 = vadd.f32 %v1274, %v1530
      %v1532 = vpop.f32.mrb[0].mxu0
      %1533 = vmatprep.mubr.bf16.mxu0 %v867
      %1534 = vmatmul.mubr.bf16.gmra.mrb[0].mxu0 %v819
      %v1535 = vpop.f32.mrb[0].mxu0
      %v1536 = vadd.f32 %v1279, %v1535
      %v1537 = vpop.f32.mrb[0].mxu0
      %v1538 = vpop.f32.mrb[0].mxu0
      %v1539 = vadd.f32 %v1282, %v1538
      %v1540 = vpop.f32.mrb[0].mxu0
      %1541 = vdwg.mxu0
      %v1542 = vld [vmem:[%s283 + $0x1] sm:$0xff]
      %v1543 = vld [vmem:[%s283 + $0x9] sm:$0xff]
      %v1544 = vld [vmem:[%s283 + $0x19] sm:$0xff]
      %v1545 = vld [vmem:[%s283 + $0x21] sm:$0xff]
      %v1546 = vld [vmem:[%s283 + $0x31] sm:$0xff]
      %v1547 = vld [vmem:[%s283 + $0x39] sm:$0xff]
      %v1548 = vld [vmem:[%s283 + $0x49] sm:$0xff]
      %v1549 = vld [vmem:[%s283 + $0x51] sm:$0xff]
      %v1550 = vld [vmem:[%s283 + $0x61] sm:$0xff]
      %v1551 = vld [vmem:[%s283 + $0x69] sm:$0xff]
      %v1552 = vld [vmem:[%s283 + $0x79] sm:$0xff]
      %v1553 = vld [vmem:[%s283 + $0x81] sm:$0xff]
      %v1554 = vld [vmem:[%s283 + $0x91] sm:$0xff]
      %v1555 = vld [vmem:[%s283 + $0x99] sm:$0xff]
      %v1556 = vld [vmem:[%s283 + $0xa9] sm:$0xff]
      %v1557 = vld [vmem:[%s283 + $0xb1] sm:$0xff]
      %v1558 = vld [vmem:[%s283 + $0xc1] sm:$0xff]
      %v1559 = vld [vmem:[%s283 + $0xc9] sm:$0xff]
      %v1560 = vld [vmem:[%s283 + $0xd9] sm:$0xff]
      %v1561 = vld [vmem:[%s283 + $0xe1] sm:$0xff]
      %v1562 = vld [vmem:[%s283 + $0xf1] sm:$0xff]
      %v1563 = vld [vmem:[%s283 + $0xf9] sm:$0xff]
      %v1564 = vld [vmem:[%s283 + $0x109] sm:$0xff]
      %v1565 = vld [vmem:[%s283 + $0x111] sm:$0xff]
      %v1566 = vld [vmem:[%s283 + $0x121] sm:$0xff]
      %v1567 = vld [vmem:[%s283 + $0x129] sm:$0xff]
      %v1568 = vld [vmem:[%s283 + $0x139] sm:$0xff]
      %v1569 = vld [vmem:[%s283 + $0x141] sm:$0xff]
      %v1570 = vld [vmem:[%s283 + $0x151] sm:$0xff]
      %v1571 = vld [vmem:[%s283 + $0x159] sm:$0xff]
      %v1572 = vld [vmem:[%s283 + $0x169] sm:$0xff]
      %v1573 = vld [vmem:[%s283 + $0x171] sm:$0xff]
      %v1574 = vpack.c.bf16 %v1543, %v1542
      %v1575 = vpack.c.bf16 %v1545, %v1544
      %v1576 = vpack.c.bf16 %v1547, %v1546
      %v1577 = vpack.c.bf16 %v1549, %v1548
      %v1578 = vpack.c.bf16 %v1551, %v1550
      %v1579 = vpack.c.bf16 %v1553, %v1552
      %v1580 = vpack.c.bf16 %v1555, %v1554
      %v1581 = vpack.c.bf16 %v1557, %v1556
      %v1582 = vpack.c.bf16 %v1559, %v1558
      %v1583 = vpack.c.bf16 %v1561, %v1560
      %v1584 = vpack.c.bf16 %v1563, %v1562
      %v1585 = vpack.c.bf16 %v1565, %v1564
      %v1586 = vpack.c.bf16 %v1567, %v1566
      %v1587 = vpack.c.bf16 %v1569, %v1568
      %v1588 = vpack.c.bf16 %v1571, %v1570
      %v1589 = vpack.c.bf16 %v1573, %v1572
      %v1590 = vld [vmem:[%s283 + $0x2] sm:$0xff]
      %v1591 = vld [vmem:[%s283 + $0xa] sm:$0xff]
      %v1592 = vld [vmem:[%s283 + $0x1a] sm:$0xff]
      %v1593 = vld [vmem:[%s283 + $0x22] sm:$0xff]
      %v1594 = vld [vmem:[%s283 + $0x32] sm:$0xff]
      %v1595 = vld [vmem:[%s283 + $0x3a] sm:$0xff]
      %v1596 = vld [vmem:[%s283 + $0x4a] sm:$0xff]
      %v1597 = vld [vmem:[%s283 + $0x52] sm:$0xff]
      %v1598 = vld [vmem:[%s283 + $0x62] sm:$0xff]
      %v1599 = vld [vmem:[%s283 + $0x6a] sm:$0xff]
      %v1600 = vld [vmem:[%s283 + $0x7a] sm:$0xff]
      %v1601 = vld [vmem:[%s283 + $0x82] sm:$0xff]
      %v1602 = vld [vmem:[%s283 + $0x92] sm:$0xff]
      %v1603 = vld [vmem:[%s283 + $0x9a] sm:$0xff]
      %v1604 = vld [vmem:[%s283 + $0xaa] sm:$0xff]
      %v1605 = vld [vmem:[%s283 + $0xb2] sm:$0xff]
      %v1606 = vld [vmem:[%s283 + $0xc2] sm:$0xff]
      %v1607 = vld [vmem:[%s283 + $0xca] sm:$0xff]
      %v1608 = vld [vmem:[%s283 + $0xda] sm:$0xff]
      %v1609 = vld [vmem:[%s283 + $0xe2] sm:$0xff]
      %v1610 = vld [vmem:[%s283 + $0xf2] sm:$0xff]
      %v1611 = vld [vmem:[%s283 + $0xfa] sm:$0xff]
      %v1612 = vld [vmem:[%s283 + $0x10a] sm:$0xff]
      %v1613 = vld [vmem:[%s283 + $0x112] sm:$0xff]
      %v1614 = vld [vmem:[%s283 + $0x122] sm:$0xff]
      %v1615 = vld [vmem:[%s283 + $0x12a] sm:$0xff]
      %v1616 = vld [vmem:[%s283 + $0x13a] sm:$0xff]
      %v1617 = vld [vmem:[%s283 + $0x142] sm:$0xff]
      %v1618 = vld [vmem:[%s283 + $0x152] sm:$0xff]
      %v1619 = vld [vmem:[%s283 + $0x15a] sm:$0xff]
      %v1620 = vld [vmem:[%s283 + $0x16a] sm:$0xff]
      %v1621 = vld [vmem:[%s283 + $0x172] sm:$0xff]
      %v1622 = vpack.c.bf16 %v1591, %v1590
      %v1623 = vpack.c.bf16 %v1593, %v1592
      %v1624 = vpack.c.bf16 %v1595, %v1594
      %v1625 = vpack.c.bf16 %v1597, %v1596
      %v1626 = vpack.c.bf16 %v1599, %v1598
      %v1627 = vpack.c.bf16 %v1601, %v1600
      %v1628 = vpack.c.bf16 %v1603, %v1602
      %v1629 = vpack.c.bf16 %v1605, %v1604
      %v1630 = vpack.c.bf16 %v1607, %v1606
      %v1631 = vpack.c.bf16 %v1609, %v1608
      %v1632 = vpack.c.bf16 %v1611, %v1610
      %v1633 = vpack.c.bf16 %v1613, %v1612
      %v1634 = vpack.c.bf16 %v1615, %v1614
      %v1635 = vpack.c.bf16 %v1617, %v1616
      %v1636 = vpack.c.bf16 %v1619, %v1618
      %v1637 = vpack.c.bf16 %v1621, %v1620
      %v1638 = vld [vmem:[%s3 + $0x100] sm:$0xf]
      %v1639 = vld [vmem:[%s3 + $0x104] sm:$0xf]
      %v1640 = vld [vmem:[%s3 + $0x108] sm:$0xf]
      %v1641 = vld [vmem:[%s3 + $0x10c] sm:$0xf]
      %v1642 = vld [vmem:[%s3 + $0x110] sm:$0xf]
      %v1643 = vld [vmem:[%s3 + $0x114] sm:$0xf]
      %v1644 = vld [vmem:[%s3 + $0x118] sm:$0xf]
      %v1645 = vld [vmem:[%s3 + $0x11c] sm:$0xf]
      %v1646 = vld [vmem:[%s3 + $0x120] sm:$0xf]
      %v1647 = vld [vmem:[%s3 + $0x124] sm:$0xf]
      %v1648 = vld [vmem:[%s3 + $0x128] sm:$0xf]
      %v1649 = vld [vmem:[%s3 + $0x12c] sm:$0xf]
      %v1650 = vld [vmem:[%s3 + $0x130] sm:$0xf]
      %v1651 = vld [vmem:[%s3 + $0x134] sm:$0xf]
      %v1652 = vld [vmem:[%s3 + $0x138] sm:$0xf]
      %v1653 = vld [vmem:[%s3 + $0x13c] sm:$0xf]
      %v1654 = vld [vmem:[%s3 + $0x140] sm:$0xf]
      %v1655 = vld [vmem:[%s3 + $0x144] sm:$0xf]
      %v1656 = vld [vmem:[%s3 + $0x148] sm:$0xf]
      %v1657 = vld [vmem:[%s3 + $0x14c] sm:$0xf]
      %v1658 = vld [vmem:[%s3 + $0x150] sm:$0xf]
      %v1659 = vld [vmem:[%s3 + $0x154] sm:$0xf]
      %v1660 = vld [vmem:[%s3 + $0x158] sm:$0xf]
      %v1661 = vld [vmem:[%s3 + $0x15c] sm:$0xf]
      %v1662 = vld [vmem:[%s3 + $0x160] sm:$0xf]
      %v1663 = vld [vmem:[%s3 + $0x164] sm:$0xf]
      %v1664 = vld [vmem:[%s3 + $0x168] sm:$0xf]
      %v1665 = vld [vmem:[%s3 + $0x16c] sm:$0xf]
      %v1666 = vld [vmem:[%s3 + $0x170] sm:$0xf]
      %v1667 = vld [vmem:[%s3 + $0x174] sm:$0xf]
      %v1668 = vld [vmem:[%s3 + $0x178] sm:$0xf]
      %v1669 = vld [vmem:[%s3 + $0x17c] sm:$0xf]
      %v1702 = vunpack.c.l.b16 %v1638
      %v1703 = vunpack.c.l.b16 %v1639
      %v1704 = vunpack.c.l.b16 %v1640
      %v1705 = vunpack.c.l.b16 %v1641
      %v1706 = vunpack.c.l.b16 %v1642
      %v1707 = vunpack.c.l.b16 %v1643
      %v1708 = vunpack.c.l.b16 %v1644
      %v1709 = vunpack.c.l.b16 %v1645
      %v1710 = vunpack.c.l.b16 %v1646
      %v1711 = vunpack.c.l.b16 %v1647
      %v1712 = vunpack.c.l.b16 %v1648
      %v1713 = vunpack.c.l.b16 %v1649
      %v1714 = vunpack.c.l.b16 %v1650
      %v1715 = vunpack.c.l.b16 %v1651
      %v1716 = vunpack.c.l.b16 %v1652
      %v1717 = vunpack.c.l.b16 %v1653
      %v1718 = vunpack.c.l.b16 %v1654
      %v1719 = vunpack.c.l.b16 %v1655
      %v1720 = vunpack.c.l.b16 %v1656
      %v1721 = vunpack.c.l.b16 %v1657
      %v1722 = vunpack.c.l.b16 %v1658
      %v1723 = vunpack.c.l.b16 %v1659
      %v1724 = vunpack.c.l.b16 %v1660
      %v1725 = vunpack.c.l.b16 %v1661
      %v1726 = vunpack.c.l.b16 %v1662
      %v1727 = vunpack.c.l.b16 %v1663
      %v1728 = vunpack.c.l.b16 %v1664
      %v1729 = vunpack.c.l.b16 %v1665
      %v1730 = vunpack.c.l.b16 %v1666
      %v1731 = vunpack.c.l.b16 %v1667
      %v1732 = vunpack.c.l.b16 %v1668
      %v1733 = vunpack.c.l.b16 %v1669
      %v1734 = vpack.c.b16 %v1703, %v1702
      %v1735 = vpack.c.b16 %v1705, %v1704
      %v1736 = vpack.c.b16 %v1707, %v1706
      %v1737 = vpack.c.b16 %v1709, %v1708
      %v1738 = vpack.c.b16 %v1711, %v1710
      %v1739 = vpack.c.b16 %v1713, %v1712
      %v1740 = vpack.c.b16 %v1715, %v1714
      %v1741 = vpack.c.b16 %v1717, %v1716
      %v1742 = vpack.c.b16 %v1719, %v1718
      %v1743 = vpack.c.b16 %v1721, %v1720
      %v1744 = vpack.c.b16 %v1723, %v1722
      %v1745 = vpack.c.b16 %v1725, %v1724
      %v1746 = vpack.c.b16 %v1727, %v1726
      %v1747 = vpack.c.b16 %v1729, %v1728
      %v1748 = vpack.c.b16 %v1731, %v1730
      %v1749 = vpack.c.b16 %v1733, %v1732
      %1766 = vmatprep.subr.bf16.mxu0 0
      %1767 = vmatpush1.bf16.msra.mxu0 %v1734
      %1768 = vmatprep.subr.bf16.mxu0 0
      %1769 = vmatpush1.bf16.msra.mxu0 %v1735
      %1770 = vmatprep.subr.bf16.mxu0 0
      %1771 = vmatpush1.bf16.msra.mxu0 %v1736
      %1772 = vmatprep.subr.bf16.mxu0 0
      %1773 = vmatpush1.bf16.msra.mxu0 %v1737
      %1774 = vmatprep.subr.bf16.mxu0 0
      %1775 = vmatpush1.bf16.msra.mxu0 %v1738
      %1776 = vmatprep.subr.bf16.mxu0 0
      %1777 = vmatpush1.bf16.msra.mxu0 %v1739
      %1778 = vmatprep.subr.bf16.mxu0 0
      %1779 = vmatpush1.bf16.msra.mxu0 %v1740
      %1780 = vmatprep.subr.bf16.mxu0 0
      %1781 = vmatpush1.bf16.msra.mxu0 %v1741
      %1782 = vmatprep.subr.bf16.mxu0 0
      %1783 = vmatpush1.bf16.msra.mxu0 %v1742
      %1784 = vmatprep.subr.bf16.mxu0 0
      %1785 = vmatpush1.bf16.msra.mxu0 %v1743
      %1786 = vmatprep.subr.bf16.mxu0 0
      %1787 = vmatpush1.bf16.msra.mxu0 %v1744
      %1788 = vmatprep.subr.bf16.mxu0 0
      %1789 = vmatpush1.bf16.msra.mxu0 %v1745
      %1790 = vmatprep.subr.bf16.mxu0 0
      %1791 = vmatpush1.bf16.msra.mxu0 %v1746
      %1792 = vmatprep.subr.bf16.mxu0 0
      %1793 = vmatpush1.bf16.msra.mxu0 %v1747
      %1794 = vmatprep.subr.bf16.mxu0 0
      %1795 = vmatpush1.bf16.msra.mxu0 %v1748
      %1796 = vmatprep.subr.bf16.mxu0 0
      %1797 = vmatpush1.bf16.msra.mxu0 %v1749
      %1798 = vmatprep.mubr.bf16.mxu0 %v1622
      %1799 = vmatmul.mubr.bf16.gmra.mrb[0].mxu0 %v1574
      %v1800 = vpop.f32.mrb[0].mxu0
      %v1801 = vadd.f32 0.0, %v1800
      %v1802 = vpop.f32.mrb[0].mxu0
      %v1803 = vpop.f32.mrb[0].mxu0
      %v1804 = vadd.f32 0.0, %v1803
      %v1805 = vpop.f32.mrb[0].mxu0
      %1806 = vmatprep.mubr.bf16.mxu0 %v1623
      %1807 = vmatmul.mubr.bf16.gmra.mrb[0].mxu0 %v1575
      %v1808 = vpop.f32.mrb[0].mxu0
      %v1809 = vadd.f32 0.0, %v1808
      %v1810 = vpop.f32.mrb[0].mxu0
      %v1811 = vpop.f32.mrb[0].mxu0
      %v1812 = vadd.f32 0.0, %v1811
      %v1813 = vpop.f32.mrb[0].mxu0
      %1814 = vmatprep.mubr.bf16.mxu0 %v1624
      %1815 = vmatmul.mubr.bf16.gmra.mrb[0].mxu0 %v1576
      %v1816 = vpop.f32.mrb[0].mxu0
      %v1817 = vadd.f32 0.0, %v1816
      %v1818 = vpop.f32.mrb[0].mxu0
      %v1819 = vpop.f32.mrb[0].mxu0
      %v1820 = vadd.f32 0.0, %v1819
      %v1821 = vpop.f32.mrb[0].mxu0
      %1822 = vmatprep.mubr.bf16.mxu0 %v1625
      %1823 = vmatmul.mubr.bf16.gmra.mrb[0].mxu0 %v1577
      %v1824 = vpop.f32.mrb[0].mxu0
      %v1825 = vadd.f32 0.0, %v1824
      %v1826 = vpop.f32.mrb[0].mxu0
      %v1827 = vpop.f32.mrb[0].mxu0
      %v1828 = vadd.f32 0.0, %v1827
      %v1829 = vpop.f32.mrb[0].mxu0
      %1830 = vmatprep.mubr.bf16.mxu0 %v1626
      %1831 = vmatmul.mubr.bf16.gmra.mrb[0].mxu0 %v1578
      %v1832 = vpop.f32.mrb[0].mxu0
      %v1833 = vadd.f32 0.0, %v1832
      %v1834 = vpop.f32.mrb[0].mxu0
      %v1835 = vpop.f32.mrb[0].mxu0
      %v1836 = vadd.f32 0.0, %v1835
      %v1837 = vpop.f32.mrb[0].mxu0
      %1838 = vmatprep.mubr.bf16.mxu0 %v1627
      %1839 = vmatmul.mubr.bf16.gmra.mrb[0].mxu0 %v1579
      %v1840 = vpop.f32.mrb[0].mxu0
      %v1841 = vadd.f32 0.0, %v1840
      %v1842 = vpop.f32.mrb[0].mxu0
      %v1843 = vpop.f32.mrb[0].mxu0
      %v1844 = vadd.f32 0.0, %v1843
      %v1845 = vpop.f32.mrb[0].mxu0
      %1846 = vmatprep.mubr.bf16.mxu0 %v1628
      %1847 = vmatmul.mubr.bf16.gmra.mrb[0].mxu0 %v1580
      %v1848 = vpop.f32.mrb[0].mxu0
      %v1849 = vadd.f32 0.0, %v1848
      %v1850 = vpop.f32.mrb[0].mxu0
      %v1851 = vpop.f32.mrb[0].mxu0
      %v1852 = vadd.f32 0.0, %v1851
      %v1853 = vpop.f32.mrb[0].mxu0
      %1854 = vmatprep.mubr.bf16.mxu0 %v1629
      %1855 = vmatmul.mubr.bf16.gmra.mrb[0].mxu0 %v1581
      %v1856 = vpop.f32.mrb[0].mxu0
      %v1857 = vadd.f32 0.0, %v1856
      %v1858 = vpop.f32.mrb[0].mxu0
      %v1859 = vpop.f32.mrb[0].mxu0
      %v1860 = vadd.f32 0.0, %v1859
      %v1861 = vpop.f32.mrb[0].mxu0
      %1862 = vmatprep.mubr.bf16.mxu0 %v1630
      %1863 = vmatmul.mubr.bf16.gmra.mrb[0].mxu0 %v1582
      %v1864 = vpop.f32.mrb[0].mxu0
      %v1865 = vadd.f32 0.0, %v1864
      %v1866 = vpop.f32.mrb[0].mxu0
      %v1867 = vpop.f32.mrb[0].mxu0
      %v1868 = vadd.f32 0.0, %v1867
      %v1869 = vpop.f32.mrb[0].mxu0
      %1870 = vmatprep.mubr.bf16.mxu0 %v1631
      %1871 = vmatmul.mubr.bf16.gmra.mrb[0].mxu0 %v1583
      %v1872 = vpop.f32.mrb[0].mxu0
      %v1873 = vadd.f32 0.0, %v1872
      %v1874 = vpop.f32.mrb[0].mxu0
      %v1875 = vpop.f32.mrb[0].mxu0
      %v1876 = vadd.f32 0.0, %v1875
      %v1877 = vpop.f32.mrb[0].mxu0
      %1878 = vmatprep.mubr.bf16.mxu0 %v1632
      %1879 = vmatmul.mubr.bf16.gmra.mrb[0].mxu0 %v1584
      %v1880 = vpop.f32.mrb[0].mxu0
      %v1881 = vadd.f32 0.0, %v1880
      %v1882 = vpop.f32.mrb[0].mxu0
      %v1883 = vpop.f32.mrb[0].mxu0
      %v1884 = vadd.f32 0.0, %v1883
      %v1885 = vpop.f32.mrb[0].mxu0
      %1886 = vmatprep.mubr.bf16.mxu0 %v1633
      %1887 = vmatmul.mubr.bf16.gmra.mrb[0].mxu0 %v1585
      %v1888 = vpop.f32.mrb[0].mxu0
      %v1889 = vadd.f32 0.0, %v1888
      %v1890 = vpop.f32.mrb[0].mxu0
      %v1891 = vpop.f32.mrb[0].mxu0
      %v1892 = vadd.f32 0.0, %v1891
      %v1893 = vpop.f32.mrb[0].mxu0
      %1894 = vmatprep.mubr.bf16.mxu0 %v1634
      %1895 = vmatmul.mubr.bf16.gmra.mrb[0].mxu0 %v1586
      %v1896 = vpop.f32.mrb[0].mxu0
      %v1897 = vadd.f32 0.0, %v1896
      %v1898 = vpop.f32.mrb[0].mxu0
      %v1899 = vpop.f32.mrb[0].mxu0
      %v1900 = vadd.f32 0.0, %v1899
      %v1901 = vpop.f32.mrb[0].mxu0
      %1902 = vmatprep.mubr.bf16.mxu0 %v1635
      %1903 = vmatmul.mubr.bf16.gmra.mrb[0].mxu0 %v1587
      %v1904 = vpop.f32.mrb[0].mxu0
      %v1905 = vadd.f32 0.0, %v1904
      %v1906 = vpop.f32.mrb[0].mxu0
      %v1907 = vpop.f32.mrb[0].mxu0
      %v1908 = vadd.f32 0.0, %v1907
      %v1909 = vpop.f32.mrb[0].mxu0
      %1910 = vmatprep.mubr.bf16.mxu0 %v1636
      %1911 = vmatmul.mubr.bf16.gmra.mrb[0].mxu0 %v1588
      %v1912 = vpop.f32.mrb[0].mxu0
      %v1913 = vadd.f32 0.0, %v1912
      %v1914 = vpop.f32.mrb[0].mxu0
      %v1915 = vpop.f32.mrb[0].mxu0
      %v1916 = vadd.f32 0.0, %v1915
      %v1917 = vpop.f32.mrb[0].mxu0
      %1918 = vmatprep.mubr.bf16.mxu0 %v1637
      %1919 = vmatmul.mubr.bf16.gmra.mrb[0].mxu0 %v1589
      %v1920 = vpop.f32.mrb[0].mxu0
      %v1921 = vadd.f32 0.0, %v1920
      %v1922 = vpop.f32.mrb[0].mxu0
      %v1923 = vpop.f32.mrb[0].mxu0
      %v1924 = vadd.f32 0.0, %v1923
      %v1925 = vpop.f32.mrb[0].mxu0
      %1926 = vdwg.mxu0
      %v1927 = vadd.f32 %v1416, %v1801
      %v1928 = vadd.f32 %v1419, %v1804
      %v1929 = vadd.f32 %v1424, %v1809
      %v1930 = vadd.f32 %v1427, %v1812
      %v1931 = vadd.f32 %v1432, %v1817
      %v1932 = vadd.f32 %v1435, %v1820
      %v1933 = vadd.f32 %v1440, %v1825
      %v1934 = vadd.f32 %v1443, %v1828
      %v1935 = vadd.f32 %v1448, %v1833
      %v1936 = vadd.f32 %v1451, %v1836
      %v1937 = vadd.f32 %v1456, %v1841
      %v1938 = vadd.f32 %v1459, %v1844
      %v1939 = vadd.f32 %v1464, %v1849
      %v1940 = vadd.f32 %v1467, %v1852
      %v1941 = vadd.f32 %v1472, %v1857
      %v1942 = vadd.f32 %v1475, %v1860
      %v1943 = vadd.f32 %v1480, %v1865
      %v1944 = vadd.f32 %v1483, %v1868
      %v1945 = vadd.f32 %v1488, %v1873
      %v1946 = vadd.f32 %v1491, %v1876
      %v1947 = vadd.f32 %v1496, %v1881
      %v1948 = vadd.f32 %v1499, %v1884
      %v1949 = vadd.f32 %v1504, %v1889
      %v1950 = vadd.f32 %v1507, %v1892
      %v1951 = vadd.f32 %v1512, %v1897
      %v1952 = vadd.f32 %v1515, %v1900
      %v1953 = vadd.f32 %v1520, %v1905
      %v1954 = vadd.f32 %v1523, %v1908
      %v1955 = vadd.f32 %v1528, %v1913
      %v1956 = vadd.f32 %v1531, %v1916
      %v1957 = vadd.f32 %v1536, %v1921
      %v1958 = vadd.f32 %v1539, %v1924
      %s1959 = scalar_lea.vmem [#allocation2], 48
      %v1960 = vld [vmem:[%s1959] sm:$0xff]
      %v1961 = vld [vmem:[%s1959 + $0x8] sm:$0xff]
      %v1962 = vld [vmem:[%s1959 + $0x18] sm:$0xff]
      %v1963 = vld [vmem:[%s1959 + $0x20] sm:$0xff]
      %v1964 = vld [vmem:[%s1959 + $0x30] sm:$0xff]
      %v1965 = vld [vmem:[%s1959 + $0x38] sm:$0xff]
      %v1966 = vld [vmem:[%s1959 + $0x48] sm:$0xff]
      %v1967 = vld [vmem:[%s1959 + $0x50] sm:$0xff]
      %v1968 = vld [vmem:[%s1959 + $0x60] sm:$0xff]
      %v1969 = vld [vmem:[%s1959 + $0x68] sm:$0xff]
      %v1970 = vld [vmem:[%s1959 + $0x78] sm:$0xff]
      %v1971 = vld [vmem:[%s1959 + $0x80] sm:$0xff]
      %v1972 = vld [vmem:[%s1959 + $0x90] sm:$0xff]
      %v1973 = vld [vmem:[%s1959 + $0x98] sm:$0xff]
      %v1974 = vld [vmem:[%s1959 + $0xa8] sm:$0xff]
      %v1975 = vld [vmem:[%s1959 + $0xb0] sm:$0xff]
      %v1976 = vld [vmem:[%s1959 + $0xc0] sm:$0xff]
      %v1977 = vld [vmem:[%s1959 + $0xc8] sm:$0xff]
      %v1978 = vld [vmem:[%s1959 + $0xd8] sm:$0xff]
      %v1979 = vld [vmem:[%s1959 + $0xe0] sm:$0xff]
      %v1980 = vld [vmem:[%s1959 + $0xf0] sm:$0xff]
      %v1981 = vld [vmem:[%s1959 + $0xf8] sm:$0xff]
      %v1982 = vld [vmem:[%s1959 + $0x108] sm:$0xff]
      %v1983 = vld [vmem:[%s1959 + $0x110] sm:$0xff]
      %v1984 = vld [vmem:[%s1959 + $0x120] sm:$0xff]
      %v1985 = vld [vmem:[%s1959 + $0x128] sm:$0xff]
      %v1986 = vld [vmem:[%s1959 + $0x138] sm:$0xff]
      %v1987 = vld [vmem:[%s1959 + $0x140] sm:$0xff]
      %v1988 = vld [vmem:[%s1959 + $0x150] sm:$0xff]
      %v1989 = vld [vmem:[%s1959 + $0x158] sm:$0xff]
      %v1990 = vld [vmem:[%s1959 + $0x168] sm:$0xff]
      %v1991 = vld [vmem:[%s1959 + $0x170] sm:$0xff]
      %v1992 = vpack.c.bf16 %v1961, %v1960
      %v1993 = vpack.c.bf16 %v1963, %v1962
      %v1994 = vpack.c.bf16 %v1965, %v1964
      %v1995 = vpack.c.bf16 %v1967, %v1966
      %v1996 = vpack.c.bf16 %v1969, %v1968
      %v1997 = vpack.c.bf16 %v1971, %v1970
      %v1998 = vpack.c.bf16 %v1973, %v1972
      %v1999 = vpack.c.bf16 %v1975, %v1974
      %v2000 = vpack.c.bf16 %v1977, %v1976
      %v2001 = vpack.c.bf16 %v1979, %v1978
      %v2002 = vpack.c.bf16 %v1981, %v1980
      %v2003 = vpack.c.bf16 %v1983, %v1982
      %v2004 = vpack.c.bf16 %v1985, %v1984
      %v2005 = vpack.c.bf16 %v1987, %v1986
      %v2006 = vpack.c.bf16 %v1989, %v1988
      %v2007 = vpack.c.bf16 %v1991, %v1990
      %v2008 = vld [vmem:[%s1959 + $0x1] sm:$0xff]
      %v2009 = vld [vmem:[%s1959 + $0x9] sm:$0xff]
      %v2010 = vld [vmem:[%s1959 + $0x19] sm:$0xff]
      %v2011 = vld [vmem:[%s1959 + $0x21] sm:$0xff]
      %v2012 = vld [vmem:[%s1959 + $0x31] sm:$0xff]
      %v2013 = vld [vmem:[%s1959 + $0x39] sm:$0xff]
      %v2014 = vld [vmem:[%s1959 + $0x49] sm:$0xff]
      %v2015 = vld [vmem:[%s1959 + $0x51] sm:$0xff]
      %v2016 = vld [vmem:[%s1959 + $0x61] sm:$0xff]
      %v2017 = vld [vmem:[%s1959 + $0x69] sm:$0xff]
      %v2018 = vld [vmem:[%s1959 + $0x79] sm:$0xff]
      %v2019 = vld [vmem:[%s1959 + $0x81] sm:$0xff]
      %v2020 = vld [vmem:[%s1959 + $0x91] sm:$0xff]
      %v2021 = vld [vmem:[%s1959 + $0x99] sm:$0xff]
      %v2022 = vld [vmem:[%s1959 + $0xa9] sm:$0xff]
      %v2023 = vld [vmem:[%s1959 + $0xb1] sm:$0xff]
      %v2024 = vld [vmem:[%s1959 + $0xc1] sm:$0xff]
      %v2025 = vld [vmem:[%s1959 + $0xc9] sm:$0xff]
      %v2026 = vld [vmem:[%s1959 + $0xd9] sm:$0xff]
      %v2027 = vld [vmem:[%s1959 + $0xe1] sm:$0xff]
      %v2028 = vld [vmem:[%s1959 + $0xf1] sm:$0xff]
      %v2029 = vld [vmem:[%s1959 + $0xf9] sm:$0xff]
      %v2030 = vld [vmem:[%s1959 + $0x109] sm:$0xff]
      %v2031 = vld [vmem:[%s1959 + $0x111] sm:$0xff]
      %v2032 = vld [vmem:[%s1959 + $0x121] sm:$0xff]
      %v2033 = vld [vmem:[%s1959 + $0x129] sm:$0xff]
      %v2034 = vld [vmem:[%s1959 + $0x139] sm:$0xff]
      %v2035 = vld [vmem:[%s1959 + $0x141] sm:$0xff]
      %v2036 = vld [vmem:[%s1959 + $0x151] sm:$0xff]
      %v2037 = vld [vmem:[%s1959 + $0x159] sm:$0xff]
      %v2038 = vld [vmem:[%s1959 + $0x169] sm:$0xff]
      %v2039 = vld [vmem:[%s1959 + $0x171] sm:$0xff]
      %v2040 = vpack.c.bf16 %v2009, %v2008
      %v2041 = vpack.c.bf16 %v2011, %v2010
      %v2042 = vpack.c.bf16 %v2013, %v2012
      %v2043 = vpack.c.bf16 %v2015, %v2014
      %v2044 = vpack.c.bf16 %v2017, %v2016
      %v2045 = vpack.c.bf16 %v2019, %v2018
      %v2046 = vpack.c.bf16 %v2021, %v2020
      %v2047 = vpack.c.bf16 %v2023, %v2022
      %v2048 = vpack.c.bf16 %v2025, %v2024
      %v2049 = vpack.c.bf16 %v2027, %v2026
      %v2050 = vpack.c.bf16 %v2029, %v2028
      %v2051 = vpack.c.bf16 %v2031, %v2030
      %v2052 = vpack.c.bf16 %v2033, %v2032
      %v2053 = vpack.c.bf16 %v2035, %v2034
      %v2054 = vpack.c.bf16 %v2037, %v2036
      %v2055 = vpack.c.bf16 %v2039, %v2038
      %v2056 = vld [vmem:[%s3 + $0x180] sm:$0xf]
      %v2057 = vld [vmem:[%s3 + $0x184] sm:$0xf]
      %v2058 = vld [vmem:[%s3 + $0x188] sm:$0xf]
      %v2059 = vld [vmem:[%s3 + $0x18c] sm:$0xf]
      %v2060 = vld [vmem:[%s3 + $0x190] sm:$0xf]
      %v2061 = vld [vmem:[%s3 + $0x194] sm:$0xf]
      %v2062 = vld [vmem:[%s3 + $0x198] sm:$0xf]
      %v2063 = vld [vmem:[%s3 + $0x19c] sm:$0xf]
      %v2064 = vld [vmem:[%s3 + $0x1a0] sm:$0xf]
      %v2065 = vld [vmem:[%s3 + $0x1a4] sm:$0xf]
      %v2066 = vld [vmem:[%s3 + $0x1a8] sm:$0xf]
      %v2067 = vld [vmem:[%s3 + $0x1ac] sm:$0xf]
      %v2068 = vld [vmem:[%s3 + $0x1b0] sm:$0xf]
      %v2069 = vld [vmem:[%s3 + $0x1b4] sm:$0xf]
      %v2070 = vld [vmem:[%s3 + $0x1b8] sm:$0xf]
      %v2071 = vld [vmem:[%s3 + $0x1bc] sm:$0xf]
      %v2072 = vld [vmem:[%s3 + $0x1c0] sm:$0xf]
      %v2073 = vld [vmem:[%s3 + $0x1c4] sm:$0xf]
      %v2074 = vld [vmem:[%s3 + $0x1c8] sm:$0xf]
      %v2075 = vld [vmem:[%s3 + $0x1cc] sm:$0xf]
      %v2076 = vld [vmem:[%s3 + $0x1d0] sm:$0xf]
      %v2077 = vld [vmem:[%s3 + $0x1d4] sm:$0xf]
      %v2078 = vld [vmem:[%s3 + $0x1d8] sm:$0xf]
      %v2079 = vld [vmem:[%s3 + $0x1dc] sm:$0xf]
      %v2080 = vld [vmem:[%s3 + $0x1e0] sm:$0xf]
      %v2081 = vld [vmem:[%s3 + $0x1e4] sm:$0xf]
      %v2082 = vld [vmem:[%s3 + $0x1e8] sm:$0xf]
      %v2083 = vld [vmem:[%s3 + $0x1ec] sm:$0xf]
      %v2084 = vld [vmem:[%s3 + $0x1f0] sm:$0xf]
      %v2085 = vld [vmem:[%s3 + $0x1f4] sm:$0xf]
      %v2086 = vld [vmem:[%s3 + $0x1f8] sm:$0xf]
      %v2087 = vld [vmem:[%s3 + $0x1fc] sm:$0xf]
      %v2120 = vunpack.c.l.b16 %v2056
      %v2121 = vunpack.c.l.b16 %v2057
      %v2122 = vunpack.c.l.b16 %v2058
      %v2123 = vunpack.c.l.b16 %v2059
      %v2124 = vunpack.c.l.b16 %v2060
      %v2125 = vunpack.c.l.b16 %v2061
      %v2126 = vunpack.c.l.b16 %v2062
      %v2127 = vunpack.c.l.b16 %v2063
      %v2128 = vunpack.c.l.b16 %v2064
      %v2129 = vunpack.c.l.b16 %v2065
      %v2130 = vunpack.c.l.b16 %v2066
      %v2131 = vunpack.c.l.b16 %v2067
      %v2132 = vunpack.c.l.b16 %v2068
      %v2133 = vunpack.c.l.b16 %v2069
      %v2134 = vunpack.c.l.b16 %v2070
      %v2135 = vunpack.c.l.b16 %v2071
      %v2136 = vunpack.c.l.b16 %v2072
      %v2137 = vunpack.c.l.b16 %v2073
      %v2138 = vunpack.c.l.b16 %v2074
      %v2139 = vunpack.c.l.b16 %v2075
      %v2140 = vunpack.c.l.b16 %v2076
      %v2141 = vunpack.c.l.b16 %v2077
      %v2142 = vunpack.c.l.b16 %v2078
      %v2143 = vunpack.c.l.b16 %v2079
      %v2144 = vunpack.c.l.b16 %v2080
      %v2145 = vunpack.c.l.b16 %v2081
      %v2146 = vunpack.c.l.b16 %v2082
      %v2147 = vunpack.c.l.b16 %v2083
      %v2148 = vunpack.c.l.b16 %v2084
      %v2149 = vunpack.c.l.b16 %v2085
      %v2150 = vunpack.c.l.b16 %v2086
      %v2151 = vunpack.c.l.b16 %v2087
      %v2152 = vpack.c.b16 %v2121, %v2120
      %v2153 = vpack.c.b16 %v2123, %v2122
      %v2154 = vpack.c.b16 %v2125, %v2124
      %v2155 = vpack.c.b16 %v2127, %v2126
      %v2156 = vpack.c.b16 %v2129, %v2128
      %v2157 = vpack.c.b16 %v2131, %v2130
      %v2158 = vpack.c.b16 %v2133, %v2132
      %v2159 = vpack.c.b16 %v2135, %v2134
      %v2160 = vpack.c.b16 %v2137, %v2136
      %v2161 = vpack.c.b16 %v2139, %v2138
      %v2162 = vpack.c.b16 %v2141, %v2140
      %v2163 = vpack.c.b16 %v2143, %v2142
      %v2164 = vpack.c.b16 %v2145, %v2144
      %v2165 = vpack.c.b16 %v2147, %v2146
      %v2166 = vpack.c.b16 %v2149, %v2148
      %v2167 = vpack.c.b16 %v2151, %v2150
      %2184 = vmatprep.subr.bf16.mxu0 0
      %2185 = vmatpush1.bf16.msra.mxu0 %v2152
      %2186 = vmatprep.subr.bf16.mxu0 0
      %2187 = vmatpush1.bf16.msra.mxu0 %v2153
      %2188 = vmatprep.subr.bf16.mxu0 0
      %2189 = vmatpush1.bf16.msra.mxu0 %v2154
      %2190 = vmatprep.subr.bf16.mxu0 0
      %2191 = vmatpush1.bf16.msra.mxu0 %v2155
      %2192 = vmatprep.subr.bf16.mxu0 0
      %2193 = vmatpush1.bf16.msra.mxu0 %v2156
      %2194 = vmatprep.subr.bf16.mxu0 0
      %2195 = vmatpush1.bf16.msra.mxu0 %v2157
      %2196 = vmatprep.subr.bf16.mxu0 0
      %2197 = vmatpush1.bf16.msra.mxu0 %v2158
      %2198 = vmatprep.subr.bf16.mxu0 0
      %2199 = vmatpush1.bf16.msra.mxu0 %v2159
      %2200 = vmatprep.subr.bf16.mxu0 0
      %2201 = vmatpush1.bf16.msra.mxu0 %v2160
      %2202 = vmatprep.subr.bf16.mxu0 0
      %2203 = vmatpush1.bf16.msra.mxu0 %v2161
      %2204 = vmatprep.subr.bf16.mxu0 0
      %2205 = vmatpush1.bf16.msra.mxu0 %v2162
      %2206 = vmatprep.subr.bf16.mxu0 0
      %2207 = vmatpush1.bf16.msra.mxu0 %v2163
      %2208 = vmatprep.subr.bf16.mxu0 0
      %2209 = vmatpush1.bf16.msra.mxu0 %v2164
      %2210 = vmatprep.subr.bf16.mxu0 0
      %2211 = vmatpush1.bf16.msra.mxu0 %v2165
      %2212 = vmatprep.subr.bf16.mxu0 0
      %2213 = vmatpush1.bf16.msra.mxu0 %v2166
      %2214 = vmatprep.subr.bf16.mxu0 0
      %2215 = vmatpush1.bf16.msra.mxu0 %v2167
      %2216 = vmatprep.mubr.bf16.mxu0 %v2040
      %2217 = vmatmul.mubr.bf16.gmra.mrb[0].mxu0 %v1992
      %v2218 = vpop.f32.mrb[0].mxu0
      %v2219 = vadd.f32 0.0, %v2218
      %v2220 = vpop.f32.mrb[0].mxu0
      %v2221 = vpop.f32.mrb[0].mxu0
      %v2222 = vadd.f32 0.0, %v2221
      %v2223 = vpop.f32.mrb[0].mxu0
      %2224 = vmatprep.mubr.bf16.mxu0 %v2041
      %2225 = vmatmul.mubr.bf16.gmra.mrb[0].mxu0 %v1993
      %v2226 = vpop.f32.mrb[0].mxu0
      %v2227 = vadd.f32 0.0, %v2226
      %v2228 = vpop.f32.mrb[0].mxu0
      %v2229 = vpop.f32.mrb[0].mxu0
      %v2230 = vadd.f32 0.0, %v2229
      %v2231 = vpop.f32.mrb[0].mxu0
      %2232 = vmatprep.mubr.bf16.mxu0 %v2042
      %2233 = vmatmul.mubr.bf16.gmra.mrb[0].mxu0 %v1994
      %v2234 = vpop.f32.mrb[0].mxu0
      %v2235 = vadd.f32 0.0, %v2234
      %v2236 = vpop.f32.mrb[0].mxu0
      %v2237 = vpop.f32.mrb[0].mxu0
      %v2238 = vadd.f32 0.0, %v2237
      %v2239 = vpop.f32.mrb[0].mxu0
      %2240 = vmatprep.mubr.bf16.mxu0 %v2043
      %2241 = vmatmul.mubr.bf16.gmra.mrb[0].mxu0 %v1995
      %v2242 = vpop.f32.mrb[0].mxu0
      %v2243 = vadd.f32 0.0, %v2242
      %v2244 = vpop.f32.mrb[0].mxu0
      %v2245 = vpop.f32.mrb[0].mxu0
      %v2246 = vadd.f32 0.0, %v2245
      %v2247 = vpop.f32.mrb[0].mxu0
      %2248 = vmatprep.mubr.bf16.mxu0 %v2044
      %2249 = vmatmul.mubr.bf16.gmra.mrb[0].mxu0 %v1996
      %v2250 = vpop.f32.mrb[0].mxu0
      %v2251 = vadd.f32 0.0, %v2250
      %v2252 = vpop.f32.mrb[0].mxu0
      %v2253 = vpop.f32.mrb[0].mxu0
      %v2254 = vadd.f32 0.0, %v2253
      %v2255 = vpop.f32.mrb[0].mxu0
      %2256 = vmatprep.mubr.bf16.mxu0 %v2045
      %2257 = vmatmul.mubr.bf16.gmra.mrb[0].mxu0 %v1997
      %v2258 = vpop.f32.mrb[0].mxu0
      %v2259 = vadd.f32 0.0, %v2258
      %v2260 = vpop.f32.mrb[0].mxu0
      %v2261 = vpop.f32.mrb[0].mxu0
      %v2262 = vadd.f32 0.0, %v2261
      %v2263 = vpop.f32.mrb[0].mxu0
      %2264 = vmatprep.mubr.bf16.mxu0 %v2046
      %2265 = vmatmul.mubr.bf16.gmra.mrb[0].mxu0 %v1998
      %v2266 = vpop.f32.mrb[0].mxu0
      %v2267 = vadd.f32 0.0, %v2266
      %v2268 = vpop.f32.mrb[0].mxu0
      %v2269 = vpop.f32.mrb[0].mxu0
      %v2270 = vadd.f32 0.0, %v2269
      %v2271 = vpop.f32.mrb[0].mxu0
      %2272 = vmatprep.mubr.bf16.mxu0 %v2047
      %2273 = vmatmul.mubr.bf16.gmra.mrb[0].mxu0 %v1999
      %v2274 = vpop.f32.mrb[0].mxu0
      %v2275 = vadd.f32 0.0, %v2274
      %v2276 = vpop.f32.mrb[0].mxu0
      %v2277 = vpop.f32.mrb[0].mxu0
      %v2278 = vadd.f32 0.0, %v2277
      %v2279 = vpop.f32.mrb[0].mxu0
      %2280 = vmatprep.mubr.bf16.mxu0 %v2048
      %2281 = vmatmul.mubr.bf16.gmra.mrb[0].mxu0 %v2000
      %v2282 = vpop.f32.mrb[0].mxu0
      %v2283 = vadd.f32 0.0, %v2282
      %v2284 = vpop.f32.mrb[0].mxu0
      %v2285 = vpop.f32.mrb[0].mxu0
      %v2286 = vadd.f32 0.0, %v2285
      %v2287 = vpop.f32.mrb[0].mxu0
      %2288 = vmatprep.mubr.bf16.mxu0 %v2049
      %2289 = vmatmul.mubr.bf16.gmra.mrb[0].mxu0 %v2001
      %v2290 = vpop.f32.mrb[0].mxu0
      %v2291 = vadd.f32 0.0, %v2290
      %v2292 = vpop.f32.mrb[0].mxu0
      %v2293 = vpop.f32.mrb[0].mxu0
      %v2294 = vadd.f32 0.0, %v2293
      %v2295 = vpop.f32.mrb[0].mxu0
      %2296 = vmatprep.mubr.bf16.mxu0 %v2050
      %2297 = vmatmul.mubr.bf16.gmra.mrb[0].mxu0 %v2002
      %v2298 = vpop.f32.mrb[0].mxu0
      %v2299 = vadd.f32 0.0, %v2298
      %v2300 = vpop.f32.mrb[0].mxu0
      %v2301 = vpop.f32.mrb[0].mxu0
      %v2302 = vadd.f32 0.0, %v2301
      %v2303 = vpop.f32.mrb[0].mxu0
      %2304 = vmatprep.mubr.bf16.mxu0 %v2051
      %2305 = vmatmul.mubr.bf16.gmra.mrb[0].mxu0 %v2003
      %v2306 = vpop.f32.mrb[0].mxu0
      %v2307 = vadd.f32 0.0, %v2306
      %v2308 = vpop.f32.mrb[0].mxu0
      %v2309 = vpop.f32.mrb[0].mxu0
      %v2310 = vadd.f32 0.0, %v2309
      %v2311 = vpop.f32.mrb[0].mxu0
      %2312 = vmatprep.mubr.bf16.mxu0 %v2052
      %2313 = vmatmul.mubr.bf16.gmra.mrb[0].mxu0 %v2004
      %v2314 = vpop.f32.mrb[0].mxu0
      %v2315 = vadd.f32 0.0, %v2314
      %v2316 = vpop.f32.mrb[0].mxu0
      %v2317 = vpop.f32.mrb[0].mxu0
      %v2318 = vadd.f32 0.0, %v2317
      %v2319 = vpop.f32.mrb[0].mxu0
      %2320 = vmatprep.mubr.bf16.mxu0 %v2053
      %2321 = vmatmul.mubr.bf16.gmra.mrb[0].mxu0 %v2005
      %v2322 = vpop.f32.mrb[0].mxu0
      %v2323 = vadd.f32 0.0, %v2322
      %v2324 = vpop.f32.mrb[0].mxu0
      %v2325 = vpop.f32.mrb[0].mxu0
      %v2326 = vadd.f32 0.0, %v2325
      %v2327 = vpop.f32.mrb[0].mxu0
      %2328 = vmatprep.mubr.bf16.mxu0 %v2054
      %2329 = vmatmul.mubr.bf16.gmra.mrb[0].mxu0 %v2006
      %v2330 = vpop.f32.mrb[0].mxu0
      %v2331 = vadd.f32 0.0, %v2330
      %v2332 = vpop.f32.mrb[0].mxu0
      %v2333 = vpop.f32.mrb[0].mxu0
      %v2334 = vadd.f32 0.0, %v2333
      %v2335 = vpop.f32.mrb[0].mxu0
      %2336 = vmatprep.mubr.bf16.mxu0 %v2055
      %2337 = vmatmul.mubr.bf16.gmra.mrb[0].mxu0 %v2007
      %v2338 = vpop.f32.mrb[0].mxu0
      %v2339 = vadd.f32 0.0, %v2338
      %v2340 = vpop.f32.mrb[0].mxu0
      %v2341 = vpop.f32.mrb[0].mxu0
      %v2342 = vadd.f32 0.0, %v2341
      %v2343 = vpop.f32.mrb[0].mxu0
      %2344 = vdwg.mxu0
      %v2345 = vadd.f32 %v1927, %v2219
      %v2346 = vadd.f32 %v1928, %v2222
      %v2347 = vadd.f32 %v1929, %v2227
      %v2348 = vadd.f32 %v1930, %v2230
      %v2349 = vadd.f32 %v1931, %v2235
      %v2350 = vadd.f32 %v1932, %v2238
      %v2351 = vadd.f32 %v1933, %v2243
      %v2352 = vadd.f32 %v1934, %v2246
      %v2353 = vadd.f32 %v1935, %v2251
      %v2354 = vadd.f32 %v1936, %v2254
      %v2355 = vadd.f32 %v1937, %v2259
      %v2356 = vadd.f32 %v1938, %v2262
      %v2357 = vadd.f32 %v1939, %v2267
      %v2358 = vadd.f32 %v1940, %v2270
      %v2359 = vadd.f32 %v1941, %v2275
      %v2360 = vadd.f32 %v1942, %v2278
      %v2361 = vadd.f32 %v1943, %v2283
      %v2362 = vadd.f32 %v1944, %v2286
      %v2363 = vadd.f32 %v1945, %v2291
      %v2364 = vadd.f32 %v1946, %v2294
      %v2365 = vadd.f32 %v1947, %v2299
      %v2366 = vadd.f32 %v1948, %v2302
      %v2367 = vadd.f32 %v1949, %v2307
      %v2368 = vadd.f32 %v1950, %v2310
      %v2369 = vadd.f32 %v1951, %v2315
      %v2370 = vadd.f32 %v1952, %v2318
      %v2371 = vadd.f32 %v1953, %v2323
      %v2372 = vadd.f32 %v1954, %v2326
      %v2373 = vadd.f32 %v1955, %v2331
      %v2374 = vadd.f32 %v1956, %v2334
      %v2375 = vadd.f32 %v1957, %v2339
      %v2376 = vadd.f32 %v1958, %v2342
      %v2377 = vld [vmem:[%s1959 + $0x2] sm:$0xff]
      %v2378 = vld [vmem:[%s1959 + $0xa] sm:$0xff]
      %v2379 = vld [vmem:[%s1959 + $0x1a] sm:$0xff]
      %v2380 = vld [vmem:[%s1959 + $0x22] sm:$0xff]
      %v2381 = vld [vmem:[%s1959 + $0x32] sm:$0xff]
      %v2382 = vld [vmem:[%s1959 + $0x3a] sm:$0xff]
      %v2383 = vld [vmem:[%s1959 + $0x4a] sm:$0xff]
      %v2384 = vld [vmem:[%s1959 + $0x52] sm:$0xff]
      %v2385 = vld [vmem:[%s1959 + $0x62] sm:$0xff]
      %v2386 = vld [vmem:[%s1959 + $0x6a] sm:$0xff]
      %v2387 = vld [vmem:[%s1959 + $0x7a] sm:$0xff]
      %v2388 = vld [vmem:[%s1959 + $0x82] sm:$0xff]
      %v2389 = vld [vmem:[%s1959 + $0x92] sm:$0xff]
      %v2390 = vld [vmem:[%s1959 + $0x9a] sm:$0xff]
      %v2391 = vld [vmem:[%s1959 + $0xaa] sm:$0xff]
      %v2392 = vld [vmem:[%s1959 + $0xb2] sm:$0xff]
      %v2393 = vld [vmem:[%s1959 + $0xc2] sm:$0xff]
      %v2394 = vld [vmem:[%s1959 + $0xca] sm:$0xff]
      %v2395 = vld [vmem:[%s1959 + $0xda] sm:$0xff]
      %v2396 = vld [vmem:[%s1959 + $0xe2] sm:$0xff]
      %v2397 = vld [vmem:[%s1959 + $0xf2] sm:$0xff]
      %v2398 = vld [vmem:[%s1959 + $0xfa] sm:$0xff]
      %v2399 = vld [vmem:[%s1959 + $0x10a] sm:$0xff]
      %v2400 = vld [vmem:[%s1959 + $0x112] sm:$0xff]
      %v2401 = vld [vmem:[%s1959 + $0x122] sm:$0xff]
      %v2402 = vld [vmem:[%s1959 + $0x12a] sm:$0xff]
      %v2403 = vld [vmem:[%s1959 + $0x13a] sm:$0xff]
      %v2404 = vld [vmem:[%s1959 + $0x142] sm:$0xff]
      %v2405 = vld [vmem:[%s1959 + $0x152] sm:$0xff]
      %v2406 = vld [vmem:[%s1959 + $0x15a] sm:$0xff]
      %v2407 = vld [vmem:[%s1959 + $0x16a] sm:$0xff]
      %v2408 = vld [vmem:[%s1959 + $0x172] sm:$0xff]
      %v2409 = vpack.c.bf16 %v2378, %v2377
      %v2410 = vpack.c.bf16 %v2380, %v2379
      %v2411 = vpack.c.bf16 %v2382, %v2381
      %v2412 = vpack.c.bf16 %v2384, %v2383
      %v2413 = vpack.c.bf16 %v2386, %v2385
      %v2414 = vpack.c.bf16 %v2388, %v2387
      %v2415 = vpack.c.bf16 %v2390, %v2389
      %v2416 = vpack.c.bf16 %v2392, %v2391
      %v2417 = vpack.c.bf16 %v2394, %v2393
      %v2418 = vpack.c.bf16 %v2396, %v2395
      %v2419 = vpack.c.bf16 %v2398, %v2397
      %v2420 = vpack.c.bf16 %v2400, %v2399
      %v2421 = vpack.c.bf16 %v2402, %v2401
      %v2422 = vpack.c.bf16 %v2404, %v2403
      %v2423 = vpack.c.bf16 %v2406, %v2405
      %v2424 = vpack.c.bf16 %v2408, %v2407
      %v2425 = vld [vmem:[%s3 + $0x200] sm:$0xf]
      %v2426 = vld [vmem:[%s3 + $0x204] sm:$0xf]
      %v2427 = vld [vmem:[%s3 + $0x208] sm:$0xf]
      %v2428 = vld [vmem:[%s3 + $0x20c] sm:$0xf]
      %v2429 = vld [vmem:[%s3 + $0x210] sm:$0xf]
      %v2430 = vld [vmem:[%s3 + $0x214] sm:$0xf]
      %v2431 = vld [vmem:[%s3 + $0x218] sm:$0xf]
      %v2432 = vld [vmem:[%s3 + $0x21c] sm:$0xf]
      %v2433 = vld [vmem:[%s3 + $0x220] sm:$0xf]
      %v2434 = vld [vmem:[%s3 + $0x224] sm:$0xf]
      %v2435 = vld [vmem:[%s3 + $0x228] sm:$0xf]
      %v2436 = vld [vmem:[%s3 + $0x22c] sm:$0xf]
      %v2437 = vld [vmem:[%s3 + $0x230] sm:$0xf]
      %v2438 = vld [vmem:[%s3 + $0x234] sm:$0xf]
      %v2439 = vld [vmem:[%s3 + $0x238] sm:$0xf]
      %v2440 = vld [vmem:[%s3 + $0x23c] sm:$0xf]
      %v2457 = vunpack.c.l.b16 %v2425
      %v2458 = vunpack.c.l.b16 %v2426
      %v2459 = vunpack.c.l.b16 %v2427
      %v2460 = vunpack.c.l.b16 %v2428
      %v2461 = vunpack.c.l.b16 %v2429
      %v2462 = vunpack.c.l.b16 %v2430
      %v2463 = vunpack.c.l.b16 %v2431
      %v2464 = vunpack.c.l.b16 %v2432
      %v2465 = vunpack.c.l.b16 %v2433
      %v2466 = vunpack.c.l.b16 %v2434
      %v2467 = vunpack.c.l.b16 %v2435
      %v2468 = vunpack.c.l.b16 %v2436
      %v2469 = vunpack.c.l.b16 %v2437
      %v2470 = vunpack.c.l.b16 %v2438
      %v2471 = vunpack.c.l.b16 %v2439
      %v2472 = vunpack.c.l.b16 %v2440
      %v2473 = vpack.c.b16 %v2458, %v2457
      %v2474 = vpack.c.b16 %v2460, %v2459
      %v2475 = vpack.c.b16 %v2462, %v2461
      %v2476 = vpack.c.b16 %v2464, %v2463
      %v2477 = vpack.c.b16 %v2466, %v2465
      %v2478 = vpack.c.b16 %v2468, %v2467
      %v2479 = vpack.c.b16 %v2470, %v2469
      %v2480 = vpack.c.b16 %v2472, %v2471
      %2489 = vmatprep.subr.bf16.mxu0 0
      %2490 = vmatpush1.bf16.msra.mxu0 %v2473
      %2491 = vmatprep.subr.bf16.mxu0 0
      %2492 = vmatpush1.bf16.msra.mxu0 %v2474
      %2493 = vmatprep.subr.bf16.mxu0 0
      %2494 = vmatpush1.bf16.msra.mxu0 %v2475
      %2495 = vmatprep.subr.bf16.mxu0 0
      %2496 = vmatpush1.bf16.msra.mxu0 %v2476
      %2497 = vmatprep.subr.bf16.mxu0 0
      %2498 = vmatpush1.bf16.msra.mxu0 %v2477
      %2499 = vmatprep.subr.bf16.mxu0 0
      %2500 = vmatpush1.bf16.msra.mxu0 %v2478
      %2501 = vmatprep.subr.bf16.mxu0 0
      %2502 = vmatpush1.bf16.msra.mxu0 %v2479
      %2503 = vmatprep.subr.bf16.mxu0 0
      %2504 = vmatpush1.bf16.msra.mxu0 %v2480
      %2505 = vmatprep.subr.bf16.mxu0 0
      %2506 = vmatpush1.bf16.msra.mxu0 0
      %2507 = vmatprep.subr.bf16.mxu0 0
      %2508 = vmatpush1.bf16.msra.mxu0 0
      %2509 = vmatprep.subr.bf16.mxu0 0
      %2510 = vmatpush1.bf16.msra.mxu0 0
      %2511 = vmatprep.subr.bf16.mxu0 0
      %2512 = vmatpush1.bf16.msra.mxu0 0
      %2513 = vmatprep.subr.bf16.mxu0 0
      %2514 = vmatpush1.bf16.msra.mxu0 0
      %2515 = vmatprep.subr.bf16.mxu0 0
      %2516 = vmatpush1.bf16.msra.mxu0 0
      %2517 = vmatprep.subr.bf16.mxu0 0
      %2518 = vmatpush1.bf16.msra.mxu0 0
      %2519 = vmatprep.subr.bf16.mxu0 0
      %2520 = vmatpush1.bf16.msra.mxu0 0
      %2521 = vmatprep.mubr.bf16.mxu0 0
      %2522 = vmatmul.mubr.bf16.gmra.mrb[0].mxu0 %v2409
      %v2523 = vpop.f32.mrb[0].mxu0
      %v2524 = vadd.f32 0.0, %v2523
      %v2525 = vpop.f32.mrb[0].mxu0
      %v2526 = vpop.f32.mrb[0].mxu0
      %v2527 = vadd.f32 0.0, %v2526
      %v2528 = vpop.f32.mrb[0].mxu0
      %2529 = vmatprep.mubr.bf16.mxu0 0
      %2530 = vmatmul.mubr.bf16.gmra.mrb[0].mxu0 %v2410
      %v2531 = vpop.f32.mrb[0].mxu0
      %v2532 = vadd.f32 0.0, %v2531
      %v2533 = vpop.f32.mrb[0].mxu0
      %v2534 = vpop.f32.mrb[0].mxu0
      %v2535 = vadd.f32 0.0, %v2534
      %v2536 = vpop.f32.mrb[0].mxu0
      %2537 = vmatprep.mubr.bf16.mxu0 0
      %2538 = vmatmul.mubr.bf16.gmra.mrb[0].mxu0 %v2411
      %v2539 = vpop.f32.mrb[0].mxu0
      %v2540 = vadd.f32 0.0, %v2539
      %v2541 = vpop.f32.mrb[0].mxu0
      %v2542 = vpop.f32.mrb[0].mxu0
      %v2543 = vadd.f32 0.0, %v2542
      %v2544 = vpop.f32.mrb[0].mxu0
      %2545 = vmatprep.mubr.bf16.mxu0 0
      %2546 = vmatmul.mubr.bf16.gmra.mrb[0].mxu0 %v2412
      %v2547 = vpop.f32.mrb[0].mxu0
      %v2548 = vadd.f32 0.0, %v2547
      %v2549 = vpop.f32.mrb[0].mxu0
      %v2550 = vpop.f32.mrb[0].mxu0
      %v2551 = vadd.f32 0.0, %v2550
      %v2552 = vpop.f32.mrb[0].mxu0
      %2553 = vmatprep.mubr.bf16.mxu0 0
      %2554 = vmatmul.mubr.bf16.gmra.mrb[0].mxu0 %v2413
      %v2555 = vpop.f32.mrb[0].mxu0
      %v2556 = vadd.f32 0.0, %v2555
      %v2557 = vpop.f32.mrb[0].mxu0
      %v2558 = vpop.f32.mrb[0].mxu0
      %v2559 = vadd.f32 0.0, %v2558
      %v2560 = vpop.f32.mrb[0].mxu0
      %2561 = vmatprep.mubr.bf16.mxu0 0
      %2562 = vmatmul.mubr.bf16.gmra.mrb[0].mxu0 %v2414
      %v2563 = vpop.f32.mrb[0].mxu0
      %v2564 = vadd.f32 0.0, %v2563
      %v2565 = vpop.f32.mrb[0].mxu0
      %v2566 = vpop.f32.mrb[0].mxu0
      %v2567 = vadd.f32 0.0, %v2566
      %v2568 = vpop.f32.mrb[0].mxu0
      %2569 = vmatprep.mubr.bf16.mxu0 0
      %2570 = vmatmul.mubr.bf16.gmra.mrb[0].mxu0 %v2415
      %v2571 = vpop.f32.mrb[0].mxu0
      %v2572 = vadd.f32 0.0, %v2571
      %v2573 = vpop.f32.mrb[0].mxu0
      %v2574 = vpop.f32.mrb[0].mxu0
      %v2575 = vadd.f32 0.0, %v2574
      %v2576 = vpop.f32.mrb[0].mxu0
      %2577 = vmatprep.mubr.bf16.mxu0 0
      %2578 = vmatmul.mubr.bf16.gmra.mrb[0].mxu0 %v2416
      %v2579 = vpop.f32.mrb[0].mxu0
      %v2580 = vadd.f32 0.0, %v2579
      %v2581 = vpop.f32.mrb[0].mxu0
      %v2582 = vpop.f32.mrb[0].mxu0
      %v2583 = vadd.f32 0.0, %v2582
      %v2584 = vpop.f32.mrb[0].mxu0
      %2585 = vmatprep.mubr.bf16.mxu0 0
      %2586 = vmatmul.mubr.bf16.gmra.mrb[0].mxu0 %v2417
      %v2587 = vpop.f32.mrb[0].mxu0
      %v2588 = vadd.f32 0.0, %v2587
      %v2589 = vpop.f32.mrb[0].mxu0
      %v2590 = vpop.f32.mrb[0].mxu0
      %v2591 = vadd.f32 0.0, %v2590
      %v2592 = vpop.f32.mrb[0].mxu0
      %2593 = vmatprep.mubr.bf16.mxu0 0
      %2594 = vmatmul.mubr.bf16.gmra.mrb[0].mxu0 %v2418
      %v2595 = vpop.f32.mrb[0].mxu0
      %v2596 = vadd.f32 0.0, %v2595
      %v2597 = vpop.f32.mrb[0].mxu0
      %v2598 = vpop.f32.mrb[0].mxu0
      %v2599 = vadd.f32 0.0, %v2598
      %v2600 = vpop.f32.mrb[0].mxu0
      %2601 = vmatprep.mubr.bf16.mxu0 0
      %2602 = vmatmul.mubr.bf16.gmra.mrb[0].mxu0 %v2419
      %v2603 = vpop.f32.mrb[0].mxu0
      %v2604 = vadd.f32 0.0, %v2603
      %v2605 = vpop.f32.mrb[0].mxu0
      %v2606 = vpop.f32.mrb[0].mxu0
      %v2607 = vadd.f32 0.0, %v2606
      %v2608 = vpop.f32.mrb[0].mxu0
      %2609 = vmatprep.mubr.bf16.mxu0 0
      %2610 = vmatmul.mubr.bf16.gmra.mrb[0].mxu0 %v2420
      %v2611 = vpop.f32.mrb[0].mxu0
      %v2612 = vadd.f32 0.0, %v2611
      %v2613 = vpop.f32.mrb[0].mxu0
      %v2614 = vpop.f32.mrb[0].mxu0
      %v2615 = vadd.f32 0.0, %v2614
      %v2616 = vpop.f32.mrb[0].mxu0
      %2617 = vmatprep.mubr.bf16.mxu0 0
      %2618 = vmatmul.mubr.bf16.gmra.mrb[0].mxu0 %v2421
      %v2619 = vpop.f32.mrb[0].mxu0
      %v2620 = vadd.f32 0.0, %v2619
      %v2621 = vpop.f32.mrb[0].mxu0
      %v2622 = vpop.f32.mrb[0].mxu0
      %v2623 = vadd.f32 0.0, %v2622
      %v2624 = vpop.f32.mrb[0].mxu0
      %2625 = vmatprep.mubr.bf16.mxu0 0
      %2626 = vmatmul.mubr.bf16.gmra.mrb[0].mxu0 %v2422
      %v2627 = vpop.f32.mrb[0].mxu0
      %v2628 = vadd.f32 0.0, %v2627
      %v2629 = vpop.f32.mrb[0].mxu0
      %v2630 = vpop.f32.mrb[0].mxu0
      %v2631 = vadd.f32 0.0, %v2630
      %v2632 = vpop.f32.mrb[0].mxu0
      %2633 = vmatprep.mubr.bf16.mxu0 0
      %2634 = vmatmul.mubr.bf16.gmra.mrb[0].mxu0 %v2423
      %v2635 = vpop.f32.mrb[0].mxu0
      %v2636 = vadd.f32 0.0, %v2635
      %v2637 = vpop.f32.mrb[0].mxu0
      %v2638 = vpop.f32.mrb[0].mxu0
      %v2639 = vadd.f32 0.0, %v2638
      %v2640 = vpop.f32.mrb[0].mxu0
      %2641 = vmatprep.mubr.bf16.mxu0 0
      %2642 = vmatmul.mubr.bf16.gmra.mrb[0].mxu0 %v2424
      %v2643 = vpop.f32.mrb[0].mxu0
      %v2644 = vadd.f32 0.0, %v2643
      %v2645 = vpop.f32.mrb[0].mxu0
      %v2646 = vpop.f32.mrb[0].mxu0
      %v2647 = vadd.f32 0.0, %v2646
      %v2648 = vpop.f32.mrb[0].mxu0
      %2649 = vdwg.mxu0
      %v2650 = vadd.f32 %v2345, %v2524
      %v2651 = vadd.f32 %v2346, %v2527
      %v2652 = vadd.f32 %v2347, %v2532
      %v2653 = vadd.f32 %v2348, %v2535
      %v2654 = vadd.f32 %v2349, %v2540
      %v2655 = vadd.f32 %v2350, %v2543
      %v2656 = vadd.f32 %v2351, %v2548
      %v2657 = vadd.f32 %v2352, %v2551
      %v2658 = vadd.f32 %v2353, %v2556
      %v2659 = vadd.f32 %v2354, %v2559
      %v2660 = vadd.f32 %v2355, %v2564
      %v2661 = vadd.f32 %v2356, %v2567
      %v2662 = vadd.f32 %v2357, %v2572
      %v2663 = vadd.f32 %v2358, %v2575
      %v2664 = vadd.f32 %v2359, %v2580
      %v2665 = vadd.f32 %v2360, %v2583
      %v2666 = vadd.f32 %v2361, %v2588
      %v2667 = vadd.f32 %v2362, %v2591
      %v2668 = vadd.f32 %v2363, %v2596
      %v2669 = vadd.f32 %v2364, %v2599
      %v2670 = vadd.f32 %v2365, %v2604
      %v2671 = vadd.f32 %v2366, %v2607
      %v2672 = vadd.f32 %v2367, %v2612
      %v2673 = vadd.f32 %v2368, %v2615
      %v2674 = vadd.f32 %v2369, %v2620
      %v2675 = vadd.f32 %v2370, %v2623
      %v2676 = vadd.f32 %v2371, %v2628
      %v2677 = vadd.f32 %v2372, %v2631
      %v2678 = vadd.f32 %v2373, %v2636
      %v2679 = vadd.f32 %v2374, %v2639
      %v2680 = vadd.f32 %v2375, %v2644
      %v2681 = vadd.f32 %v2376, %v2647
      %v2682 = vld [vmem:[%s4] sm:$0x1]
      %v2684 = vlaneseq
      %v2685 = vshrl.u32 %v2684, 7
      %v2686 = vsub.s32 0, %v2685
      %v2687 = vrot.slane %v2682, %v2686
      %v2689 = vadd.f32 %v2650, %v2687
      %v2690 = vadd.f32 %v2651, %v2687
      %v2691 = vadd.f32 %v2652, %v2687
      %v2692 = vadd.f32 %v2653, %v2687
      %v2693 = vadd.f32 %v2654, %v2687
      %v2694 = vadd.f32 %v2655, %v2687
      %v2695 = vadd.f32 %v2656, %v2687
      %v2696 = vadd.f32 %v2657, %v2687
      %v2697 = vadd.f32 %v2658, %v2687
      %v2698 = vadd.f32 %v2659, %v2687
      %v2699 = vadd.f32 %v2660, %v2687
      %v2700 = vadd.f32 %v2661, %v2687
      %v2701 = vadd.f32 %v2662, %v2687
      %v2702 = vadd.f32 %v2663, %v2687
      %v2703 = vadd.f32 %v2664, %v2687
      %v2704 = vadd.f32 %v2665, %v2687
      %v2705 = vadd.f32 %v2666, %v2687
      %v2706 = vadd.f32 %v2667, %v2687
      %v2707 = vadd.f32 %v2668, %v2687
      %v2708 = vadd.f32 %v2669, %v2687
      %v2709 = vadd.f32 %v2670, %v2687
      %v2710 = vadd.f32 %v2671, %v2687
      %v2711 = vadd.f32 %v2672, %v2687
      %v2712 = vadd.f32 %v2673, %v2687
      %v2713 = vadd.f32 %v2674, %v2687
      %v2714 = vadd.f32 %v2675, %v2687
      %v2715 = vadd.f32 %v2676, %v2687
      %v2716 = vadd.f32 %v2677, %v2687
      %v2717 = vadd.f32 %v2678, %v2687
      %v2718 = vadd.f32 %v2679, %v2687
      %v2719 = vadd.f32 %v2680, %v2687
      %v2720 = vadd.f32 %v2681, %v2687
      %v2721 = vmax.f32 %v2689, 0.0
      %v2722 = vmax.f32 %v2690, 0.0
      %v2723 = vmax.f32 %v2691, 0.0
      %v2724 = vmax.f32 %v2692, 0.0
      %v2725 = vmax.f32 %v2693, 0.0
      %v2726 = vmax.f32 %v2694, 0.0
      %v2727 = vmax.f32 %v2695, 0.0
      %v2728 = vmax.f32 %v2696, 0.0
      %v2729 = vmax.f32 %v2697, 0.0
      %v2730 = vmax.f32 %v2698, 0.0
      %v2731 = vmax.f32 %v2699, 0.0
      %v2732 = vmax.f32 %v2700, 0.0
      %v2733 = vmax.f32 %v2701, 0.0
      %v2734 = vmax.f32 %v2702, 0.0
      %v2735 = vmax.f32 %v2703, 0.0
      %v2736 = vmax.f32 %v2704, 0.0
      %v2737 = vmax.f32 %v2705, 0.0
      %v2738 = vmax.f32 %v2706, 0.0
      %v2739 = vmax.f32 %v2707, 0.0
      %v2740 = vmax.f32 %v2708, 0.0
      %v2741 = vmax.f32 %v2709, 0.0
      %v2742 = vmax.f32 %v2710, 0.0
      %v2743 = vmax.f32 %v2711, 0.0
      %v2744 = vmax.f32 %v2712, 0.0
      %v2745 = vmax.f32 %v2713, 0.0
      %v2746 = vmax.f32 %v2714, 0.0
      %v2747 = vmax.f32 %v2715, 0.0
      %v2748 = vmax.f32 %v2716, 0.0
      %v2749 = vmax.f32 %v2717, 0.0
      %v2750 = vmax.f32 %v2718, 0.0
      %v2751 = vmax.f32 %v2719, 0.0
      %v2752 = vmax.f32 %v2720, 0.0
      %2753 = vst [vmem:[%s283 + $0x1] sm:$0xff] %v2721
      %2754 = vst [vmem:[%s283 + $0x9] sm:$0xff] %v2722
      %2755 = vst [vmem:[%s283 + $0x19] sm:$0xff] %v2723
      %2756 = vst [vmem:[%s283 + $0x21] sm:$0xff] %v2724
      %2757 = vst [vmem:[%s283 + $0x31] sm:$0xff] %v2725
      %2758 = vst [vmem:[%s283 + $0x39] sm:$0xff] %v2726
      %2759 = vst [vmem:[%s283 + $0x49] sm:$0xff] %v2727
      %2760 = vst [vmem:[%s283 + $0x51] sm:$0xff] %v2728
      %2761 = vst [vmem:[%s283 + $0x61] sm:$0xff] %v2729
      %2762 = vst [vmem:[%s283 + $0x69] sm:$0xff] %v2730
      %2763 = vst [vmem:[%s283 + $0x79] sm:$0xff] %v2731
      %2764 = vst [vmem:[%s283 + $0x81] sm:$0xff] %v2732
      %2765 = vst [vmem:[%s283 + $0x91] sm:$0xff] %v2733
      %2766 = vst [vmem:[%s283 + $0x99] sm:$0xff] %v2734
      %2767 = vst [vmem:[%s283 + $0xa9] sm:$0xff] %v2735
      %2768 = vst [vmem:[%s283 + $0xb1] sm:$0xff] %v2736
      %2769 = vst [vmem:[%s283 + $0xc1] sm:$0xff] %v2737
      %2770 = vst [vmem:[%s283 + $0xc9] sm:$0xff] %v2738
      %2771 = vst [vmem:[%s283 + $0xd9] sm:$0xff] %v2739
      %2772 = vst [vmem:[%s283 + $0xe1] sm:$0xff] %v2740
      %2773 = vst [vmem:[%s283 + $0xf1] sm:$0xff] %v2741
      %2774 = vst [vmem:[%s283 + $0xf9] sm:$0xff] %v2742
      %2775 = vst [vmem:[%s283 + $0x109] sm:$0xff] %v2743
      %2776 = vst [vmem:[%s283 + $0x111] sm:$0xff] %v2744
      %2777 = vst [vmem:[%s283 + $0x121] sm:$0xff] %v2745
      %2778 = vst [vmem:[%s283 + $0x129] sm:$0xff] %v2746
      %2779 = vst [vmem:[%s283 + $0x139] sm:$0xff] %v2747
      %2780 = vst [vmem:[%s283 + $0x141] sm:$0xff] %v2748
      %2781 = vst [vmem:[%s283 + $0x151] sm:$0xff] %v2749
      %2782 = vst [vmem:[%s283 + $0x159] sm:$0xff] %v2750
      %2783 = vst [vmem:[%s283 + $0x169] sm:$0xff] %v2751
      %2784 = vst [vmem:[%s283 + $0x171] sm:$0xff] %v2752
      %v2785 = vld [vmem:[#allocation2] sm:$0xff]
      %v2786 = vld [vmem:[#allocation2 + $0x8] sm:$0xff]
      %v2787 = vld [vmem:[#allocation2 + $0x18] sm:$0xff]
      %v2788 = vld [vmem:[#allocation2 + $0x20] sm:$0xff]
      %v2789 = vld [vmem:[#allocation2 + $0x30] sm:$0xff]
      %v2790 = vld [vmem:[#allocation2 + $0x38] sm:$0xff]
      %v2791 = vld [vmem:[#allocation2 + $0x48] sm:$0xff]
      %v2792 = vld [vmem:[#allocation2 + $0x50] sm:$0xff]
      %v2793 = vld [vmem:[#allocation2 + $0x60] sm:$0xff]
      %v2794 = vld [vmem:[#allocation2 + $0x68] sm:$0xff]
      %v2795 = vld [vmem:[#allocation2 + $0x78] sm:$0xff]
      %v2796 = vld [vmem:[#allocation2 + $0x80] sm:$0xff]
      %v2797 = vld [vmem:[#allocation2 + $0x90] sm:$0xff]
      %v2798 = vld [vmem:[#allocation2 + $0x98] sm:$0xff]
      %v2799 = vld [vmem:[#allocation2 + $0xa8] sm:$0xff]
      %v2800 = vld [vmem:[#allocation2 + $0xb0] sm:$0xff]
      %v2801 = vld [vmem:[#allocation2 + $0xc0] sm:$0xff]
      %v2802 = vld [vmem:[#allocation2 + $0xc8] sm:$0xff]
      %v2803 = vld [vmem:[#allocation2 + $0xd8] sm:$0xff]
      %v2804 = vld [vmem:[#allocation2 + $0xe0] sm:$0xff]
      %v2805 = vld [vmem:[#allocation2 + $0xf0] sm:$0xff]
      %v2806 = vld [vmem:[#allocation2 + $0xf8] sm:$0xff]
      %v2807 = vld [vmem:[#allocation2 + $0x108] sm:$0xff]
      %v2808 = vld [vmem:[#allocation2 + $0x110] sm:$0xff]
      %v2809 = vld [vmem:[#allocation2 + $0x120] sm:$0xff]
      %v2810 = vld [vmem:[#allocation2 + $0x128] sm:$0xff]
      %v2811 = vld [vmem:[#allocation2 + $0x138] sm:$0xff]
      %v2812 = vld [vmem:[#allocation2 + $0x140] sm:$0xff]
      %v2813 = vld [vmem:[#allocation2 + $0x150] sm:$0xff]
      %v2814 = vld [vmem:[#allocation2 + $0x158] sm:$0xff]
      %v2815 = vld [vmem:[#allocation2 + $0x168] sm:$0xff]
      %v2816 = vld [vmem:[#allocation2 + $0x170] sm:$0xff]
      %v2817 = vpack.c.bf16 %v2786, %v2785
      %v2818 = vpack.c.bf16 %v2788, %v2787
      %v2819 = vpack.c.bf16 %v2790, %v2789
      %v2820 = vpack.c.bf16 %v2792, %v2791
      %v2821 = vpack.c.bf16 %v2794, %v2793
      %v2822 = vpack.c.bf16 %v2796, %v2795
      %v2823 = vpack.c.bf16 %v2798, %v2797
      %v2824 = vpack.c.bf16 %v2800, %v2799
      %v2825 = vpack.c.bf16 %v2802, %v2801
      %v2826 = vpack.c.bf16 %v2804, %v2803
      %v2827 = vpack.c.bf16 %v2806, %v2805
      %v2828 = vpack.c.bf16 %v2808, %v2807
      %v2829 = vpack.c.bf16 %v2810, %v2809
      %v2830 = vpack.c.bf16 %v2812, %v2811
      %v2831 = vpack.c.bf16 %v2814, %v2813
      %v2832 = vpack.c.bf16 %v2816, %v2815
      %v2833 = vld [vmem:[#allocation2 + $0x1] sm:$0xff]
      %v2834 = vld [vmem:[#allocation2 + $0x9] sm:$0xff]
      %v2835 = vld [vmem:[#allocation2 + $0x19] sm:$0xff]
      %v2836 = vld [vmem:[#allocation2 + $0x21] sm:$0xff]
      %v2837 = vld [vmem:[#allocation2 + $0x31] sm:$0xff]
      %v2838 = vld [vmem:[#allocation2 + $0x39] sm:$0xff]
      %v2839 = vld [vmem:[#allocation2 + $0x49] sm:$0xff]
      %v2840 = vld [vmem:[#allocation2 + $0x51] sm:$0xff]
      %v2841 = vld [vmem:[#allocation2 + $0x61] sm:$0xff]
      %v2842 = vld [vmem:[#allocation2 + $0x69] sm:$0xff]
      %v2843 = vld [vmem:[#allocation2 + $0x79] sm:$0xff]
      %v2844 = vld [vmem:[#allocation2 + $0x81] sm:$0xff]
      %v2845 = vld [vmem:[#allocation2 + $0x91] sm:$0xff]
      %v2846 = vld [vmem:[#allocation2 + $0x99] sm:$0xff]
      %v2847 = vld [vmem:[#allocation2 + $0xa9] sm:$0xff]
      %v2848 = vld [vmem:[#allocation2 + $0xb1] sm:$0xff]
      %v2849 = vld [vmem:[#allocation2 + $0xc1] sm:$0xff]
      %v2850 = vld [vmem:[#allocation2 + $0xc9] sm:$0xff]
      %v2851 = vld [vmem:[#allocation2 + $0xd9] sm:$0xff]
      %v2852 = vld [vmem:[#allocation2 + $0xe1] sm:$0xff]
      %v2853 = vld [vmem:[#allocation2 + $0xf1] sm:$0xff]
      %v2854 = vld [vmem:[#allocation2 + $0xf9] sm:$0xff]
      %v2855 = vld [vmem:[#allocation2 + $0x109] sm:$0xff]
      %v2856 = vld [vmem:[#allocation2 + $0x111] sm:$0xff]
      %v2857 = vld [vmem:[#allocation2 + $0x121] sm:$0xff]
      %v2858 = vld [vmem:[#allocation2 + $0x129] sm:$0xff]
      %v2859 = vld [vmem:[#allocation2 + $0x139] sm:$0xff]
      %v2860 = vld [vmem:[#allocation2 + $0x141] sm:$0xff]
      %v2861 = vld [vmem:[#allocation2 + $0x151] sm:$0xff]
      %v2862 = vld [vmem:[#allocation2 + $0x159] sm:$0xff]
      %v2863 = vld [vmem:[#allocation2 + $0x169] sm:$0xff]
      %v2864 = vld [vmem:[#allocation2 + $0x171] sm:$0xff]
      %v2865 = vpack.c.bf16 %v2834, %v2833
      %v2866 = vpack.c.bf16 %v2836, %v2835
      %v2867 = vpack.c.bf16 %v2838, %v2837
      %v2868 = vpack.c.bf16 %v2840, %v2839
      %v2869 = vpack.c.bf16 %v2842, %v2841
      %v2870 = vpack.c.bf16 %v2844, %v2843
      %v2871 = vpack.c.bf16 %v2846, %v2845
      %v2872 = vpack.c.bf16 %v2848, %v2847
      %v2873 = vpack.c.bf16 %v2850, %v2849
      %v2874 = vpack.c.bf16 %v2852, %v2851
      %v2875 = vpack.c.bf16 %v2854, %v2853
      %v2876 = vpack.c.bf16 %v2856, %v2855
      %v2877 = vpack.c.bf16 %v2858, %v2857
      %v2878 = vpack.c.bf16 %v2860, %v2859
      %v2879 = vpack.c.bf16 %v2862, %v2861
      %v2880 = vpack.c.bf16 %v2864, %v2863
      %v2881 = vld [vmem:[%s5] sm:$0xf]
      %v2882 = vld [vmem:[%s5 + $0x4] sm:$0xf]
      %v2883 = vld [vmem:[%s5 + $0x8] sm:$0xf]
      %v2884 = vld [vmem:[%s5 + $0xc] sm:$0xf]
      %v2885 = vld [vmem:[%s5 + $0x10] sm:$0xf]
      %v2886 = vld [vmem:[%s5 + $0x14] sm:$0xf]
      %v2887 = vld [vmem:[%s5 + $0x18] sm:$0xf]
      %v2888 = vld [vmem:[%s5 + $0x1c] sm:$0xf]
      %v2889 = vld [vmem:[%s5 + $0x20] sm:$0xf]
      %v2890 = vld [vmem:[%s5 + $0x24] sm:$0xf]
      %v2891 = vld [vmem:[%s5 + $0x28] sm:$0xf]
      %v2892 = vld [vmem:[%s5 + $0x2c] sm:$0xf]
      %v2893 = vld [vmem:[%s5 + $0x30] sm:$0xf]
      %v2894 = vld [vmem:[%s5 + $0x34] sm:$0xf]
      %v2895 = vld [vmem:[%s5 + $0x38] sm:$0xf]
      %v2896 = vld [vmem:[%s5 + $0x3c] sm:$0xf]
      %v2897 = vld [vmem:[%s5 + $0x40] sm:$0xf]
      %v2898 = vld [vmem:[%s5 + $0x44] sm:$0xf]
      %v2899 = vld [vmem:[%s5 + $0x48] sm:$0xf]
      %v2900 = vld [vmem:[%s5 + $0x4c] sm:$0xf]
      %v2901 = vld [vmem:[%s5 + $0x50] sm:$0xf]
      %v2902 = vld [vmem:[%s5 + $0x54] sm:$0xf]
      %v2903 = vld [vmem:[%s5 + $0x58] sm:$0xf]
      %v2904 = vld [vmem:[%s5 + $0x5c] sm:$0xf]
      %v2905 = vld [vmem:[%s5 + $0x60] sm:$0xf]
      %v2906 = vld [vmem:[%s5 + $0x64] sm:$0xf]
      %v2907 = vld [vmem:[%s5 + $0x68] sm:$0xf]
      %v2908 = vld [vmem:[%s5 + $0x6c] sm:$0xf]
      %v2909 = vld [vmem:[%s5 + $0x70] sm:$0xf]
      %v2910 = vld [vmem:[%s5 + $0x74] sm:$0xf]
      %v2911 = vld [vmem:[%s5 + $0x78] sm:$0xf]
      %v2912 = vld [vmem:[%s5 + $0x7c] sm:$0xf]
      %v2913 = vld [vmem:[#allocation2 + $0x2] sm:$0xff]
      %v2914 = vld [vmem:[#allocation2 + $0xa] sm:$0xff]
      %v2915 = vld [vmem:[#allocation2 + $0x1a] sm:$0xff]
      %v2916 = vld [vmem:[#allocation2 + $0x22] sm:$0xff]
      %v2917 = vld [vmem:[#allocation2 + $0x32] sm:$0xff]
      %v2918 = vld [vmem:[#allocation2 + $0x3a] sm:$0xff]
      %v2919 = vld [vmem:[#allocation2 + $0x4a] sm:$0xff]
      %v2920 = vld [vmem:[#allocation2 + $0x52] sm:$0xff]
      %v2921 = vld [vmem:[#allocation2 + $0x62] sm:$0xff]
      %v2922 = vld [vmem:[#allocation2 + $0x6a] sm:$0xff]
      %v2923 = vld [vmem:[#allocation2 + $0x7a] sm:$0xff]
      %v2924 = vld [vmem:[#allocation2 + $0x82] sm:$0xff]
      %v2925 = vld [vmem:[#allocation2 + $0x92] sm:$0xff]
      %v2926 = vld [vmem:[#allocation2 + $0x9a] sm:$0xff]
      %v2927 = vld [vmem:[#allocation2 + $0xaa] sm:$0xff]
      %v2928 = vld [vmem:[#allocation2 + $0xb2] sm:$0xff]
      %v2929 = vld [vmem:[#allocation2 + $0xc2] sm:$0xff]
      %v2930 = vld [vmem:[#allocation2 + $0xca] sm:$0xff]
      %v2931 = vld [vmem:[#allocation2 + $0xda] sm:$0xff]
      %v2932 = vld [vmem:[#allocation2 + $0xe2] sm:$0xff]
      %v2933 = vld [vmem:[#allocation2 + $0xf2] sm:$0xff]
      %v2934 = vld [vmem:[#allocation2 + $0xfa] sm:$0xff]
      %v2935 = vld [vmem:[#allocation2 + $0x10a] sm:$0xff]
      %v2936 = vld [vmem:[#allocation2 + $0x112] sm:$0xff]
      %v2937 = vld [vmem:[#allocation2 + $0x122] sm:$0xff]
      %v2938 = vld [vmem:[#allocation2 + $0x12a] sm:$0xff]
      %v2939 = vld [vmem:[#allocation2 + $0x13a] sm:$0xff]
      %v2940 = vld [vmem:[#allocation2 + $0x142] sm:$0xff]
      %v2941 = vld [vmem:[#allocation2 + $0x152] sm:$0xff]
      %v2942 = vld [vmem:[#allocation2 + $0x15a] sm:$0xff]
      %v2943 = vld [vmem:[#allocation2 + $0x16a] sm:$0xff]
      %v2944 = vld [vmem:[#allocation2 + $0x172] sm:$0xff]
      %v2945 = vpack.c.bf16 %v2914, %v2913
      %v2946 = vpack.c.bf16 %v2916, %v2915
      %v2947 = vpack.c.bf16 %v2918, %v2917
      %v2948 = vpack.c.bf16 %v2920, %v2919
      %v2949 = vpack.c.bf16 %v2922, %v2921
      %v2950 = vpack.c.bf16 %v2924, %v2923
      %v2951 = vpack.c.bf16 %v2926, %v2925
      %v2952 = vpack.c.bf16 %v2928, %v2927
      %v2953 = vpack.c.bf16 %v2930, %v2929
      %v2954 = vpack.c.bf16 %v2932, %v2931
      %v2955 = vpack.c.bf16 %v2934, %v2933
      %v2956 = vpack.c.bf16 %v2936, %v2935
      %v2957 = vpack.c.bf16 %v2938, %v2937
      %v2958 = vpack.c.bf16 %v2940, %v2939
      %v2959 = vpack.c.bf16 %v2942, %v2941
      %v2960 = vpack.c.bf16 %v2944, %v2943
      %v2961 = vld [vmem:[%s283] sm:$0xff]
      %v2962 = vld [vmem:[%s283 + $0x8] sm:$0xff]
      %v2963 = vld [vmem:[%s283 + $0x18] sm:$0xff]
      %v2964 = vld [vmem:[%s283 + $0x20] sm:$0xff]
      %v2965 = vld [vmem:[%s283 + $0x30] sm:$0xff]
      %v2966 = vld [vmem:[%s283 + $0x38] sm:$0xff]
      %v2967 = vld [vmem:[%s283 + $0x48] sm:$0xff]
      %v2968 = vld [vmem:[%s283 + $0x50] sm:$0xff]
      %v2969 = vld [vmem:[%s283 + $0x60] sm:$0xff]
      %v2970 = vld [vmem:[%s283 + $0x68] sm:$0xff]
      %v2971 = vld [vmem:[%s283 + $0x78] sm:$0xff]
      %v2972 = vld [vmem:[%s283 + $0x80] sm:$0xff]
      %v2973 = vld [vmem:[%s283 + $0x90] sm:$0xff]
      %v2974 = vld [vmem:[%s283 + $0x98] sm:$0xff]
      %v2975 = vld [vmem:[%s283 + $0xa8] sm:$0xff]
      %v2976 = vld [vmem:[%s283 + $0xb0] sm:$0xff]
      %v2977 = vld [vmem:[%s283 + $0xc0] sm:$0xff]
      %v2978 = vld [vmem:[%s283 + $0xc8] sm:$0xff]
      %v2979 = vld [vmem:[%s283 + $0xd8] sm:$0xff]
      %v2980 = vld [vmem:[%s283 + $0xe0] sm:$0xff]
      %v2981 = vld [vmem:[%s283 + $0xf0] sm:$0xff]
      %v2982 = vld [vmem:[%s283 + $0xf8] sm:$0xff]
      %v2983 = vld [vmem:[%s283 + $0x108] sm:$0xff]
      %v2984 = vld [vmem:[%s283 + $0x110] sm:$0xff]
      %v2985 = vld [vmem:[%s283 + $0x120] sm:$0xff]
      %v2986 = vld [vmem:[%s283 + $0x128] sm:$0xff]
      %v2987 = vld [vmem:[%s283 + $0x138] sm:$0xff]
      %v2988 = vld [vmem:[%s283 + $0x140] sm:$0xff]
      %v2989 = vld [vmem:[%s283 + $0x150] sm:$0xff]
      %v2990 = vld [vmem:[%s283 + $0x158] sm:$0xff]
      %v2991 = vld [vmem:[%s283 + $0x168] sm:$0xff]
      %v2992 = vld [vmem:[%s283 + $0x170] sm:$0xff]
      %v2993 = vpack.c.bf16 %v2962, %v2961
      %v2994 = vpack.c.bf16 %v2964, %v2963
      %v2995 = vpack.c.bf16 %v2966, %v2965
      %v2996 = vpack.c.bf16 %v2968, %v2967
      %v2997 = vpack.c.bf16 %v2970, %v2969
      %v2998 = vpack.c.bf16 %v2972, %v2971
      %v2999 = vpack.c.bf16 %v2974, %v2973
      %v3000 = vpack.c.bf16 %v2976, %v2975
      %v3001 = vpack.c.bf16 %v2978, %v2977
      %v3002 = vpack.c.bf16 %v2980, %v2979
      %v3003 = vpack.c.bf16 %v2982, %v2981
      %v3004 = vpack.c.bf16 %v2984, %v2983
      %v3005 = vpack.c.bf16 %v2986, %v2985
      %v3006 = vpack.c.bf16 %v2988, %v2987
      %v3007 = vpack.c.bf16 %v2990, %v2989
      %v3008 = vpack.c.bf16 %v2992, %v2991
      %v3009 = vld [vmem:[%s5 + $0x80] sm:$0xf]
      %v3010 = vld [vmem:[%s5 + $0x84] sm:$0xf]
      %v3011 = vld [vmem:[%s5 + $0x88] sm:$0xf]
      %v3012 = vld [vmem:[%s5 + $0x8c] sm:$0xf]
      %v3013 = vld [vmem:[%s5 + $0x90] sm:$0xf]
      %v3014 = vld [vmem:[%s5 + $0x94] sm:$0xf]
      %v3015 = vld [vmem:[%s5 + $0x98] sm:$0xf]
      %v3016 = vld [vmem:[%s5 + $0x9c] sm:$0xf]
      %v3017 = vld [vmem:[%s5 + $0xa0] sm:$0xf]
      %v3018 = vld [vmem:[%s5 + $0xa4] sm:$0xf]
      %v3019 = vld [vmem:[%s5 + $0xa8] sm:$0xf]
      %v3020 = vld [vmem:[%s5 + $0xac] sm:$0xf]
      %v3021 = vld [vmem:[%s5 + $0xb0] sm:$0xf]
      %v3022 = vld [vmem:[%s5 + $0xb4] sm:$0xf]
      %v3023 = vld [vmem:[%s5 + $0xb8] sm:$0xf]
      %v3024 = vld [vmem:[%s5 + $0xbc] sm:$0xf]
      %v3025 = vld [vmem:[%s5 + $0xc0] sm:$0xf]
      %v3026 = vld [vmem:[%s5 + $0xc4] sm:$0xf]
      %v3027 = vld [vmem:[%s5 + $0xc8] sm:$0xf]
      %v3028 = vld [vmem:[%s5 + $0xcc] sm:$0xf]
      %v3029 = vld [vmem:[%s5 + $0xd0] sm:$0xf]
      %v3030 = vld [vmem:[%s5 + $0xd4] sm:$0xf]
      %v3031 = vld [vmem:[%s5 + $0xd8] sm:$0xf]
      %v3032 = vld [vmem:[%s5 + $0xdc] sm:$0xf]
      %v3033 = vld [vmem:[%s5 + $0xe0] sm:$0xf]
      %v3034 = vld [vmem:[%s5 + $0xe4] sm:$0xf]
      %v3035 = vld [vmem:[%s5 + $0xe8] sm:$0xf]
      %v3036 = vld [vmem:[%s5 + $0xec] sm:$0xf]
      %v3037 = vld [vmem:[%s5 + $0xf0] sm:$0xf]
      %v3038 = vld [vmem:[%s5 + $0xf4] sm:$0xf]
      %v3039 = vld [vmem:[%s5 + $0xf8] sm:$0xf]
      %v3040 = vld [vmem:[%s5 + $0xfc] sm:$0xf]
      %v3073 = vunpack.c.l.b16 %v3009
      %v3074 = vunpack.c.l.b16 %v3010
      %v3075 = vunpack.c.l.b16 %v3011
      %v3076 = vunpack.c.l.b16 %v3012
      %v3077 = vunpack.c.l.b16 %v3013
      %v3078 = vunpack.c.l.b16 %v3014
      %v3079 = vunpack.c.l.b16 %v3015
      %v3080 = vunpack.c.l.b16 %v3016
      %v3081 = vunpack.c.l.b16 %v3017
      %v3082 = vunpack.c.l.b16 %v3018
      %v3083 = vunpack.c.l.b16 %v3019
      %v3084 = vunpack.c.l.b16 %v3020
      %v3085 = vunpack.c.l.b16 %v3021
      %v3086 = vunpack.c.l.b16 %v3022
      %v3087 = vunpack.c.l.b16 %v3023
      %v3088 = vunpack.c.l.b16 %v3024
      %v3089 = vunpack.c.l.b16 %v3025
      %v3090 = vunpack.c.l.b16 %v3026
      %v3091 = vunpack.c.l.b16 %v3027
      %v3092 = vunpack.c.l.b16 %v3028
      %v3093 = vunpack.c.l.b16 %v3029
      %v3094 = vunpack.c.l.b16 %v3030
      %v3095 = vunpack.c.l.b16 %v3031
      %v3096 = vunpack.c.l.b16 %v3032
      %v3097 = vunpack.c.l.b16 %v3033
      %v3098 = vunpack.c.l.b16 %v3034
      %v3099 = vunpack.c.l.b16 %v3035
      %v3100 = vunpack.c.l.b16 %v3036
      %v3101 = vunpack.c.l.b16 %v3037
      %v3102 = vunpack.c.l.b16 %v3038
      %v3103 = vunpack.c.l.b16 %v3039
      %v3104 = vunpack.c.l.b16 %v3040
      %v3105 = vpack.c.b16 %v3074, %v3073
      %v3106 = vpack.c.b16 %v3076, %v3075
      %v3107 = vpack.c.b16 %v3078, %v3077
      %v3108 = vpack.c.b16 %v3080, %v3079
      %v3109 = vpack.c.b16 %v3082, %v3081
      %v3110 = vpack.c.b16 %v3084, %v3083
      %v3111 = vpack.c.b16 %v3086, %v3085
      %v3112 = vpack.c.b16 %v3088, %v3087
      %v3113 = vpack.c.b16 %v3090, %v3089
      %v3114 = vpack.c.b16 %v3092, %v3091
      %v3115 = vpack.c.b16 %v3094, %v3093
      %v3116 = vpack.c.b16 %v3096, %v3095
      %v3117 = vpack.c.b16 %v3098, %v3097
      %v3118 = vpack.c.b16 %v3100, %v3099
      %v3119 = vpack.c.b16 %v3102, %v3101
      %v3120 = vpack.c.b16 %v3104, %v3103
      %3137 = vmatprep.subr.bf16.mxu0 0
      %3138 = vmatpush1.bf16.msra.mxu0 %v3105
      %3139 = vmatprep.subr.bf16.mxu0 0
      %3140 = vmatpush1.bf16.msra.mxu0 %v3106
      %3141 = vmatprep.subr.bf16.mxu0 0
      %3142 = vmatpush1.bf16.msra.mxu0 %v3107
      %3143 = vmatprep.subr.bf16.mxu0 0
      %3144 = vmatpush1.bf16.msra.mxu0 %v3108
      %3145 = vmatprep.subr.bf16.mxu0 0
      %3146 = vmatpush1.bf16.msra.mxu0 %v3109
      %3147 = vmatprep.subr.bf16.mxu0 0
      %3148 = vmatpush1.bf16.msra.mxu0 %v3110
      %3149 = vmatprep.subr.bf16.mxu0 0
      %3150 = vmatpush1.bf16.msra.mxu0 %v3111
      %3151 = vmatprep.subr.bf16.mxu0 0
      %3152 = vmatpush1.bf16.msra.mxu0 %v3112
      %3153 = vmatprep.subr.bf16.mxu0 0
      %3154 = vmatpush1.bf16.msra.mxu0 %v3113
      %3155 = vmatprep.subr.bf16.mxu0 0
      %3156 = vmatpush1.bf16.msra.mxu0 %v3114
      %3157 = vmatprep.subr.bf16.mxu0 0
      %3158 = vmatpush1.bf16.msra.mxu0 %v3115
      %3159 = vmatprep.subr.bf16.mxu0 0
      %3160 = vmatpush1.bf16.msra.mxu0 %v3116
      %3161 = vmatprep.subr.bf16.mxu0 0
      %3162 = vmatpush1.bf16.msra.mxu0 %v3117
      %3163 = vmatprep.subr.bf16.mxu0 0
      %3164 = vmatpush1.bf16.msra.mxu0 %v3118
      %3165 = vmatprep.subr.bf16.mxu0 0
      %3166 = vmatpush1.bf16.msra.mxu0 %v3119
      %3167 = vmatprep.subr.bf16.mxu0 0
      %3168 = vmatpush1.bf16.msra.mxu0 %v3120
      %3169 = vmatprep.mubr.bf16.mxu0 %v2993
      %3170 = vmatmul.mubr.bf16.gmra.mrb[0].mxu0 %v2945
      %v3171 = vpop.f32.mrb[0].mxu0
      %v3172 = vadd.f32 0.0, %v3171
      %v3173 = vpop.f32.mrb[0].mxu0
      %v3174 = vpop.f32.mrb[0].mxu0
      %v3175 = vadd.f32 0.0, %v3174
      %v3176 = vpop.f32.mrb[0].mxu0
      %3177 = vmatprep.mubr.bf16.mxu0 %v2994
      %3178 = vmatmul.mubr.bf16.gmra.mrb[0].mxu0 %v2946
      %v3179 = vpop.f32.mrb[0].mxu0
      %v3180 = vadd.f32 0.0, %v3179
      %v3181 = vpop.f32.mrb[0].mxu0
      %v3182 = vpop.f32.mrb[0].mxu0
      %v3183 = vadd.f32 0.0, %v3182
      %v3184 = vpop.f32.mrb[0].mxu0
      %3185 = vmatprep.mubr.bf16.mxu0 %v2995
      %3186 = vmatmul.mubr.bf16.gmra.mrb[0].mxu0 %v2947
      %v3187 = vpop.f32.mrb[0].mxu0
      %v3188 = vadd.f32 0.0, %v3187
      %v3189 = vpop.f32.mrb[0].mxu0
      %v3190 = vpop.f32.mrb[0].mxu0
      %v3191 = vadd.f32 0.0, %v3190
      %v3192 = vpop.f32.mrb[0].mxu0
      %3193 = vmatprep.mubr.bf16.mxu0 %v2996
      %3194 = vmatmul.mubr.bf16.gmra.mrb[0].mxu0 %v2948
      %v3195 = vpop.f32.mrb[0].mxu0
      %v3196 = vadd.f32 0.0, %v3195
      %v3197 = vpop.f32.mrb[0].mxu0
      %v3198 = vpop.f32.mrb[0].mxu0
      %v3199 = vadd.f32 0.0, %v3198
      %v3200 = vpop.f32.mrb[0].mxu0
      %3201 = vmatprep.mubr.bf16.mxu0 %v2997
      %3202 = vmatmul.mubr.bf16.gmra.mrb[0].mxu0 %v2949
      %v3203 = vpop.f32.mrb[0].mxu0
      %v3204 = vadd.f32 0.0, %v3203
      %v3205 = vpop.f32.mrb[0].mxu0
      %v3206 = vpop.f32.mrb[0].mxu0
      %v3207 = vadd.f32 0.0, %v3206
      %v3208 = vpop.f32.mrb[0].mxu0
      %3209 = vmatprep.mubr.bf16.mxu0 %v2998
      %3210 = vmatmul.mubr.bf16.gmra.mrb[0].mxu0 %v2950
      %v3211 = vpop.f32.mrb[0].mxu0
      %v3212 = vadd.f32 0.0, %v3211
      %v3213 = vpop.f32.mrb[0].mxu0
      %v3214 = vpop.f32.mrb[0].mxu0
      %v3215 = vadd.f32 0.0, %v3214
      %v3216 = vpop.f32.mrb[0].mxu0
      %3217 = vmatprep.mubr.bf16.mxu0 %v2999
      %3218 = vmatmul.mubr.bf16.gmra.mrb[0].mxu0 %v2951
      %v3219 = vpop.f32.mrb[0].mxu0
      %v3220 = vadd.f32 0.0, %v3219
      %v3221 = vpop.f32.mrb[0].mxu0
      %v3222 = vpop.f32.mrb[0].mxu0
      %v3223 = vadd.f32 0.0, %v3222
      %v3224 = vpop.f32.mrb[0].mxu0
      %3225 = vmatprep.mubr.bf16.mxu0 %v3000
      %3226 = vmatmul.mubr.bf16.gmra.mrb[0].mxu0 %v2952
      %v3227 = vpop.f32.mrb[0].mxu0
      %v3228 = vadd.f32 0.0, %v3227
      %v3229 = vpop.f32.mrb[0].mxu0
      %v3230 = vpop.f32.mrb[0].mxu0
      %v3231 = vadd.f32 0.0, %v3230
      %v3232 = vpop.f32.mrb[0].mxu0
      %3233 = vmatprep.mubr.bf16.mxu0 %v3001
      %3234 = vmatmul.mubr.bf16.gmra.mrb[0].mxu0 %v2953
      %v3235 = vpop.f32.mrb[0].mxu0
      %v3236 = vadd.f32 0.0, %v3235
      %v3237 = vpop.f32.mrb[0].mxu0
      %v3238 = vpop.f32.mrb[0].mxu0
      %v3239 = vadd.f32 0.0, %v3238
      %v3240 = vpop.f32.mrb[0].mxu0
      %3241 = vmatprep.mubr.bf16.mxu0 %v3002
      %3242 = vmatmul.mubr.bf16.gmra.mrb[0].mxu0 %v2954
      %v3243 = vpop.f32.mrb[0].mxu0
      %v3244 = vadd.f32 0.0, %v3243
      %v3245 = vpop.f32.mrb[0].mxu0
      %v3246 = vpop.f32.mrb[0].mxu0
      %v3247 = vadd.f32 0.0, %v3246
      %v3248 = vpop.f32.mrb[0].mxu0
      %3249 = vmatprep.mubr.bf16.mxu0 %v3003
      %3250 = vmatmul.mubr.bf16.gmra.mrb[0].mxu0 %v2955
      %v3251 = vpop.f32.mrb[0].mxu0
      %v3252 = vadd.f32 0.0, %v3251
      %v3253 = vpop.f32.mrb[0].mxu0
      %v3254 = vpop.f32.mrb[0].mxu0
      %v3255 = vadd.f32 0.0, %v3254
      %v3256 = vpop.f32.mrb[0].mxu0
      %3257 = vmatprep.mubr.bf16.mxu0 %v3004
      %3258 = vmatmul.mubr.bf16.gmra.mrb[0].mxu0 %v2956
      %v3259 = vpop.f32.mrb[0].mxu0
      %v3260 = vadd.f32 0.0, %v3259
      %v3261 = vpop.f32.mrb[0].mxu0
      %v3262 = vpop.f32.mrb[0].mxu0
      %v3263 = vadd.f32 0.0, %v3262
      %v3264 = vpop.f32.mrb[0].mxu0
      %3265 = vmatprep.mubr.bf16.mxu0 %v3005
      %3266 = vmatmul.mubr.bf16.gmra.mrb[0].mxu0 %v2957
      %v3267 = vpop.f32.mrb[0].mxu0
      %v3268 = vadd.f32 0.0, %v3267
      %v3269 = vpop.f32.mrb[0].mxu0
      %v3270 = vpop.f32.mrb[0].mxu0
      %v3271 = vadd.f32 0.0, %v3270
      %v3272 = vpop.f32.mrb[0].mxu0
      %3273 = vmatprep.mubr.bf16.mxu0 %v3006
      %3274 = vmatmul.mubr.bf16.gmra.mrb[0].mxu0 %v2958
      %v3275 = vpop.f32.mrb[0].mxu0
      %v3276 = vadd.f32 0.0, %v3275
      %v3277 = vpop.f32.mrb[0].mxu0
      %v3278 = vpop.f32.mrb[0].mxu0
      %v3279 = vadd.f32 0.0, %v3278
      %v3280 = vpop.f32.mrb[0].mxu0
      %3281 = vmatprep.mubr.bf16.mxu0 %v3007
      %3282 = vmatmul.mubr.bf16.gmra.mrb[0].mxu0 %v2959
      %v3283 = vpop.f32.mrb[0].mxu0
      %v3284 = vadd.f32 0.0, %v3283
      %v3285 = vpop.f32.mrb[0].mxu0
      %v3286 = vpop.f32.mrb[0].mxu0
      %v3287 = vadd.f32 0.0, %v3286
      %v3288 = vpop.f32.mrb[0].mxu0
      %3289 = vmatprep.mubr.bf16.mxu0 %v3008
      %3290 = vmatmul.mubr.bf16.gmra.mrb[0].mxu0 %v2960
      %v3291 = vpop.f32.mrb[0].mxu0
      %v3292 = vadd.f32 0.0, %v3291
      %v3293 = vpop.f32.mrb[0].mxu0
      %v3294 = vpop.f32.mrb[0].mxu0
      %v3295 = vadd.f32 0.0, %v3294
      %v3296 = vpop.f32.mrb[0].mxu0
      %3297 = vdwg.mxu0
      %v3330 = vunpack.c.l.b16 %v2881
      %v3331 = vunpack.c.l.b16 %v2882
      %v3332 = vunpack.c.l.b16 %v2883
      %v3333 = vunpack.c.l.b16 %v2884
      %v3334 = vunpack.c.l.b16 %v2885
      %v3335 = vunpack.c.l.b16 %v2886
      %v3336 = vunpack.c.l.b16 %v2887
      %v3337 = vunpack.c.l.b16 %v2888
      %v3338 = vunpack.c.l.b16 %v2889
      %v3339 = vunpack.c.l.b16 %v2890
      %v3340 = vunpack.c.l.b16 %v2891
      %v3341 = vunpack.c.l.b16 %v2892
      %v3342 = vunpack.c.l.b16 %v2893
      %v3343 = vunpack.c.l.b16 %v2894
      %v3344 = vunpack.c.l.b16 %v2895
      %v3345 = vunpack.c.l.b16 %v2896
      %v3346 = vunpack.c.l.b16 %v2897
      %v3347 = vunpack.c.l.b16 %v2898
      %v3348 = vunpack.c.l.b16 %v2899
      %v3349 = vunpack.c.l.b16 %v2900
      %v3350 = vunpack.c.l.b16 %v2901
      %v3351 = vunpack.c.l.b16 %v2902
      %v3352 = vunpack.c.l.b16 %v2903
      %v3353 = vunpack.c.l.b16 %v2904
      %v3354 = vunpack.c.l.b16 %v2905
      %v3355 = vunpack.c.l.b16 %v2906
      %v3356 = vunpack.c.l.b16 %v2907
      %v3357 = vunpack.c.l.b16 %v2908
      %v3358 = vunpack.c.l.b16 %v2909
      %v3359 = vunpack.c.l.b16 %v2910
      %v3360 = vunpack.c.l.b16 %v2911
      %v3361 = vunpack.c.l.b16 %v2912
      %v3362 = vpack.c.b16 %v3331, %v3330
      %v3363 = vpack.c.b16 %v3333, %v3332
      %v3364 = vpack.c.b16 %v3335, %v3334
      %v3365 = vpack.c.b16 %v3337, %v3336
      %v3366 = vpack.c.b16 %v3339, %v3338
      %v3367 = vpack.c.b16 %v3341, %v3340
      %v3368 = vpack.c.b16 %v3343, %v3342
      %v3369 = vpack.c.b16 %v3345, %v3344
      %v3370 = vpack.c.b16 %v3347, %v3346
      %v3371 = vpack.c.b16 %v3349, %v3348
      %v3372 = vpack.c.b16 %v3351, %v3350
      %v3373 = vpack.c.b16 %v3353, %v3352
      %v3374 = vpack.c.b16 %v3355, %v3354
      %v3375 = vpack.c.b16 %v3357, %v3356
      %v3376 = vpack.c.b16 %v3359, %v3358
      %v3377 = vpack.c.b16 %v3361, %v3360
      %3394 = vmatprep.subr.bf16.mxu0 0
      %3395 = vmatpush1.bf16.msra.mxu0 %v3362
      %3396 = vmatprep.subr.bf16.mxu0 0
      %3397 = vmatpush1.bf16.msra.mxu0 %v3363
      %3398 = vmatprep.subr.bf16.mxu0 0
      %3399 = vmatpush1.bf16.msra.mxu0 %v3364
      %3400 = vmatprep.subr.bf16.mxu0 0
      %3401 = vmatpush1.bf16.msra.mxu0 %v3365
      %3402 = vmatprep.subr.bf16.mxu0 0
      %3403 = vmatpush1.bf16.msra.mxu0 %v3366
      %3404 = vmatprep.subr.bf16.mxu0 0
      %3405 = vmatpush1.bf16.msra.mxu0 %v3367
      %3406 = vmatprep.subr.bf16.mxu0 0
      %3407 = vmatpush1.bf16.msra.mxu0 %v3368
      %3408 = vmatprep.subr.bf16.mxu0 0
      %3409 = vmatpush1.bf16.msra.mxu0 %v3369
      %3410 = vmatprep.subr.bf16.mxu0 0
      %3411 = vmatpush1.bf16.msra.mxu0 %v3370
      %3412 = vmatprep.subr.bf16.mxu0 0
      %3413 = vmatpush1.bf16.msra.mxu0 %v3371
      %3414 = vmatprep.subr.bf16.mxu0 0
      %3415 = vmatpush1.bf16.msra.mxu0 %v3372
      %3416 = vmatprep.subr.bf16.mxu0 0
      %3417 = vmatpush1.bf16.msra.mxu0 %v3373
      %3418 = vmatprep.subr.bf16.mxu0 0
      %3419 = vmatpush1.bf16.msra.mxu0 %v3374
      %3420 = vmatprep.subr.bf16.mxu0 0
      %3421 = vmatpush1.bf16.msra.mxu0 %v3375
      %3422 = vmatprep.subr.bf16.mxu0 0
      %3423 = vmatpush1.bf16.msra.mxu0 %v3376
      %3424 = vmatprep.subr.bf16.mxu0 0
      %3425 = vmatpush1.bf16.msra.mxu0 %v3377
      %3426 = vmatprep.mubr.bf16.mxu0 %v2865
      %3427 = vmatmul.mubr.bf16.gmra.mrb[0].mxu0 %v2817
      %v3428 = vpop.f32.mrb[0].mxu0
      %v3429 = vadd.f32 %v3172, %v3428
      %v3430 = vpop.f32.mrb[0].mxu0
      %v3431 = vpop.f32.mrb[0].mxu0
      %v3432 = vadd.f32 %v3175, %v3431
      %v3433 = vpop.f32.mrb[0].mxu0
      %3434 = vmatprep.mubr.bf16.mxu0 %v2866
      %3435 = vmatmul.mubr.bf16.gmra.mrb[0].mxu0 %v2818
      %v3436 = vpop.f32.mrb[0].mxu0
      %v3437 = vadd.f32 %v3180, %v3436
      %v3438 = vpop.f32.mrb[0].mxu0
      %v3439 = vpop.f32.mrb[0].mxu0
      %v3440 = vadd.f32 %v3183, %v3439
      %v3441 = vpop.f32.mrb[0].mxu0
      %3442 = vmatprep.mubr.bf16.mxu0 %v2867
      %3443 = vmatmul.mubr.bf16.gmra.mrb[0].mxu0 %v2819
      %v3444 = vpop.f32.mrb[0].mxu0
      %v3445 = vadd.f32 %v3188, %v3444
      %v3446 = vpop.f32.mrb[0].mxu0
      %v3447 = vpop.f32.mrb[0].mxu0
      %v3448 = vadd.f32 %v3191, %v3447
      %v3449 = vpop.f32.mrb[0].mxu0
      %3450 = vmatprep.mubr.bf16.mxu0 %v2868
      %3451 = vmatmul.mubr.bf16.gmra.mrb[0].mxu0 %v2820
      %v3452 = vpop.f32.mrb[0].mxu0
      %v3453 = vadd.f32 %v3196, %v3452
      %v3454 = vpop.f32.mrb[0].mxu0
      %v3455 = vpop.f32.mrb[0].mxu0
      %v3456 = vadd.f32 %v3199, %v3455
      %v3457 = vpop.f32.mrb[0].mxu0
      %3458 = vmatprep.mubr.bf16.mxu0 %v2869
      %3459 = vmatmul.mubr.bf16.gmra.mrb[0].mxu0 %v2821
      %v3460 = vpop.f32.mrb[0].mxu0
      %v3461 = vadd.f32 %v3204, %v3460
      %v3462 = vpop.f32.mrb[0].mxu0
      %v3463 = vpop.f32.mrb[0].mxu0
      %v3464 = vadd.f32 %v3207, %v3463
      %v3465 = vpop.f32.mrb[0].mxu0
      %3466 = vmatprep.mubr.bf16.mxu0 %v2870
      %3467 = vmatmul.mubr.bf16.gmra.mrb[0].mxu0 %v2822
      %v3468 = vpop.f32.mrb[0].mxu0
      %v3469 = vadd.f32 %v3212, %v3468
      %v3470 = vpop.f32.mrb[0].mxu0
      %v3471 = vpop.f32.mrb[0].mxu0
      %v3472 = vadd.f32 %v3215, %v3471
      %v3473 = vpop.f32.mrb[0].mxu0
      %3474 = vmatprep.mubr.bf16.mxu0 %v2871
      %3475 = vmatmul.mubr.bf16.gmra.mrb[0].mxu0 %v2823
      %v3476 = vpop.f32.mrb[0].mxu0
      %v3477 = vadd.f32 %v3220, %v3476
      %v3478 = vpop.f32.mrb[0].mxu0
      %v3479 = vpop.f32.mrb[0].mxu0
      %v3480 = vadd.f32 %v3223, %v3479
      %v3481 = vpop.f32.mrb[0].mxu0
      %3482 = vmatprep.mubr.bf16.mxu0 %v2872
      %3483 = vmatmul.mubr.bf16.gmra.mrb[0].mxu0 %v2824
      %v3484 = vpop.f32.mrb[0].mxu0
      %v3485 = vadd.f32 %v3228, %v3484
      %v3486 = vpop.f32.mrb[0].mxu0
      %v3487 = vpop.f32.mrb[0].mxu0
      %v3488 = vadd.f32 %v3231, %v3487
      %v3489 = vpop.f32.mrb[0].mxu0
      %3490 = vmatprep.mubr.bf16.mxu0 %v2873
      %3491 = vmatmul.mubr.bf16.gmra.mrb[0].mxu0 %v2825
      %v3492 = vpop.f32.mrb[0].mxu0
      %v3493 = vadd.f32 %v3236, %v3492
      %v3494 = vpop.f32.mrb[0].mxu0
      %v3495 = vpop.f32.mrb[0].mxu0
      %v3496 = vadd.f32 %v3239, %v3495
      %v3497 = vpop.f32.mrb[0].mxu0
      %3498 = vmatprep.mubr.bf16.mxu0 %v2874
      %3499 = vmatmul.mubr.bf16.gmra.mrb[0].mxu0 %v2826
      %v3500 = vpop.f32.mrb[0].mxu0
      %v3501 = vadd.f32 %v3244, %v3500
      %v3502 = vpop.f32.mrb[0].mxu0
      %v3503 = vpop.f32.mrb[0].mxu0
      %v3504 = vadd.f32 %v3247, %v3503
      %v3505 = vpop.f32.mrb[0].mxu0
      %3506 = vmatprep.mubr.bf16.mxu0 %v2875
      %3507 = vmatmul.mubr.bf16.gmra.mrb[0].mxu0 %v2827
      %v3508 = vpop.f32.mrb[0].mxu0
      %v3509 = vadd.f32 %v3252, %v3508
      %v3510 = vpop.f32.mrb[0].mxu0
      %v3511 = vpop.f32.mrb[0].mxu0
      %v3512 = vadd.f32 %v3255, %v3511
      %v3513 = vpop.f32.mrb[0].mxu0
      %3514 = vmatprep.mubr.bf16.mxu0 %v2876
      %3515 = vmatmul.mubr.bf16.gmra.mrb[0].mxu0 %v2828
      %v3516 = vpop.f32.mrb[0].mxu0
      %v3517 = vadd.f32 %v3260, %v3516
      %v3518 = vpop.f32.mrb[0].mxu0
      %v3519 = vpop.f32.mrb[0].mxu0
      %v3520 = vadd.f32 %v3263, %v3519
      %v3521 = vpop.f32.mrb[0].mxu0
      %3522 = vmatprep.mubr.bf16.mxu0 %v2877
      %3523 = vmatmul.mubr.bf16.gmra.mrb[0].mxu0 %v2829
      %v3524 = vpop.f32.mrb[0].mxu0
      %v3525 = vadd.f32 %v3268, %v3524
      %v3526 = vpop.f32.mrb[0].mxu0
      %v3527 = vpop.f32.mrb[0].mxu0
      %v3528 = vadd.f32 %v3271, %v3527
      %v3529 = vpop.f32.mrb[0].mxu0
      %3530 = vmatprep.mubr.bf16.mxu0 %v2878
      %3531 = vmatmul.mubr.bf16.gmra.mrb[0].mxu0 %v2830
      %v3532 = vpop.f32.mrb[0].mxu0
      %v3533 = vadd.f32 %v3276, %v3532
      %v3534 = vpop.f32.mrb[0].mxu0
      %v3535 = vpop.f32.mrb[0].mxu0
      %v3536 = vadd.f32 %v3279, %v3535
      %v3537 = vpop.f32.mrb[0].mxu0
      %3538 = vmatprep.mubr.bf16.mxu0 %v2879
      %3539 = vmatmul.mubr.bf16.gmra.mrb[0].mxu0 %v2831
      %v3540 = vpop.f32.mrb[0].mxu0
      %v3541 = vadd.f32 %v3284, %v3540
      %v3542 = vpop.f32.mrb[0].mxu0
      %v3543 = vpop.f32.mrb[0].mxu0
      %v3544 = vadd.f32 %v3287, %v3543
      %v3545 = vpop.f32.mrb[0].mxu0
      %3546 = vmatprep.mubr.bf16.mxu0 %v2880
      %3547 = vmatmul.mubr.bf16.gmra.mrb[0].mxu0 %v2832
      %v3548 = vpop.f32.mrb[0].mxu0
      %v3549 = vadd.f32 %v3292, %v3548
      %v3550 = vpop.f32.mrb[0].mxu0
      %v3551 = vpop.f32.mrb[0].mxu0
      %v3552 = vadd.f32 %v3295, %v3551
      %v3553 = vpop.f32.mrb[0].mxu0
      %3554 = vdwg.mxu0
      %v3555 = vld [vmem:[%s283 + $0x1] sm:$0xff]
      %v3556 = vld [vmem:[%s283 + $0x9] sm:$0xff]
      %v3557 = vld [vmem:[%s283 + $0x19] sm:$0xff]
      %v3558 = vld [vmem:[%s283 + $0x21] sm:$0xff]
      %v3559 = vld [vmem:[%s283 + $0x31] sm:$0xff]
      %v3560 = vld [vmem:[%s283 + $0x39] sm:$0xff]
      %v3561 = vld [vmem:[%s283 + $0x49] sm:$0xff]
      %v3562 = vld [vmem:[%s283 + $0x51] sm:$0xff]
      %v3563 = vld [vmem:[%s283 + $0x61] sm:$0xff]
      %v3564 = vld [vmem:[%s283 + $0x69] sm:$0xff]
      %v3565 = vld [vmem:[%s283 + $0x79] sm:$0xff]
      %v3566 = vld [vmem:[%s283 + $0x81] sm:$0xff]
      %v3567 = vld [vmem:[%s283 + $0x91] sm:$0xff]
      %v3568 = vld [vmem:[%s283 + $0x99] sm:$0xff]
      %v3569 = vld [vmem:[%s283 + $0xa9] sm:$0xff]
      %v3570 = vld [vmem:[%s283 + $0xb1] sm:$0xff]
      %v3571 = vld [vmem:[%s283 + $0xc1] sm:$0xff]
      %v3572 = vld [vmem:[%s283 + $0xc9] sm:$0xff]
      %v3573 = vld [vmem:[%s283 + $0xd9] sm:$0xff]
      %v3574 = vld [vmem:[%s283 + $0xe1] sm:$0xff]
      %v3575 = vld [vmem:[%s283 + $0xf1] sm:$0xff]
      %v3576 = vld [vmem:[%s283 + $0xf9] sm:$0xff]
      %v3577 = vld [vmem:[%s283 + $0x109] sm:$0xff]
      %v3578 = vld [vmem:[%s283 + $0x111] sm:$0xff]
      %v3579 = vld [vmem:[%s283 + $0x121] sm:$0xff]
      %v3580 = vld [vmem:[%s283 + $0x129] sm:$0xff]
      %v3581 = vld [vmem:[%s283 + $0x139] sm:$0xff]
      %v3582 = vld [vmem:[%s283 + $0x141] sm:$0xff]
      %v3583 = vld [vmem:[%s283 + $0x151] sm:$0xff]
      %v3584 = vld [vmem:[%s283 + $0x159] sm:$0xff]
      %v3585 = vld [vmem:[%s283 + $0x169] sm:$0xff]
      %v3586 = vld [vmem:[%s283 + $0x171] sm:$0xff]
      %v3587 = vpack.c.bf16 %v3556, %v3555
      %v3588 = vpack.c.bf16 %v3558, %v3557
      %v3589 = vpack.c.bf16 %v3560, %v3559
      %v3590 = vpack.c.bf16 %v3562, %v3561
      %v3591 = vpack.c.bf16 %v3564, %v3563
      %v3592 = vpack.c.bf16 %v3566, %v3565
      %v3593 = vpack.c.bf16 %v3568, %v3567
      %v3594 = vpack.c.bf16 %v3570, %v3569
      %v3595 = vpack.c.bf16 %v3572, %v3571
      %v3596 = vpack.c.bf16 %v3574, %v3573
      %v3597 = vpack.c.bf16 %v3576, %v3575
      %v3598 = vpack.c.bf16 %v3578, %v3577
      %v3599 = vpack.c.bf16 %v3580, %v3579
      %v3600 = vpack.c.bf16 %v3582, %v3581
      %v3601 = vpack.c.bf16 %v3584, %v3583
      %v3602 = vpack.c.bf16 %v3586, %v3585
      %v3603 = vld [vmem:[%s283 + $0x2] sm:$0xff]
      %v3604 = vld [vmem:[%s283 + $0xa] sm:$0xff]
      %v3605 = vld [vmem:[%s283 + $0x1a] sm:$0xff]
      %v3606 = vld [vmem:[%s283 + $0x22] sm:$0xff]
      %v3607 = vld [vmem:[%s283 + $0x32] sm:$0xff]
      %v3608 = vld [vmem:[%s283 + $0x3a] sm:$0xff]
      %v3609 = vld [vmem:[%s283 + $0x4a] sm:$0xff]
      %v3610 = vld [vmem:[%s283 + $0x52] sm:$0xff]
      %v3611 = vld [vmem:[%s283 + $0x62] sm:$0xff]
      %v3612 = vld [vmem:[%s283 + $0x6a] sm:$0xff]
      %v3613 = vld [vmem:[%s283 + $0x7a] sm:$0xff]
      %v3614 = vld [vmem:[%s283 + $0x82] sm:$0xff]
      %v3615 = vld [vmem:[%s283 + $0x92] sm:$0xff]
      %v3616 = vld [vmem:[%s283 + $0x9a] sm:$0xff]
      %v3617 = vld [vmem:[%s283 + $0xaa] sm:$0xff]
      %v3618 = vld [vmem:[%s283 + $0xb2] sm:$0xff]
      %v3619 = vld [vmem:[%s283 + $0xc2] sm:$0xff]
      %v3620 = vld [vmem:[%s283 + $0xca] sm:$0xff]
      %v3621 = vld [vmem:[%s283 + $0xda] sm:$0xff]
      %v3622 = vld [vmem:[%s283 + $0xe2] sm:$0xff]
      %v3623 = vld [vmem:[%s283 + $0xf2] sm:$0xff]
      %v3624 = vld [vmem:[%s283 + $0xfa] sm:$0xff]
      %v3625 = vld [vmem:[%s283 + $0x10a] sm:$0xff]
      %v3626 = vld [vmem:[%s283 + $0x112] sm:$0xff]
      %v3627 = vld [vmem:[%s283 + $0x122] sm:$0xff]
      %v3628 = vld [vmem:[%s283 + $0x12a] sm:$0xff]
      %v3629 = vld [vmem:[%s283 + $0x13a] sm:$0xff]
      %v3630 = vld [vmem:[%s283 + $0x142] sm:$0xff]
      %v3631 = vld [vmem:[%s283 + $0x152] sm:$0xff]
      %v3632 = vld [vmem:[%s283 + $0x15a] sm:$0xff]
      %v3633 = vld [vmem:[%s283 + $0x16a] sm:$0xff]
      %v3634 = vld [vmem:[%s283 + $0x172] sm:$0xff]
      %v3635 = vpack.c.bf16 %v3604, %v3603
      %v3636 = vpack.c.bf16 %v3606, %v3605
      %v3637 = vpack.c.bf16 %v3608, %v3607
      %v3638 = vpack.c.bf16 %v3610, %v3609
      %v3639 = vpack.c.bf16 %v3612, %v3611
      %v3640 = vpack.c.bf16 %v3614, %v3613
      %v3641 = vpack.c.bf16 %v3616, %v3615
      %v3642 = vpack.c.bf16 %v3618, %v3617
      %v3643 = vpack.c.bf16 %v3620, %v3619
      %v3644 = vpack.c.bf16 %v3622, %v3621
      %v3645 = vpack.c.bf16 %v3624, %v3623
      %v3646 = vpack.c.bf16 %v3626, %v3625
      %v3647 = vpack.c.bf16 %v3628, %v3627
      %v3648 = vpack.c.bf16 %v3630, %v3629
      %v3649 = vpack.c.bf16 %v3632, %v3631
      %v3650 = vpack.c.bf16 %v3634, %v3633
      %v3651 = vld [vmem:[%s5 + $0x100] sm:$0xf]
      %v3652 = vld [vmem:[%s5 + $0x104] sm:$0xf]
      %v3653 = vld [vmem:[%s5 + $0x108] sm:$0xf]
      %v3654 = vld [vmem:[%s5 + $0x10c] sm:$0xf]
      %v3655 = vld [vmem:[%s5 + $0x110] sm:$0xf]
      %v3656 = vld [vmem:[%s5 + $0x114] sm:$0xf]
      %v3657 = vld [vmem:[%s5 + $0x118] sm:$0xf]
      %v3658 = vld [vmem:[%s5 + $0x11c] sm:$0xf]
      %v3659 = vld [vmem:[%s5 + $0x120] sm:$0xf]
      %v3660 = vld [vmem:[%s5 + $0x124] sm:$0xf]
      %v3661 = vld [vmem:[%s5 + $0x128] sm:$0xf]
      %v3662 = vld [vmem:[%s5 + $0x12c] sm:$0xf]
      %v3663 = vld [vmem:[%s5 + $0x130] sm:$0xf]
      %v3664 = vld [vmem:[%s5 + $0x134] sm:$0xf]
      %v3665 = vld [vmem:[%s5 + $0x138] sm:$0xf]
      %v3666 = vld [vmem:[%s5 + $0x13c] sm:$0xf]
      %v3667 = vld [vmem:[%s5 + $0x140] sm:$0xf]
      %v3668 = vld [vmem:[%s5 + $0x144] sm:$0xf]
      %v3669 = vld [vmem:[%s5 + $0x148] sm:$0xf]
      %v3670 = vld [vmem:[%s5 + $0x14c] sm:$0xf]
      %v3671 = vld [vmem:[%s5 + $0x150] sm:$0xf]
      %v3672 = vld [vmem:[%s5 + $0x154] sm:$0xf]
      %v3673 = vld [vmem:[%s5 + $0x158] sm:$0xf]
      %v3674 = vld [vmem:[%s5 + $0x15c] sm:$0xf]
      %v3675 = vld [vmem:[%s5 + $0x160] sm:$0xf]
      %v3676 = vld [vmem:[%s5 + $0x164] sm:$0xf]
      %v3677 = vld [vmem:[%s5 + $0x168] sm:$0xf]
      %v3678 = vld [vmem:[%s5 + $0x16c] sm:$0xf]
      %v3679 = vld [vmem:[%s5 + $0x170] sm:$0xf]
      %v3680 = vld [vmem:[%s5 + $0x174] sm:$0xf]
      %v3681 = vld [vmem:[%s5 + $0x178] sm:$0xf]
      %v3682 = vld [vmem:[%s5 + $0x17c] sm:$0xf]
      %v3715 = vunpack.c.l.b16 %v3651
      %v3716 = vunpack.c.l.b16 %v3652
      %v3717 = vunpack.c.l.b16 %v3653
      %v3718 = vunpack.c.l.b16 %v3654
      %v3719 = vunpack.c.l.b16 %v3655
      %v3720 = vunpack.c.l.b16 %v3656
      %v3721 = vunpack.c.l.b16 %v3657
      %v3722 = vunpack.c.l.b16 %v3658
      %v3723 = vunpack.c.l.b16 %v3659
      %v3724 = vunpack.c.l.b16 %v3660
      %v3725 = vunpack.c.l.b16 %v3661
      %v3726 = vunpack.c.l.b16 %v3662
      %v3727 = vunpack.c.l.b16 %v3663
      %v3728 = vunpack.c.l.b16 %v3664
      %v3729 = vunpack.c.l.b16 %v3665
      %v3730 = vunpack.c.l.b16 %v3666
      %v3731 = vunpack.c.l.b16 %v3667
      %v3732 = vunpack.c.l.b16 %v3668
      %v3733 = vunpack.c.l.b16 %v3669
      %v3734 = vunpack.c.l.b16 %v3670
      %v3735 = vunpack.c.l.b16 %v3671
      %v3736 = vunpack.c.l.b16 %v3672
      %v3737 = vunpack.c.l.b16 %v3673
      %v3738 = vunpack.c.l.b16 %v3674
      %v3739 = vunpack.c.l.b16 %v3675
      %v3740 = vunpack.c.l.b16 %v3676
      %v3741 = vunpack.c.l.b16 %v3677
      %v3742 = vunpack.c.l.b16 %v3678
      %v3743 = vunpack.c.l.b16 %v3679
      %v3744 = vunpack.c.l.b16 %v3680
      %v3745 = vunpack.c.l.b16 %v3681
      %v3746 = vunpack.c.l.b16 %v3682
      %v3747 = vpack.c.b16 %v3716, %v3715
      %v3748 = vpack.c.b16 %v3718, %v3717
      %v3749 = vpack.c.b16 %v3720, %v3719
      %v3750 = vpack.c.b16 %v3722, %v3721
      %v3751 = vpack.c.b16 %v3724, %v3723
      %v3752 = vpack.c.b16 %v3726, %v3725
      %v3753 = vpack.c.b16 %v3728, %v3727
      %v3754 = vpack.c.b16 %v3730, %v3729
      %v3755 = vpack.c.b16 %v3732, %v3731
      %v3756 = vpack.c.b16 %v3734, %v3733
      %v3757 = vpack.c.b16 %v3736, %v3735
      %v3758 = vpack.c.b16 %v3738, %v3737
      %v3759 = vpack.c.b16 %v3740, %v3739
      %v3760 = vpack.c.b16 %v3742, %v3741
      %v3761 = vpack.c.b16 %v3744, %v3743
      %v3762 = vpack.c.b16 %v3746, %v3745
      %3779 = vmatprep.subr.bf16.mxu0 0
      %3780 = vmatpush1.bf16.msra.mxu0 %v3747
      %3781 = vmatprep.subr.bf16.mxu0 0
      %3782 = vmatpush1.bf16.msra.mxu0 %v3748
      %3783 = vmatprep.subr.bf16.mxu0 0
      %3784 = vmatpush1.bf16.msra.mxu0 %v3749
      %3785 = vmatprep.subr.bf16.mxu0 0
      %3786 = vmatpush1.bf16.msra.mxu0 %v3750
      %3787 = vmatprep.subr.bf16.mxu0 0
      %3788 = vmatpush1.bf16.msra.mxu0 %v3751
      %3789 = vmatprep.subr.bf16.mxu0 0
      %3790 = vmatpush1.bf16.msra.mxu0 %v3752
      %3791 = vmatprep.subr.bf16.mxu0 0
      %3792 = vmatpush1.bf16.msra.mxu0 %v3753
      %3793 = vmatprep.subr.bf16.mxu0 0
      %3794 = vmatpush1.bf16.msra.mxu0 %v3754
      %3795 = vmatprep.subr.bf16.mxu0 0
      %3796 = vmatpush1.bf16.msra.mxu0 %v3755
      %3797 = vmatprep.subr.bf16.mxu0 0
      %3798 = vmatpush1.bf16.msra.mxu0 %v3756
      %3799 = vmatprep.subr.bf16.mxu0 0
      %3800 = vmatpush1.bf16.msra.mxu0 %v3757
      %3801 = vmatprep.subr.bf16.mxu0 0
      %3802 = vmatpush1.bf16.msra.mxu0 %v3758
      %3803 = vmatprep.subr.bf16.mxu0 0
      %3804 = vmatpush1.bf16.msra.mxu0 %v3759
      %3805 = vmatprep.subr.bf16.mxu0 0
      %3806 = vmatpush1.bf16.msra.mxu0 %v3760
      %3807 = vmatprep.subr.bf16.mxu0 0
      %3808 = vmatpush1.bf16.msra.mxu0 %v3761
      %3809 = vmatprep.subr.bf16.mxu0 0
      %3810 = vmatpush1.bf16.msra.mxu0 %v3762
      %3811 = vmatprep.mubr.bf16.mxu0 %v3635
      %3812 = vmatmul.mubr.bf16.gmra.mrb[0].mxu0 %v3587
      %v3813 = vpop.f32.mrb[0].mxu0
      %v3814 = vadd.f32 0.0, %v3813
      %v3815 = vpop.f32.mrb[0].mxu0
      %v3816 = vpop.f32.mrb[0].mxu0
      %v3817 = vadd.f32 0.0, %v3816
      %v3818 = vpop.f32.mrb[0].mxu0
      %3819 = vmatprep.mubr.bf16.mxu0 %v3636
      %3820 = vmatmul.mubr.bf16.gmra.mrb[0].mxu0 %v3588
      %v3821 = vpop.f32.mrb[0].mxu0
      %v3822 = vadd.f32 0.0, %v3821
      %v3823 = vpop.f32.mrb[0].mxu0
      %v3824 = vpop.f32.mrb[0].mxu0
      %v3825 = vadd.f32 0.0, %v3824
      %v3826 = vpop.f32.mrb[0].mxu0
      %3827 = vmatprep.mubr.bf16.mxu0 %v3637
      %3828 = vmatmul.mubr.bf16.gmra.mrb[0].mxu0 %v3589
      %v3829 = vpop.f32.mrb[0].mxu0
      %v3830 = vadd.f32 0.0, %v3829
      %v3831 = vpop.f32.mrb[0].mxu0
      %v3832 = vpop.f32.mrb[0].mxu0
      %v3833 = vadd.f32 0.0, %v3832
      %v3834 = vpop.f32.mrb[0].mxu0
      %3835 = vmatprep.mubr.bf16.mxu0 %v3638
      %3836 = vmatmul.mubr.bf16.gmra.mrb[0].mxu0 %v3590
      %v3837 = vpop.f32.mrb[0].mxu0
      %v3838 = vadd.f32 0.0, %v3837
      %v3839 = vpop.f32.mrb[0].mxu0
      %v3840 = vpop.f32.mrb[0].mxu0
      %v3841 = vadd.f32 0.0, %v3840
      %v3842 = vpop.f32.mrb[0].mxu0
      %3843 = vmatprep.mubr.bf16.mxu0 %v3639
      %3844 = vmatmul.mubr.bf16.gmra.mrb[0].mxu0 %v3591
      %v3845 = vpop.f32.mrb[0].mxu0
      %v3846 = vadd.f32 0.0, %v3845
      %v3847 = vpop.f32.mrb[0].mxu0
      %v3848 = vpop.f32.mrb[0].mxu0
      %v3849 = vadd.f32 0.0, %v3848
      %v3850 = vpop.f32.mrb[0].mxu0
      %3851 = vmatprep.mubr.bf16.mxu0 %v3640
      %3852 = vmatmul.mubr.bf16.gmra.mrb[0].mxu0 %v3592
      %v3853 = vpop.f32.mrb[0].mxu0
      %v3854 = vadd.f32 0.0, %v3853
      %v3855 = vpop.f32.mrb[0].mxu0
      %v3856 = vpop.f32.mrb[0].mxu0
      %v3857 = vadd.f32 0.0, %v3856
      %v3858 = vpop.f32.mrb[0].mxu0
      %3859 = vmatprep.mubr.bf16.mxu0 %v3641
      %3860 = vmatmul.mubr.bf16.gmra.mrb[0].mxu0 %v3593
      %v3861 = vpop.f32.mrb[0].mxu0
      %v3862 = vadd.f32 0.0, %v3861
      %v3863 = vpop.f32.mrb[0].mxu0
      %v3864 = vpop.f32.mrb[0].mxu0
      %v3865 = vadd.f32 0.0, %v3864
      %v3866 = vpop.f32.mrb[0].mxu0
      %3867 = vmatprep.mubr.bf16.mxu0 %v3642
      %3868 = vmatmul.mubr.bf16.gmra.mrb[0].mxu0 %v3594
      %v3869 = vpop.f32.mrb[0].mxu0
      %v3870 = vadd.f32 0.0, %v3869
      %v3871 = vpop.f32.mrb[0].mxu0
      %v3872 = vpop.f32.mrb[0].mxu0
      %v3873 = vadd.f32 0.0, %v3872
      %v3874 = vpop.f32.mrb[0].mxu0
      %3875 = vmatprep.mubr.bf16.mxu0 %v3643
      %3876 = vmatmul.mubr.bf16.gmra.mrb[0].mxu0 %v3595
      %v3877 = vpop.f32.mrb[0].mxu0
      %v3878 = vadd.f32 0.0, %v3877
      %v3879 = vpop.f32.mrb[0].mxu0
      %v3880 = vpop.f32.mrb[0].mxu0
      %v3881 = vadd.f32 0.0, %v3880
      %v3882 = vpop.f32.mrb[0].mxu0
      %3883 = vmatprep.mubr.bf16.mxu0 %v3644
      %3884 = vmatmul.mubr.bf16.gmra.mrb[0].mxu0 %v3596
      %v3885 = vpop.f32.mrb[0].mxu0
      %v3886 = vadd.f32 0.0, %v3885
      %v3887 = vpop.f32.mrb[0].mxu0
      %v3888 = vpop.f32.mrb[0].mxu0
      %v3889 = vadd.f32 0.0, %v3888
      %v3890 = vpop.f32.mrb[0].mxu0
      %3891 = vmatprep.mubr.bf16.mxu0 %v3645
      %3892 = vmatmul.mubr.bf16.gmra.mrb[0].mxu0 %v3597
      %v3893 = vpop.f32.mrb[0].mxu0
      %v3894 = vadd.f32 0.0, %v3893
      %v3895 = vpop.f32.mrb[0].mxu0
      %v3896 = vpop.f32.mrb[0].mxu0
      %v3897 = vadd.f32 0.0, %v3896
      %v3898 = vpop.f32.mrb[0].mxu0
      %3899 = vmatprep.mubr.bf16.mxu0 %v3646
      %3900 = vmatmul.mubr.bf16.gmra.mrb[0].mxu0 %v3598
      %v3901 = vpop.f32.mrb[0].mxu0
      %v3902 = vadd.f32 0.0, %v3901
      %v3903 = vpop.f32.mrb[0].mxu0
      %v3904 = vpop.f32.mrb[0].mxu0
      %v3905 = vadd.f32 0.0, %v3904
      %v3906 = vpop.f32.mrb[0].mxu0
      %3907 = vmatprep.mubr.bf16.mxu0 %v3647
      %3908 = vmatmul.mubr.bf16.gmra.mrb[0].mxu0 %v3599
      %v3909 = vpop.f32.mrb[0].mxu0
      %v3910 = vadd.f32 0.0, %v3909
      %v3911 = vpop.f32.mrb[0].mxu0
      %v3912 = vpop.f32.mrb[0].mxu0
      %v3913 = vadd.f32 0.0, %v3912
      %v3914 = vpop.f32.mrb[0].mxu0
      %3915 = vmatprep.mubr.bf16.mxu0 %v3648
      %3916 = vmatmul.mubr.bf16.gmra.mrb[0].mxu0 %v3600
      %v3917 = vpop.f32.mrb[0].mxu0
      %v3918 = vadd.f32 0.0, %v3917
      %v3919 = vpop.f32.mrb[0].mxu0
      %v3920 = vpop.f32.mrb[0].mxu0
      %v3921 = vadd.f32 0.0, %v3920
      %v3922 = vpop.f32.mrb[0].mxu0
      %3923 = vmatprep.mubr.bf16.mxu0 %v3649
      %3924 = vmatmul.mubr.bf16.gmra.mrb[0].mxu0 %v3601
      %v3925 = vpop.f32.mrb[0].mxu0
      %v3926 = vadd.f32 0.0, %v3925
      %v3927 = vpop.f32.mrb[0].mxu0
      %v3928 = vpop.f32.mrb[0].mxu0
      %v3929 = vadd.f32 0.0, %v3928
      %v3930 = vpop.f32.mrb[0].mxu0
      %3931 = vmatprep.mubr.bf16.mxu0 %v3650
      %3932 = vmatmul.mubr.bf16.gmra.mrb[0].mxu0 %v3602
      %v3933 = vpop.f32.mrb[0].mxu0
      %v3934 = vadd.f32 0.0, %v3933
      %v3935 = vpop.f32.mrb[0].mxu0
      %v3936 = vpop.f32.mrb[0].mxu0
      %v3937 = vadd.f32 0.0, %v3936
      %v3938 = vpop.f32.mrb[0].mxu0
      %3939 = vdwg.mxu0
      %v3940 = vadd.f32 %v3429, %v3814
      %v3941 = vadd.f32 %v3432, %v3817
      %v3942 = vadd.f32 %v3437, %v3822
      %v3943 = vadd.f32 %v3440, %v3825
      %v3944 = vadd.f32 %v3445, %v3830
      %v3945 = vadd.f32 %v3448, %v3833
      %v3946 = vadd.f32 %v3453, %v3838
      %v3947 = vadd.f32 %v3456, %v3841
      %v3948 = vadd.f32 %v3461, %v3846
      %v3949 = vadd.f32 %v3464, %v3849
      %v3950 = vadd.f32 %v3469, %v3854
      %v3951 = vadd.f32 %v3472, %v3857
      %v3952 = vadd.f32 %v3477, %v3862
      %v3953 = vadd.f32 %v3480, %v3865
      %v3954 = vadd.f32 %v3485, %v3870
      %v3955 = vadd.f32 %v3488, %v3873
      %v3956 = vadd.f32 %v3493, %v3878
      %v3957 = vadd.f32 %v3496, %v3881
      %v3958 = vadd.f32 %v3501, %v3886
      %v3959 = vadd.f32 %v3504, %v3889
      %v3960 = vadd.f32 %v3509, %v3894
      %v3961 = vadd.f32 %v3512, %v3897
      %v3962 = vadd.f32 %v3517, %v3902
      %v3963 = vadd.f32 %v3520, %v3905
      %v3964 = vadd.f32 %v3525, %v3910
      %v3965 = vadd.f32 %v3528, %v3913
      %v3966 = vadd.f32 %v3533, %v3918
      %v3967 = vadd.f32 %v3536, %v3921
      %v3968 = vadd.f32 %v3541, %v3926
      %v3969 = vadd.f32 %v3544, %v3929
      %v3970 = vadd.f32 %v3549, %v3934
      %v3971 = vadd.f32 %v3552, %v3937
      %v3972 = vld [vmem:[%s1959] sm:$0xff]
      %v3973 = vld [vmem:[%s1959 + $0x8] sm:$0xff]
      %v3974 = vld [vmem:[%s1959 + $0x18] sm:$0xff]
      %v3975 = vld [vmem:[%s1959 + $0x20] sm:$0xff]
      %v3976 = vld [vmem:[%s1959 + $0x30] sm:$0xff]
      %v3977 = vld [vmem:[%s1959 + $0x38] sm:$0xff]
      %v3978 = vld [vmem:[%s1959 + $0x48] sm:$0xff]
      %v3979 = vld [vmem:[%s1959 + $0x50] sm:$0xff]
      %v3980 = vld [vmem:[%s1959 + $0x60] sm:$0xff]
      %v3981 = vld [vmem:[%s1959 + $0x68] sm:$0xff]
      %v3982 = vld [vmem:[%s1959 + $0x78] sm:$0xff]
      %v3983 = vld [vmem:[%s1959 + $0x80] sm:$0xff]
      %v3984 = vld [vmem:[%s1959 + $0x90] sm:$0xff]
      %v3985 = vld [vmem:[%s1959 + $0x98] sm:$0xff]
      %v3986 = vld [vmem:[%s1959 + $0xa8] sm:$0xff]
      %v3987 = vld [vmem:[%s1959 + $0xb0] sm:$0xff]
      %v3988 = vld [vmem:[%s1959 + $0xc0] sm:$0xff]
      %v3989 = vld [vmem:[%s1959 + $0xc8] sm:$0xff]
      %v3990 = vld [vmem:[%s1959 + $0xd8] sm:$0xff]
      %v3991 = vld [vmem:[%s1959 + $0xe0] sm:$0xff]
      %v3992 = vld [vmem:[%s1959 + $0xf0] sm:$0xff]
      %v3993 = vld [vmem:[%s1959 + $0xf8] sm:$0xff]
      %v3994 = vld [vmem:[%s1959 + $0x108] sm:$0xff]
      %v3995 = vld [vmem:[%s1959 + $0x110] sm:$0xff]
      %v3996 = vld [vmem:[%s1959 + $0x120] sm:$0xff]
      %v3997 = vld [vmem:[%s1959 + $0x128] sm:$0xff]
      %v3998 = vld [vmem:[%s1959 + $0x138] sm:$0xff]
      %v3999 = vld [vmem:[%s1959 + $0x140] sm:$0xff]
      %v4000 = vld [vmem:[%s1959 + $0x150] sm:$0xff]
      %v4001 = vld [vmem:[%s1959 + $0x158] sm:$0xff]
      %v4002 = vld [vmem:[%s1959 + $0x168] sm:$0xff]
      %v4003 = vld [vmem:[%s1959 + $0x170] sm:$0xff]
      %v4004 = vpack.c.bf16 %v3973, %v3972
      %v4005 = vpack.c.bf16 %v3975, %v3974
      %v4006 = vpack.c.bf16 %v3977, %v3976
      %v4007 = vpack.c.bf16 %v3979, %v3978
      %v4008 = vpack.c.bf16 %v3981, %v3980
      %v4009 = vpack.c.bf16 %v3983, %v3982
      %v4010 = vpack.c.bf16 %v3985, %v3984
      %v4011 = vpack.c.bf16 %v3987, %v3986
      %v4012 = vpack.c.bf16 %v3989, %v3988
      %v4013 = vpack.c.bf16 %v3991, %v3990
      %v4014 = vpack.c.bf16 %v3993, %v3992
      %v4015 = vpack.c.bf16 %v3995, %v3994
      %v4016 = vpack.c.bf16 %v3997, %v3996
      %v4017 = vpack.c.bf16 %v3999, %v3998
      %v4018 = vpack.c.bf16 %v4001, %v4000
      %v4019 = vpack.c.bf16 %v4003, %v4002
      %v4020 = vld [vmem:[%s1959 + $0x1] sm:$0xff]
      %v4021 = vld [vmem:[%s1959 + $0x9] sm:$0xff]
      %v4022 = vld [vmem:[%s1959 + $0x19] sm:$0xff]
      %v4023 = vld [vmem:[%s1959 + $0x21] sm:$0xff]
      %v4024 = vld [vmem:[%s1959 + $0x31] sm:$0xff]
      %v4025 = vld [vmem:[%s1959 + $0x39] sm:$0xff]
      %v4026 = vld [vmem:[%s1959 + $0x49] sm:$0xff]
      %v4027 = vld [vmem:[%s1959 + $0x51] sm:$0xff]
      %v4028 = vld [vmem:[%s1959 + $0x61] sm:$0xff]
      %v4029 = vld [vmem:[%s1959 + $0x69] sm:$0xff]
      %v4030 = vld [vmem:[%s1959 + $0x79] sm:$0xff]
      %v4031 = vld [vmem:[%s1959 + $0x81] sm:$0xff]
      %v4032 = vld [vmem:[%s1959 + $0x91] sm:$0xff]
      %v4033 = vld [vmem:[%s1959 + $0x99] sm:$0xff]
      %v4034 = vld [vmem:[%s1959 + $0xa9] sm:$0xff]
      %v4035 = vld [vmem:[%s1959 + $0xb1] sm:$0xff]
      %v4036 = vld [vmem:[%s1959 + $0xc1] sm:$0xff]
      %v4037 = vld [vmem:[%s1959 + $0xc9] sm:$0xff]
      %v4038 = vld [vmem:[%s1959 + $0xd9] sm:$0xff]
      %v4039 = vld [vmem:[%s1959 + $0xe1] sm:$0xff]
      %v4040 = vld [vmem:[%s1959 + $0xf1] sm:$0xff]
      %v4041 = vld [vmem:[%s1959 + $0xf9] sm:$0xff]
      %v4042 = vld [vmem:[%s1959 + $0x109] sm:$0xff]
      %v4043 = vld [vmem:[%s1959 + $0x111] sm:$0xff]
      %v4044 = vld [vmem:[%s1959 + $0x121] sm:$0xff]
      %v4045 = vld [vmem:[%s1959 + $0x129] sm:$0xff]
      %v4046 = vld [vmem:[%s1959 + $0x139] sm:$0xff]
      %v4047 = vld [vmem:[%s1959 + $0x141] sm:$0xff]
      %v4048 = vld [vmem:[%s1959 + $0x151] sm:$0xff]
      %v4049 = vld [vmem:[%s1959 + $0x159] sm:$0xff]
      %v4050 = vld [vmem:[%s1959 + $0x169] sm:$0xff]
      %v4051 = vld [vmem:[%s1959 + $0x171] sm:$0xff]
      %v4052 = vpack.c.bf16 %v4021, %v4020
      %v4053 = vpack.c.bf16 %v4023, %v4022
      %v4054 = vpack.c.bf16 %v4025, %v4024
      %v4055 = vpack.c.bf16 %v4027, %v4026
      %v4056 = vpack.c.bf16 %v4029, %v4028
      %v4057 = vpack.c.bf16 %v4031, %v4030
      %v4058 = vpack.c.bf16 %v4033, %v4032
      %v4059 = vpack.c.bf16 %v4035, %v4034
      %v4060 = vpack.c.bf16 %v4037, %v4036
      %v4061 = vpack.c.bf16 %v4039, %v4038
      %v4062 = vpack.c.bf16 %v4041, %v4040
      %v4063 = vpack.c.bf16 %v4043, %v4042
      %v4064 = vpack.c.bf16 %v4045, %v4044
      %v4065 = vpack.c.bf16 %v4047, %v4046
      %v4066 = vpack.c.bf16 %v4049, %v4048
      %v4067 = vpack.c.bf16 %v4051, %v4050
      %v4068 = vld [vmem:[%s5 + $0x180] sm:$0xf]
      %v4069 = vld [vmem:[%s5 + $0x184] sm:$0xf]
      %v4070 = vld [vmem:[%s5 + $0x188] sm:$0xf]
      %v4071 = vld [vmem:[%s5 + $0x18c] sm:$0xf]
      %v4072 = vld [vmem:[%s5 + $0x190] sm:$0xf]
      %v4073 = vld [vmem:[%s5 + $0x194] sm:$0xf]
      %v4074 = vld [vmem:[%s5 + $0x198] sm:$0xf]
      %v4075 = vld [vmem:[%s5 + $0x19c] sm:$0xf]
      %v4076 = vld [vmem:[%s5 + $0x1a0] sm:$0xf]
      %v4077 = vld [vmem:[%s5 + $0x1a4] sm:$0xf]
      %v4078 = vld [vmem:[%s5 + $0x1a8] sm:$0xf]
      %v4079 = vld [vmem:[%s5 + $0x1ac] sm:$0xf]
      %v4080 = vld [vmem:[%s5 + $0x1b0] sm:$0xf]
      %v4081 = vld [vmem:[%s5 + $0x1b4] sm:$0xf]
      %v4082 = vld [vmem:[%s5 + $0x1b8] sm:$0xf]
      %v4083 = vld [vmem:[%s5 + $0x1bc] sm:$0xf]
      %v4084 = vld [vmem:[%s5 + $0x1c0] sm:$0xf]
      %v4085 = vld [vmem:[%s5 + $0x1c4] sm:$0xf]
      %v4086 = vld [vmem:[%s5 + $0x1c8] sm:$0xf]
      %v4087 = vld [vmem:[%s5 + $0x1cc] sm:$0xf]
      %v4088 = vld [vmem:[%s5 + $0x1d0] sm:$0xf]
      %v4089 = vld [vmem:[%s5 + $0x1d4] sm:$0xf]
      %v4090 = vld [vmem:[%s5 + $0x1d8] sm:$0xf]
      %v4091 = vld [vmem:[%s5 + $0x1dc] sm:$0xf]
      %v4092 = vld [vmem:[%s5 + $0x1e0] sm:$0xf]
      %v4093 = vld [vmem:[%s5 + $0x1e4] sm:$0xf]
      %v4094 = vld [vmem:[%s5 + $0x1e8] sm:$0xf]
      %v4095 = vld [vmem:[%s5 + $0x1ec] sm:$0xf]
      %v4096 = vld [vmem:[%s5 + $0x1f0] sm:$0xf]
      %v4097 = vld [vmem:[%s5 + $0x1f4] sm:$0xf]
      %v4098 = vld [vmem:[%s5 + $0x1f8] sm:$0xf]
      %v4099 = vld [vmem:[%s5 + $0x1fc] sm:$0xf]
      %v4132 = vunpack.c.l.b16 %v4068
      %v4133 = vunpack.c.l.b16 %v4069
      %v4134 = vunpack.c.l.b16 %v4070
      %v4135 = vunpack.c.l.b16 %v4071
      %v4136 = vunpack.c.l.b16 %v4072
      %v4137 = vunpack.c.l.b16 %v4073
      %v4138 = vunpack.c.l.b16 %v4074
      %v4139 = vunpack.c.l.b16 %v4075
      %v4140 = vunpack.c.l.b16 %v4076
      %v4141 = vunpack.c.l.b16 %v4077
      %v4142 = vunpack.c.l.b16 %v4078
      %v4143 = vunpack.c.l.b16 %v4079
      %v4144 = vunpack.c.l.b16 %v4080
      %v4145 = vunpack.c.l.b16 %v4081
      %v4146 = vunpack.c.l.b16 %v4082
      %v4147 = vunpack.c.l.b16 %v4083
      %v4148 = vunpack.c.l.b16 %v4084
      %v4149 = vunpack.c.l.b16 %v4085
      %v4150 = vunpack.c.l.b16 %v4086
      %v4151 = vunpack.c.l.b16 %v4087
      %v4152 = vunpack.c.l.b16 %v4088
      %v4153 = vunpack.c.l.b16 %v4089
      %v4154 = vunpack.c.l.b16 %v4090
      %v4155 = vunpack.c.l.b16 %v4091
      %v4156 = vunpack.c.l.b16 %v4092
      %v4157 = vunpack.c.l.b16 %v4093
      %v4158 = vunpack.c.l.b16 %v4094
      %v4159 = vunpack.c.l.b16 %v4095
      %v4160 = vunpack.c.l.b16 %v4096
      %v4161 = vunpack.c.l.b16 %v4097
      %v4162 = vunpack.c.l.b16 %v4098
      %v4163 = vunpack.c.l.b16 %v4099
      %v4164 = vpack.c.b16 %v4133, %v4132
      %v4165 = vpack.c.b16 %v4135, %v4134
      %v4166 = vpack.c.b16 %v4137, %v4136
      %v4167 = vpack.c.b16 %v4139, %v4138
      %v4168 = vpack.c.b16 %v4141, %v4140
      %v4169 = vpack.c.b16 %v4143, %v4142
      %v4170 = vpack.c.b16 %v4145, %v4144
      %v4171 = vpack.c.b16 %v4147, %v4146
      %v4172 = vpack.c.b16 %v4149, %v4148
      %v4173 = vpack.c.b16 %v4151, %v4150
      %v4174 = vpack.c.b16 %v4153, %v4152
      %v4175 = vpack.c.b16 %v4155, %v4154
      %v4176 = vpack.c.b16 %v4157, %v4156
      %v4177 = vpack.c.b16 %v4159, %v4158
      %v4178 = vpack.c.b16 %v4161, %v4160
      %v4179 = vpack.c.b16 %v4163, %v4162
      %4196 = vmatprep.subr.bf16.mxu0 0
      %4197 = vmatpush1.bf16.msra.mxu0 %v4164
      %4198 = vmatprep.subr.bf16.mxu0 0
      %4199 = vmatpush1.bf16.msra.mxu0 %v4165
      %4200 = vmatprep.subr.bf16.mxu0 0
      %4201 = vmatpush1.bf16.msra.mxu0 %v4166
      %4202 = vmatprep.subr.bf16.mxu0 0
      %4203 = vmatpush1.bf16.msra.mxu0 %v4167
      %4204 = vmatprep.subr.bf16.mxu0 0
      %4205 = vmatpush1.bf16.msra.mxu0 %v4168
      %4206 = vmatprep.subr.bf16.mxu0 0
      %4207 = vmatpush1.bf16.msra.mxu0 %v4169
      %4208 = vmatprep.subr.bf16.mxu0 0
      %4209 = vmatpush1.bf16.msra.mxu0 %v4170
      %4210 = vmatprep.subr.bf16.mxu0 0
      %4211 = vmatpush1.bf16.msra.mxu0 %v4171
      %4212 = vmatprep.subr.bf16.mxu0 0
      %4213 = vmatpush1.bf16.msra.mxu0 %v4172
      %4214 = vmatprep.subr.bf16.mxu0 0
      %4215 = vmatpush1.bf16.msra.mxu0 %v4173
      %4216 = vmatprep.subr.bf16.mxu0 0
      %4217 = vmatpush1.bf16.msra.mxu0 %v4174
      %4218 = vmatprep.subr.bf16.mxu0 0
      %4219 = vmatpush1.bf16.msra.mxu0 %v4175
      %4220 = vmatprep.subr.bf16.mxu0 0
      %4221 = vmatpush1.bf16.msra.mxu0 %v4176
      %4222 = vmatprep.subr.bf16.mxu0 0
      %4223 = vmatpush1.bf16.msra.mxu0 %v4177
      %4224 = vmatprep.subr.bf16.mxu0 0
      %4225 = vmatpush1.bf16.msra.mxu0 %v4178
      %4226 = vmatprep.subr.bf16.mxu0 0
      %4227 = vmatpush1.bf16.msra.mxu0 %v4179
      %4228 = vmatprep.mubr.bf16.mxu0 %v4052
      %4229 = vmatmul.mubr.bf16.gmra.mrb[0].mxu0 %v4004
      %v4230 = vpop.f32.mrb[0].mxu0
      %v4231 = vadd.f32 0.0, %v4230
      %v4232 = vpop.f32.mrb[0].mxu0
      %v4233 = vpop.f32.mrb[0].mxu0
      %v4234 = vadd.f32 0.0, %v4233
      %v4235 = vpop.f32.mrb[0].mxu0
      %4236 = vmatprep.mubr.bf16.mxu0 %v4053
      %4237 = vmatmul.mubr.bf16.gmra.mrb[0].mxu0 %v4005
      %v4238 = vpop.f32.mrb[0].mxu0
      %v4239 = vadd.f32 0.0, %v4238
      %v4240 = vpop.f32.mrb[0].mxu0
      %v4241 = vpop.f32.mrb[0].mxu0
      %v4242 = vadd.f32 0.0, %v4241
      %v4243 = vpop.f32.mrb[0].mxu0
      %4244 = vmatprep.mubr.bf16.mxu0 %v4054
      %4245 = vmatmul.mubr.bf16.gmra.mrb[0].mxu0 %v4006
      %v4246 = vpop.f32.mrb[0].mxu0
      %v4247 = vadd.f32 0.0, %v4246
      %v4248 = vpop.f32.mrb[0].mxu0
      %v4249 = vpop.f32.mrb[0].mxu0
      %v4250 = vadd.f32 0.0, %v4249
      %v4251 = vpop.f32.mrb[0].mxu0
      %4252 = vmatprep.mubr.bf16.mxu0 %v4055
      %4253 = vmatmul.mubr.bf16.gmra.mrb[0].mxu0 %v4007
      %v4254 = vpop.f32.mrb[0].mxu0
      %v4255 = vadd.f32 0.0, %v4254
      %v4256 = vpop.f32.mrb[0].mxu0
      %v4257 = vpop.f32.mrb[0].mxu0
      %v4258 = vadd.f32 0.0, %v4257
      %v4259 = vpop.f32.mrb[0].mxu0
      %4260 = vmatprep.mubr.bf16.mxu0 %v4056
      %4261 = vmatmul.mubr.bf16.gmra.mrb[0].mxu0 %v4008
      %v4262 = vpop.f32.mrb[0].mxu0
      %v4263 = vadd.f32 0.0, %v4262
      %v4264 = vpop.f32.mrb[0].mxu0
      %v4265 = vpop.f32.mrb[0].mxu0
      %v4266 = vadd.f32 0.0, %v4265
      %v4267 = vpop.f32.mrb[0].mxu0
      %4268 = vmatprep.mubr.bf16.mxu0 %v4057
      %4269 = vmatmul.mubr.bf16.gmra.mrb[0].mxu0 %v4009
      %v4270 = vpop.f32.mrb[0].mxu0
      %v4271 = vadd.f32 0.0, %v4270
      %v4272 = vpop.f32.mrb[0].mxu0
      %v4273 = vpop.f32.mrb[0].mxu0
      %v4274 = vadd.f32 0.0, %v4273
      %v4275 = vpop.f32.mrb[0].mxu0
      %4276 = vmatprep.mubr.bf16.mxu0 %v4058
      %4277 = vmatmul.mubr.bf16.gmra.mrb[0].mxu0 %v4010
      %v4278 = vpop.f32.mrb[0].mxu0
      %v4279 = vadd.f32 0.0, %v4278
      %v4280 = vpop.f32.mrb[0].mxu0
      %v4281 = vpop.f32.mrb[0].mxu0
      %v4282 = vadd.f32 0.0, %v4281
      %v4283 = vpop.f32.mrb[0].mxu0
      %4284 = vmatprep.mubr.bf16.mxu0 %v4059
      %4285 = vmatmul.mubr.bf16.gmra.mrb[0].mxu0 %v4011
      %v4286 = vpop.f32.mrb[0].mxu0
      %v4287 = vadd.f32 0.0, %v4286
      %v4288 = vpop.f32.mrb[0].mxu0
      %v4289 = vpop.f32.mrb[0].mxu0
      %v4290 = vadd.f32 0.0, %v4289
      %v4291 = vpop.f32.mrb[0].mxu0
      %4292 = vmatprep.mubr.bf16.mxu0 %v4060
      %4293 = vmatmul.mubr.bf16.gmra.mrb[0].mxu0 %v4012
      %v4294 = vpop.f32.mrb[0].mxu0
      %v4295 = vadd.f32 0.0, %v4294
      %v4296 = vpop.f32.mrb[0].mxu0
      %v4297 = vpop.f32.mrb[0].mxu0
      %v4298 = vadd.f32 0.0, %v4297
      %v4299 = vpop.f32.mrb[0].mxu0
      %4300 = vmatprep.mubr.bf16.mxu0 %v4061
      %4301 = vmatmul.mubr.bf16.gmra.mrb[0].mxu0 %v4013
      %v4302 = vpop.f32.mrb[0].mxu0
      %v4303 = vadd.f32 0.0, %v4302
      %v4304 = vpop.f32.mrb[0].mxu0
      %v4305 = vpop.f32.mrb[0].mxu0
      %v4306 = vadd.f32 0.0, %v4305
      %v4307 = vpop.f32.mrb[0].mxu0
      %4308 = vmatprep.mubr.bf16.mxu0 %v4062
      %4309 = vmatmul.mubr.bf16.gmra.mrb[0].mxu0 %v4014
      %v4310 = vpop.f32.mrb[0].mxu0
      %v4311 = vadd.f32 0.0, %v4310
      %v4312 = vpop.f32.mrb[0].mxu0
      %v4313 = vpop.f32.mrb[0].mxu0
      %v4314 = vadd.f32 0.0, %v4313
      %v4315 = vpop.f32.mrb[0].mxu0
      %4316 = vmatprep.mubr.bf16.mxu0 %v4063
      %4317 = vmatmul.mubr.bf16.gmra.mrb[0].mxu0 %v4015
      %v4318 = vpop.f32.mrb[0].mxu0
      %v4319 = vadd.f32 0.0, %v4318
      %v4320 = vpop.f32.mrb[0].mxu0
      %v4321 = vpop.f32.mrb[0].mxu0
      %v4322 = vadd.f32 0.0, %v4321
      %v4323 = vpop.f32.mrb[0].mxu0
      %4324 = vmatprep.mubr.bf16.mxu0 %v4064
      %4325 = vmatmul.mubr.bf16.gmra.mrb[0].mxu0 %v4016
      %v4326 = vpop.f32.mrb[0].mxu0
      %v4327 = vadd.f32 0.0, %v4326
      %v4328 = vpop.f32.mrb[0].mxu0
      %v4329 = vpop.f32.mrb[0].mxu0
      %v4330 = vadd.f32 0.0, %v4329
      %v4331 = vpop.f32.mrb[0].mxu0
      %4332 = vmatprep.mubr.bf16.mxu0 %v4065
      %4333 = vmatmul.mubr.bf16.gmra.mrb[0].mxu0 %v4017
      %v4334 = vpop.f32.mrb[0].mxu0
      %v4335 = vadd.f32 0.0, %v4334
      %v4336 = vpop.f32.mrb[0].mxu0
      %v4337 = vpop.f32.mrb[0].mxu0
      %v4338 = vadd.f32 0.0, %v4337
      %v4339 = vpop.f32.mrb[0].mxu0
      %4340 = vmatprep.mubr.bf16.mxu0 %v4066
      %4341 = vmatmul.mubr.bf16.gmra.mrb[0].mxu0 %v4018
      %v4342 = vpop.f32.mrb[0].mxu0
      %v4343 = vadd.f32 0.0, %v4342
      %v4344 = vpop.f32.mrb[0].mxu0
      %v4345 = vpop.f32.mrb[0].mxu0
      %v4346 = vadd.f32 0.0, %v4345
      %v4347 = vpop.f32.mrb[0].mxu0
      %4348 = vmatprep.mubr.bf16.mxu0 %v4067
      %4349 = vmatmul.mubr.bf16.gmra.mrb[0].mxu0 %v4019
      %v4350 = vpop.f32.mrb[0].mxu0
      %v4351 = vadd.f32 0.0, %v4350
      %v4352 = vpop.f32.mrb[0].mxu0
      %v4353 = vpop.f32.mrb[0].mxu0
      %v4354 = vadd.f32 0.0, %v4353
      %v4355 = vpop.f32.mrb[0].mxu0
      %4356 = vdwg.mxu0
      %v4357 = vadd.f32 %v3940, %v4231
      %v4358 = vadd.f32 %v3941, %v4234
      %v4359 = vadd.f32 %v3942, %v4239
      %v4360 = vadd.f32 %v3943, %v4242
      %v4361 = vadd.f32 %v3944, %v4247
      %v4362 = vadd.f32 %v3945, %v4250
      %v4363 = vadd.f32 %v3946, %v4255
      %v4364 = vadd.f32 %v3947, %v4258
      %v4365 = vadd.f32 %v3948, %v4263
      %v4366 = vadd.f32 %v3949, %v4266
      %v4367 = vadd.f32 %v3950, %v4271
      %v4368 = vadd.f32 %v3951, %v4274
      %v4369 = vadd.f32 %v3952, %v4279
      %v4370 = vadd.f32 %v3953, %v4282
      %v4371 = vadd.f32 %v3954, %v4287
      %v4372 = vadd.f32 %v3955, %v4290
      %v4373 = vadd.f32 %v3956, %v4295
      %v4374 = vadd.f32 %v3957, %v4298
      %v4375 = vadd.f32 %v3958, %v4303
      %v4376 = vadd.f32 %v3959, %v4306
      %v4377 = vadd.f32 %v3960, %v4311
      %v4378 = vadd.f32 %v3961, %v4314
      %v4379 = vadd.f32 %v3962, %v4319
      %v4380 = vadd.f32 %v3963, %v4322
      %v4381 = vadd.f32 %v3964, %v4327
      %v4382 = vadd.f32 %v3965, %v4330
      %v4383 = vadd.f32 %v3966, %v4335
      %v4384 = vadd.f32 %v3967, %v4338
      %v4385 = vadd.f32 %v3968, %v4343
      %v4386 = vadd.f32 %v3969, %v4346
      %v4387 = vadd.f32 %v3970, %v4351
      %v4388 = vadd.f32 %v3971, %v4354
      %v4389 = vld [vmem:[%s1959 + $0x2] sm:$0xff]
      %v4390 = vld [vmem:[%s1959 + $0xa] sm:$0xff]
      %v4391 = vld [vmem:[%s1959 + $0x1a] sm:$0xff]
      %v4392 = vld [vmem:[%s1959 + $0x22] sm:$0xff]
      %v4393 = vld [vmem:[%s1959 + $0x32] sm:$0xff]
      %v4394 = vld [vmem:[%s1959 + $0x3a] sm:$0xff]
      %v4395 = vld [vmem:[%s1959 + $0x4a] sm:$0xff]
      %v4396 = vld [vmem:[%s1959 + $0x52] sm:$0xff]
      %v4397 = vld [vmem:[%s1959 + $0x62] sm:$0xff]
      %v4398 = vld [vmem:[%s1959 + $0x6a] sm:$0xff]
      %v4399 = vld [vmem:[%s1959 + $0x7a] sm:$0xff]
      %v4400 = vld [vmem:[%s1959 + $0x82] sm:$0xff]
      %v4401 = vld [vmem:[%s1959 + $0x92] sm:$0xff]
      %v4402 = vld [vmem:[%s1959 + $0x9a] sm:$0xff]
      %v4403 = vld [vmem:[%s1959 + $0xaa] sm:$0xff]
      %v4404 = vld [vmem:[%s1959 + $0xb2] sm:$0xff]
      %v4405 = vld [vmem:[%s1959 + $0xc2] sm:$0xff]
      %v4406 = vld [vmem:[%s1959 + $0xca] sm:$0xff]
      %v4407 = vld [vmem:[%s1959 + $0xda] sm:$0xff]
      %v4408 = vld [vmem:[%s1959 + $0xe2] sm:$0xff]
      %v4409 = vld [vmem:[%s1959 + $0xf2] sm:$0xff]
      %v4410 = vld [vmem:[%s1959 + $0xfa] sm:$0xff]
      %v4411 = vld [vmem:[%s1959 + $0x10a] sm:$0xff]
      %v4412 = vld [vmem:[%s1959 + $0x112] sm:$0xff]
      %v4413 = vld [vmem:[%s1959 + $0x122] sm:$0xff]
      %v4414 = vld [vmem:[%s1959 + $0x12a] sm:$0xff]
      %v4415 = vld [vmem:[%s1959 + $0x13a] sm:$0xff]
      %v4416 = vld [vmem:[%s1959 + $0x142] sm:$0xff]
      %v4417 = vld [vmem:[%s1959 + $0x152] sm:$0xff]
      %v4418 = vld [vmem:[%s1959 + $0x15a] sm:$0xff]
      %v4419 = vld [vmem:[%s1959 + $0x16a] sm:$0xff]
      %v4420 = vld [vmem:[%s1959 + $0x172] sm:$0xff]
      %v4421 = vpack.c.bf16 %v4390, %v4389
      %v4422 = vpack.c.bf16 %v4392, %v4391
      %v4423 = vpack.c.bf16 %v4394, %v4393
      %v4424 = vpack.c.bf16 %v4396, %v4395
      %v4425 = vpack.c.bf16 %v4398, %v4397
      %v4426 = vpack.c.bf16 %v4400, %v4399
      %v4427 = vpack.c.bf16 %v4402, %v4401
      %v4428 = vpack.c.bf16 %v4404, %v4403
      %v4429 = vpack.c.bf16 %v4406, %v4405
      %v4430 = vpack.c.bf16 %v4408, %v4407
      %v4431 = vpack.c.bf16 %v4410, %v4409
      %v4432 = vpack.c.bf16 %v4412, %v4411
      %v4433 = vpack.c.bf16 %v4414, %v4413
      %v4434 = vpack.c.bf16 %v4416, %v4415
      %v4435 = vpack.c.bf16 %v4418, %v4417
      %v4436 = vpack.c.bf16 %v4420, %v4419
      %v4437 = vld [vmem:[%s5 + $0x200] sm:$0xf]
      %v4438 = vld [vmem:[%s5 + $0x204] sm:$0xf]
      %v4439 = vld [vmem:[%s5 + $0x208] sm:$0xf]
      %v4440 = vld [vmem:[%s5 + $0x20c] sm:$0xf]
      %v4441 = vld [vmem:[%s5 + $0x210] sm:$0xf]
      %v4442 = vld [vmem:[%s5 + $0x214] sm:$0xf]
      %v4443 = vld [vmem:[%s5 + $0x218] sm:$0xf]
      %v4444 = vld [vmem:[%s5 + $0x21c] sm:$0xf]
      %v4445 = vld [vmem:[%s5 + $0x220] sm:$0xf]
      %v4446 = vld [vmem:[%s5 + $0x224] sm:$0xf]
      %v4447 = vld [vmem:[%s5 + $0x228] sm:$0xf]
      %v4448 = vld [vmem:[%s5 + $0x22c] sm:$0xf]
      %v4449 = vld [vmem:[%s5 + $0x230] sm:$0xf]
      %v4450 = vld [vmem:[%s5 + $0x234] sm:$0xf]
      %v4451 = vld [vmem:[%s5 + $0x238] sm:$0xf]
      %v4452 = vld [vmem:[%s5 + $0x23c] sm:$0xf]
      %v4469 = vunpack.c.l.b16 %v4437
      %v4470 = vunpack.c.l.b16 %v4438
      %v4471 = vunpack.c.l.b16 %v4439
      %v4472 = vunpack.c.l.b16 %v4440
      %v4473 = vunpack.c.l.b16 %v4441
      %v4474 = vunpack.c.l.b16 %v4442
      %v4475 = vunpack.c.l.b16 %v4443
      %v4476 = vunpack.c.l.b16 %v4444
      %v4477 = vunpack.c.l.b16 %v4445
      %v4478 = vunpack.c.l.b16 %v4446
      %v4479 = vunpack.c.l.b16 %v4447
      %v4480 = vunpack.c.l.b16 %v4448
      %v4481 = vunpack.c.l.b16 %v4449
      %v4482 = vunpack.c.l.b16 %v4450
      %v4483 = vunpack.c.l.b16 %v4451
      %v4484 = vunpack.c.l.b16 %v4452
      %v4485 = vpack.c.b16 %v4470, %v4469
      %v4486 = vpack.c.b16 %v4472, %v4471
      %v4487 = vpack.c.b16 %v4474, %v4473
      %v4488 = vpack.c.b16 %v4476, %v4475
      %v4489 = vpack.c.b16 %v4478, %v4477
      %v4490 = vpack.c.b16 %v4480, %v4479
      %v4491 = vpack.c.b16 %v4482, %v4481
      %v4492 = vpack.c.b16 %v4484, %v4483
      %4501 = vmatprep.subr.bf16.mxu0 0
      %4502 = vmatpush1.bf16.msra.mxu0 %v4485
      %4503 = vmatprep.subr.bf16.mxu0 0
      %4504 = vmatpush1.bf16.msra.mxu0 %v4486
      %4505 = vmatprep.subr.bf16.mxu0 0
      %4506 = vmatpush1.bf16.msra.mxu0 %v4487
      %4507 = vmatprep.subr.bf16.mxu0 0
      %4508 = vmatpush1.bf16.msra.mxu0 %v4488
      %4509 = vmatprep.subr.bf16.mxu0 0
      %4510 = vmatpush1.bf16.msra.mxu0 %v4489
      %4511 = vmatprep.subr.bf16.mxu0 0
      %4512 = vmatpush1.bf16.msra.mxu0 %v4490
      %4513 = vmatprep.subr.bf16.mxu0 0
      %4514 = vmatpush1.bf16.msra.mxu0 %v4491
      %4515 = vmatprep.subr.bf16.mxu0 0
      %4516 = vmatpush1.bf16.msra.mxu0 %v4492
      %4517 = vmatprep.subr.bf16.mxu0 0
      %4518 = vmatpush1.bf16.msra.mxu0 0
      %4519 = vmatprep.subr.bf16.mxu0 0
      %4520 = vmatpush1.bf16.msra.mxu0 0
      %4521 = vmatprep.subr.bf16.mxu0 0
      %4522 = vmatpush1.bf16.msra.mxu0 0
      %4523 = vmatprep.subr.bf16.mxu0 0
      %4524 = vmatpush1.bf16.msra.mxu0 0
      %4525 = vmatprep.subr.bf16.mxu0 0
      %4526 = vmatpush1.bf16.msra.mxu0 0
      %4527 = vmatprep.subr.bf16.mxu0 0
      %4528 = vmatpush1.bf16.msra.mxu0 0
      %4529 = vmatprep.subr.bf16.mxu0 0
      %4530 = vmatpush1.bf16.msra.mxu0 0
      %4531 = vmatprep.subr.bf16.mxu0 0
      %4532 = vmatpush1.bf16.msra.mxu0 0
      %4533 = vmatprep.mubr.bf16.mxu0 0
      %4534 = vmatmul.mubr.bf16.gmra.mrb[0].mxu0 %v4421
      %v4535 = vpop.f32.mrb[0].mxu0
      %v4536 = vadd.f32 0.0, %v4535
      %v4537 = vpop.f32.mrb[0].mxu0
      %v4538 = vpop.f32.mrb[0].mxu0
      %v4539 = vadd.f32 0.0, %v4538
      %v4540 = vpop.f32.mrb[0].mxu0
      %4541 = vmatprep.mubr.bf16.mxu0 0
      %4542 = vmatmul.mubr.bf16.gmra.mrb[0].mxu0 %v4422
      %v4543 = vpop.f32.mrb[0].mxu0
      %v4544 = vadd.f32 0.0, %v4543
      %v4545 = vpop.f32.mrb[0].mxu0
      %v4546 = vpop.f32.mrb[0].mxu0
      %v4547 = vadd.f32 0.0, %v4546
      %v4548 = vpop.f32.mrb[0].mxu0
      %4549 = vmatprep.mubr.bf16.mxu0 0
      %4550 = vmatmul.mubr.bf16.gmra.mrb[0].mxu0 %v4423
      %v4551 = vpop.f32.mrb[0].mxu0
      %v4552 = vadd.f32 0.0, %v4551
      %v4553 = vpop.f32.mrb[0].mxu0
      %v4554 = vpop.f32.mrb[0].mxu0
      %v4555 = vadd.f32 0.0, %v4554
      %v4556 = vpop.f32.mrb[0].mxu0
      %4557 = vmatprep.mubr.bf16.mxu0 0
      %4558 = vmatmul.mubr.bf16.gmra.mrb[0].mxu0 %v4424
      %v4559 = vpop.f32.mrb[0].mxu0
      %v4560 = vadd.f32 0.0, %v4559
      %v4561 = vpop.f32.mrb[0].mxu0
      %v4562 = vpop.f32.mrb[0].mxu0
      %v4563 = vadd.f32 0.0, %v4562
      %v4564 = vpop.f32.mrb[0].mxu0
      %4565 = vmatprep.mubr.bf16.mxu0 0
      %4566 = vmatmul.mubr.bf16.gmra.mrb[0].mxu0 %v4425
      %v4567 = vpop.f32.mrb[0].mxu0
      %v4568 = vadd.f32 0.0, %v4567
      %v4569 = vpop.f32.mrb[0].mxu0
      %v4570 = vpop.f32.mrb[0].mxu0
      %v4571 = vadd.f32 0.0, %v4570
      %v4572 = vpop.f32.mrb[0].mxu0
      %4573 = vmatprep.mubr.bf16.mxu0 0
      %4574 = vmatmul.mubr.bf16.gmra.mrb[0].mxu0 %v4426
      %v4575 = vpop.f32.mrb[0].mxu0
      %v4576 = vadd.f32 0.0, %v4575
      %v4577 = vpop.f32.mrb[0].mxu0
      %v4578 = vpop.f32.mrb[0].mxu0
      %v4579 = vadd.f32 0.0, %v4578
      %v4580 = vpop.f32.mrb[0].mxu0
      %4581 = vmatprep.mubr.bf16.mxu0 0
      %4582 = vmatmul.mubr.bf16.gmra.mrb[0].mxu0 %v4427
      %v4583 = vpop.f32.mrb[0].mxu0
      %v4584 = vadd.f32 0.0, %v4583
      %v4585 = vpop.f32.mrb[0].mxu0
      %v4586 = vpop.f32.mrb[0].mxu0
      %v4587 = vadd.f32 0.0, %v4586
      %v4588 = vpop.f32.mrb[0].mxu0
      %4589 = vmatprep.mubr.bf16.mxu0 0
      %4590 = vmatmul.mubr.bf16.gmra.mrb[0].mxu0 %v4428
      %v4591 = vpop.f32.mrb[0].mxu0
      %v4592 = vadd.f32 0.0, %v4591
      %v4593 = vpop.f32.mrb[0].mxu0
      %v4594 = vpop.f32.mrb[0].mxu0
      %v4595 = vadd.f32 0.0, %v4594
      %v4596 = vpop.f32.mrb[0].mxu0
      %4597 = vmatprep.mubr.bf16.mxu0 0
      %4598 = vmatmul.mubr.bf16.gmra.mrb[0].mxu0 %v4429
      %v4599 = vpop.f32.mrb[0].mxu0
      %v4600 = vadd.f32 0.0, %v4599
      %v4601 = vpop.f32.mrb[0].mxu0
      %v4602 = vpop.f32.mrb[0].mxu0
      %v4603 = vadd.f32 0.0, %v4602
      %v4604 = vpop.f32.mrb[0].mxu0
      %4605 = vmatprep.mubr.bf16.mxu0 0
      %4606 = vmatmul.mubr.bf16.gmra.mrb[0].mxu0 %v4430
      %v4607 = vpop.f32.mrb[0].mxu0
      %v4608 = vadd.f32 0.0, %v4607
      %v4609 = vpop.f32.mrb[0].mxu0
      %v4610 = vpop.f32.mrb[0].mxu0
      %v4611 = vadd.f32 0.0, %v4610
      %v4612 = vpop.f32.mrb[0].mxu0
      %4613 = vmatprep.mubr.bf16.mxu0 0
      %4614 = vmatmul.mubr.bf16.gmra.mrb[0].mxu0 %v4431
      %v4615 = vpop.f32.mrb[0].mxu0
      %v4616 = vadd.f32 0.0, %v4615
      %v4617 = vpop.f32.mrb[0].mxu0
      %v4618 = vpop.f32.mrb[0].mxu0
      %v4619 = vadd.f32 0.0, %v4618
      %v4620 = vpop.f32.mrb[0].mxu0
      %4621 = vmatprep.mubr.bf16.mxu0 0
      %4622 = vmatmul.mubr.bf16.gmra.mrb[0].mxu0 %v4432
      %v4623 = vpop.f32.mrb[0].mxu0
      %v4624 = vadd.f32 0.0, %v4623
      %v4625 = vpop.f32.mrb[0].mxu0
      %v4626 = vpop.f32.mrb[0].mxu0
      %v4627 = vadd.f32 0.0, %v4626
      %v4628 = vpop.f32.mrb[0].mxu0
      %4629 = vmatprep.mubr.bf16.mxu0 0
      %4630 = vmatmul.mubr.bf16.gmra.mrb[0].mxu0 %v4433
      %v4631 = vpop.f32.mrb[0].mxu0
      %v4632 = vadd.f32 0.0, %v4631
      %v4633 = vpop.f32.mrb[0].mxu0
      %v4634 = vpop.f32.mrb[0].mxu0
      %v4635 = vadd.f32 0.0, %v4634
      %v4636 = vpop.f32.mrb[0].mxu0
      %4637 = vmatprep.mubr.bf16.mxu0 0
      %4638 = vmatmul.mubr.bf16.gmra.mrb[0].mxu0 %v4434
      %v4639 = vpop.f32.mrb[0].mxu0
      %v4640 = vadd.f32 0.0, %v4639
      %v4641 = vpop.f32.mrb[0].mxu0
      %v4642 = vpop.f32.mrb[0].mxu0
      %v4643 = vadd.f32 0.0, %v4642
      %v4644 = vpop.f32.mrb[0].mxu0
      %4645 = vmatprep.mubr.bf16.mxu0 0
      %4646 = vmatmul.mubr.bf16.gmra.mrb[0].mxu0 %v4435
      %v4647 = vpop.f32.mrb[0].mxu0
      %v4648 = vadd.f32 0.0, %v4647
      %v4649 = vpop.f32.mrb[0].mxu0
      %v4650 = vpop.f32.mrb[0].mxu0
      %v4651 = vadd.f32 0.0, %v4650
      %v4652 = vpop.f32.mrb[0].mxu0
      %4653 = vmatprep.mubr.bf16.mxu0 0
      %4654 = vmatmul.mubr.bf16.gmra.mrb[0].mxu0 %v4436
      %v4655 = vpop.f32.mrb[0].mxu0
      %v4656 = vadd.f32 0.0, %v4655
      %v4657 = vpop.f32.mrb[0].mxu0
      %v4658 = vpop.f32.mrb[0].mxu0
      %v4659 = vadd.f32 0.0, %v4658
      %v4660 = vpop.f32.mrb[0].mxu0
      %4661 = vdwg.mxu0
      %v4662 = vadd.f32 %v4357, %v4536
      %v4663 = vadd.f32 %v4358, %v4539
      %v4664 = vadd.f32 %v4359, %v4544
      %v4665 = vadd.f32 %v4360, %v4547
      %v4666 = vadd.f32 %v4361, %v4552
      %v4667 = vadd.f32 %v4362, %v4555
      %v4668 = vadd.f32 %v4363, %v4560
      %v4669 = vadd.f32 %v4364, %v4563
      %v4670 = vadd.f32 %v4365, %v4568
      %v4671 = vadd.f32 %v4366, %v4571
      %v4672 = vadd.f32 %v4367, %v4576
      %v4673 = vadd.f32 %v4368, %v4579
      %v4674 = vadd.f32 %v4369, %v4584
      %v4675 = vadd.f32 %v4370, %v4587
      %v4676 = vadd.f32 %v4371, %v4592
      %v4677 = vadd.f32 %v4372, %v4595
      %v4678 = vadd.f32 %v4373, %v4600
      %v4679 = vadd.f32 %v4374, %v4603
      %v4680 = vadd.f32 %v4375, %v4608
      %v4681 = vadd.f32 %v4376, %v4611
      %v4682 = vadd.f32 %v4377, %v4616
      %v4683 = vadd.f32 %v4378, %v4619
      %v4684 = vadd.f32 %v4379, %v4624
      %v4685 = vadd.f32 %v4380, %v4627
      %v4686 = vadd.f32 %v4381, %v4632
      %v4687 = vadd.f32 %v4382, %v4635
      %v4688 = vadd.f32 %v4383, %v4640
      %v4689 = vadd.f32 %v4384, %v4643
      %v4690 = vadd.f32 %v4385, %v4648
      %v4691 = vadd.f32 %v4386, %v4651
      %v4692 = vadd.f32 %v4387, %v4656
      %v4693 = vadd.f32 %v4388, %v4659
      %v4694 = vld [vmem:[%s6] sm:$0x1]
      %v4696 = vlaneseq
      %v4697 = vshrl.u32 %v4696, 7
      %v4698 = vsub.s32 0, %v4697
      %v4699 = vrot.slane %v4694, %v4698
      %v4701 = vadd.f32 %v4662, %v4699
      %v4702 = vadd.f32 %v4663, %v4699
      %v4703 = vadd.f32 %v4664, %v4699
      %v4704 = vadd.f32 %v4665, %v4699
      %v4705 = vadd.f32 %v4666, %v4699
      %v4706 = vadd.f32 %v4667, %v4699
      %v4707 = vadd.f32 %v4668, %v4699
      %v4708 = vadd.f32 %v4669, %v4699
      %v4709 = vadd.f32 %v4670, %v4699
      %v4710 = vadd.f32 %v4671, %v4699
      %v4711 = vadd.f32 %v4672, %v4699
      %v4712 = vadd.f32 %v4673, %v4699
      %v4713 = vadd.f32 %v4674, %v4699
      %v4714 = vadd.f32 %v4675, %v4699
      %v4715 = vadd.f32 %v4676, %v4699
      %v4716 = vadd.f32 %v4677, %v4699
      %v4717 = vadd.f32 %v4678, %v4699
      %v4718 = vadd.f32 %v4679, %v4699
      %v4719 = vadd.f32 %v4680, %v4699
      %v4720 = vadd.f32 %v4681, %v4699
      %v4721 = vadd.f32 %v4682, %v4699
      %v4722 = vadd.f32 %v4683, %v4699
      %v4723 = vadd.f32 %v4684, %v4699
      %v4724 = vadd.f32 %v4685, %v4699
      %v4725 = vadd.f32 %v4686, %v4699
      %v4726 = vadd.f32 %v4687, %v4699
      %v4727 = vadd.f32 %v4688, %v4699
      %v4728 = vadd.f32 %v4689, %v4699
      %v4729 = vadd.f32 %v4690, %v4699
      %v4730 = vadd.f32 %v4691, %v4699
      %v4731 = vadd.f32 %v4692, %v4699
      %v4732 = vadd.f32 %v4693, %v4699
      %v4733 = vld [vmem:[#allocation3] sm:$0xff]
      %v4734 = vld [vmem:[#allocation3 + $0x8] sm:$0xff]
      %v4735 = vld [vmem:[#allocation3 + $0x10] sm:$0xff]
      %v4736 = vld [vmem:[#allocation3 + $0x18] sm:$0xff]
      %v4737 = vld [vmem:[#allocation3 + $0x20] sm:$0xff]
      %v4738 = vld [vmem:[#allocation3 + $0x28] sm:$0xff]
      %v4739 = vld [vmem:[#allocation3 + $0x30] sm:$0xff]
      %v4740 = vld [vmem:[#allocation3 + $0x38] sm:$0xff]
      %v4741 = vld [vmem:[#allocation3 + $0x40] sm:$0xff]
      %v4742 = vld [vmem:[#allocation3 + $0x48] sm:$0xff]
      %v4743 = vld [vmem:[#allocation3 + $0x50] sm:$0xff]
      %v4744 = vld [vmem:[#allocation3 + $0x58] sm:$0xff]
      %v4745 = vld [vmem:[#allocation3 + $0x60] sm:$0xff]
      %v4746 = vld [vmem:[#allocation3 + $0x68] sm:$0xff]
      %v4747 = vld [vmem:[#allocation3 + $0x70] sm:$0xff]
      %v4748 = vld [vmem:[#allocation3 + $0x78] sm:$0xff]
      %v4749 = vunpack.c.l.bf16 %v4733
      %v4750 = vunpack.c.h.bf16 %v4733
      %v4751 = vunpack.c.l.bf16 %v4734
      %v4752 = vunpack.c.h.bf16 %v4734
      %v4753 = vunpack.c.l.bf16 %v4735
      %v4754 = vunpack.c.h.bf16 %v4735
      %v4755 = vunpack.c.l.bf16 %v4736
      %v4756 = vunpack.c.h.bf16 %v4736
      %v4757 = vunpack.c.l.bf16 %v4737
      %v4758 = vunpack.c.h.bf16 %v4737
      %v4759 = vunpack.c.l.bf16 %v4738
      %v4760 = vunpack.c.h.bf16 %v4738
      %v4761 = vunpack.c.l.bf16 %v4739
      %v4762 = vunpack.c.h.bf16 %v4739
      %v4763 = vunpack.c.l.bf16 %v4740
      %v4764 = vunpack.c.h.bf16 %v4740
      %v4765 = vunpack.c.l.bf16 %v4741
      %v4766 = vunpack.c.h.bf16 %v4741
      %v4767 = vunpack.c.l.bf16 %v4742
      %v4768 = vunpack.c.h.bf16 %v4742
      %v4769 = vunpack.c.l.bf16 %v4743
      %v4770 = vunpack.c.h.bf16 %v4743
      %v4771 = vunpack.c.l.bf16 %v4744
      %v4772 = vunpack.c.h.bf16 %v4744
      %v4773 = vunpack.c.l.bf16 %v4745
      %v4774 = vunpack.c.h.bf16 %v4745
      %v4775 = vunpack.c.l.bf16 %v4746
      %v4776 = vunpack.c.h.bf16 %v4746
      %v4777 = vunpack.c.l.bf16 %v4747
      %v4778 = vunpack.c.h.bf16 %v4747
      %v4779 = vunpack.c.l.bf16 %v4748
      %v4780 = vunpack.c.h.bf16 %v4748
      %v4781 = vadd.f32 %v4701, %v4749
      %v4782 = vadd.f32 %v4702, %v4750
      %v4783 = vadd.f32 %v4703, %v4751
      %v4784 = vadd.f32 %v4704, %v4752
      %v4785 = vadd.f32 %v4705, %v4753
      %v4786 = vadd.f32 %v4706, %v4754
      %v4787 = vadd.f32 %v4707, %v4755
      %v4788 = vadd.f32 %v4708, %v4756
      %v4789 = vadd.f32 %v4709, %v4757
      %v4790 = vadd.f32 %v4710, %v4758
      %v4791 = vadd.f32 %v4711, %v4759
      %v4792 = vadd.f32 %v4712, %v4760
      %v4793 = vadd.f32 %v4713, %v4761
      %v4794 = vadd.f32 %v4714, %v4762
      %v4795 = vadd.f32 %v4715, %v4763
      %v4796 = vadd.f32 %v4716, %v4764
      %v4797 = vadd.f32 %v4717, %v4765
      %v4798 = vadd.f32 %v4718, %v4766
      %v4799 = vadd.f32 %v4719, %v4767
      %v4800 = vadd.f32 %v4720, %v4768
      %v4801 = vadd.f32 %v4721, %v4769
      %v4802 = vadd.f32 %v4722, %v4770
      %v4803 = vadd.f32 %v4723, %v4771
      %v4804 = vadd.f32 %v4724, %v4772
      %v4805 = vadd.f32 %v4725, %v4773
      %v4806 = vadd.f32 %v4726, %v4774
      %v4807 = vadd.f32 %v4727, %v4775
      %v4808 = vadd.f32 %v4728, %v4776
      %v4809 = vadd.f32 %v4729, %v4777
      %v4810 = vadd.f32 %v4730, %v4778
      %v4811 = vadd.f32 %v4731, %v4779
      %v4812 = vadd.f32 %v4732, %v4780
      %v4813 = vmax.f32 %v4781, 0.0
      %v4814 = vmax.f32 %v4782, 0.0
      %v4815 = vmax.f32 %v4783, 0.0
      %v4816 = vmax.f32 %v4784, 0.0
      %v4817 = vmax.f32 %v4785, 0.0
      %v4818 = vmax.f32 %v4786, 0.0
      %v4819 = vmax.f32 %v4787, 0.0
      %v4820 = vmax.f32 %v4788, 0.0
      %v4821 = vmax.f32 %v4789, 0.0
      %v4822 = vmax.f32 %v4790, 0.0
      %v4823 = vmax.f32 %v4791, 0.0
      %v4824 = vmax.f32 %v4792, 0.0
      %v4825 = vmax.f32 %v4793, 0.0
      %v4826 = vmax.f32 %v4794, 0.0
      %v4827 = vmax.f32 %v4795, 0.0
      %v4828 = vmax.f32 %v4796, 0.0
      %v4829 = vmax.f32 %v4797, 0.0
      %v4830 = vmax.f32 %v4798, 0.0
      %v4831 = vmax.f32 %v4799, 0.0
      %v4832 = vmax.f32 %v4800, 0.0
      %v4833 = vmax.f32 %v4801, 0.0
      %v4834 = vmax.f32 %v4802, 0.0
      %v4835 = vmax.f32 %v4803, 0.0
      %v4836 = vmax.f32 %v4804, 0.0
      %v4837 = vmax.f32 %v4805, 0.0
      %v4838 = vmax.f32 %v4806, 0.0
      %v4839 = vmax.f32 %v4807, 0.0
      %v4840 = vmax.f32 %v4808, 0.0
      %v4841 = vmax.f32 %v4809, 0.0
      %v4842 = vmax.f32 %v4810, 0.0
      %v4843 = vmax.f32 %v4811, 0.0
      %v4844 = vmax.f32 %v4812, 0.0
      %4845 = vmatprep.subr.mxu0 0.0
      %4846 = vmatpush1.msra.mxu0 %v4813
      %4847 = vmatprep.subr.mxu0 0.0
      %4848 = vmatpush1.msra.mxu0 %v4814
      %4849 = vmatprep.subr.mxu0 0.0
      %4850 = vmatpush1.msra.mxu0 %v4815
      %4851 = vmatprep.subr.mxu0 0.0
      %4852 = vmatpush1.msra.mxu0 %v4816
      %4853 = vmatprep.subr.mxu0 0.0
      %4854 = vmatpush1.msra.mxu0 %v4817
      %4855 = vmatprep.subr.mxu0 0.0
      %4856 = vmatpush1.msra.mxu0 %v4818
      %4857 = vmatprep.subr.mxu0 0.0
      %4858 = vmatpush1.msra.mxu0 %v4819
      %4859 = vmatprep.subr.mxu0 0.0
      %4860 = vmatpush1.msra.mxu0 %v4820
      %4861 = vmatprep.subr.mxu0 0.0
      %4862 = vmatpush1.msra.mxu0 %v4821
      %4863 = vmatprep.subr.mxu0 0.0
      %4864 = vmatpush1.msra.mxu0 %v4822
      %4865 = vmatprep.subr.mxu0 0.0
      %4866 = vmatpush1.msra.mxu0 %v4823
      %4867 = vmatprep.subr.mxu0 0.0
      %4868 = vmatpush1.msra.mxu0 %v4824
      %4869 = vmatprep.subr.mxu0 0.0
      %4870 = vmatpush1.msra.mxu0 %v4825
      %4871 = vmatprep.subr.mxu0 0.0
      %4872 = vmatpush1.msra.mxu0 %v4826
      %4873 = vmatprep.subr.mxu0 0.0
      %4874 = vmatpush1.msra.mxu0 %v4827
      %4875 = vmatprep.subr.mxu0 0.0
      %4876 = vmatpush1.msra.mxu0 %v4828
      %4877 = vmatprep.subr.mxu0 0.0
      %4878 = vmatpush1.msra.mxu0 %v4829
      %4879 = vmatprep.subr.mxu0 0.0
      %4880 = vmatpush1.msra.mxu0 %v4830
      %4881 = vmatprep.subr.mxu0 0.0
      %4882 = vmatpush1.msra.mxu0 %v4831
      %4883 = vmatprep.subr.mxu0 0.0
      %4884 = vmatpush1.msra.mxu0 %v4832
      %4885 = vmatprep.subr.mxu0 0.0
      %4886 = vmatpush1.msra.mxu0 %v4833
      %4887 = vmatprep.subr.mxu0 0.0
      %4888 = vmatpush1.msra.mxu0 %v4834
      %4889 = vmatprep.subr.mxu0 0.0
      %4890 = vmatpush1.msra.mxu0 %v4835
      %4891 = vmatprep.subr.mxu0 0.0
      %4892 = vmatpush1.msra.mxu0 %v4836
      %4893 = vmatprep.subr.mxu0 0.0
      %4894 = vmatpush1.msra.mxu0 %v4837
      %4895 = vmatprep.subr.mxu0 0.0
      %4896 = vmatpush1.msra.mxu0 %v4838
      %4897 = vmatprep.subr.mxu0 0.0
      %4898 = vmatpush1.msra.mxu0 %v4839
      %4899 = vmatprep.subr.mxu0 0.0
      %4900 = vmatpush1.msra.mxu0 %v4840
      %4901 = vmatprep.subr.mxu0 0.0
      %4902 = vmatpush1.msra.mxu0 %v4841
      %4903 = vmatprep.subr.mxu0 0.0
      %4904 = vmatpush1.msra.mxu0 %v4842
      %4905 = vmatprep.subr.mxu0 0.0
      %4906 = vmatpush1.msra.mxu0 %v4843
      %4907 = vmatprep.subr.mxu0 0.0
      %4908 = vmatpush1.msra.mxu0 %v4844
      %4909 = vmatprep.mubr.f32.mxu0 0.00390625
      %4910 = vmatmul.mubr.f32.gmra.mrb[0].mxu0 0.00390625
      %v4911 = vpop.f32.mrb[0].mxu0
      %v4912 = vadd.f32 0.0, %v4911
      %v4913 = vpop.f32.mrb[0].mxu0
      %4914 = vdwg.mxu0
      %4915 = vst [vmem:[%s274] sm:$0x1] %v4912
      %p4916 = scmp.lt.s32.totalorder %s18, 1
      %s4917 = scalar_select %p4916, %s18, 1
      %s4918 = scalar_lea.vmem %s7, %s4917
      // Predicated region
      $region49: #{my_model_forward.2} parent=47 // pred_check
        %p4919 = pneg %p188
      $region50: #{my_model_forward.2} parent=47 // pred_check_branch
        %4921 = sbr.rel (%p4919) target = $region52
      $region51: #{my_model_forward.2} parent=47 // pred_region
        _
      $region52: #{my_model_forward.2} parent=47 // pred_fallthru
        _
    $region48: #{my_model_forward.2} parent=5 // pred_fallthru
      _
    %p4922 = scmp.le.s32.totalorder 2, %s13
    // Predicated region
    $region53: #{my_model_forward.2} parent=5 // pred_check
      %p4923 = pneg %p4922
    $region54: #{my_model_forward.2} parent=5 // pred_check_branch
      %4925 = sbr.rel (%p4923) target = $region56
    $region55: #{my_model_forward.2} parent=5 // pred_region
      %s4926 = ssub.s32 %s13, 2
      // Predicated region
      $region57: #{my_model_forward.2} parent=55 // pred_check
        %p4927 = pneg %p194
      $region58: #{my_model_forward.2} parent=55 // pred_check_branch
        %4929 = sbr.rel (%p4927) target = $region60
      $region59: #{my_model_forward.2} parent=55 // pred_region
        %p4930 = scmp.lt.s32.totalorder %s19, 1
        %s4931 = scalar_select %p4930, %s19, 1
        %s4932 = scalar_lea.vmem %s7, %s4931
      $region60: #{my_model_forward.2} parent=55 // pred_fallthru
        _
    $region56: #{my_model_forward.2} parent=5 // pred_fallthru
      _
  $region6: #{my_model_forward.2} parent=0 // loop_footer
    %s17 = sadd.s32 1, %s13
  $region7: #{my_model_forward.2} parent=0 // loop_footer_branch
    %12 = sbr.rel target = $region3
  $region8: #{my_model_forward.2} parent=0 // loop_exit
    _

</llo_original>
